<compile_context>
chip_gen: v7x
topology: tpu7x:2x2x1
jax: 0.10.0
libtpu: 0.0.40
codegen_flags: <defaults>
</compile_context>

<pallas_src>
import functools
import math

import jax
import jax.numpy as jnp
from jax.experimental import pallas as pl
from jax.experimental.pallas import tpu as pltpu


# ----------------------------------------------------------------------------
# Fused kernel: conv-matmul tile -> ReLU -> per-image partial sums (accumulated
# in VMEM scratch) -> [last tile] mean -> fc -> L2-normalize -> out
# ----------------------------------------------------------------------------
def fused_forward_kernel(p_ref, w_ref, fcw_ref, fcb_ref, outw_ref, outb_ref,
                         o_ref, acc_ref, *, hw, tile_b, tile_hw):
    t = pl.program_id(1)

    # Fresh pooled-sum accumulator at the start of every batch tile.
    @pl.when(t == 0)
    def _():
        acc_ref[...] = jnp.zeros_like(acc_ref)

    kp = w_ref.shape[0]
    c = w_ref.shape[1]

    # Encoder conv as a matmul on this tile: (TILE_B*TILE_HW, Kp) @ (Kp, C),
    # bf16 operands, f32 accumulation on the MXU.
    p2 = p_ref[...].reshape(tile_b * tile_hw, kp)
    feat = jnp.dot(p2, w_ref[...], preferred_element_type=jnp.float32)
    feat = jnp.maximum(feat, 0.0)                                    # F.relu

    # Partial adaptive_avg_pool2d((1,1)): per-image sum of this tile's rows.
    acc_ref[...] += feat.reshape(tile_b, tile_hw, c).sum(axis=1)

    # Head runs once per batch tile, on the final hw tile.
    @pl.when(t == pl.num_programs(1) - 1)
    def _():
        pooled = acc_ref[...] * (1.0 / hw)                           # mean + view
        # self.fc (bf16 operands, f32 accumulation)
        h = jnp.dot(pooled.astype(jnp.bfloat16), fcw_ref[...],
                    preferred_element_type=jnp.float32) + fcb_ref[...]
        # F.normalize(dim=-1) with the eps=1e-12 clamp (rsqrt -> EUP slot).
        sumsq = jnp.sum(h * h, axis=-1, keepdims=True)
        h = h * jax.lax.rsqrt(jnp.maximum(sumsq, 1e-24))
        # self.out (lane-dense: num_classes padded to a multiple of 128).
        o_ref[...] = jnp.dot(h.astype(jnp.bfloat16), outw_ref[...],
                             preferred_element_type=jnp.float32) + outb_ref[...]


# ----------------------------------------------------------------------------
# Glue: im2col for a 3x3 / stride-2 / pad-1 conv (pure data movement)
# ----------------------------------------------------------------------------
def im2col_3x3_s2(x):
    B, Cin, H, W = x.shape
    assert H % 2 == 0 and W % 2 == 0, "im2col assumes even H, W for k=3/s=2/p=1"
    Ho, Wo = H // 2, W // 2
    xp = jnp.pad(x, ((0, 0), (0, 0), (1, 1), (1, 1)))
    cols = []
    for kh in range(3):
        for kw in range(3):
            cols.append(xp[:, :, kh:kh + 2 * Ho:2, kw:kw + 2 * Wo:2])  # (B,Cin,Ho,Wo)
    p = jnp.stack(cols, axis=2)                      # (B, Cin, 9, Ho, Wo), kh*3+kw order
    p = p.transpose(0, 3, 4, 1, 2)                   # (B, Ho, Wo, Cin, 9)
    return p.reshape(B, Ho * Wo, Cin * 9), Ho, Wo


# ----------------------------------------------------------------------------
# Wrapper: Network.forward(x) -> logits (B, num_classes)
# ----------------------------------------------------------------------------
def network_forward(x, conv_w, fc_w, fc_b, out_w, out_b, *,
                    tile_b=8, tile_hw=128):
    B, Cin, H, W = x.shape
    C = conv_w.shape[0]                              # feature_dim (densenet121 -> 1024)
    HIDDEN = out_w.shape[0]
    NC = out_w.shape[1]

    patches, Ho, Wo = im2col_3x3_s2(x)               # (B, HW, K), K = Cin*9
    HW = Ho * Wo
    K = Cin * 9

    tile_hw = min(tile_hw, HW)
    assert HW % tile_hw == 0 and tile_hw % 8 == 0, "tile_hw must tile HW and be 8-aligned"

    # Lane-dense patch layout: pad K (27) up to 128 — unmasked loads, still one MXU pass.
    Kp = max(128, ((K + 127) // 128) * 128)
    # Batch padded to whole sublane-aligned tiles (padded rows are zeros -> sliced off).
    Bp = ((B + tile_b - 1) // tile_b) * tile_b

    patches_p = jnp.pad(patches, ((0, Bp - B), (0, 0), (0, Kp - K))).astype(jnp.bfloat16)

    w_mat = conv_w.reshape(C, K).T                   # (K, C), Cin-major then (kh, kw)
    w_mat = jnp.pad(w_mat, ((0, Kp - K), (0, 0))).astype(jnp.bfloat16)

    # bf16 GEMM operands (f32 accumulation happens inside the kernel).
    fc_w_b = fc_w.astype(jnp.bfloat16)

    # Lane-dense classifier: pad num_classes up to a multiple of 128.
    NCp = ((NC + 127) // 128) * 128
    out_w_p = jnp.pad(out_w, ((0, 0), (0, NCp - NC))).astype(jnp.bfloat16)
    out_b_p = jnp.pad(out_b, ((0, 0), (0, NCp - NC)))

    grid = (Bp // tile_b, HW // tile_hw)

    cost = pl.CostEstimate(
        flops=2 * Bp * HW * Kp * C + 2 * Bp * C * HIDDEN + 2 * Bp * HIDDEN * NCp,
        transcendentals=Bp,
        bytes_accessed=(patches_p.size * 2 + w_mat.size * 2 + fc_w_b.size * 2
                        + fc_b.size * 4 + out_w_p.size * 2 + out_b_p.size * 4
                        + Bp * NCp * 4),
    )

    out_p = pl.pallas_call(
        functools.partial(fused_forward_kernel,
                          hw=HW, tile_b=tile_b, tile_hw=tile_hw),
        out_shape=jax.ShapeDtypeStruct((Bp, NCp), jnp.float32),
        grid_spec=pltpu.PrefetchScalarGridSpec(
            num_scalar_prefetch=0,
            grid=grid,
            in_specs=[
                pl.BlockSpec((tile_b, tile_hw, Kp), lambda b, t: (b, t, 0)),   # patches
                pl.BlockSpec((Kp, C), lambda b, t: (0, 0)),                    # conv weight
                pl.BlockSpec((C, HIDDEN), lambda b, t: (0, 0)),                # fc weight
                pl.BlockSpec((1, HIDDEN), lambda b, t: (0, 0)),                # fc bias
                pl.BlockSpec((HIDDEN, NCp), lambda b, t: (0, 0)),              # out weight
                pl.BlockSpec((1, NCp), lambda b, t: (0, 0)),                   # out bias
            ],
            out_specs=pl.BlockSpec((tile_b, NCp), lambda b, t: (b, 0)),
            scratch_shapes=[pltpu.VMEM((tile_b, C), jnp.float32)],             # pooled sums
        ),
        compiler_params=pltpu.CompilerParams(
            dimension_semantics=("parallel", "arbitrary")),
        cost_estimate=cost,
    )(patches_p, w_mat, fc_w_b, fc_b, out_w_p, out_b_p)

    return out_p[:B, :NC]


# ----------------------------------------------------------------------------
# Pure-JAX reference (same math, no Pallas) for the correctness check
# ----------------------------------------------------------------------------
def reference_forward(x, conv_w, fc_w, fc_b, out_w, out_b):
    feat = jax.lax.conv_general_dilated(
        x, conv_w, window_strides=(2, 2), padding=((1, 1), (1, 1)),
        dimension_numbers=('NCHW', 'OIHW', 'NCHW'), precision='highest')
    feat = jnp.maximum(feat, 0.0)
    pooled = jnp.mean(feat, axis=(2, 3))
    h = pooled @ fc_w + fc_b[0]
    h = h / jnp.maximum(jnp.linalg.norm(h, axis=-1, keepdims=True), 1e-12)
    return h @ out_w + out_b[0]


if __name__ == "__main__":
    B, Cin, H, W = 2, 3, 32, 32          # small RGB input, NCHW like PyTorch
    FEATURE_DIM = 1024                   # densenet121.classifier.in_features
    HIDDEN = 128                         # nn.Linear(feature_dim, 128)
    NUM_CLASSES = 10

    key = jax.random.PRNGKey(0)
    kx, kc, kf1, kf2, kb1, kb2 = jax.random.split(key, 6)

    x = jax.random.normal(kx, (B, Cin, H, W), jnp.float32)

    # Deterministic synthetic parameters (shapes implied by the module).
    conv_w = jax.random.normal(kc, (FEATURE_DIM, Cin, 3, 3), jnp.float32) / math.sqrt(Cin * 9)
    fc_w = jax.random.normal(kf1, (FEATURE_DIM, HIDDEN), jnp.float32) / math.sqrt(FEATURE_DIM)
    fc_b = jax.random.normal(kb1, (1, HIDDEN), jnp.float32) * 0.01
    out_w = jax.random.normal(kf2, (HIDDEN, NUM_CLASSES), jnp.float32) / math.sqrt(HIDDEN)
    out_b = jax.random.normal(kb2, (1, NUM_CLASSES), jnp.float32) * 0.01

    out = jax.jit(network_forward)(x, conv_w, fc_w, fc_b, out_w, out_b)
    out = jax.block_until_ready(out)

    ref = reference_forward(x, conv_w, fc_w, fc_b, out_w, out_b)
    assert out.shape == (B, NUM_CLASSES)
    err = float(jnp.max(jnp.abs(out - ref)))
    scale = float(jnp.max(jnp.abs(ref)))
    assert err <= 1e-2 + 1e-2 * scale, f"max abs err {err} vs ref scale {scale}"

    print("KERNEL_OK")
</pallas_src>

<mosaic_0001>
module attributes {stable_mosaic.version = 11 : i64} {
  func.func @fused_forward_kernel(%arg0: i32, %arg1: i32, %arg2: memref<8x128x128xbf16, #tpu.memory_space<vmem>>, %arg3: memref<128x1024xbf16, #tpu.memory_space<vmem>>, %arg4: memref<1024x128xbf16, #tpu.memory_space<vmem>>, %arg5: memref<1x128xf32, #tpu.memory_space<vmem>>, %arg6: memref<128x128xbf16, #tpu.memory_space<vmem>>, %arg7: memref<1x128xf32, #tpu.memory_space<vmem>>, %arg8: memref<8x128xf32, #tpu.memory_space<vmem>>, %arg9: memref<8x1024xf32, #tpu.memory_space<vmem>>) attributes {dimension_semantics = [#tpu.dimension_semantics<parallel>, #tpu.dimension_semantics<arbitrary>], iteration_bounds = array<i64: 1, 2>, scalar_prefetch = 0 : i64, scratch_operands = 1 : i64, tpu.core_type = #tpu.core_type<tc>, window_params = [{transform_indices = @transform_0, window_bounds = array<i64: 8, 128, 128>}, {pipeline_mode = #tpu.pipeline_mode<synchronous>, transform_indices = @transform_1, window_bounds = array<i64: 128, 1024>}, {pipeline_mode = #tpu.pipeline_mode<synchronous>, transform_indices = @transform_2, window_bounds = array<i64: 1024, 128>}, {pipeline_mode = #tpu.pipeline_mode<synchronous>, transform_indices = @transform_3, window_bounds = array<i64: 1, 128>}, {pipeline_mode = #tpu.pipeline_mode<synchronous>, transform_indices = @transform_4, window_bounds = array<i64: 128, 128>}, {pipeline_mode = #tpu.pipeline_mode<synchronous>, transform_indices = @transform_5, window_bounds = array<i64: 1, 128>}, {transform_indices = @transform_6, window_bounds = array<i64: 8, 128>}]} {
    %c0_i32 = arith.constant 0 : i32
    %0 = arith.cmpi eq, %arg1, %c0_i32 : i32
    %1 = arith.extui %0 : i1 to i32
    %c0_i32_0 = arith.constant 0 : i32
    %2 = arith.cmpi ne, %1, %c0_i32_0 : i32
    scf.if %2 {
      %cst_12 = arith.constant 0.000000e+00 : f32
      %17 = vector.broadcast %cst_12 : f32 to vector<8x1024xf32>
      %c0_13 = arith.constant 0 : index
      %c0_14 = arith.constant 0 : index
      %18 = vector.load %arg9[%c0_13, %c0_14] : memref<8x1024xf32, #tpu.memory_space<vmem>>, vector<8x1024xf32>
      tpu.vector_store %arg9[%c0_13, %c0_14], %17 {strides = array<i32>} : memref<8x1024xf32, #tpu.memory_space<vmem>>, vector<8x1024xf32>,
    } else {
    }
    %c0 = arith.constant 0 : index
    %c0_1 = arith.constant 0 : index
    %c0_2 = arith.constant 0 : index
    %3 = vector.load %arg2[%c0, %c0_1, %c0_2] : memref<8x128x128xbf16, #tpu.memory_space<vmem>>, vector<8x128x128xbf16>
    %4 = vector.shape_cast %3 : vector<8x128x128xbf16> to vector<1024x128xbf16>
    %c0_3 = arith.constant 0 : index
    %c0_4 = arith.constant 0 : index
    %5 = vector.load %arg3[%c0_3, %c0_4] : memref<128x1024xbf16, #tpu.memory_space<vmem>>, vector<128x1024xbf16>
    %cst = arith.constant dense<0.000000e+00> : vector<1024x1024xf32>
    %6 = tpu.matmul %4, %5, %cst {dimension_numbers = #tpu.dot_dimension_numbers<[1], [0], [0], [1], [0, 0, 1, 1], [], []>} : vector<1024x128xbf16>, vector<128x1024xbf16>, vector<1024x1024xf32> -> vector<1024x1024xf32>
    %cst_5 = arith.constant 0.000000e+00 : f32
    %7 = vector.broadcast %cst_5 : f32 to vector<1024x1024xf32>
    %8 = arith.maximumf %6, %7 : vector<1024x1024xf32>
    %c0_6 = arith.constant 0 : index
    %c0_7 = arith.constant 0 : index
    %9 = vector.load %arg9[%c0_6, %c0_7] : memref<8x1024xf32, #tpu.memory_space<vmem>>, vector<8x1024xf32>
    %10 = vector.shape_cast %8 : vector<1024x1024xf32> to vector<8x128x1024xf32>
    %cst_8 = arith.constant dense<0.000000e+00> : vector<8x1024xf32>
    %11 = vector.multi_reduction <add>, %10, %cst_8 [1] : vector<8x128x1024xf32> to vector<8x1024xf32>
    %12 = arith.addf %9, %11 : vector<8x1024xf32>
    %c0_9 = arith.constant 0 : index
    %c0_10 = arith.constant 0 : index
    %13 = vector.load %arg9[%c0_9, %c0_10] : memref<8x1024xf32, #tpu.memory_space<vmem>>, vector<8x1024xf32>
    tpu.vector_store %arg9[%c0_9, %c0_10], %12 {strides = array<i32>} : memref<8x1024xf32, #tpu.memory_space<vmem>>, vector<8x1024xf32>,
    %c1_i32 = arith.constant 1 : i32
    %14 = arith.cmpi eq, %arg1, %c1_i32 : i32
    %15 = arith.extui %14 : i1 to i32
    %c0_i32_11 = arith.constant 0 : i32
    %16 = arith.cmpi ne, %15, %c0_i32_11 : i32
    scf.if %16 {
      %c0_12 = arith.constant 0 : index
      %c0_13 = arith.constant 0 : index
      %17 = vector.load %arg9[%c0_12, %c0_13] : memref<8x1024xf32, #tpu.memory_space<vmem>>, vector<8x1024xf32>
      %cst_14 = arith.constant 3.906250e-03 : f32
      %18 = vector.broadcast %cst_14 : f32 to vector<8x1024xf32>
      %19 = arith.mulf %17, %18 : vector<8x1024xf32>
      %20 = arith.truncf %19 : vector<8x1024xf32> to vector<8x1024xbf16>
      %c0_15 = arith.constant 0 : index
      %c0_16 = arith.constant 0 : index
      %21 = vector.load %arg4[%c0_15, %c0_16] : memref<1024x128xbf16, #tpu.memory_space<vmem>>, vector<1024x128xbf16>
      %cst_17 = arith.constant dense<0.000000e+00> : vector<8x128xf32>
      %22 = tpu.matmul %20, %21, %cst_17 {dimension_numbers = #tpu.dot_dimension_numbers<[1], [0], [0], [1], [0, 0, 1, 1], [], []>} : vector<8x1024xbf16>, vector<1024x128xbf16>, vector<8x128xf32> -> vector<8x128xf32>
      %c0_18 = arith.constant 0 : index
      %c0_19 = arith.constant 0 : index
      %23 = vector.load %arg5[%c0_18, %c0_19] : memref<1x128xf32, #tpu.memory_space<vmem>>, vector<1x128xf32>
      %24 = vector.broadcast %23 : vector<1x128xf32> to vector<8x128xf32>
      %25 = arith.addf %22, %24 : vector<8x128xf32>
      %26 = arith.mulf %25, %25 : vector<8x128xf32>
      %cst_20 = arith.constant dense<0.000000e+00> : vector<8xf32>
      %27 = vector.multi_reduction <add>, %26, %cst_20 [1] : vector<8x128xf32> to vector<8xf32>
      %28 = vector.shape_cast %27 : vector<8xf32> to vector<8x1xf32>
      %cst_21 = arith.constant 1.000000e-24 : f32
      %29 = vector.broadcast %cst_21 : f32 to vector<8x1xf32>
      %30 = arith.maximumf %28, %29 : vector<8x1xf32>
      %31 = math.rsqrt %30 : vector<8x1xf32>
      %32 = vector.broadcast %31 : vector<8x1xf32> to vector<8x128xf32>
      %33 = arith.mulf %25, %32 : vector<8x128xf32>
      %34 = arith.truncf %33 : vector<8x128xf32> to vector<8x128xbf16>
      %c0_22 = arith.constant 0 : index
      %c0_23 = arith.constant 0 : index
      %35 = vector.load %arg6[%c0_22, %c0_23] : memref<128x128xbf16, #tpu.memory_space<vmem>>, vector<128x128xbf16>
      %cst_24 = arith.constant dense<0.000000e+00> : vector<8x128xf32>
      %36 = tpu.matmul %34, %35, %cst_24 {dimension_numbers = #tpu.dot_dimension_numbers<[1], [0], [0], [1], [0, 0, 1, 1], [], []>} : vector<8x128xbf16>, vector<128x128xbf16>, vector<8x128xf32> -> vector<8x128xf32>
      %c0_25 = arith.constant 0 : index
      %c0_26 = arith.constant 0 : index
      %37 = vector.load %arg7[%c0_25, %c0_26] : memref<1x128xf32, #tpu.memory_space<vmem>>, vector<1x128xf32>
      %38 = vector.broadcast %37 : vector<1x128xf32> to vector<8x128xf32>
      %39 = arith.addf %36, %38 : vector<8x128xf32>
      %c0_27 = arith.constant 0 : index
      %c0_28 = arith.constant 0 : index
      %40 = vector.load %arg8[%c0_27, %c0_28] : memref<8x128xf32, #tpu.memory_space<vmem>>, vector<8x128xf32>
      tpu.vector_store %arg8[%c0_27, %c0_28], %39 {strides = array<i32>} : memref<8x128xf32, #tpu.memory_space<vmem>>, vector<8x128xf32>,
    } else {
    }
    return
  }
  func.func @transform_0(%arg0: i32, %arg1: i32) -> (i32, i32, i32) {
    %c0_i32 = arith.constant 0 : i32
    %c0_i32_0 = arith.constant 0 : i32
    return %arg0, %arg1, %c0_i32 : i32, i32, i32
  }
  func.func @transform_1(%arg0: i32, %arg1: i32) -> (i32, i32) {
    %c0_i32 = arith.constant 0 : i32
    %c0_i32_0 = arith.constant 0 : i32
    %c0_i32_1 = arith.constant 0 : i32
    return %c0_i32, %c0_i32_0 : i32, i32
  }
  func.func @transform_2(%arg0: i32, %arg1: i32) -> (i32, i32) {
    %c0_i32 = arith.constant 0 : i32
    %c0_i32_0 = arith.constant 0 : i32
    %c0_i32_1 = arith.constant 0 : i32
    return %c0_i32, %c0_i32_0 : i32, i32
  }
  func.func @transform_3(%arg0: i32, %arg1: i32) -> (i32, i32) {
    %c0_i32 = arith.constant 0 : i32
    %c0_i32_0 = arith.constant 0 : i32
    %c0_i32_1 = arith.constant 0 : i32
    return %c0_i32, %c0_i32_0 : i32, i32
  }
  func.func @transform_4(%arg0: i32, %arg1: i32) -> (i32, i32) {
    %c0_i32 = arith.constant 0 : i32
    %c0_i32_0 = arith.constant 0 : i32
    %c0_i32_1 = arith.constant 0 : i32
    return %c0_i32, %c0_i32_0 : i32, i32
  }
  func.func @transform_5(%arg0: i32, %arg1: i32) -> (i32, i32) {
    %c0_i32 = arith.constant 0 : i32
    %c0_i32_0 = arith.constant 0 : i32
    %c0_i32_1 = arith.constant 0 : i32
    return %c0_i32, %c0_i32_0 : i32, i32
  }
  func.func @transform_6(%arg0: i32, %arg1: i32) -> (i32, i32) {
    %c0_i32 = arith.constant 0 : i32
    %c0_i32_0 = arith.constant 0 : i32
    return %arg0, %c0_i32 : i32, i32
  }
}

</mosaic_0001>

<llo_original>
// kernel: network_forward.1
$region0: #{network_forward.1}
  #allocation0 [shape = 'u32[]', space=smem, size = 0x4, offset = 0x4, fixed_abs, tag = 'smem constant byte address 0x4 - core index']
  #allocation1 [shape = 'u32[144,128]{1,0:T(1,128)}', space=vmem, size = 0x12000, scoped, tag = 'internal scratch']
  #allocation2 [shape = 'f32[8,1024]{1,0:T(8,128)}', space=vmem, size = 0x8000, scoped, tag = 'scratch operand']
  %s0 = inlined_call_operand.vmem [shape: bf16[8,256,128], index: 0, kind: input, shape index: {}]
  %s1 = inlined_call_operand.vmem [shape: bf16[128,1024], index: 1, kind: input, shape index: {}]
  %s2 = inlined_call_operand.vmem [shape: bf16[1024,128], index: 2, kind: input, shape index: {}]
  %s3 = inlined_call_operand.vmem [shape: f32[1,128], index: 3, kind: input, shape index: {}]
  %s4 = inlined_call_operand.vmem [shape: bf16[128,128], index: 4, kind: input, shape index: {}]
  %s5 = inlined_call_operand.vmem [shape: f32[1,128], index: 5, kind: input, shape index: {}]
  %s6 = inlined_call_operand.vmem [shape: f32[8,128], index: 6, kind: output, shape index: {}]
  %s7 = sld [smem:[#allocation0]]
  $region106: #{network_forward.1} parent=0
    _
  %s9 = ssub.s32 1, %s7
  %s10 = scalar_select 0, %s9, %s7
  $region1: #{network_forward.1} parent=0
    #allocation3 [shape = 'u8[524288]{0}', space=vmem, size = 0x80000, scoped, tag = 'input window, operand 0']
    loop: start=0, step=1, limit=4
    $region2: #{network_forward.1} parent=1 // loop_pre_header
      _
    $region3: #{network_forward.1} parent=1 // loop_header
      %s12 = sphi 0, %s16
      %p13 = scmp.ge.s32.totalorder %s12, 4
      %s19 = sphi 0, %s31
      %s20 = sphi 0, %s27
      %s21 = sphi 0, %s19
      %s22 = sphi 0, %s20
      %s23 = sphi 0, %s21
      %s24 = sphi 0, %s22
      %s36 = sphi 0, %s38
      %s39 = sphi 0, %s36
      %s40 = sphi 0, %s39
      %s56 = sphi 0, %s40
      %s60 = sphi 0, %s60
      %s62 = sphi 0, %s60
      %s63 = sphi 0, %s62
      %s77 = sphi 0, %s63
      %s81 = sphi 0, %s81
      %s83 = sphi 0, %s81
      %s84 = sphi 0, %s83
      %s98 = sphi 0, %s84
      %s102 = sphi 0, %s102
      %s104 = sphi 0, %s102
      %s105 = sphi 0, %s104
      %s119 = sphi 0, %s105
      %s123 = sphi 0, %s123
      %s125 = sphi 0, %s123
      %s126 = sphi 0, %s125
      %s140 = sphi 0, %s126
      %s144 = sphi 0, %s144
      %s146 = sphi 0, %s144
      %s147 = sphi 0, %s146
      %s161 = sphi 0, %s147
      %s167 = sphi 0, %s169
      %s170 = sphi 0, %s167
      %s171 = sphi 0, %s170
      %s187 = sphi 0, %s171
    $region4: #{network_forward.1} parent=1 // loop_header_branch
      %15 = sbr.rel (%p13) target = $region8
    $region5: #{network_forward.1} parent=1 // loop_body
      %s17 = ssub.s32 %s12, 1
      %s18 = ssub.s32 %s12, 2
      %s25 = sadd.s32 1, %s20
      %p26 = scmp.ge.s32.totalorder %s25, 2
      %s27 = scalar_select %p26, 0, %s25
      %s28 = sadd.s32 1, %s19
      %s29 = scalar_select %p26, %s28, %s19
      %p30 = scmp.ge.s32.totalorder %s29, 1
      %s31 = scalar_select %p30, 0, %s29
      %s32 = ssub.s32 %s19, %s31
      %s33 = ssub.s32 %s20, %s27
      %s34 = sor.u32 %s32, %s33
      %p35 = scmp.eq.s32.totalorder %s34, 0
      %s37 = sadd.s32 %s36, 1
      %s38 = scalar_select %p35, %s36, %s37
      %p41 = pneg %p35
      %p42 = scmp.eq.s32.totalorder %s12, 1
      %p43 = por %p41, %p42
      %p44 = scmp.ne.s32.totalorder %s36, %s39
      %p45 = scmp.eq.s32.totalorder %s12, 0
      %p46 = por %p44, %p45
      %p47 = scmp.ne.s32.totalorder %s36, %s39
      %p48 = scmp.eq.s32.totalorder %s17, 1
      %p49 = por %p47, %p48
      %p50 = scmp.ne.s32.totalorder %s39, %s40
      %p51 = scmp.eq.s32.totalorder %s17, 0
      %p52 = por %p50, %p51
      %p53 = scmp.ne.s32.totalorder %s39, %s40
      %p54 = scmp.eq.s32.totalorder %s18, 1
      %p55 = por %p53, %p54
      %p57 = scmp.ne.s32.totalorder %s40, %s56
      %p58 = scmp.eq.s32.totalorder %s18, 0
      %p59 = por %p57, %p58
      %s61 = sadd.s32 %s60, 1
      %p64 = scmp.eq.s32.totalorder %s12, 1
      %p65 = scmp.ne.s32.totalorder %s60, %s62
      %p66 = scmp.eq.s32.totalorder %s12, 0
      %p67 = por %p65, %p66
      %p68 = scmp.ne.s32.totalorder %s60, %s62
      %p69 = scmp.eq.s32.totalorder %s17, 1
      %p70 = por %p68, %p69
      %p71 = scmp.ne.s32.totalorder %s62, %s63
      %p72 = scmp.eq.s32.totalorder %s17, 0
      %p73 = por %p71, %p72
      %p74 = scmp.ne.s32.totalorder %s62, %s63
      %p75 = scmp.eq.s32.totalorder %s18, 1
      %p76 = por %p74, %p75
      %p78 = scmp.ne.s32.totalorder %s63, %s77
      %p79 = scmp.eq.s32.totalorder %s18, 0
      %p80 = por %p78, %p79
      %s82 = sadd.s32 %s81, 1
      %p85 = scmp.eq.s32.totalorder %s12, 1
      %p86 = scmp.ne.s32.totalorder %s81, %s83
      %p87 = scmp.eq.s32.totalorder %s12, 0
      %p88 = por %p86, %p87
      %p89 = scmp.ne.s32.totalorder %s81, %s83
      %p90 = scmp.eq.s32.totalorder %s17, 1
      %p91 = por %p89, %p90
      %p92 = scmp.ne.s32.totalorder %s83, %s84
      %p93 = scmp.eq.s32.totalorder %s17, 0
      %p94 = por %p92, %p93
      %p95 = scmp.ne.s32.totalorder %s83, %s84
      %p96 = scmp.eq.s32.totalorder %s18, 1
      %p97 = por %p95, %p96
      %p99 = scmp.ne.s32.totalorder %s84, %s98
      %p100 = scmp.eq.s32.totalorder %s18, 0
      %p101 = por %p99, %p100
      %s103 = sadd.s32 %s102, 1
      %p106 = scmp.eq.s32.totalorder %s12, 1
      %p107 = scmp.ne.s32.totalorder %s102, %s104
      %p108 = scmp.eq.s32.totalorder %s12, 0
      %p109 = por %p107, %p108
      %p110 = scmp.ne.s32.totalorder %s102, %s104
      %p111 = scmp.eq.s32.totalorder %s17, 1
      %p112 = por %p110, %p111
      %p113 = scmp.ne.s32.totalorder %s104, %s105
      %p114 = scmp.eq.s32.totalorder %s17, 0
      %p115 = por %p113, %p114
      %p116 = scmp.ne.s32.totalorder %s104, %s105
      %p117 = scmp.eq.s32.totalorder %s18, 1
      %p118 = por %p116, %p117
      %p120 = scmp.ne.s32.totalorder %s105, %s119
      %p121 = scmp.eq.s32.totalorder %s18, 0
      %p122 = por %p120, %p121
      %s124 = sadd.s32 %s123, 1
      %p127 = scmp.eq.s32.totalorder %s12, 1
      %p128 = scmp.ne.s32.totalorder %s123, %s125
      %p129 = scmp.eq.s32.totalorder %s12, 0
      %p130 = por %p128, %p129
      %p131 = scmp.ne.s32.totalorder %s123, %s125
      %p132 = scmp.eq.s32.totalorder %s17, 1
      %p133 = por %p131, %p132
      %p134 = scmp.ne.s32.totalorder %s125, %s126
      %p135 = scmp.eq.s32.totalorder %s17, 0
      %p136 = por %p134, %p135
      %p137 = scmp.ne.s32.totalorder %s125, %s126
      %p138 = scmp.eq.s32.totalorder %s18, 1
      %p139 = por %p137, %p138
      %p141 = scmp.ne.s32.totalorder %s126, %s140
      %p142 = scmp.eq.s32.totalorder %s18, 0
      %p143 = por %p141, %p142
      %s145 = sadd.s32 %s144, 1
      %p148 = scmp.eq.s32.totalorder %s12, 1
      %p149 = scmp.ne.s32.totalorder %s144, %s146
      %p150 = scmp.eq.s32.totalorder %s12, 0
      %p151 = por %p149, %p150
      %p152 = scmp.ne.s32.totalorder %s144, %s146
      %p153 = scmp.eq.s32.totalorder %s17, 1
      %p154 = por %p152, %p153
      %p155 = scmp.ne.s32.totalorder %s146, %s147
      %p156 = scmp.eq.s32.totalorder %s17, 0
      %p157 = por %p155, %p156
      %p158 = scmp.ne.s32.totalorder %s146, %s147
      %p159 = scmp.eq.s32.totalorder %s18, 1
      %p160 = por %p158, %p159
      %p162 = scmp.ne.s32.totalorder %s147, %s161
      %p163 = scmp.eq.s32.totalorder %s18, 0
      %p164 = por %p162, %p163
      %s165 = ssub.s32 %s19, %s31
      %p166 = scmp.eq.s32.totalorder %s165, 0
      %s168 = sadd.s32 %s167, 1
      %s169 = scalar_select %p166, %s167, %s168
      %p172 = pneg %p166
      %p173 = scmp.eq.s32.totalorder %s12, 1
      %p174 = por %p172, %p173
      %p175 = scmp.ne.s32.totalorder %s167, %s170
      %p176 = scmp.eq.s32.totalorder %s12, 0
      %p177 = por %p175, %p176
      %p178 = scmp.ne.s32.totalorder %s167, %s170
      %p179 = scmp.eq.s32.totalorder %s17, 1
      %p180 = por %p178, %p179
      %p181 = scmp.ne.s32.totalorder %s170, %s171
      %p182 = scmp.eq.s32.totalorder %s17, 0
      %p183 = por %p181, %p182
      %p184 = scmp.ne.s32.totalorder %s170, %s171
      %p185 = scmp.eq.s32.totalorder %s18, 1
      %p186 = por %p184, %p185
      %p188 = scmp.ne.s32.totalorder %s171, %s187
      %p189 = scmp.eq.s32.totalorder %s18, 0
      %p190 = por %p188, %p189
      %p191 = scmp.le.s32.totalorder 1, %s12
      %p192 = scmp.lt.s32.totalorder %s12, 3
      %p193 = pnand %p191, %p192
      %p194 = pneg %p193
      // Predicated region
      $region9: #{network_forward.1} parent=5 // pred_check
        _
      $region10: #{network_forward.1} parent=5 // pred_check_branch
        %196 = sbr.rel (%p193) target = $region12
      $region11: #{network_forward.1} parent=5 // pred_region
        %s197 = ssub.s32 %s12, 1
        // Predicated region
        $region13: #{network_forward.1} parent=11 // pred_check
          %p198 = pneg %p73
        $region14: #{network_forward.1} parent=11 // pred_check_branch
          %200 = sbr.rel (%p198) target = $region16
        $region15: #{network_forward.1} parent=11 // pred_region
          _
        $region16: #{network_forward.1} parent=11 // pred_fallthru
          _
        // Predicated region
        $region17: #{network_forward.1} parent=11 // pred_check
          %p201 = pneg %p94
        $region18: #{network_forward.1} parent=11 // pred_check_branch
          %203 = sbr.rel (%p201) target = $region20
        $region19: #{network_forward.1} parent=11 // pred_region
          _
        $region20: #{network_forward.1} parent=11 // pred_fallthru
          _
        // Predicated region
        $region21: #{network_forward.1} parent=11 // pred_check
          %p204 = pneg %p115
        $region22: #{network_forward.1} parent=11 // pred_check_branch
          %206 = sbr.rel (%p204) target = $region24
        $region23: #{network_forward.1} parent=11 // pred_region
          _
        $region24: #{network_forward.1} parent=11 // pred_fallthru
          _
        // Predicated region
        $region25: #{network_forward.1} parent=11 // pred_check
          %p207 = pneg %p136
        $region26: #{network_forward.1} parent=11 // pred_check_branch
          %209 = sbr.rel (%p207) target = $region28
        $region27: #{network_forward.1} parent=11 // pred_region
          _
        $region28: #{network_forward.1} parent=11 // pred_fallthru
          _
        // Predicated region
        $region29: #{network_forward.1} parent=11 // pred_check
          %p210 = pneg %p157
        $region30: #{network_forward.1} parent=11 // pred_check_branch
          %212 = sbr.rel (%p210) target = $region32
        $region31: #{network_forward.1} parent=11 // pred_region
          _
        $region32: #{network_forward.1} parent=11 // pred_fallthru
          _
      $region12: #{network_forward.1} parent=5 // pred_fallthru
        _
      %p213 = scmp.lt.s32.totalorder %s12, 2
      // Predicated region
      $region33: #{network_forward.1} parent=5 // pred_check
        %p214 = pneg %p213
      $region34: #{network_forward.1} parent=5 // pred_check_branch
        %216 = sbr.rel (%p214) target = $region36
      $region35: #{network_forward.1} parent=5 // pred_region
        // Predicated region
        $region37: #{network_forward.1} parent=35 // pred_check
          %p217 = pneg %p46
        $region38: #{network_forward.1} parent=35 // pred_check_branch
          %219 = sbr.rel (%p217) target = $region40
        $region39: #{network_forward.1} parent=35 // pred_region
          %s220 = sand.u32 %s36, 1
          %s221 = sand.u32 %s36, 1
          %s222 = smul.addr %s221, 512
          %s223 = scalar_lea.vmem [#allocation3], %s222
          %s224 = smul.u32 8, %s19
          %s225 = smul.u32 16, %s20
          %s226 = smul.addr %s224, 32
          %s227 = sadd.s32 %s225, %s226
          %s228 = smul.addr %s227, 4
          %s229 = scalar_lea.vmem %s0, %s228
          // Predicated region
          $region41: #{network_forward.1} parent=39 // pred_check
            _
          $region42: #{network_forward.1} parent=39 // pred_check_branch
            %231 = sbr.rel (0) target = $region44
          $region43: #{network_forward.1} parent=39 // pred_region
            // Predicated region
            $region45: #{network_forward.1} parent=43 // pred_check
              _
            $region46: #{network_forward.1} parent=43 // pred_check_branch
              %233 = sbr.rel target = $region48
            $region47: #{network_forward.1} parent=43 // pred_region
              // Predicated region
              $region60: #{network_forward.1} parent=47 // pred_check
                _
              $region61: #{network_forward.1} parent=47 // pred_check_branch
                %502 = sbr.rel (0) target = $region63
              $region62: #{network_forward.1} parent=47 // pred_region
                loop: start=0, step=1, limit=1
                $region64: #{network_forward.1} parent=62 // loop_pre_header
                  _
                $region65: #{network_forward.1} parent=62 // loop_header
                  %s504 = sphi 0, %s508
                  %p505 = scmp.ge.s32.totalorder %s504, 1
                  %s509 = sphi %s229, %s229
                  %s510 = sphi %s223, %s223
                $region66: #{network_forward.1} parent=62 // loop_header_branch
                  %507 = sbr.rel (%p505) target = $region70
                $region67: #{network_forward.1} parent=62 // loop_body
                  _
                $region68: #{network_forward.1} parent=62 // loop_footer
                  %s508 = sadd.s32 1, %s504
                $region69: #{network_forward.1} parent=62 // loop_footer_branch
                  %503 = sbr.rel target = $region65
                $region70: #{network_forward.1} parent=62 // loop_exit
                  _
                loop: start=0, step=1, limit=1
                $region71: #{network_forward.1} parent=62 // loop_pre_header
                  _
                $region72: #{network_forward.1} parent=62 // loop_header
                  %s513 = sphi 0, %s517
                  %p514 = scmp.ge.s32.totalorder %s513, 1
                  %s518 = sphi %s229, %s229
                  %s519 = sphi %s223, %s223
                $region73: #{network_forward.1} parent=62 // loop_header_branch
                  %516 = sbr.rel (%p514) target = $region77
                $region74: #{network_forward.1} parent=62 // loop_body
                  %v520 = vld [vmem:[%s518] sm:$0xf]
                  %521 = vst [vmem:[%s519] sm:$0xf] %v520
                  %v522 = vld [vmem:[%s518 + $0x4] sm:$0xf]
                  %523 = vst [vmem:[%s519 + $0x4] sm:$0xf] %v522
                  %v524 = vld [vmem:[%s518 + $0x8] sm:$0xf]
                  %525 = vst [vmem:[%s519 + $0x8] sm:$0xf] %v524
                  %v526 = vld [vmem:[%s518 + $0xc] sm:$0xf]
                  %527 = vst [vmem:[%s519 + $0xc] sm:$0xf] %v526
                  %v528 = vld [vmem:[%s518 + $0x10] sm:$0xf]
                  %529 = vst [vmem:[%s519 + $0x10] sm:$0xf] %v528
                  %v530 = vld [vmem:[%s518 + $0x14] sm:$0xf]
                  %531 = vst [vmem:[%s519 + $0x14] sm:$0xf] %v530
                  %v532 = vld [vmem:[%s518 + $0x18] sm:$0xf]
                  %533 = vst [vmem:[%s519 + $0x18] sm:$0xf] %v532
                  %v534 = vld [vmem:[%s518 + $0x1c] sm:$0xf]
                  %535 = vst [vmem:[%s519 + $0x1c] sm:$0xf] %v534
                  %v536 = vld [vmem:[%s518 + $0x20] sm:$0xf]
                  %537 = vst [vmem:[%s519 + $0x20] sm:$0xf] %v536
                  %v538 = vld [vmem:[%s518 + $0x24] sm:$0xf]
                  %539 = vst [vmem:[%s519 + $0x24] sm:$0xf] %v538
                  %v540 = vld [vmem:[%s518 + $0x28] sm:$0xf]
                  %541 = vst [vmem:[%s519 + $0x28] sm:$0xf] %v540
                  %v542 = vld [vmem:[%s518 + $0x2c] sm:$0xf]
                  %543 = vst [vmem:[%s519 + $0x2c] sm:$0xf] %v542
                  %v544 = vld [vmem:[%s518 + $0x30] sm:$0xf]
                  %545 = vst [vmem:[%s519 + $0x30] sm:$0xf] %v544
                  %v546 = vld [vmem:[%s518 + $0x34] sm:$0xf]
                  %547 = vst [vmem:[%s519 + $0x34] sm:$0xf] %v546
                  %v548 = vld [vmem:[%s518 + $0x38] sm:$0xf]
                  %549 = vst [vmem:[%s519 + $0x38] sm:$0xf] %v548
                  %v550 = vld [vmem:[%s518 + $0x3c] sm:$0xf]
                  %551 = vst [vmem:[%s519 + $0x3c] sm:$0xf] %v550
                  %v552 = vld [vmem:[%s518 + $0x80] sm:$0xf]
                  %553 = vst [vmem:[%s519 + $0x40] sm:$0xf] %v552
                  %v554 = vld [vmem:[%s518 + $0x84] sm:$0xf]
                  %555 = vst [vmem:[%s519 + $0x44] sm:$0xf] %v554
                  %v556 = vld [vmem:[%s518 + $0x88] sm:$0xf]
                  %557 = vst [vmem:[%s519 + $0x48] sm:$0xf] %v556
                  %v558 = vld [vmem:[%s518 + $0x8c] sm:$0xf]
                  %559 = vst [vmem:[%s519 + $0x4c] sm:$0xf] %v558
                  %v560 = vld [vmem:[%s518 + $0x90] sm:$0xf]
                  %561 = vst [vmem:[%s519 + $0x50] sm:$0xf] %v560
                  %v562 = vld [vmem:[%s518 + $0x94] sm:$0xf]
                  %563 = vst [vmem:[%s519 + $0x54] sm:$0xf] %v562
                  %v564 = vld [vmem:[%s518 + $0x98] sm:$0xf]
                  %565 = vst [vmem:[%s519 + $0x58] sm:$0xf] %v564
                  %v566 = vld [vmem:[%s518 + $0x9c] sm:$0xf]
                  %567 = vst [vmem:[%s519 + $0x5c] sm:$0xf] %v566
                  %v568 = vld [vmem:[%s518 + $0xa0] sm:$0xf]
                  %569 = vst [vmem:[%s519 + $0x60] sm:$0xf] %v568
                  %v570 = vld [vmem:[%s518 + $0xa4] sm:$0xf]
                  %571 = vst [vmem:[%s519 + $0x64] sm:$0xf] %v570
                  %v572 = vld [vmem:[%s518 + $0xa8] sm:$0xf]
                  %573 = vst [vmem:[%s519 + $0x68] sm:$0xf] %v572
                  %v574 = vld [vmem:[%s518 + $0xac] sm:$0xf]
                  %575 = vst [vmem:[%s519 + $0x6c] sm:$0xf] %v574
                  %v576 = vld [vmem:[%s518 + $0xb0] sm:$0xf]
                  %577 = vst [vmem:[%s519 + $0x70] sm:$0xf] %v576
                  %v578 = vld [vmem:[%s518 + $0xb4] sm:$0xf]
                  %579 = vst [vmem:[%s519 + $0x74] sm:$0xf] %v578
                  %v580 = vld [vmem:[%s518 + $0xb8] sm:$0xf]
                  %581 = vst [vmem:[%s519 + $0x78] sm:$0xf] %v580
                  %v582 = vld [vmem:[%s518 + $0xbc] sm:$0xf]
                  %583 = vst [vmem:[%s519 + $0x7c] sm:$0xf] %v582
                  %v584 = vld [vmem:[%s518 + $0x100] sm:$0xf]
                  %585 = vst [vmem:[%s519 + $0x80] sm:$0xf] %v584
                  %v586 = vld [vmem:[%s518 + $0x104] sm:$0xf]
                  %587 = vst [vmem:[%s519 + $0x84] sm:$0xf] %v586
                  %v588 = vld [vmem:[%s518 + $0x108] sm:$0xf]
                  %589 = vst [vmem:[%s519 + $0x88] sm:$0xf] %v588
                  %v590 = vld [vmem:[%s518 + $0x10c] sm:$0xf]
                  %591 = vst [vmem:[%s519 + $0x8c] sm:$0xf] %v590
                  %v592 = vld [vmem:[%s518 + $0x110] sm:$0xf]
                  %593 = vst [vmem:[%s519 + $0x90] sm:$0xf] %v592
                  %v594 = vld [vmem:[%s518 + $0x114] sm:$0xf]
                  %595 = vst [vmem:[%s519 + $0x94] sm:$0xf] %v594
                  %v596 = vld [vmem:[%s518 + $0x118] sm:$0xf]
                  %597 = vst [vmem:[%s519 + $0x98] sm:$0xf] %v596
                  %v598 = vld [vmem:[%s518 + $0x11c] sm:$0xf]
                  %599 = vst [vmem:[%s519 + $0x9c] sm:$0xf] %v598
                  %v600 = vld [vmem:[%s518 + $0x120] sm:$0xf]
                  %601 = vst [vmem:[%s519 + $0xa0] sm:$0xf] %v600
                  %v602 = vld [vmem:[%s518 + $0x124] sm:$0xf]
                  %603 = vst [vmem:[%s519 + $0xa4] sm:$0xf] %v602
                  %v604 = vld [vmem:[%s518 + $0x128] sm:$0xf]
                  %605 = vst [vmem:[%s519 + $0xa8] sm:$0xf] %v604
                  %v606 = vld [vmem:[%s518 + $0x12c] sm:$0xf]
                  %607 = vst [vmem:[%s519 + $0xac] sm:$0xf] %v606
                  %v608 = vld [vmem:[%s518 + $0x130] sm:$0xf]
                  %609 = vst [vmem:[%s519 + $0xb0] sm:$0xf] %v608
                  %v610 = vld [vmem:[%s518 + $0x134] sm:$0xf]
                  %611 = vst [vmem:[%s519 + $0xb4] sm:$0xf] %v610
                  %v612 = vld [vmem:[%s518 + $0x138] sm:$0xf]
                  %613 = vst [vmem:[%s519 + $0xb8] sm:$0xf] %v612
                  %v614 = vld [vmem:[%s518 + $0x13c] sm:$0xf]
                  %615 = vst [vmem:[%s519 + $0xbc] sm:$0xf] %v614
                  %v616 = vld [vmem:[%s518 + $0x180] sm:$0xf]
                  %617 = vst [vmem:[%s519 + $0xc0] sm:$0xf] %v616
                  %v618 = vld [vmem:[%s518 + $0x184] sm:$0xf]
                  %619 = vst [vmem:[%s519 + $0xc4] sm:$0xf] %v618
                  %v620 = vld [vmem:[%s518 + $0x188] sm:$0xf]
                  %621 = vst [vmem:[%s519 + $0xc8] sm:$0xf] %v620
                  %v622 = vld [vmem:[%s518 + $0x18c] sm:$0xf]
                  %623 = vst [vmem:[%s519 + $0xcc] sm:$0xf] %v622
                  %v624 = vld [vmem:[%s518 + $0x190] sm:$0xf]
                  %625 = vst [vmem:[%s519 + $0xd0] sm:$0xf] %v624
                  %v626 = vld [vmem:[%s518 + $0x194] sm:$0xf]
                  %627 = vst [vmem:[%s519 + $0xd4] sm:$0xf] %v626
                  %v628 = vld [vmem:[%s518 + $0x198] sm:$0xf]
                  %629 = vst [vmem:[%s519 + $0xd8] sm:$0xf] %v628
                  %v630 = vld [vmem:[%s518 + $0x19c] sm:$0xf]
                  %631 = vst [vmem:[%s519 + $0xdc] sm:$0xf] %v630
                  %v632 = vld [vmem:[%s518 + $0x1a0] sm:$0xf]
                  %633 = vst [vmem:[%s519 + $0xe0] sm:$0xf] %v632
                  %v634 = vld [vmem:[%s518 + $0x1a4] sm:$0xf]
                  %635 = vst [vmem:[%s519 + $0xe4] sm:$0xf] %v634
                  %v636 = vld [vmem:[%s518 + $0x1a8] sm:$0xf]
                  %637 = vst [vmem:[%s519 + $0xe8] sm:$0xf] %v636
                  %v638 = vld [vmem:[%s518 + $0x1ac] sm:$0xf]
                  %639 = vst [vmem:[%s519 + $0xec] sm:$0xf] %v638
                  %v640 = vld [vmem:[%s518 + $0x1b0] sm:$0xf]
                  %641 = vst [vmem:[%s519 + $0xf0] sm:$0xf] %v640
                  %v642 = vld [vmem:[%s518 + $0x1b4] sm:$0xf]
                  %643 = vst [vmem:[%s519 + $0xf4] sm:$0xf] %v642
                  %v644 = vld [vmem:[%s518 + $0x1b8] sm:$0xf]
                  %645 = vst [vmem:[%s519 + $0xf8] sm:$0xf] %v644
                  %v646 = vld [vmem:[%s518 + $0x1bc] sm:$0xf]
                  %647 = vst [vmem:[%s519 + $0xfc] sm:$0xf] %v646
                  %v648 = vld [vmem:[%s518 + $0x200] sm:$0xf]
                  %649 = vst [vmem:[%s519 + $0x100] sm:$0xf] %v648
                  %v650 = vld [vmem:[%s518 + $0x204] sm:$0xf]
                  %651 = vst [vmem:[%s519 + $0x104] sm:$0xf] %v650
                  %v652 = vld [vmem:[%s518 + $0x208] sm:$0xf]
                  %653 = vst [vmem:[%s519 + $0x108] sm:$0xf] %v652
                  %v654 = vld [vmem:[%s518 + $0x20c] sm:$0xf]
                  %655 = vst [vmem:[%s519 + $0x10c] sm:$0xf] %v654
                  %v656 = vld [vmem:[%s518 + $0x210] sm:$0xf]
                  %657 = vst [vmem:[%s519 + $0x110] sm:$0xf] %v656
                  %v658 = vld [vmem:[%s518 + $0x214] sm:$0xf]
                  %659 = vst [vmem:[%s519 + $0x114] sm:$0xf] %v658
                  %v660 = vld [vmem:[%s518 + $0x218] sm:$0xf]
                  %661 = vst [vmem:[%s519 + $0x118] sm:$0xf] %v660
                  %v662 = vld [vmem:[%s518 + $0x21c] sm:$0xf]
                  %663 = vst [vmem:[%s519 + $0x11c] sm:$0xf] %v662
                  %v664 = vld [vmem:[%s518 + $0x220] sm:$0xf]
                  %665 = vst [vmem:[%s519 + $0x120] sm:$0xf] %v664
                  %v666 = vld [vmem:[%s518 + $0x224] sm:$0xf]
                  %667 = vst [vmem:[%s519 + $0x124] sm:$0xf] %v666
                  %v668 = vld [vmem:[%s518 + $0x228] sm:$0xf]
                  %669 = vst [vmem:[%s519 + $0x128] sm:$0xf] %v668
                  %v670 = vld [vmem:[%s518 + $0x22c] sm:$0xf]
                  %671 = vst [vmem:[%s519 + $0x12c] sm:$0xf] %v670
                  %v672 = vld [vmem:[%s518 + $0x230] sm:$0xf]
                  %673 = vst [vmem:[%s519 + $0x130] sm:$0xf] %v672
                  %v674 = vld [vmem:[%s518 + $0x234] sm:$0xf]
                  %675 = vst [vmem:[%s519 + $0x134] sm:$0xf] %v674
                  %v676 = vld [vmem:[%s518 + $0x238] sm:$0xf]
                  %677 = vst [vmem:[%s519 + $0x138] sm:$0xf] %v676
                  %v678 = vld [vmem:[%s518 + $0x23c] sm:$0xf]
                  %679 = vst [vmem:[%s519 + $0x13c] sm:$0xf] %v678
                  %v680 = vld [vmem:[%s518 + $0x280] sm:$0xf]
                  %681 = vst [vmem:[%s519 + $0x140] sm:$0xf] %v680
                  %v682 = vld [vmem:[%s518 + $0x284] sm:$0xf]
                  %683 = vst [vmem:[%s519 + $0x144] sm:$0xf] %v682
                  %v684 = vld [vmem:[%s518 + $0x288] sm:$0xf]
                  %685 = vst [vmem:[%s519 + $0x148] sm:$0xf] %v684
                  %v686 = vld [vmem:[%s518 + $0x28c] sm:$0xf]
                  %687 = vst [vmem:[%s519 + $0x14c] sm:$0xf] %v686
                  %v688 = vld [vmem:[%s518 + $0x290] sm:$0xf]
                  %689 = vst [vmem:[%s519 + $0x150] sm:$0xf] %v688
                  %v690 = vld [vmem:[%s518 + $0x294] sm:$0xf]
                  %691 = vst [vmem:[%s519 + $0x154] sm:$0xf] %v690
                  %v692 = vld [vmem:[%s518 + $0x298] sm:$0xf]
                  %693 = vst [vmem:[%s519 + $0x158] sm:$0xf] %v692
                  %v694 = vld [vmem:[%s518 + $0x29c] sm:$0xf]
                  %695 = vst [vmem:[%s519 + $0x15c] sm:$0xf] %v694
                  %v696 = vld [vmem:[%s518 + $0x2a0] sm:$0xf]
                  %697 = vst [vmem:[%s519 + $0x160] sm:$0xf] %v696
                  %v698 = vld [vmem:[%s518 + $0x2a4] sm:$0xf]
                  %699 = vst [vmem:[%s519 + $0x164] sm:$0xf] %v698
                  %v700 = vld [vmem:[%s518 + $0x2a8] sm:$0xf]
                  %701 = vst [vmem:[%s519 + $0x168] sm:$0xf] %v700
                  %v702 = vld [vmem:[%s518 + $0x2ac] sm:$0xf]
                  %703 = vst [vmem:[%s519 + $0x16c] sm:$0xf] %v702
                  %v704 = vld [vmem:[%s518 + $0x2b0] sm:$0xf]
                  %705 = vst [vmem:[%s519 + $0x170] sm:$0xf] %v704
                  %v706 = vld [vmem:[%s518 + $0x2b4] sm:$0xf]
                  %707 = vst [vmem:[%s519 + $0x174] sm:$0xf] %v706
                  %v708 = vld [vmem:[%s518 + $0x2b8] sm:$0xf]
                  %709 = vst [vmem:[%s519 + $0x178] sm:$0xf] %v708
                  %v710 = vld [vmem:[%s518 + $0x2bc] sm:$0xf]
                  %711 = vst [vmem:[%s519 + $0x17c] sm:$0xf] %v710
                  %v712 = vld [vmem:[%s518 + $0x300] sm:$0xf]
                  %713 = vst [vmem:[%s519 + $0x180] sm:$0xf] %v712
                  %v714 = vld [vmem:[%s518 + $0x304] sm:$0xf]
                  %715 = vst [vmem:[%s519 + $0x184] sm:$0xf] %v714
                  %v716 = vld [vmem:[%s518 + $0x308] sm:$0xf]
                  %717 = vst [vmem:[%s519 + $0x188] sm:$0xf] %v716
                  %v718 = vld [vmem:[%s518 + $0x30c] sm:$0xf]
                  %719 = vst [vmem:[%s519 + $0x18c] sm:$0xf] %v718
                  %v720 = vld [vmem:[%s518 + $0x310] sm:$0xf]
                  %721 = vst [vmem:[%s519 + $0x190] sm:$0xf] %v720
                  %v722 = vld [vmem:[%s518 + $0x314] sm:$0xf]
                  %723 = vst [vmem:[%s519 + $0x194] sm:$0xf] %v722
                  %v724 = vld [vmem:[%s518 + $0x318] sm:$0xf]
                  %725 = vst [vmem:[%s519 + $0x198] sm:$0xf] %v724
                  %v726 = vld [vmem:[%s518 + $0x31c] sm:$0xf]
                  %727 = vst [vmem:[%s519 + $0x19c] sm:$0xf] %v726
                  %v728 = vld [vmem:[%s518 + $0x320] sm:$0xf]
                  %729 = vst [vmem:[%s519 + $0x1a0] sm:$0xf] %v728
                  %v730 = vld [vmem:[%s518 + $0x324] sm:$0xf]
                  %731 = vst [vmem:[%s519 + $0x1a4] sm:$0xf] %v730
                  %v732 = vld [vmem:[%s518 + $0x328] sm:$0xf]
                  %733 = vst [vmem:[%s519 + $0x1a8] sm:$0xf] %v732
                  %v734 = vld [vmem:[%s518 + $0x32c] sm:$0xf]
                  %735 = vst [vmem:[%s519 + $0x1ac] sm:$0xf] %v734
                  %v736 = vld [vmem:[%s518 + $0x330] sm:$0xf]
                  %737 = vst [vmem:[%s519 + $0x1b0] sm:$0xf] %v736
                  %v738 = vld [vmem:[%s518 + $0x334] sm:$0xf]
                  %739 = vst [vmem:[%s519 + $0x1b4] sm:$0xf] %v738
                  %v740 = vld [vmem:[%s518 + $0x338] sm:$0xf]
                  %741 = vst [vmem:[%s519 + $0x1b8] sm:$0xf] %v740
                  %v742 = vld [vmem:[%s518 + $0x33c] sm:$0xf]
                  %743 = vst [vmem:[%s519 + $0x1bc] sm:$0xf] %v742
                  %v744 = vld [vmem:[%s518 + $0x380] sm:$0xf]
                  %745 = vst [vmem:[%s519 + $0x1c0] sm:$0xf] %v744
                  %v746 = vld [vmem:[%s518 + $0x384] sm:$0xf]
                  %747 = vst [vmem:[%s519 + $0x1c4] sm:$0xf] %v746
                  %v748 = vld [vmem:[%s518 + $0x388] sm:$0xf]
                  %749 = vst [vmem:[%s519 + $0x1c8] sm:$0xf] %v748
                  %v750 = vld [vmem:[%s518 + $0x38c] sm:$0xf]
                  %751 = vst [vmem:[%s519 + $0x1cc] sm:$0xf] %v750
                  %v752 = vld [vmem:[%s518 + $0x390] sm:$0xf]
                  %753 = vst [vmem:[%s519 + $0x1d0] sm:$0xf] %v752
                  %v754 = vld [vmem:[%s518 + $0x394] sm:$0xf]
                  %755 = vst [vmem:[%s519 + $0x1d4] sm:$0xf] %v754
                  %v756 = vld [vmem:[%s518 + $0x398] sm:$0xf]
                  %757 = vst [vmem:[%s519 + $0x1d8] sm:$0xf] %v756
                  %v758 = vld [vmem:[%s518 + $0x39c] sm:$0xf]
                  %759 = vst [vmem:[%s519 + $0x1dc] sm:$0xf] %v758
                  %v760 = vld [vmem:[%s518 + $0x3a0] sm:$0xf]
                  %761 = vst [vmem:[%s519 + $0x1e0] sm:$0xf] %v760
                  %v762 = vld [vmem:[%s518 + $0x3a4] sm:$0xf]
                  %763 = vst [vmem:[%s519 + $0x1e4] sm:$0xf] %v762
                  %v764 = vld [vmem:[%s518 + $0x3a8] sm:$0xf]
                  %765 = vst [vmem:[%s519 + $0x1e8] sm:$0xf] %v764
                  %v766 = vld [vmem:[%s518 + $0x3ac] sm:$0xf]
                  %767 = vst [vmem:[%s519 + $0x1ec] sm:$0xf] %v766
                  %v768 = vld [vmem:[%s518 + $0x3b0] sm:$0xf]
                  %769 = vst [vmem:[%s519 + $0x1f0] sm:$0xf] %v768
                  %v770 = vld [vmem:[%s518 + $0x3b4] sm:$0xf]
                  %771 = vst [vmem:[%s519 + $0x1f4] sm:$0xf] %v770
                  %v772 = vld [vmem:[%s518 + $0x3b8] sm:$0xf]
                  %773 = vst [vmem:[%s519 + $0x1f8] sm:$0xf] %v772
                  %v774 = vld [vmem:[%s518 + $0x3bc] sm:$0xf]
                  %775 = vst [vmem:[%s519 + $0x1fc] sm:$0xf] %v774
                $region75: #{network_forward.1} parent=62 // loop_footer
                  %s517 = sadd.s32 1, %s513
                $region76: #{network_forward.1} parent=62 // loop_footer_branch
                  %512 = sbr.rel target = $region72
                $region77: #{network_forward.1} parent=62 // loop_exit
                  _
              $region63: #{network_forward.1} parent=47 // pred_fallthru
                _
            $region48: #{network_forward.1} parent=43 // pred_fallthru
              _
            // Predicated region
            $region49: #{network_forward.1} parent=43 // pred_check
              _
            $region50: #{network_forward.1} parent=43 // pred_check_branch
              %235 = sbr.rel (0) target = $region52
            $region51: #{network_forward.1} parent=43 // pred_region
              loop: start=0, step=1, limit=1
              $region53: #{network_forward.1} parent=51 // loop_pre_header
                _
              $region54: #{network_forward.1} parent=51 // loop_header
                %s238 = sphi 0, %s242
                %p239 = scmp.ge.s32.totalorder %s238, 1
                %s243 = sphi %s229, %s229
                %s244 = sphi %s223, %s223
              $region55: #{network_forward.1} parent=51 // loop_header_branch
                %241 = sbr.rel (%p239) target = $region59
              $region56: #{network_forward.1} parent=51 // loop_body
                %v245 = vld [vmem:[%s243] sm:$0xf]
                %246 = vst [vmem:[%s244] sm:$0xf] %v245
                %v247 = vld [vmem:[%s243 + $0x4] sm:$0xf]
                %248 = vst [vmem:[%s244 + $0x4] sm:$0xf] %v247
                %v249 = vld [vmem:[%s243 + $0x8] sm:$0xf]
                %250 = vst [vmem:[%s244 + $0x8] sm:$0xf] %v249
                %v251 = vld [vmem:[%s243 + $0xc] sm:$0xf]
                %252 = vst [vmem:[%s244 + $0xc] sm:$0xf] %v251
                %v253 = vld [vmem:[%s243 + $0x10] sm:$0xf]
                %254 = vst [vmem:[%s244 + $0x10] sm:$0xf] %v253
                %v255 = vld [vmem:[%s243 + $0x14] sm:$0xf]
                %256 = vst [vmem:[%s244 + $0x14] sm:$0xf] %v255
                %v257 = vld [vmem:[%s243 + $0x18] sm:$0xf]
                %258 = vst [vmem:[%s244 + $0x18] sm:$0xf] %v257
                %v259 = vld [vmem:[%s243 + $0x1c] sm:$0xf]
                %260 = vst [vmem:[%s244 + $0x1c] sm:$0xf] %v259
                %v261 = vld [vmem:[%s243 + $0x20] sm:$0xf]
                %262 = vst [vmem:[%s244 + $0x20] sm:$0xf] %v261
                %v263 = vld [vmem:[%s243 + $0x24] sm:$0xf]
                %264 = vst [vmem:[%s244 + $0x24] sm:$0xf] %v263
                %v265 = vld [vmem:[%s243 + $0x28] sm:$0xf]
                %266 = vst [vmem:[%s244 + $0x28] sm:$0xf] %v265
                %v267 = vld [vmem:[%s243 + $0x2c] sm:$0xf]
                %268 = vst [vmem:[%s244 + $0x2c] sm:$0xf] %v267
                %v269 = vld [vmem:[%s243 + $0x30] sm:$0xf]
                %270 = vst [vmem:[%s244 + $0x30] sm:$0xf] %v269
                %v271 = vld [vmem:[%s243 + $0x34] sm:$0xf]
                %272 = vst [vmem:[%s244 + $0x34] sm:$0xf] %v271
                %v273 = vld [vmem:[%s243 + $0x38] sm:$0xf]
                %274 = vst [vmem:[%s244 + $0x38] sm:$0xf] %v273
                %v275 = vld [vmem:[%s243 + $0x3c] sm:$0xf]
                %276 = vst [vmem:[%s244 + $0x3c] sm:$0xf] %v275
                %v277 = vld [vmem:[%s243 + $0x80] sm:$0xf]
                %278 = vst [vmem:[%s244 + $0x40] sm:$0xf] %v277
                %v279 = vld [vmem:[%s243 + $0x84] sm:$0xf]
                %280 = vst [vmem:[%s244 + $0x44] sm:$0xf] %v279
                %v281 = vld [vmem:[%s243 + $0x88] sm:$0xf]
                %282 = vst [vmem:[%s244 + $0x48] sm:$0xf] %v281
                %v283 = vld [vmem:[%s243 + $0x8c] sm:$0xf]
                %284 = vst [vmem:[%s244 + $0x4c] sm:$0xf] %v283
                %v285 = vld [vmem:[%s243 + $0x90] sm:$0xf]
                %286 = vst [vmem:[%s244 + $0x50] sm:$0xf] %v285
                %v287 = vld [vmem:[%s243 + $0x94] sm:$0xf]
                %288 = vst [vmem:[%s244 + $0x54] sm:$0xf] %v287
                %v289 = vld [vmem:[%s243 + $0x98] sm:$0xf]
                %290 = vst [vmem:[%s244 + $0x58] sm:$0xf] %v289
                %v291 = vld [vmem:[%s243 + $0x9c] sm:$0xf]
                %292 = vst [vmem:[%s244 + $0x5c] sm:$0xf] %v291
                %v293 = vld [vmem:[%s243 + $0xa0] sm:$0xf]
                %294 = vst [vmem:[%s244 + $0x60] sm:$0xf] %v293
                %v295 = vld [vmem:[%s243 + $0xa4] sm:$0xf]
                %296 = vst [vmem:[%s244 + $0x64] sm:$0xf] %v295
                %v297 = vld [vmem:[%s243 + $0xa8] sm:$0xf]
                %298 = vst [vmem:[%s244 + $0x68] sm:$0xf] %v297
                %v299 = vld [vmem:[%s243 + $0xac] sm:$0xf]
                %300 = vst [vmem:[%s244 + $0x6c] sm:$0xf] %v299
                %v301 = vld [vmem:[%s243 + $0xb0] sm:$0xf]
                %302 = vst [vmem:[%s244 + $0x70] sm:$0xf] %v301
                %v303 = vld [vmem:[%s243 + $0xb4] sm:$0xf]
                %304 = vst [vmem:[%s244 + $0x74] sm:$0xf] %v303
                %v305 = vld [vmem:[%s243 + $0xb8] sm:$0xf]
                %306 = vst [vmem:[%s244 + $0x78] sm:$0xf] %v305
                %v307 = vld [vmem:[%s243 + $0xbc] sm:$0xf]
                %308 = vst [vmem:[%s244 + $0x7c] sm:$0xf] %v307
                %v309 = vld [vmem:[%s243 + $0x100] sm:$0xf]
                %310 = vst [vmem:[%s244 + $0x80] sm:$0xf] %v309
                %v311 = vld [vmem:[%s243 + $0x104] sm:$0xf]
                %312 = vst [vmem:[%s244 + $0x84] sm:$0xf] %v311
                %v313 = vld [vmem:[%s243 + $0x108] sm:$0xf]
                %314 = vst [vmem:[%s244 + $0x88] sm:$0xf] %v313
                %v315 = vld [vmem:[%s243 + $0x10c] sm:$0xf]
                %316 = vst [vmem:[%s244 + $0x8c] sm:$0xf] %v315
                %v317 = vld [vmem:[%s243 + $0x110] sm:$0xf]
                %318 = vst [vmem:[%s244 + $0x90] sm:$0xf] %v317
                %v319 = vld [vmem:[%s243 + $0x114] sm:$0xf]
                %320 = vst [vmem:[%s244 + $0x94] sm:$0xf] %v319
                %v321 = vld [vmem:[%s243 + $0x118] sm:$0xf]
                %322 = vst [vmem:[%s244 + $0x98] sm:$0xf] %v321
                %v323 = vld [vmem:[%s243 + $0x11c] sm:$0xf]
                %324 = vst [vmem:[%s244 + $0x9c] sm:$0xf] %v323
                %v325 = vld [vmem:[%s243 + $0x120] sm:$0xf]
                %326 = vst [vmem:[%s244 + $0xa0] sm:$0xf] %v325
                %v327 = vld [vmem:[%s243 + $0x124] sm:$0xf]
                %328 = vst [vmem:[%s244 + $0xa4] sm:$0xf] %v327
                %v329 = vld [vmem:[%s243 + $0x128] sm:$0xf]
                %330 = vst [vmem:[%s244 + $0xa8] sm:$0xf] %v329
                %v331 = vld [vmem:[%s243 + $0x12c] sm:$0xf]
                %332 = vst [vmem:[%s244 + $0xac] sm:$0xf] %v331
                %v333 = vld [vmem:[%s243 + $0x130] sm:$0xf]
                %334 = vst [vmem:[%s244 + $0xb0] sm:$0xf] %v333
                %v335 = vld [vmem:[%s243 + $0x134] sm:$0xf]
                %336 = vst [vmem:[%s244 + $0xb4] sm:$0xf] %v335
                %v337 = vld [vmem:[%s243 + $0x138] sm:$0xf]
                %338 = vst [vmem:[%s244 + $0xb8] sm:$0xf] %v337
                %v339 = vld [vmem:[%s243 + $0x13c] sm:$0xf]
                %340 = vst [vmem:[%s244 + $0xbc] sm:$0xf] %v339
                %v341 = vld [vmem:[%s243 + $0x180] sm:$0xf]
                %342 = vst [vmem:[%s244 + $0xc0] sm:$0xf] %v341
                %v343 = vld [vmem:[%s243 + $0x184] sm:$0xf]
                %344 = vst [vmem:[%s244 + $0xc4] sm:$0xf] %v343
                %v345 = vld [vmem:[%s243 + $0x188] sm:$0xf]
                %346 = vst [vmem:[%s244 + $0xc8] sm:$0xf] %v345
                %v347 = vld [vmem:[%s243 + $0x18c] sm:$0xf]
                %348 = vst [vmem:[%s244 + $0xcc] sm:$0xf] %v347
                %v349 = vld [vmem:[%s243 + $0x190] sm:$0xf]
                %350 = vst [vmem:[%s244 + $0xd0] sm:$0xf] %v349
                %v351 = vld [vmem:[%s243 + $0x194] sm:$0xf]
                %352 = vst [vmem:[%s244 + $0xd4] sm:$0xf] %v351
                %v353 = vld [vmem:[%s243 + $0x198] sm:$0xf]
                %354 = vst [vmem:[%s244 + $0xd8] sm:$0xf] %v353
                %v355 = vld [vmem:[%s243 + $0x19c] sm:$0xf]
                %356 = vst [vmem:[%s244 + $0xdc] sm:$0xf] %v355
                %v357 = vld [vmem:[%s243 + $0x1a0] sm:$0xf]
                %358 = vst [vmem:[%s244 + $0xe0] sm:$0xf] %v357
                %v359 = vld [vmem:[%s243 + $0x1a4] sm:$0xf]
                %360 = vst [vmem:[%s244 + $0xe4] sm:$0xf] %v359
                %v361 = vld [vmem:[%s243 + $0x1a8] sm:$0xf]
                %362 = vst [vmem:[%s244 + $0xe8] sm:$0xf] %v361
                %v363 = vld [vmem:[%s243 + $0x1ac] sm:$0xf]
                %364 = vst [vmem:[%s244 + $0xec] sm:$0xf] %v363
                %v365 = vld [vmem:[%s243 + $0x1b0] sm:$0xf]
                %366 = vst [vmem:[%s244 + $0xf0] sm:$0xf] %v365
                %v367 = vld [vmem:[%s243 + $0x1b4] sm:$0xf]
                %368 = vst [vmem:[%s244 + $0xf4] sm:$0xf] %v367
                %v369 = vld [vmem:[%s243 + $0x1b8] sm:$0xf]
                %370 = vst [vmem:[%s244 + $0xf8] sm:$0xf] %v369
                %v371 = vld [vmem:[%s243 + $0x1bc] sm:$0xf]
                %372 = vst [vmem:[%s244 + $0xfc] sm:$0xf] %v371
                %v373 = vld [vmem:[%s243 + $0x200] sm:$0xf]
                %374 = vst [vmem:[%s244 + $0x100] sm:$0xf] %v373
                %v375 = vld [vmem:[%s243 + $0x204] sm:$0xf]
                %376 = vst [vmem:[%s244 + $0x104] sm:$0xf] %v375
                %v377 = vld [vmem:[%s243 + $0x208] sm:$0xf]
                %378 = vst [vmem:[%s244 + $0x108] sm:$0xf] %v377
                %v379 = vld [vmem:[%s243 + $0x20c] sm:$0xf]
                %380 = vst [vmem:[%s244 + $0x10c] sm:$0xf] %v379
                %v381 = vld [vmem:[%s243 + $0x210] sm:$0xf]
                %382 = vst [vmem:[%s244 + $0x110] sm:$0xf] %v381
                %v383 = vld [vmem:[%s243 + $0x214] sm:$0xf]
                %384 = vst [vmem:[%s244 + $0x114] sm:$0xf] %v383
                %v385 = vld [vmem:[%s243 + $0x218] sm:$0xf]
                %386 = vst [vmem:[%s244 + $0x118] sm:$0xf] %v385
                %v387 = vld [vmem:[%s243 + $0x21c] sm:$0xf]
                %388 = vst [vmem:[%s244 + $0x11c] sm:$0xf] %v387
                %v389 = vld [vmem:[%s243 + $0x220] sm:$0xf]
                %390 = vst [vmem:[%s244 + $0x120] sm:$0xf] %v389
                %v391 = vld [vmem:[%s243 + $0x224] sm:$0xf]
                %392 = vst [vmem:[%s244 + $0x124] sm:$0xf] %v391
                %v393 = vld [vmem:[%s243 + $0x228] sm:$0xf]
                %394 = vst [vmem:[%s244 + $0x128] sm:$0xf] %v393
                %v395 = vld [vmem:[%s243 + $0x22c] sm:$0xf]
                %396 = vst [vmem:[%s244 + $0x12c] sm:$0xf] %v395
                %v397 = vld [vmem:[%s243 + $0x230] sm:$0xf]
                %398 = vst [vmem:[%s244 + $0x130] sm:$0xf] %v397
                %v399 = vld [vmem:[%s243 + $0x234] sm:$0xf]
                %400 = vst [vmem:[%s244 + $0x134] sm:$0xf] %v399
                %v401 = vld [vmem:[%s243 + $0x238] sm:$0xf]
                %402 = vst [vmem:[%s244 + $0x138] sm:$0xf] %v401
                %v403 = vld [vmem:[%s243 + $0x23c] sm:$0xf]
                %404 = vst [vmem:[%s244 + $0x13c] sm:$0xf] %v403
                %v405 = vld [vmem:[%s243 + $0x280] sm:$0xf]
                %406 = vst [vmem:[%s244 + $0x140] sm:$0xf] %v405
                %v407 = vld [vmem:[%s243 + $0x284] sm:$0xf]
                %408 = vst [vmem:[%s244 + $0x144] sm:$0xf] %v407
                %v409 = vld [vmem:[%s243 + $0x288] sm:$0xf]
                %410 = vst [vmem:[%s244 + $0x148] sm:$0xf] %v409
                %v411 = vld [vmem:[%s243 + $0x28c] sm:$0xf]
                %412 = vst [vmem:[%s244 + $0x14c] sm:$0xf] %v411
                %v413 = vld [vmem:[%s243 + $0x290] sm:$0xf]
                %414 = vst [vmem:[%s244 + $0x150] sm:$0xf] %v413
                %v415 = vld [vmem:[%s243 + $0x294] sm:$0xf]
                %416 = vst [vmem:[%s244 + $0x154] sm:$0xf] %v415
                %v417 = vld [vmem:[%s243 + $0x298] sm:$0xf]
                %418 = vst [vmem:[%s244 + $0x158] sm:$0xf] %v417
                %v419 = vld [vmem:[%s243 + $0x29c] sm:$0xf]
                %420 = vst [vmem:[%s244 + $0x15c] sm:$0xf] %v419
                %v421 = vld [vmem:[%s243 + $0x2a0] sm:$0xf]
                %422 = vst [vmem:[%s244 + $0x160] sm:$0xf] %v421
                %v423 = vld [vmem:[%s243 + $0x2a4] sm:$0xf]
                %424 = vst [vmem:[%s244 + $0x164] sm:$0xf] %v423
                %v425 = vld [vmem:[%s243 + $0x2a8] sm:$0xf]
                %426 = vst [vmem:[%s244 + $0x168] sm:$0xf] %v425
                %v427 = vld [vmem:[%s243 + $0x2ac] sm:$0xf]
                %428 = vst [vmem:[%s244 + $0x16c] sm:$0xf] %v427
                %v429 = vld [vmem:[%s243 + $0x2b0] sm:$0xf]
                %430 = vst [vmem:[%s244 + $0x170] sm:$0xf] %v429
                %v431 = vld [vmem:[%s243 + $0x2b4] sm:$0xf]
                %432 = vst [vmem:[%s244 + $0x174] sm:$0xf] %v431
                %v433 = vld [vmem:[%s243 + $0x2b8] sm:$0xf]
                %434 = vst [vmem:[%s244 + $0x178] sm:$0xf] %v433
                %v435 = vld [vmem:[%s243 + $0x2bc] sm:$0xf]
                %436 = vst [vmem:[%s244 + $0x17c] sm:$0xf] %v435
                %v437 = vld [vmem:[%s243 + $0x300] sm:$0xf]
                %438 = vst [vmem:[%s244 + $0x180] sm:$0xf] %v437
                %v439 = vld [vmem:[%s243 + $0x304] sm:$0xf]
                %440 = vst [vmem:[%s244 + $0x184] sm:$0xf] %v439
                %v441 = vld [vmem:[%s243 + $0x308] sm:$0xf]
                %442 = vst [vmem:[%s244 + $0x188] sm:$0xf] %v441
                %v443 = vld [vmem:[%s243 + $0x30c] sm:$0xf]
                %444 = vst [vmem:[%s244 + $0x18c] sm:$0xf] %v443
                %v445 = vld [vmem:[%s243 + $0x310] sm:$0xf]
                %446 = vst [vmem:[%s244 + $0x190] sm:$0xf] %v445
                %v447 = vld [vmem:[%s243 + $0x314] sm:$0xf]
                %448 = vst [vmem:[%s244 + $0x194] sm:$0xf] %v447
                %v449 = vld [vmem:[%s243 + $0x318] sm:$0xf]
                %450 = vst [vmem:[%s244 + $0x198] sm:$0xf] %v449
                %v451 = vld [vmem:[%s243 + $0x31c] sm:$0xf]
                %452 = vst [vmem:[%s244 + $0x19c] sm:$0xf] %v451
                %v453 = vld [vmem:[%s243 + $0x320] sm:$0xf]
                %454 = vst [vmem:[%s244 + $0x1a0] sm:$0xf] %v453
                %v455 = vld [vmem:[%s243 + $0x324] sm:$0xf]
                %456 = vst [vmem:[%s244 + $0x1a4] sm:$0xf] %v455
                %v457 = vld [vmem:[%s243 + $0x328] sm:$0xf]
                %458 = vst [vmem:[%s244 + $0x1a8] sm:$0xf] %v457
                %v459 = vld [vmem:[%s243 + $0x32c] sm:$0xf]
                %460 = vst [vmem:[%s244 + $0x1ac] sm:$0xf] %v459
                %v461 = vld [vmem:[%s243 + $0x330] sm:$0xf]
                %462 = vst [vmem:[%s244 + $0x1b0] sm:$0xf] %v461
                %v463 = vld [vmem:[%s243 + $0x334] sm:$0xf]
                %464 = vst [vmem:[%s244 + $0x1b4] sm:$0xf] %v463
                %v465 = vld [vmem:[%s243 + $0x338] sm:$0xf]
                %466 = vst [vmem:[%s244 + $0x1b8] sm:$0xf] %v465
                %v467 = vld [vmem:[%s243 + $0x33c] sm:$0xf]
                %468 = vst [vmem:[%s244 + $0x1bc] sm:$0xf] %v467
                %v469 = vld [vmem:[%s243 + $0x380] sm:$0xf]
                %470 = vst [vmem:[%s244 + $0x1c0] sm:$0xf] %v469
                %v471 = vld [vmem:[%s243 + $0x384] sm:$0xf]
                %472 = vst [vmem:[%s244 + $0x1c4] sm:$0xf] %v471
                %v473 = vld [vmem:[%s243 + $0x388] sm:$0xf]
                %474 = vst [vmem:[%s244 + $0x1c8] sm:$0xf] %v473
                %v475 = vld [vmem:[%s243 + $0x38c] sm:$0xf]
                %476 = vst [vmem:[%s244 + $0x1cc] sm:$0xf] %v475
                %v477 = vld [vmem:[%s243 + $0x390] sm:$0xf]
                %478 = vst [vmem:[%s244 + $0x1d0] sm:$0xf] %v477
                %v479 = vld [vmem:[%s243 + $0x394] sm:$0xf]
                %480 = vst [vmem:[%s244 + $0x1d4] sm:$0xf] %v479
                %v481 = vld [vmem:[%s243 + $0x398] sm:$0xf]
                %482 = vst [vmem:[%s244 + $0x1d8] sm:$0xf] %v481
                %v483 = vld [vmem:[%s243 + $0x39c] sm:$0xf]
                %484 = vst [vmem:[%s244 + $0x1dc] sm:$0xf] %v483
                %v485 = vld [vmem:[%s243 + $0x3a0] sm:$0xf]
                %486 = vst [vmem:[%s244 + $0x1e0] sm:$0xf] %v485
                %v487 = vld [vmem:[%s243 + $0x3a4] sm:$0xf]
                %488 = vst [vmem:[%s244 + $0x1e4] sm:$0xf] %v487
                %v489 = vld [vmem:[%s243 + $0x3a8] sm:$0xf]
                %490 = vst [vmem:[%s244 + $0x1e8] sm:$0xf] %v489
                %v491 = vld [vmem:[%s243 + $0x3ac] sm:$0xf]
                %492 = vst [vmem:[%s244 + $0x1ec] sm:$0xf] %v491
                %v493 = vld [vmem:[%s243 + $0x3b0] sm:$0xf]
                %494 = vst [vmem:[%s244 + $0x1f0] sm:$0xf] %v493
                %v495 = vld [vmem:[%s243 + $0x3b4] sm:$0xf]
                %496 = vst [vmem:[%s244 + $0x1f4] sm:$0xf] %v495
                %v497 = vld [vmem:[%s243 + $0x3b8] sm:$0xf]
                %498 = vst [vmem:[%s244 + $0x1f8] sm:$0xf] %v497
                %v499 = vld [vmem:[%s243 + $0x3bc] sm:$0xf]
                %500 = vst [vmem:[%s244 + $0x1fc] sm:$0xf] %v499
              $region57: #{network_forward.1} parent=51 // loop_footer
                %s242 = sadd.s32 1, %s238
              $region58: #{network_forward.1} parent=51 // loop_footer_branch
                %237 = sbr.rel target = $region54
              $region59: #{network_forward.1} parent=51 // loop_exit
                _
            $region52: #{network_forward.1} parent=43 // pred_fallthru
              _
          $region44: #{network_forward.1} parent=39 // pred_fallthru
            _
          %776 = vnop
        $region40: #{network_forward.1} parent=35 // pred_fallthru
          _
      $region36: #{network_forward.1} parent=5 // pred_fallthru
        _
      %p777 = scmp.le.s32.totalorder 1, %s12
      %p778 = scmp.lt.s32.totalorder %s12, 3
      %p779 = pnand %p777, %p778
      %p780 = pneg %p779
      // Predicated region
      $region78: #{network_forward.1} parent=5 // pred_check
        _
      $region79: #{network_forward.1} parent=5 // pred_check_branch
        %782 = sbr.rel (%p779) target = $region81
      $region80: #{network_forward.1} parent=5 // pred_region
        %s783 = ssub.s32 %s12, 1
        %s784 = sand.u32 %s39, 1
        %s785 = sand.u32 %s39, 1
        %s786 = smul.addr %s785, 512
        %s787 = scalar_lea.vmem [#allocation3], %s786
        // Predicated region
        $region82: #{network_forward.1} parent=80 // pred_check
          %p788 = pneg %p52
        $region83: #{network_forward.1} parent=80 // pred_check_branch
          %790 = sbr.rel (%p788) target = $region85
        $region84: #{network_forward.1} parent=80 // pred_region
          _
        $region85: #{network_forward.1} parent=80 // pred_fallthru
          _
        %s791 = sand.u32 %s39, 1
        %s792 = sand.u32 %s39, 1
        %s793 = smul.addr %s792, 512
        %s794 = scalar_lea.vmem [#allocation3], %s793
        %p795 = pneg %p52
        %p796 = pneg %p49
        %p797 = pneg %p73
        %p798 = pneg %p70
        %p799 = pneg %p94
        %p800 = pneg %p91
        %p801 = pneg %p115
        %p802 = pneg %p112
        %p803 = pneg %p136
        %p804 = pneg %p133
        %p805 = pneg %p157
        %p806 = pneg %p154
        %p807 = pneg %p183
        %p808 = pneg %p180
        %p809 = scmp.lt.s32.totalorder %s21, 0
        %s810 = scalar_select %p809, %s21, 0
        %s811 = smul.addr %s810, 8
        %s812 = scalar_lea.vmem %s6, %s811
        %s813 = smul.u32 8, %s21
        %s814 = smul.u32 16, %s22
        %p815 = scmp.lt.s32.totalorder %s21, 0
        %s816 = scalar_select %p815, %s21, 0
        %s817 = smul.addr %s816, 8
        %s818 = scalar_lea.vmem %s6, %s817
        %p820 = scmp.eq.s32.totalorder %s22, 0
        // Predicated region
        $region86: #{network_forward.1} parent=80 // pred_check
          %p821 = pneg %p820
        $region87: #{network_forward.1} parent=80 // pred_check_branch
          %823 = sbr.rel (%p821) target = $region89
        $region88: #{network_forward.1} parent=80 // pred_region
          %824 = vst [vmem:[#allocation2] sm:$0xff] 0.0
          %825 = vst [vmem:[#allocation2 + $0x8] sm:$0xff] 0.0
          %826 = vst [vmem:[#allocation2 + $0x10] sm:$0xff] 0.0
          %827 = vst [vmem:[#allocation2 + $0x18] sm:$0xff] 0.0
          %828 = vst [vmem:[#allocation2 + $0x20] sm:$0xff] 0.0
          %829 = vst [vmem:[#allocation2 + $0x28] sm:$0xff] 0.0
          %830 = vst [vmem:[#allocation2 + $0x30] sm:$0xff] 0.0
          %831 = vst [vmem:[#allocation2 + $0x38] sm:$0xff] 0.0
        $region89: #{network_forward.1} parent=80 // pred_fallthru
          _
        %v832 = vld [vmem:[%s787] sm:$0xf]
        %v833 = vld [vmem:[%s787 + $0x4] sm:$0xf]
        %v834 = vld [vmem:[%s787 + $0x8] sm:$0xf]
        %v835 = vld [vmem:[%s787 + $0xc] sm:$0xf]
        %v836 = vld [vmem:[%s787 + $0x10] sm:$0xf]
        %v837 = vld [vmem:[%s787 + $0x14] sm:$0xf]
        %v838 = vld [vmem:[%s787 + $0x18] sm:$0xf]
        %v839 = vld [vmem:[%s787 + $0x1c] sm:$0xf]
        %v840 = vld [vmem:[%s787 + $0x20] sm:$0xf]
        %v841 = vld [vmem:[%s787 + $0x24] sm:$0xf]
        %v842 = vld [vmem:[%s787 + $0x28] sm:$0xf]
        %v843 = vld [vmem:[%s787 + $0x2c] sm:$0xf]
        %v844 = vld [vmem:[%s787 + $0x30] sm:$0xf]
        %v845 = vld [vmem:[%s787 + $0x34] sm:$0xf]
        %v846 = vld [vmem:[%s787 + $0x38] sm:$0xf]
        %v847 = vld [vmem:[%s787 + $0x3c] sm:$0xf]
        %v848 = vld [vmem:[%s787 + $0x40] sm:$0xf]
        %v849 = vld [vmem:[%s787 + $0x44] sm:$0xf]
        %v850 = vld [vmem:[%s787 + $0x48] sm:$0xf]
        %v851 = vld [vmem:[%s787 + $0x4c] sm:$0xf]
        %v852 = vld [vmem:[%s787 + $0x50] sm:$0xf]
        %v853 = vld [vmem:[%s787 + $0x54] sm:$0xf]
        %v854 = vld [vmem:[%s787 + $0x58] sm:$0xf]
        %v855 = vld [vmem:[%s787 + $0x5c] sm:$0xf]
        %v856 = vld [vmem:[%s787 + $0x60] sm:$0xf]
        %v857 = vld [vmem:[%s787 + $0x64] sm:$0xf]
        %v858 = vld [vmem:[%s787 + $0x68] sm:$0xf]
        %v859 = vld [vmem:[%s787 + $0x6c] sm:$0xf]
        %v860 = vld [vmem:[%s787 + $0x70] sm:$0xf]
        %v861 = vld [vmem:[%s787 + $0x74] sm:$0xf]
        %v862 = vld [vmem:[%s787 + $0x78] sm:$0xf]
        %v863 = vld [vmem:[%s787 + $0x7c] sm:$0xf]
        %v864 = vld [vmem:[%s787 + $0x80] sm:$0xf]
        %v865 = vld [vmem:[%s787 + $0x84] sm:$0xf]
        %v866 = vld [vmem:[%s787 + $0x88] sm:$0xf]
        %v867 = vld [vmem:[%s787 + $0x8c] sm:$0xf]
        %v868 = vld [vmem:[%s787 + $0x90] sm:$0xf]
        %v869 = vld [vmem:[%s787 + $0x94] sm:$0xf]
        %v870 = vld [vmem:[%s787 + $0x98] sm:$0xf]
        %v871 = vld [vmem:[%s787 + $0x9c] sm:$0xf]
        %v872 = vld [vmem:[%s787 + $0xa0] sm:$0xf]
        %v873 = vld [vmem:[%s787 + $0xa4] sm:$0xf]
        %v874 = vld [vmem:[%s787 + $0xa8] sm:$0xf]
        %v875 = vld [vmem:[%s787 + $0xac] sm:$0xf]
        %v876 = vld [vmem:[%s787 + $0xb0] sm:$0xf]
        %v877 = vld [vmem:[%s787 + $0xb4] sm:$0xf]
        %v878 = vld [vmem:[%s787 + $0xb8] sm:$0xf]
        %v879 = vld [vmem:[%s787 + $0xbc] sm:$0xf]
        %v880 = vld [vmem:[%s787 + $0xc0] sm:$0xf]
        %v881 = vld [vmem:[%s787 + $0xc4] sm:$0xf]
        %v882 = vld [vmem:[%s787 + $0xc8] sm:$0xf]
        %v883 = vld [vmem:[%s787 + $0xcc] sm:$0xf]
        %v884 = vld [vmem:[%s787 + $0xd0] sm:$0xf]
        %v885 = vld [vmem:[%s787 + $0xd4] sm:$0xf]
        %v886 = vld [vmem:[%s787 + $0xd8] sm:$0xf]
        %v887 = vld [vmem:[%s787 + $0xdc] sm:$0xf]
        %v888 = vld [vmem:[%s787 + $0xe0] sm:$0xf]
        %v889 = vld [vmem:[%s787 + $0xe4] sm:$0xf]
        %v890 = vld [vmem:[%s787 + $0xe8] sm:$0xf]
        %v891 = vld [vmem:[%s787 + $0xec] sm:$0xf]
        %v892 = vld [vmem:[%s787 + $0xf0] sm:$0xf]
        %v893 = vld [vmem:[%s787 + $0xf4] sm:$0xf]
        %v894 = vld [vmem:[%s787 + $0xf8] sm:$0xf]
        %v895 = vld [vmem:[%s787 + $0xfc] sm:$0xf]
        %v896 = vld [vmem:[%s787 + $0x100] sm:$0xf]
        %v897 = vld [vmem:[%s787 + $0x104] sm:$0xf]
        %v898 = vld [vmem:[%s787 + $0x108] sm:$0xf]
        %v899 = vld [vmem:[%s787 + $0x10c] sm:$0xf]
        %v900 = vld [vmem:[%s787 + $0x110] sm:$0xf]
        %v901 = vld [vmem:[%s787 + $0x114] sm:$0xf]
        %v902 = vld [vmem:[%s787 + $0x118] sm:$0xf]
        %v903 = vld [vmem:[%s787 + $0x11c] sm:$0xf]
        %v904 = vld [vmem:[%s787 + $0x120] sm:$0xf]
        %v905 = vld [vmem:[%s787 + $0x124] sm:$0xf]
        %v906 = vld [vmem:[%s787 + $0x128] sm:$0xf]
        %v907 = vld [vmem:[%s787 + $0x12c] sm:$0xf]
        %v908 = vld [vmem:[%s787 + $0x130] sm:$0xf]
        %v909 = vld [vmem:[%s787 + $0x134] sm:$0xf]
        %v910 = vld [vmem:[%s787 + $0x138] sm:$0xf]
        %v911 = vld [vmem:[%s787 + $0x13c] sm:$0xf]
        %v912 = vld [vmem:[%s787 + $0x140] sm:$0xf]
        %v913 = vld [vmem:[%s787 + $0x144] sm:$0xf]
        %v914 = vld [vmem:[%s787 + $0x148] sm:$0xf]
        %v915 = vld [vmem:[%s787 + $0x14c] sm:$0xf]
        %v916 = vld [vmem:[%s787 + $0x150] sm:$0xf]
        %v917 = vld [vmem:[%s787 + $0x154] sm:$0xf]
        %v918 = vld [vmem:[%s787 + $0x158] sm:$0xf]
        %v919 = vld [vmem:[%s787 + $0x15c] sm:$0xf]
        %v920 = vld [vmem:[%s787 + $0x160] sm:$0xf]
        %v921 = vld [vmem:[%s787 + $0x164] sm:$0xf]
        %v922 = vld [vmem:[%s787 + $0x168] sm:$0xf]
        %v923 = vld [vmem:[%s787 + $0x16c] sm:$0xf]
        %v924 = vld [vmem:[%s787 + $0x170] sm:$0xf]
        %v925 = vld [vmem:[%s787 + $0x174] sm:$0xf]
        %v926 = vld [vmem:[%s787 + $0x178] sm:$0xf]
        %v927 = vld [vmem:[%s787 + $0x17c] sm:$0xf]
        %v928 = vld [vmem:[%s787 + $0x180] sm:$0xf]
        %v929 = vld [vmem:[%s787 + $0x184] sm:$0xf]
        %v930 = vld [vmem:[%s787 + $0x188] sm:$0xf]
        %v931 = vld [vmem:[%s787 + $0x18c] sm:$0xf]
        %v932 = vld [vmem:[%s787 + $0x190] sm:$0xf]
        %v933 = vld [vmem:[%s787 + $0x194] sm:$0xf]
        %v934 = vld [vmem:[%s787 + $0x198] sm:$0xf]
        %v935 = vld [vmem:[%s787 + $0x19c] sm:$0xf]
        %v936 = vld [vmem:[%s787 + $0x1a0] sm:$0xf]
        %v937 = vld [vmem:[%s787 + $0x1a4] sm:$0xf]
        %v938 = vld [vmem:[%s787 + $0x1a8] sm:$0xf]
        %v939 = vld [vmem:[%s787 + $0x1ac] sm:$0xf]
        %v940 = vld [vmem:[%s787 + $0x1b0] sm:$0xf]
        %v941 = vld [vmem:[%s787 + $0x1b4] sm:$0xf]
        %v942 = vld [vmem:[%s787 + $0x1b8] sm:$0xf]
        %v943 = vld [vmem:[%s787 + $0x1bc] sm:$0xf]
        %v944 = vld [vmem:[%s787 + $0x1c0] sm:$0xf]
        %v945 = vld [vmem:[%s787 + $0x1c4] sm:$0xf]
        %v946 = vld [vmem:[%s787 + $0x1c8] sm:$0xf]
        %v947 = vld [vmem:[%s787 + $0x1cc] sm:$0xf]
        %v948 = vld [vmem:[%s787 + $0x1d0] sm:$0xf]
        %v949 = vld [vmem:[%s787 + $0x1d4] sm:$0xf]
        %v950 = vld [vmem:[%s787 + $0x1d8] sm:$0xf]
        %v951 = vld [vmem:[%s787 + $0x1dc] sm:$0xf]
        %v952 = vld [vmem:[%s787 + $0x1e0] sm:$0xf]
        %v953 = vld [vmem:[%s787 + $0x1e4] sm:$0xf]
        %v954 = vld [vmem:[%s787 + $0x1e8] sm:$0xf]
        %v955 = vld [vmem:[%s787 + $0x1ec] sm:$0xf]
        %v956 = vld [vmem:[%s787 + $0x1f0] sm:$0xf]
        %v957 = vld [vmem:[%s787 + $0x1f4] sm:$0xf]
        %v958 = vld [vmem:[%s787 + $0x1f8] sm:$0xf]
        %v959 = vld [vmem:[%s787 + $0x1fc] sm:$0xf]
        %v960 = vld [vmem:[%s1] sm:$0xff]
        %v961 = vld [vmem:[%s1 + $0x8] sm:$0xff]
        %v962 = vld [vmem:[%s1 + $0x10] sm:$0xff]
        %v963 = vld [vmem:[%s1 + $0x18] sm:$0xff]
        %v964 = vld [vmem:[%s1 + $0x20] sm:$0xff]
        %v965 = vld [vmem:[%s1 + $0x28] sm:$0xff]
        %v966 = vld [vmem:[%s1 + $0x30] sm:$0xff]
        %v967 = vld [vmem:[%s1 + $0x38] sm:$0xff]
        %v968 = vld [vmem:[%s1 + $0x40] sm:$0xff]
        %v969 = vld [vmem:[%s1 + $0x48] sm:$0xff]
        %v970 = vld [vmem:[%s1 + $0x50] sm:$0xff]
        %v971 = vld [vmem:[%s1 + $0x58] sm:$0xff]
        %v972 = vld [vmem:[%s1 + $0x60] sm:$0xff]
        %v973 = vld [vmem:[%s1 + $0x68] sm:$0xff]
        %v974 = vld [vmem:[%s1 + $0x70] sm:$0xff]
        %v975 = vld [vmem:[%s1 + $0x78] sm:$0xff]
        %v976 = vld [vmem:[%s1 + $0x80] sm:$0xff]
        %v977 = vld [vmem:[%s1 + $0x88] sm:$0xff]
        %v978 = vld [vmem:[%s1 + $0x90] sm:$0xff]
        %v979 = vld [vmem:[%s1 + $0x98] sm:$0xff]
        %v980 = vld [vmem:[%s1 + $0xa0] sm:$0xff]
        %v981 = vld [vmem:[%s1 + $0xa8] sm:$0xff]
        %v982 = vld [vmem:[%s1 + $0xb0] sm:$0xff]
        %v983 = vld [vmem:[%s1 + $0xb8] sm:$0xff]
        %v984 = vld [vmem:[%s1 + $0xc0] sm:$0xff]
        %v985 = vld [vmem:[%s1 + $0xc8] sm:$0xff]
        %v986 = vld [vmem:[%s1 + $0xd0] sm:$0xff]
        %v987 = vld [vmem:[%s1 + $0xd8] sm:$0xff]
        %v988 = vld [vmem:[%s1 + $0xe0] sm:$0xff]
        %v989 = vld [vmem:[%s1 + $0xe8] sm:$0xff]
        %v990 = vld [vmem:[%s1 + $0xf0] sm:$0xff]
        %v991 = vld [vmem:[%s1 + $0xf8] sm:$0xff]
        %v992 = vld [vmem:[%s1 + $0x100] sm:$0xff]
        %v993 = vld [vmem:[%s1 + $0x108] sm:$0xff]
        %v994 = vld [vmem:[%s1 + $0x110] sm:$0xff]
        %v995 = vld [vmem:[%s1 + $0x118] sm:$0xff]
        %v996 = vld [vmem:[%s1 + $0x120] sm:$0xff]
        %v997 = vld [vmem:[%s1 + $0x128] sm:$0xff]
        %v998 = vld [vmem:[%s1 + $0x130] sm:$0xff]
        %v999 = vld [vmem:[%s1 + $0x138] sm:$0xff]
        %v1000 = vld [vmem:[%s1 + $0x140] sm:$0xff]
        %v1001 = vld [vmem:[%s1 + $0x148] sm:$0xff]
        %v1002 = vld [vmem:[%s1 + $0x150] sm:$0xff]
        %v1003 = vld [vmem:[%s1 + $0x158] sm:$0xff]
        %v1004 = vld [vmem:[%s1 + $0x160] sm:$0xff]
        %v1005 = vld [vmem:[%s1 + $0x168] sm:$0xff]
        %v1006 = vld [vmem:[%s1 + $0x170] sm:$0xff]
        %v1007 = vld [vmem:[%s1 + $0x178] sm:$0xff]
        %v1008 = vld [vmem:[%s1 + $0x180] sm:$0xff]
        %v1009 = vld [vmem:[%s1 + $0x188] sm:$0xff]
        %v1010 = vld [vmem:[%s1 + $0x190] sm:$0xff]
        %v1011 = vld [vmem:[%s1 + $0x198] sm:$0xff]
        %v1012 = vld [vmem:[%s1 + $0x1a0] sm:$0xff]
        %v1013 = vld [vmem:[%s1 + $0x1a8] sm:$0xff]
        %v1014 = vld [vmem:[%s1 + $0x1b0] sm:$0xff]
        %v1015 = vld [vmem:[%s1 + $0x1b8] sm:$0xff]
        %v1016 = vld [vmem:[%s1 + $0x1c0] sm:$0xff]
        %v1017 = vld [vmem:[%s1 + $0x1c8] sm:$0xff]
        %v1018 = vld [vmem:[%s1 + $0x1d0] sm:$0xff]
        %v1019 = vld [vmem:[%s1 + $0x1d8] sm:$0xff]
        %v1020 = vld [vmem:[%s1 + $0x1e0] sm:$0xff]
        %v1021 = vld [vmem:[%s1 + $0x1e8] sm:$0xff]
        %v1022 = vld [vmem:[%s1 + $0x1f0] sm:$0xff]
        %v1023 = vld [vmem:[%s1 + $0x1f8] sm:$0xff]
        %v1152 = vunpack.c.l.b16 %v832
        %v1153 = vunpack.c.l.b16 %v833
        %v1154 = vunpack.c.l.b16 %v834
        %v1155 = vunpack.c.l.b16 %v835
        %v1156 = vunpack.c.l.b16 %v836
        %v1157 = vunpack.c.l.b16 %v837
        %v1158 = vunpack.c.l.b16 %v838
        %v1159 = vunpack.c.l.b16 %v839
        %v1160 = vunpack.c.l.b16 %v840
        %v1161 = vunpack.c.l.b16 %v841
        %v1162 = vunpack.c.l.b16 %v842
        %v1163 = vunpack.c.l.b16 %v843
        %v1164 = vunpack.c.l.b16 %v844
        %v1165 = vunpack.c.l.b16 %v845
        %v1166 = vunpack.c.l.b16 %v846
        %v1167 = vunpack.c.l.b16 %v847
        %v1168 = vunpack.c.l.b16 %v848
        %v1169 = vunpack.c.l.b16 %v849
        %v1170 = vunpack.c.l.b16 %v850
        %v1171 = vunpack.c.l.b16 %v851
        %v1172 = vunpack.c.l.b16 %v852
        %v1173 = vunpack.c.l.b16 %v853
        %v1174 = vunpack.c.l.b16 %v854
        %v1175 = vunpack.c.l.b16 %v855
        %v1176 = vunpack.c.l.b16 %v856
        %v1177 = vunpack.c.l.b16 %v857
        %v1178 = vunpack.c.l.b16 %v858
        %v1179 = vunpack.c.l.b16 %v859
        %v1180 = vunpack.c.l.b16 %v860
        %v1181 = vunpack.c.l.b16 %v861
        %v1182 = vunpack.c.l.b16 %v862
        %v1183 = vunpack.c.l.b16 %v863
        %v1184 = vunpack.c.l.b16 %v864
        %v1185 = vunpack.c.l.b16 %v865
        %v1186 = vunpack.c.l.b16 %v866
        %v1187 = vunpack.c.l.b16 %v867
        %v1188 = vunpack.c.l.b16 %v868
        %v1189 = vunpack.c.l.b16 %v869
        %v1190 = vunpack.c.l.b16 %v870
        %v1191 = vunpack.c.l.b16 %v871
        %v1192 = vunpack.c.l.b16 %v872
        %v1193 = vunpack.c.l.b16 %v873
        %v1194 = vunpack.c.l.b16 %v874
        %v1195 = vunpack.c.l.b16 %v875
        %v1196 = vunpack.c.l.b16 %v876
        %v1197 = vunpack.c.l.b16 %v877
        %v1198 = vunpack.c.l.b16 %v878
        %v1199 = vunpack.c.l.b16 %v879
        %v1200 = vunpack.c.l.b16 %v880
        %v1201 = vunpack.c.l.b16 %v881
        %v1202 = vunpack.c.l.b16 %v882
        %v1203 = vunpack.c.l.b16 %v883
        %v1204 = vunpack.c.l.b16 %v884
        %v1205 = vunpack.c.l.b16 %v885
        %v1206 = vunpack.c.l.b16 %v886
        %v1207 = vunpack.c.l.b16 %v887
        %v1208 = vunpack.c.l.b16 %v888
        %v1209 = vunpack.c.l.b16 %v889
        %v1210 = vunpack.c.l.b16 %v890
        %v1211 = vunpack.c.l.b16 %v891
        %v1212 = vunpack.c.l.b16 %v892
        %v1213 = vunpack.c.l.b16 %v893
        %v1214 = vunpack.c.l.b16 %v894
        %v1215 = vunpack.c.l.b16 %v895
        %v1216 = vunpack.c.l.b16 %v896
        %v1217 = vunpack.c.l.b16 %v897
        %v1218 = vunpack.c.l.b16 %v898
        %v1219 = vunpack.c.l.b16 %v899
        %v1220 = vunpack.c.l.b16 %v900
        %v1221 = vunpack.c.l.b16 %v901
        %v1222 = vunpack.c.l.b16 %v902
        %v1223 = vunpack.c.l.b16 %v903
        %v1224 = vunpack.c.l.b16 %v904
        %v1225 = vunpack.c.l.b16 %v905
        %v1226 = vunpack.c.l.b16 %v906
        %v1227 = vunpack.c.l.b16 %v907
        %v1228 = vunpack.c.l.b16 %v908
        %v1229 = vunpack.c.l.b16 %v909
        %v1230 = vunpack.c.l.b16 %v910
        %v1231 = vunpack.c.l.b16 %v911
        %v1232 = vunpack.c.l.b16 %v912
        %v1233 = vunpack.c.l.b16 %v913
        %v1234 = vunpack.c.l.b16 %v914
        %v1235 = vunpack.c.l.b16 %v915
        %v1236 = vunpack.c.l.b16 %v916
        %v1237 = vunpack.c.l.b16 %v917
        %v1238 = vunpack.c.l.b16 %v918
        %v1239 = vunpack.c.l.b16 %v919
        %v1240 = vunpack.c.l.b16 %v920
        %v1241 = vunpack.c.l.b16 %v921
        %v1242 = vunpack.c.l.b16 %v922
        %v1243 = vunpack.c.l.b16 %v923
        %v1244 = vunpack.c.l.b16 %v924
        %v1245 = vunpack.c.l.b16 %v925
        %v1246 = vunpack.c.l.b16 %v926
        %v1247 = vunpack.c.l.b16 %v927
        %v1248 = vunpack.c.l.b16 %v928
        %v1249 = vunpack.c.l.b16 %v929
        %v1250 = vunpack.c.l.b16 %v930
        %v1251 = vunpack.c.l.b16 %v931
        %v1252 = vunpack.c.l.b16 %v932
        %v1253 = vunpack.c.l.b16 %v933
        %v1254 = vunpack.c.l.b16 %v934
        %v1255 = vunpack.c.l.b16 %v935
        %v1256 = vunpack.c.l.b16 %v936
        %v1257 = vunpack.c.l.b16 %v937
        %v1258 = vunpack.c.l.b16 %v938
        %v1259 = vunpack.c.l.b16 %v939
        %v1260 = vunpack.c.l.b16 %v940
        %v1261 = vunpack.c.l.b16 %v941
        %v1262 = vunpack.c.l.b16 %v942
        %v1263 = vunpack.c.l.b16 %v943
        %v1264 = vunpack.c.l.b16 %v944
        %v1265 = vunpack.c.l.b16 %v945
        %v1266 = vunpack.c.l.b16 %v946
        %v1267 = vunpack.c.l.b16 %v947
        %v1268 = vunpack.c.l.b16 %v948
        %v1269 = vunpack.c.l.b16 %v949
        %v1270 = vunpack.c.l.b16 %v950
        %v1271 = vunpack.c.l.b16 %v951
        %v1272 = vunpack.c.l.b16 %v952
        %v1273 = vunpack.c.l.b16 %v953
        %v1274 = vunpack.c.l.b16 %v954
        %v1275 = vunpack.c.l.b16 %v955
        %v1276 = vunpack.c.l.b16 %v956
        %v1277 = vunpack.c.l.b16 %v957
        %v1278 = vunpack.c.l.b16 %v958
        %v1279 = vunpack.c.l.b16 %v959
        %v1280 = vpack.c.b16 %v1153, %v1152
        %v1281 = vpack.c.b16 %v1155, %v1154
        %v1282 = vpack.c.b16 %v1157, %v1156
        %v1283 = vpack.c.b16 %v1159, %v1158
        %v1284 = vpack.c.b16 %v1161, %v1160
        %v1285 = vpack.c.b16 %v1163, %v1162
        %v1286 = vpack.c.b16 %v1165, %v1164
        %v1287 = vpack.c.b16 %v1167, %v1166
        %v1288 = vpack.c.b16 %v1169, %v1168
        %v1289 = vpack.c.b16 %v1171, %v1170
        %v1290 = vpack.c.b16 %v1173, %v1172
        %v1291 = vpack.c.b16 %v1175, %v1174
        %v1292 = vpack.c.b16 %v1177, %v1176
        %v1293 = vpack.c.b16 %v1179, %v1178
        %v1294 = vpack.c.b16 %v1181, %v1180
        %v1295 = vpack.c.b16 %v1183, %v1182
        %v1296 = vpack.c.b16 %v1185, %v1184
        %v1297 = vpack.c.b16 %v1187, %v1186
        %v1298 = vpack.c.b16 %v1189, %v1188
        %v1299 = vpack.c.b16 %v1191, %v1190
        %v1300 = vpack.c.b16 %v1193, %v1192
        %v1301 = vpack.c.b16 %v1195, %v1194
        %v1302 = vpack.c.b16 %v1197, %v1196
        %v1303 = vpack.c.b16 %v1199, %v1198
        %v1304 = vpack.c.b16 %v1201, %v1200
        %v1305 = vpack.c.b16 %v1203, %v1202
        %v1306 = vpack.c.b16 %v1205, %v1204
        %v1307 = vpack.c.b16 %v1207, %v1206
        %v1308 = vpack.c.b16 %v1209, %v1208
        %v1309 = vpack.c.b16 %v1211, %v1210
        %v1310 = vpack.c.b16 %v1213, %v1212
        %v1311 = vpack.c.b16 %v1215, %v1214
        %v1312 = vpack.c.b16 %v1217, %v1216
        %v1313 = vpack.c.b16 %v1219, %v1218
        %v1314 = vpack.c.b16 %v1221, %v1220
        %v1315 = vpack.c.b16 %v1223, %v1222
        %v1316 = vpack.c.b16 %v1225, %v1224
        %v1317 = vpack.c.b16 %v1227, %v1226
        %v1318 = vpack.c.b16 %v1229, %v1228
        %v1319 = vpack.c.b16 %v1231, %v1230
        %v1320 = vpack.c.b16 %v1233, %v1232
        %v1321 = vpack.c.b16 %v1235, %v1234
        %v1322 = vpack.c.b16 %v1237, %v1236
        %v1323 = vpack.c.b16 %v1239, %v1238
        %v1324 = vpack.c.b16 %v1241, %v1240
        %v1325 = vpack.c.b16 %v1243, %v1242
        %v1326 = vpack.c.b16 %v1245, %v1244
        %v1327 = vpack.c.b16 %v1247, %v1246
        %v1328 = vpack.c.b16 %v1249, %v1248
        %v1329 = vpack.c.b16 %v1251, %v1250
        %v1330 = vpack.c.b16 %v1253, %v1252
        %v1331 = vpack.c.b16 %v1255, %v1254
        %v1332 = vpack.c.b16 %v1257, %v1256
        %v1333 = vpack.c.b16 %v1259, %v1258
        %v1334 = vpack.c.b16 %v1261, %v1260
        %v1335 = vpack.c.b16 %v1263, %v1262
        %v1336 = vpack.c.b16 %v1265, %v1264
        %v1337 = vpack.c.b16 %v1267, %v1266
        %v1338 = vpack.c.b16 %v1269, %v1268
        %v1339 = vpack.c.b16 %v1271, %v1270
        %v1340 = vpack.c.b16 %v1273, %v1272
        %v1341 = vpack.c.b16 %v1275, %v1274
        %v1342 = vpack.c.b16 %v1277, %v1276
        %v1343 = vpack.c.b16 %v1279, %v1278
        %v1472 = vunpack.c.l.b16 %v960
        %v1473 = vunpack.c.h.b16 %v960
        %v1474 = vunpack.c.l.b16 %v961
        %v1475 = vunpack.c.h.b16 %v961
        %v1476 = vunpack.c.l.b16 %v962
        %v1477 = vunpack.c.h.b16 %v962
        %v1478 = vunpack.c.l.b16 %v963
        %v1479 = vunpack.c.h.b16 %v963
        %v1480 = vunpack.c.l.b16 %v964
        %v1481 = vunpack.c.h.b16 %v964
        %v1482 = vunpack.c.l.b16 %v965
        %v1483 = vunpack.c.h.b16 %v965
        %v1484 = vunpack.c.l.b16 %v966
        %v1485 = vunpack.c.h.b16 %v966
        %v1486 = vunpack.c.l.b16 %v967
        %v1487 = vunpack.c.h.b16 %v967
        %v1488 = vunpack.c.l.b16 %v968
        %v1489 = vunpack.c.h.b16 %v968
        %v1490 = vunpack.c.l.b16 %v969
        %v1491 = vunpack.c.h.b16 %v969
        %v1492 = vunpack.c.l.b16 %v970
        %v1493 = vunpack.c.h.b16 %v970
        %v1494 = vunpack.c.l.b16 %v971
        %v1495 = vunpack.c.h.b16 %v971
        %v1496 = vunpack.c.l.b16 %v972
        %v1497 = vunpack.c.h.b16 %v972
        %v1498 = vunpack.c.l.b16 %v973
        %v1499 = vunpack.c.h.b16 %v973
        %v1500 = vunpack.c.l.b16 %v974
        %v1501 = vunpack.c.h.b16 %v974
        %v1502 = vunpack.c.l.b16 %v975
        %v1503 = vunpack.c.h.b16 %v975
        %v1504 = vunpack.c.l.b16 %v976
        %v1505 = vunpack.c.h.b16 %v976
        %v1506 = vunpack.c.l.b16 %v977
        %v1507 = vunpack.c.h.b16 %v977
        %v1508 = vunpack.c.l.b16 %v978
        %v1509 = vunpack.c.h.b16 %v978
        %v1510 = vunpack.c.l.b16 %v979
        %v1511 = vunpack.c.h.b16 %v979
        %v1512 = vunpack.c.l.b16 %v980
        %v1513 = vunpack.c.h.b16 %v980
        %v1514 = vunpack.c.l.b16 %v981
        %v1515 = vunpack.c.h.b16 %v981
        %v1516 = vunpack.c.l.b16 %v982
        %v1517 = vunpack.c.h.b16 %v982
        %v1518 = vunpack.c.l.b16 %v983
        %v1519 = vunpack.c.h.b16 %v983
        %v1520 = vunpack.c.l.b16 %v984
        %v1521 = vunpack.c.h.b16 %v984
        %v1522 = vunpack.c.l.b16 %v985
        %v1523 = vunpack.c.h.b16 %v985
        %v1524 = vunpack.c.l.b16 %v986
        %v1525 = vunpack.c.h.b16 %v986
        %v1526 = vunpack.c.l.b16 %v987
        %v1527 = vunpack.c.h.b16 %v987
        %v1528 = vunpack.c.l.b16 %v988
        %v1529 = vunpack.c.h.b16 %v988
        %v1530 = vunpack.c.l.b16 %v989
        %v1531 = vunpack.c.h.b16 %v989
        %v1532 = vunpack.c.l.b16 %v990
        %v1533 = vunpack.c.h.b16 %v990
        %v1534 = vunpack.c.l.b16 %v991
        %v1535 = vunpack.c.h.b16 %v991
        %v1536 = vunpack.c.l.b16 %v992
        %v1537 = vunpack.c.h.b16 %v992
        %v1538 = vunpack.c.l.b16 %v993
        %v1539 = vunpack.c.h.b16 %v993
        %v1540 = vunpack.c.l.b16 %v994
        %v1541 = vunpack.c.h.b16 %v994
        %v1542 = vunpack.c.l.b16 %v995
        %v1543 = vunpack.c.h.b16 %v995
        %v1544 = vunpack.c.l.b16 %v996
        %v1545 = vunpack.c.h.b16 %v996
        %v1546 = vunpack.c.l.b16 %v997
        %v1547 = vunpack.c.h.b16 %v997
        %v1548 = vunpack.c.l.b16 %v998
        %v1549 = vunpack.c.h.b16 %v998
        %v1550 = vunpack.c.l.b16 %v999
        %v1551 = vunpack.c.h.b16 %v999
        %v1552 = vunpack.c.l.b16 %v1000
        %v1553 = vunpack.c.h.b16 %v1000
        %v1554 = vunpack.c.l.b16 %v1001
        %v1555 = vunpack.c.h.b16 %v1001
        %v1556 = vunpack.c.l.b16 %v1002
        %v1557 = vunpack.c.h.b16 %v1002
        %v1558 = vunpack.c.l.b16 %v1003
        %v1559 = vunpack.c.h.b16 %v1003
        %v1560 = vunpack.c.l.b16 %v1004
        %v1561 = vunpack.c.h.b16 %v1004
        %v1562 = vunpack.c.l.b16 %v1005
        %v1563 = vunpack.c.h.b16 %v1005
        %v1564 = vunpack.c.l.b16 %v1006
        %v1565 = vunpack.c.h.b16 %v1006
        %v1566 = vunpack.c.l.b16 %v1007
        %v1567 = vunpack.c.h.b16 %v1007
        %v1568 = vunpack.c.l.b16 %v1008
        %v1569 = vunpack.c.h.b16 %v1008
        %v1570 = vunpack.c.l.b16 %v1009
        %v1571 = vunpack.c.h.b16 %v1009
        %v1572 = vunpack.c.l.b16 %v1010
        %v1573 = vunpack.c.h.b16 %v1010
        %v1574 = vunpack.c.l.b16 %v1011
        %v1575 = vunpack.c.h.b16 %v1011
        %v1576 = vunpack.c.l.b16 %v1012
        %v1577 = vunpack.c.h.b16 %v1012
        %v1578 = vunpack.c.l.b16 %v1013
        %v1579 = vunpack.c.h.b16 %v1013
        %v1580 = vunpack.c.l.b16 %v1014
        %v1581 = vunpack.c.h.b16 %v1014
        %v1582 = vunpack.c.l.b16 %v1015
        %v1583 = vunpack.c.h.b16 %v1015
        %v1584 = vunpack.c.l.b16 %v1016
        %v1585 = vunpack.c.h.b16 %v1016
        %v1586 = vunpack.c.l.b16 %v1017
        %v1587 = vunpack.c.h.b16 %v1017
        %v1588 = vunpack.c.l.b16 %v1018
        %v1589 = vunpack.c.h.b16 %v1018
        %v1590 = vunpack.c.l.b16 %v1019
        %v1591 = vunpack.c.h.b16 %v1019
        %v1592 = vunpack.c.l.b16 %v1020
        %v1593 = vunpack.c.h.b16 %v1020
        %v1594 = vunpack.c.l.b16 %v1021
        %v1595 = vunpack.c.h.b16 %v1021
        %v1596 = vunpack.c.l.b16 %v1022
        %v1597 = vunpack.c.h.b16 %v1022
        %v1598 = vunpack.c.l.b16 %v1023
        %v1599 = vunpack.c.h.b16 %v1023
        %v1600 = vpack.c.b16 %v1480, %v1472
        %v1601 = vpack.c.b16 %v1481, %v1473
        %v1602 = vpack.c.b16 %v1482, %v1474
        %v1603 = vpack.c.b16 %v1483, %v1475
        %v1604 = vpack.c.b16 %v1484, %v1476
        %v1605 = vpack.c.b16 %v1485, %v1477
        %v1606 = vpack.c.b16 %v1486, %v1478
        %v1607 = vpack.c.b16 %v1487, %v1479
        %v1608 = vpack.c.b16 %v1496, %v1488
        %v1609 = vpack.c.b16 %v1497, %v1489
        %v1610 = vpack.c.b16 %v1498, %v1490
        %v1611 = vpack.c.b16 %v1499, %v1491
        %v1612 = vpack.c.b16 %v1500, %v1492
        %v1613 = vpack.c.b16 %v1501, %v1493
        %v1614 = vpack.c.b16 %v1502, %v1494
        %v1615 = vpack.c.b16 %v1503, %v1495
        %v1616 = vpack.c.b16 %v1512, %v1504
        %v1617 = vpack.c.b16 %v1513, %v1505
        %v1618 = vpack.c.b16 %v1514, %v1506
        %v1619 = vpack.c.b16 %v1515, %v1507
        %v1620 = vpack.c.b16 %v1516, %v1508
        %v1621 = vpack.c.b16 %v1517, %v1509
        %v1622 = vpack.c.b16 %v1518, %v1510
        %v1623 = vpack.c.b16 %v1519, %v1511
        %v1624 = vpack.c.b16 %v1528, %v1520
        %v1625 = vpack.c.b16 %v1529, %v1521
        %v1626 = vpack.c.b16 %v1530, %v1522
        %v1627 = vpack.c.b16 %v1531, %v1523
        %v1628 = vpack.c.b16 %v1532, %v1524
        %v1629 = vpack.c.b16 %v1533, %v1525
        %v1630 = vpack.c.b16 %v1534, %v1526
        %v1631 = vpack.c.b16 %v1535, %v1527
        %v1632 = vpack.c.b16 %v1544, %v1536
        %v1633 = vpack.c.b16 %v1545, %v1537
        %v1634 = vpack.c.b16 %v1546, %v1538
        %v1635 = vpack.c.b16 %v1547, %v1539
        %v1636 = vpack.c.b16 %v1548, %v1540
        %v1637 = vpack.c.b16 %v1549, %v1541
        %v1638 = vpack.c.b16 %v1550, %v1542
        %v1639 = vpack.c.b16 %v1551, %v1543
        %v1640 = vpack.c.b16 %v1560, %v1552
        %v1641 = vpack.c.b16 %v1561, %v1553
        %v1642 = vpack.c.b16 %v1562, %v1554
        %v1643 = vpack.c.b16 %v1563, %v1555
        %v1644 = vpack.c.b16 %v1564, %v1556
        %v1645 = vpack.c.b16 %v1565, %v1557
        %v1646 = vpack.c.b16 %v1566, %v1558
        %v1647 = vpack.c.b16 %v1567, %v1559
        %v1648 = vpack.c.b16 %v1576, %v1568
        %v1649 = vpack.c.b16 %v1577, %v1569
        %v1650 = vpack.c.b16 %v1578, %v1570
        %v1651 = vpack.c.b16 %v1579, %v1571
        %v1652 = vpack.c.b16 %v1580, %v1572
        %v1653 = vpack.c.b16 %v1581, %v1573
        %v1654 = vpack.c.b16 %v1582, %v1574
        %v1655 = vpack.c.b16 %v1583, %v1575
        %v1656 = vpack.c.b16 %v1592, %v1584
        %v1657 = vpack.c.b16 %v1593, %v1585
        %v1658 = vpack.c.b16 %v1594, %v1586
        %v1659 = vpack.c.b16 %v1595, %v1587
        %v1660 = vpack.c.b16 %v1596, %v1588
        %v1661 = vpack.c.b16 %v1597, %v1589
        %v1662 = vpack.c.b16 %v1598, %v1590
        %v1663 = vpack.c.b16 %v1599, %v1591
        %1728 = vmatprep.subr.bf16.mxu0 %v1601
        %1729 = vmatpush1.bf16.msra.mxu0 %v1600
        %1730 = vmatprep.subr.bf16.mxu0 %v1609
        %1731 = vmatpush1.bf16.msra.mxu0 %v1608
        %1732 = vmatprep.subr.bf16.mxu0 %v1617
        %1733 = vmatpush1.bf16.msra.mxu0 %v1616
        %1734 = vmatprep.subr.bf16.mxu0 %v1625
        %1735 = vmatpush1.bf16.msra.mxu0 %v1624
        %1736 = vmatprep.subr.bf16.mxu0 %v1633
        %1737 = vmatpush1.bf16.msra.mxu0 %v1632
        %1738 = vmatprep.subr.bf16.mxu0 %v1641
        %1739 = vmatpush1.bf16.msra.mxu0 %v1640
        %1740 = vmatprep.subr.bf16.mxu0 %v1649
        %1741 = vmatpush1.bf16.msra.mxu0 %v1648
        %1742 = vmatprep.subr.bf16.mxu0 %v1657
        %1743 = vmatpush1.bf16.msra.mxu0 %v1656
        %1744 = vmatprep.subr.bf16.mxu0 0
        %1745 = vmatpush1.bf16.msra.mxu0 0
        %1746 = vmatprep.subr.bf16.mxu0 0
        %1747 = vmatpush1.bf16.msra.mxu0 0
        %1748 = vmatprep.subr.bf16.mxu0 0
        %1749 = vmatpush1.bf16.msra.mxu0 0
        %1750 = vmatprep.subr.bf16.mxu0 0
        %1751 = vmatpush1.bf16.msra.mxu0 0
        %1752 = vmatprep.subr.bf16.mxu0 0
        %1753 = vmatpush1.bf16.msra.mxu0 0
        %1754 = vmatprep.subr.bf16.mxu0 0
        %1755 = vmatpush1.bf16.msra.mxu0 0
        %1756 = vmatprep.subr.bf16.mxu0 0
        %1757 = vmatpush1.bf16.msra.mxu0 0
        %1758 = vmatprep.subr.bf16.mxu0 0
        %1759 = vmatpush1.bf16.msra.mxu0 0
        %1760 = vmatprep.mubr.bf16.mxu0 0
        %1761 = vmatmul.mubr.bf16.gmra.mrb[0].mxu0 %v1280
        %v1762 = vpop.f32.mrb[0].mxu0
        %v1763 = vadd.f32 0.0, %v1762
        %v1764 = vpop.f32.mrb[0].mxu0
        %v1765 = vadd.f32 0.0, %v1764
        %v1766 = vpop.f32.mrb[0].mxu0
        %v1767 = vadd.f32 0.0, %v1766
        %v1768 = vpop.f32.mrb[0].mxu0
        %v1769 = vadd.f32 0.0, %v1768
        %1770 = vmatprep.mubr.bf16.mxu0 0
        %1771 = vmatmul.mubr.bf16.gmra.mrb[0].mxu0 %v1281
        %v1772 = vpop.f32.mrb[0].mxu0
        %v1773 = vadd.f32 0.0, %v1772
        %v1774 = vpop.f32.mrb[0].mxu0
        %v1775 = vadd.f32 0.0, %v1774
        %v1776 = vpop.f32.mrb[0].mxu0
        %v1777 = vadd.f32 0.0, %v1776
        %v1778 = vpop.f32.mrb[0].mxu0
        %v1779 = vadd.f32 0.0, %v1778
        %1780 = vmatprep.mubr.bf16.mxu0 0
        %1781 = vmatmul.mubr.bf16.gmra.mrb[0].mxu0 %v1282
        %v1782 = vpop.f32.mrb[0].mxu0
        %v1783 = vadd.f32 0.0, %v1782
        %v1784 = vpop.f32.mrb[0].mxu0
        %v1785 = vadd.f32 0.0, %v1784
        %v1786 = vpop.f32.mrb[0].mxu0
        %v1787 = vadd.f32 0.0, %v1786
        %v1788 = vpop.f32.mrb[0].mxu0
        %v1789 = vadd.f32 0.0, %v1788
        %1790 = vmatprep.mubr.bf16.mxu0 0
        %1791 = vmatmul.mubr.bf16.gmra.mrb[0].mxu0 %v1283
        %v1792 = vpop.f32.mrb[0].mxu0
        %v1793 = vadd.f32 0.0, %v1792
        %v1794 = vpop.f32.mrb[0].mxu0
        %v1795 = vadd.f32 0.0, %v1794
        %v1796 = vpop.f32.mrb[0].mxu0
        %v1797 = vadd.f32 0.0, %v1796
        %v1798 = vpop.f32.mrb[0].mxu0
        %v1799 = vadd.f32 0.0, %v1798
        %1800 = vmatprep.mubr.bf16.mxu0 0
        %1801 = vmatmul.mubr.bf16.gmra.mrb[0].mxu0 %v1284
        %v1802 = vpop.f32.mrb[0].mxu0
        %v1803 = vadd.f32 0.0, %v1802
        %v1804 = vpop.f32.mrb[0].mxu0
        %v1805 = vadd.f32 0.0, %v1804
        %v1806 = vpop.f32.mrb[0].mxu0
        %v1807 = vadd.f32 0.0, %v1806
        %v1808 = vpop.f32.mrb[0].mxu0
        %v1809 = vadd.f32 0.0, %v1808
        %1810 = vmatprep.mubr.bf16.mxu0 0
        %1811 = vmatmul.mubr.bf16.gmra.mrb[0].mxu0 %v1285
        %v1812 = vpop.f32.mrb[0].mxu0
        %v1813 = vadd.f32 0.0, %v1812
        %v1814 = vpop.f32.mrb[0].mxu0
        %v1815 = vadd.f32 0.0, %v1814
        %v1816 = vpop.f32.mrb[0].mxu0
        %v1817 = vadd.f32 0.0, %v1816
        %v1818 = vpop.f32.mrb[0].mxu0
        %v1819 = vadd.f32 0.0, %v1818
        %1820 = vmatprep.mubr.bf16.mxu0 0
        %1821 = vmatmul.mubr.bf16.gmra.mrb[0].mxu0 %v1286
        %v1822 = vpop.f32.mrb[0].mxu0
        %v1823 = vadd.f32 0.0, %v1822
        %v1824 = vpop.f32.mrb[0].mxu0
        %v1825 = vadd.f32 0.0, %v1824
        %v1826 = vpop.f32.mrb[0].mxu0
        %v1827 = vadd.f32 0.0, %v1826
        %v1828 = vpop.f32.mrb[0].mxu0
        %v1829 = vadd.f32 0.0, %v1828
        %1830 = vmatprep.mubr.bf16.mxu0 0
        %1831 = vmatmul.mubr.bf16.gmra.mrb[0].mxu0 %v1287
        %v1832 = vpop.f32.mrb[0].mxu0
        %v1833 = vadd.f32 0.0, %v1832
        %v1834 = vpop.f32.mrb[0].mxu0
        %v1835 = vadd.f32 0.0, %v1834
        %v1836 = vpop.f32.mrb[0].mxu0
        %v1837 = vadd.f32 0.0, %v1836
        %v1838 = vpop.f32.mrb[0].mxu0
        %v1839 = vadd.f32 0.0, %v1838
        %1840 = vmatprep.mubr.bf16.mxu0 0
        %1841 = vmatmul.mubr.bf16.gmra.mrb[0].mxu0 %v1288
        %v1842 = vpop.f32.mrb[0].mxu0
        %v1843 = vadd.f32 0.0, %v1842
        %v1844 = vpop.f32.mrb[0].mxu0
        %v1845 = vadd.f32 0.0, %v1844
        %v1846 = vpop.f32.mrb[0].mxu0
        %v1847 = vadd.f32 0.0, %v1846
        %v1848 = vpop.f32.mrb[0].mxu0
        %v1849 = vadd.f32 0.0, %v1848
        %1850 = vmatprep.mubr.bf16.mxu0 0
        %1851 = vmatmul.mubr.bf16.gmra.mrb[0].mxu0 %v1289
        %v1852 = vpop.f32.mrb[0].mxu0
        %v1853 = vadd.f32 0.0, %v1852
        %v1854 = vpop.f32.mrb[0].mxu0
        %v1855 = vadd.f32 0.0, %v1854
        %v1856 = vpop.f32.mrb[0].mxu0
        %v1857 = vadd.f32 0.0, %v1856
        %v1858 = vpop.f32.mrb[0].mxu0
        %v1859 = vadd.f32 0.0, %v1858
        %1860 = vmatprep.mubr.bf16.mxu0 0
        %1861 = vmatmul.mubr.bf16.gmra.mrb[0].mxu0 %v1290
        %v1862 = vpop.f32.mrb[0].mxu0
        %v1863 = vadd.f32 0.0, %v1862
        %v1864 = vpop.f32.mrb[0].mxu0
        %v1865 = vadd.f32 0.0, %v1864
        %v1866 = vpop.f32.mrb[0].mxu0
        %v1867 = vadd.f32 0.0, %v1866
        %v1868 = vpop.f32.mrb[0].mxu0
        %v1869 = vadd.f32 0.0, %v1868
        %1870 = vmatprep.mubr.bf16.mxu0 0
        %1871 = vmatmul.mubr.bf16.gmra.mrb[0].mxu0 %v1291
        %v1872 = vpop.f32.mrb[0].mxu0
        %v1873 = vadd.f32 0.0, %v1872
        %v1874 = vpop.f32.mrb[0].mxu0
        %v1875 = vadd.f32 0.0, %v1874
        %v1876 = vpop.f32.mrb[0].mxu0
        %v1877 = vadd.f32 0.0, %v1876
        %v1878 = vpop.f32.mrb[0].mxu0
        %v1879 = vadd.f32 0.0, %v1878
        %1880 = vmatprep.mubr.bf16.mxu0 0
        %1881 = vmatmul.mubr.bf16.gmra.mrb[0].mxu0 %v1292
        %v1882 = vpop.f32.mrb[0].mxu0
        %v1883 = vadd.f32 0.0, %v1882
        %v1884 = vpop.f32.mrb[0].mxu0
        %v1885 = vadd.f32 0.0, %v1884
        %v1886 = vpop.f32.mrb[0].mxu0
        %v1887 = vadd.f32 0.0, %v1886
        %v1888 = vpop.f32.mrb[0].mxu0
        %v1889 = vadd.f32 0.0, %v1888
        %1890 = vmatprep.mubr.bf16.mxu0 0
        %1891 = vmatmul.mubr.bf16.gmra.mrb[0].mxu0 %v1293
        %v1892 = vpop.f32.mrb[0].mxu0
        %v1893 = vadd.f32 0.0, %v1892
        %v1894 = vpop.f32.mrb[0].mxu0
        %v1895 = vadd.f32 0.0, %v1894
        %v1896 = vpop.f32.mrb[0].mxu0
        %v1897 = vadd.f32 0.0, %v1896
        %v1898 = vpop.f32.mrb[0].mxu0
        %v1899 = vadd.f32 0.0, %v1898
        %1900 = vmatprep.mubr.bf16.mxu0 0
        %1901 = vmatmul.mubr.bf16.gmra.mrb[0].mxu0 %v1294
        %v1902 = vpop.f32.mrb[0].mxu0
        %v1903 = vadd.f32 0.0, %v1902
        %v1904 = vpop.f32.mrb[0].mxu0
        %v1905 = vadd.f32 0.0, %v1904
        %v1906 = vpop.f32.mrb[0].mxu0
        %v1907 = vadd.f32 0.0, %v1906
        %v1908 = vpop.f32.mrb[0].mxu0
        %v1909 = vadd.f32 0.0, %v1908
        %1910 = vmatprep.mubr.bf16.mxu0 0
        %1911 = vmatmul.mubr.bf16.gmra.mrb[0].mxu0 %v1295
        %v1912 = vpop.f32.mrb[0].mxu0
        %v1913 = vadd.f32 0.0, %v1912
        %v1914 = vpop.f32.mrb[0].mxu0
        %v1915 = vadd.f32 0.0, %v1914
        %v1916 = vpop.f32.mrb[0].mxu0
        %v1917 = vadd.f32 0.0, %v1916
        %v1918 = vpop.f32.mrb[0].mxu0
        %v1919 = vadd.f32 0.0, %v1918
        %1920 = vmatprep.mubr.bf16.mxu0 0
        %1921 = vmatmul.mubr.bf16.gmra.mrb[0].mxu0 %v1296
        %v1922 = vpop.f32.mrb[0].mxu0
        %v1923 = vadd.f32 0.0, %v1922
        %v1924 = vpop.f32.mrb[0].mxu0
        %v1925 = vadd.f32 0.0, %v1924
        %v1926 = vpop.f32.mrb[0].mxu0
        %v1927 = vadd.f32 0.0, %v1926
        %v1928 = vpop.f32.mrb[0].mxu0
        %v1929 = vadd.f32 0.0, %v1928
        %1930 = vmatprep.mubr.bf16.mxu0 0
        %1931 = vmatmul.mubr.bf16.gmra.mrb[0].mxu0 %v1297
        %v1932 = vpop.f32.mrb[0].mxu0
        %v1933 = vadd.f32 0.0, %v1932
        %v1934 = vpop.f32.mrb[0].mxu0
        %v1935 = vadd.f32 0.0, %v1934
        %v1936 = vpop.f32.mrb[0].mxu0
        %v1937 = vadd.f32 0.0, %v1936
        %v1938 = vpop.f32.mrb[0].mxu0
        %v1939 = vadd.f32 0.0, %v1938
        %1940 = vmatprep.mubr.bf16.mxu0 0
        %1941 = vmatmul.mubr.bf16.gmra.mrb[0].mxu0 %v1298
        %v1942 = vpop.f32.mrb[0].mxu0
        %v1943 = vadd.f32 0.0, %v1942
        %v1944 = vpop.f32.mrb[0].mxu0
        %v1945 = vadd.f32 0.0, %v1944
        %v1946 = vpop.f32.mrb[0].mxu0
        %v1947 = vadd.f32 0.0, %v1946
        %v1948 = vpop.f32.mrb[0].mxu0
        %v1949 = vadd.f32 0.0, %v1948
        %1950 = vmatprep.mubr.bf16.mxu0 0
        %1951 = vmatmul.mubr.bf16.gmra.mrb[0].mxu0 %v1299
        %v1952 = vpop.f32.mrb[0].mxu0
        %v1953 = vadd.f32 0.0, %v1952
        %v1954 = vpop.f32.mrb[0].mxu0
        %v1955 = vadd.f32 0.0, %v1954
        %v1956 = vpop.f32.mrb[0].mxu0
        %v1957 = vadd.f32 0.0, %v1956
        %v1958 = vpop.f32.mrb[0].mxu0
        %v1959 = vadd.f32 0.0, %v1958
        %1960 = vmatprep.mubr.bf16.mxu0 0
        %1961 = vmatmul.mubr.bf16.gmra.mrb[0].mxu0 %v1300
        %v1962 = vpop.f32.mrb[0].mxu0
        %v1963 = vadd.f32 0.0, %v1962
        %v1964 = vpop.f32.mrb[0].mxu0
        %v1965 = vadd.f32 0.0, %v1964
        %v1966 = vpop.f32.mrb[0].mxu0
        %v1967 = vadd.f32 0.0, %v1966
        %v1968 = vpop.f32.mrb[0].mxu0
        %v1969 = vadd.f32 0.0, %v1968
        %1970 = vmatprep.mubr.bf16.mxu0 0
        %1971 = vmatmul.mubr.bf16.gmra.mrb[0].mxu0 %v1301
        %v1972 = vpop.f32.mrb[0].mxu0
        %v1973 = vadd.f32 0.0, %v1972
        %v1974 = vpop.f32.mrb[0].mxu0
        %v1975 = vadd.f32 0.0, %v1974
        %v1976 = vpop.f32.mrb[0].mxu0
        %v1977 = vadd.f32 0.0, %v1976
        %v1978 = vpop.f32.mrb[0].mxu0
        %v1979 = vadd.f32 0.0, %v1978
        %1980 = vmatprep.mubr.bf16.mxu0 0
        %1981 = vmatmul.mubr.bf16.gmra.mrb[0].mxu0 %v1302
        %v1982 = vpop.f32.mrb[0].mxu0
        %v1983 = vadd.f32 0.0, %v1982
        %v1984 = vpop.f32.mrb[0].mxu0
        %v1985 = vadd.f32 0.0, %v1984
        %v1986 = vpop.f32.mrb[0].mxu0
        %v1987 = vadd.f32 0.0, %v1986
        %v1988 = vpop.f32.mrb[0].mxu0
        %v1989 = vadd.f32 0.0, %v1988
        %1990 = vmatprep.mubr.bf16.mxu0 0
        %1991 = vmatmul.mubr.bf16.gmra.mrb[0].mxu0 %v1303
        %v1992 = vpop.f32.mrb[0].mxu0
        %v1993 = vadd.f32 0.0, %v1992
        %v1994 = vpop.f32.mrb[0].mxu0
        %v1995 = vadd.f32 0.0, %v1994
        %v1996 = vpop.f32.mrb[0].mxu0
        %v1997 = vadd.f32 0.0, %v1996
        %v1998 = vpop.f32.mrb[0].mxu0
        %v1999 = vadd.f32 0.0, %v1998
        %2000 = vmatprep.mubr.bf16.mxu0 0
        %2001 = vmatmul.mubr.bf16.gmra.mrb[0].mxu0 %v1304
        %v2002 = vpop.f32.mrb[0].mxu0
        %v2003 = vadd.f32 0.0, %v2002
        %v2004 = vpop.f32.mrb[0].mxu0
        %v2005 = vadd.f32 0.0, %v2004
        %v2006 = vpop.f32.mrb[0].mxu0
        %v2007 = vadd.f32 0.0, %v2006
        %v2008 = vpop.f32.mrb[0].mxu0
        %v2009 = vadd.f32 0.0, %v2008
        %2010 = vmatprep.mubr.bf16.mxu0 0
        %2011 = vmatmul.mubr.bf16.gmra.mrb[0].mxu0 %v1305
        %v2012 = vpop.f32.mrb[0].mxu0
        %v2013 = vadd.f32 0.0, %v2012
        %v2014 = vpop.f32.mrb[0].mxu0
        %v2015 = vadd.f32 0.0, %v2014
        %v2016 = vpop.f32.mrb[0].mxu0
        %v2017 = vadd.f32 0.0, %v2016
        %v2018 = vpop.f32.mrb[0].mxu0
        %v2019 = vadd.f32 0.0, %v2018
        %2020 = vmatprep.mubr.bf16.mxu0 0
        %2021 = vmatmul.mubr.bf16.gmra.mrb[0].mxu0 %v1306
        %v2022 = vpop.f32.mrb[0].mxu0
        %v2023 = vadd.f32 0.0, %v2022
        %v2024 = vpop.f32.mrb[0].mxu0
        %v2025 = vadd.f32 0.0, %v2024
        %v2026 = vpop.f32.mrb[0].mxu0
        %v2027 = vadd.f32 0.0, %v2026
        %v2028 = vpop.f32.mrb[0].mxu0
        %v2029 = vadd.f32 0.0, %v2028
        %2030 = vmatprep.mubr.bf16.mxu0 0
        %2031 = vmatmul.mubr.bf16.gmra.mrb[0].mxu0 %v1307
        %v2032 = vpop.f32.mrb[0].mxu0
        %v2033 = vadd.f32 0.0, %v2032
        %v2034 = vpop.f32.mrb[0].mxu0
        %v2035 = vadd.f32 0.0, %v2034
        %v2036 = vpop.f32.mrb[0].mxu0
        %v2037 = vadd.f32 0.0, %v2036
        %v2038 = vpop.f32.mrb[0].mxu0
        %v2039 = vadd.f32 0.0, %v2038
        %2040 = vmatprep.mubr.bf16.mxu0 0
        %2041 = vmatmul.mubr.bf16.gmra.mrb[0].mxu0 %v1308
        %v2042 = vpop.f32.mrb[0].mxu0
        %v2043 = vadd.f32 0.0, %v2042
        %v2044 = vpop.f32.mrb[0].mxu0
        %v2045 = vadd.f32 0.0, %v2044
        %v2046 = vpop.f32.mrb[0].mxu0
        %v2047 = vadd.f32 0.0, %v2046
        %v2048 = vpop.f32.mrb[0].mxu0
        %v2049 = vadd.f32 0.0, %v2048
        %2050 = vmatprep.mubr.bf16.mxu0 0
        %2051 = vmatmul.mubr.bf16.gmra.mrb[0].mxu0 %v1309
        %v2052 = vpop.f32.mrb[0].mxu0
        %v2053 = vadd.f32 0.0, %v2052
        %v2054 = vpop.f32.mrb[0].mxu0
        %v2055 = vadd.f32 0.0, %v2054
        %v2056 = vpop.f32.mrb[0].mxu0
        %v2057 = vadd.f32 0.0, %v2056
        %v2058 = vpop.f32.mrb[0].mxu0
        %v2059 = vadd.f32 0.0, %v2058
        %2060 = vmatprep.mubr.bf16.mxu0 0
        %2061 = vmatmul.mubr.bf16.gmra.mrb[0].mxu0 %v1310
        %v2062 = vpop.f32.mrb[0].mxu0
        %v2063 = vadd.f32 0.0, %v2062
        %v2064 = vpop.f32.mrb[0].mxu0
        %v2065 = vadd.f32 0.0, %v2064
        %v2066 = vpop.f32.mrb[0].mxu0
        %v2067 = vadd.f32 0.0, %v2066
        %v2068 = vpop.f32.mrb[0].mxu0
        %v2069 = vadd.f32 0.0, %v2068
        %2070 = vmatprep.mubr.bf16.mxu0 0
        %2071 = vmatmul.mubr.bf16.gmra.mrb[0].mxu0 %v1311
        %v2072 = vpop.f32.mrb[0].mxu0
        %v2073 = vadd.f32 0.0, %v2072
        %v2074 = vpop.f32.mrb[0].mxu0
        %v2075 = vadd.f32 0.0, %v2074
        %v2076 = vpop.f32.mrb[0].mxu0
        %v2077 = vadd.f32 0.0, %v2076
        %v2078 = vpop.f32.mrb[0].mxu0
        %v2079 = vadd.f32 0.0, %v2078
        %2080 = vmatprep.mubr.bf16.mxu0 0
        %2081 = vmatmul.mubr.bf16.gmra.mrb[0].mxu0 %v1312
        %v2082 = vpop.f32.mrb[0].mxu0
        %v2083 = vadd.f32 0.0, %v2082
        %v2084 = vpop.f32.mrb[0].mxu0
        %v2085 = vadd.f32 0.0, %v2084
        %v2086 = vpop.f32.mrb[0].mxu0
        %v2087 = vadd.f32 0.0, %v2086
        %v2088 = vpop.f32.mrb[0].mxu0
        %v2089 = vadd.f32 0.0, %v2088
        %2090 = vmatprep.mubr.bf16.mxu0 0
        %2091 = vmatmul.mubr.bf16.gmra.mrb[0].mxu0 %v1313
        %v2092 = vpop.f32.mrb[0].mxu0
        %v2093 = vadd.f32 0.0, %v2092
        %v2094 = vpop.f32.mrb[0].mxu0
        %v2095 = vadd.f32 0.0, %v2094
        %v2096 = vpop.f32.mrb[0].mxu0
        %v2097 = vadd.f32 0.0, %v2096
        %v2098 = vpop.f32.mrb[0].mxu0
        %v2099 = vadd.f32 0.0, %v2098
        %2100 = vmatprep.mubr.bf16.mxu0 0
        %2101 = vmatmul.mubr.bf16.gmra.mrb[0].mxu0 %v1314
        %v2102 = vpop.f32.mrb[0].mxu0
        %v2103 = vadd.f32 0.0, %v2102
        %v2104 = vpop.f32.mrb[0].mxu0
        %v2105 = vadd.f32 0.0, %v2104
        %v2106 = vpop.f32.mrb[0].mxu0
        %v2107 = vadd.f32 0.0, %v2106
        %v2108 = vpop.f32.mrb[0].mxu0
        %v2109 = vadd.f32 0.0, %v2108
        %2110 = vmatprep.mubr.bf16.mxu0 0
        %2111 = vmatmul.mubr.bf16.gmra.mrb[0].mxu0 %v1315
        %v2112 = vpop.f32.mrb[0].mxu0
        %v2113 = vadd.f32 0.0, %v2112
        %v2114 = vpop.f32.mrb[0].mxu0
        %v2115 = vadd.f32 0.0, %v2114
        %v2116 = vpop.f32.mrb[0].mxu0
        %v2117 = vadd.f32 0.0, %v2116
        %v2118 = vpop.f32.mrb[0].mxu0
        %v2119 = vadd.f32 0.0, %v2118
        %2120 = vmatprep.mubr.bf16.mxu0 0
        %2121 = vmatmul.mubr.bf16.gmra.mrb[0].mxu0 %v1316
        %v2122 = vpop.f32.mrb[0].mxu0
        %v2123 = vadd.f32 0.0, %v2122
        %v2124 = vpop.f32.mrb[0].mxu0
        %v2125 = vadd.f32 0.0, %v2124
        %v2126 = vpop.f32.mrb[0].mxu0
        %v2127 = vadd.f32 0.0, %v2126
        %v2128 = vpop.f32.mrb[0].mxu0
        %v2129 = vadd.f32 0.0, %v2128
        %2130 = vmatprep.mubr.bf16.mxu0 0
        %2131 = vmatmul.mubr.bf16.gmra.mrb[0].mxu0 %v1317
        %v2132 = vpop.f32.mrb[0].mxu0
        %v2133 = vadd.f32 0.0, %v2132
        %v2134 = vpop.f32.mrb[0].mxu0
        %v2135 = vadd.f32 0.0, %v2134
        %v2136 = vpop.f32.mrb[0].mxu0
        %v2137 = vadd.f32 0.0, %v2136
        %v2138 = vpop.f32.mrb[0].mxu0
        %v2139 = vadd.f32 0.0, %v2138
        %2140 = vmatprep.mubr.bf16.mxu0 0
        %2141 = vmatmul.mubr.bf16.gmra.mrb[0].mxu0 %v1318
        %v2142 = vpop.f32.mrb[0].mxu0
        %v2143 = vadd.f32 0.0, %v2142
        %v2144 = vpop.f32.mrb[0].mxu0
        %v2145 = vadd.f32 0.0, %v2144
        %v2146 = vpop.f32.mrb[0].mxu0
        %v2147 = vadd.f32 0.0, %v2146
        %v2148 = vpop.f32.mrb[0].mxu0
        %v2149 = vadd.f32 0.0, %v2148
        %2150 = vmatprep.mubr.bf16.mxu0 0
        %2151 = vmatmul.mubr.bf16.gmra.mrb[0].mxu0 %v1319
        %v2152 = vpop.f32.mrb[0].mxu0
        %v2153 = vadd.f32 0.0, %v2152
        %v2154 = vpop.f32.mrb[0].mxu0
        %v2155 = vadd.f32 0.0, %v2154
        %v2156 = vpop.f32.mrb[0].mxu0
        %v2157 = vadd.f32 0.0, %v2156
        %v2158 = vpop.f32.mrb[0].mxu0
        %v2159 = vadd.f32 0.0, %v2158
        %2160 = vmatprep.mubr.bf16.mxu0 0
        %2161 = vmatmul.mubr.bf16.gmra.mrb[0].mxu0 %v1320
        %v2162 = vpop.f32.mrb[0].mxu0
        %v2163 = vadd.f32 0.0, %v2162
        %v2164 = vpop.f32.mrb[0].mxu0
        %v2165 = vadd.f32 0.0, %v2164
        %v2166 = vpop.f32.mrb[0].mxu0
        %v2167 = vadd.f32 0.0, %v2166
        %v2168 = vpop.f32.mrb[0].mxu0
        %v2169 = vadd.f32 0.0, %v2168
        %2170 = vmatprep.mubr.bf16.mxu0 0
        %2171 = vmatmul.mubr.bf16.gmra.mrb[0].mxu0 %v1321
        %v2172 = vpop.f32.mrb[0].mxu0
        %v2173 = vadd.f32 0.0, %v2172
        %v2174 = vpop.f32.mrb[0].mxu0
        %v2175 = vadd.f32 0.0, %v2174
        %v2176 = vpop.f32.mrb[0].mxu0
        %v2177 = vadd.f32 0.0, %v2176
        %v2178 = vpop.f32.mrb[0].mxu0
        %v2179 = vadd.f32 0.0, %v2178
        %2180 = vmatprep.mubr.bf16.mxu0 0
        %2181 = vmatmul.mubr.bf16.gmra.mrb[0].mxu0 %v1322
        %v2182 = vpop.f32.mrb[0].mxu0
        %v2183 = vadd.f32 0.0, %v2182
        %v2184 = vpop.f32.mrb[0].mxu0
        %v2185 = vadd.f32 0.0, %v2184
        %v2186 = vpop.f32.mrb[0].mxu0
        %v2187 = vadd.f32 0.0, %v2186
        %v2188 = vpop.f32.mrb[0].mxu0
        %v2189 = vadd.f32 0.0, %v2188
        %2190 = vmatprep.mubr.bf16.mxu0 0
        %2191 = vmatmul.mubr.bf16.gmra.mrb[0].mxu0 %v1323
        %v2192 = vpop.f32.mrb[0].mxu0
        %v2193 = vadd.f32 0.0, %v2192
        %v2194 = vpop.f32.mrb[0].mxu0
        %v2195 = vadd.f32 0.0, %v2194
        %v2196 = vpop.f32.mrb[0].mxu0
        %v2197 = vadd.f32 0.0, %v2196
        %v2198 = vpop.f32.mrb[0].mxu0
        %v2199 = vadd.f32 0.0, %v2198
        %2200 = vmatprep.mubr.bf16.mxu0 0
        %2201 = vmatmul.mubr.bf16.gmra.mrb[0].mxu0 %v1324
        %v2202 = vpop.f32.mrb[0].mxu0
        %v2203 = vadd.f32 0.0, %v2202
        %v2204 = vpop.f32.mrb[0].mxu0
        %v2205 = vadd.f32 0.0, %v2204
        %v2206 = vpop.f32.mrb[0].mxu0
        %v2207 = vadd.f32 0.0, %v2206
        %v2208 = vpop.f32.mrb[0].mxu0
        %v2209 = vadd.f32 0.0, %v2208
        %2210 = vmatprep.mubr.bf16.mxu0 0
        %2211 = vmatmul.mubr.bf16.gmra.mrb[0].mxu0 %v1325
        %v2212 = vpop.f32.mrb[0].mxu0
        %v2213 = vadd.f32 0.0, %v2212
        %v2214 = vpop.f32.mrb[0].mxu0
        %v2215 = vadd.f32 0.0, %v2214
        %v2216 = vpop.f32.mrb[0].mxu0
        %v2217 = vadd.f32 0.0, %v2216
        %v2218 = vpop.f32.mrb[0].mxu0
        %v2219 = vadd.f32 0.0, %v2218
        %2220 = vmatprep.mubr.bf16.mxu0 0
        %2221 = vmatmul.mubr.bf16.gmra.mrb[0].mxu0 %v1326
        %v2222 = vpop.f32.mrb[0].mxu0
        %v2223 = vadd.f32 0.0, %v2222
        %v2224 = vpop.f32.mrb[0].mxu0
        %v2225 = vadd.f32 0.0, %v2224
        %v2226 = vpop.f32.mrb[0].mxu0
        %v2227 = vadd.f32 0.0, %v2226
        %v2228 = vpop.f32.mrb[0].mxu0
        %v2229 = vadd.f32 0.0, %v2228
        %2230 = vmatprep.mubr.bf16.mxu0 0
        %2231 = vmatmul.mubr.bf16.gmra.mrb[0].mxu0 %v1327
        %v2232 = vpop.f32.mrb[0].mxu0
        %v2233 = vadd.f32 0.0, %v2232
        %v2234 = vpop.f32.mrb[0].mxu0
        %v2235 = vadd.f32 0.0, %v2234
        %v2236 = vpop.f32.mrb[0].mxu0
        %v2237 = vadd.f32 0.0, %v2236
        %v2238 = vpop.f32.mrb[0].mxu0
        %v2239 = vadd.f32 0.0, %v2238
        %2240 = vmatprep.mubr.bf16.mxu0 0
        %2241 = vmatmul.mubr.bf16.gmra.mrb[0].mxu0 %v1328
        %v2242 = vpop.f32.mrb[0].mxu0
        %v2243 = vadd.f32 0.0, %v2242
        %v2244 = vpop.f32.mrb[0].mxu0
        %v2245 = vadd.f32 0.0, %v2244
        %v2246 = vpop.f32.mrb[0].mxu0
        %v2247 = vadd.f32 0.0, %v2246
        %v2248 = vpop.f32.mrb[0].mxu0
        %v2249 = vadd.f32 0.0, %v2248
        %2250 = vmatprep.mubr.bf16.mxu0 0
        %2251 = vmatmul.mubr.bf16.gmra.mrb[0].mxu0 %v1329
        %v2252 = vpop.f32.mrb[0].mxu0
        %v2253 = vadd.f32 0.0, %v2252
        %v2254 = vpop.f32.mrb[0].mxu0
        %v2255 = vadd.f32 0.0, %v2254
        %v2256 = vpop.f32.mrb[0].mxu0
        %v2257 = vadd.f32 0.0, %v2256
        %v2258 = vpop.f32.mrb[0].mxu0
        %v2259 = vadd.f32 0.0, %v2258
        %2260 = vmatprep.mubr.bf16.mxu0 0
        %2261 = vmatmul.mubr.bf16.gmra.mrb[0].mxu0 %v1330
        %v2262 = vpop.f32.mrb[0].mxu0
        %v2263 = vadd.f32 0.0, %v2262
        %v2264 = vpop.f32.mrb[0].mxu0
        %v2265 = vadd.f32 0.0, %v2264
        %v2266 = vpop.f32.mrb[0].mxu0
        %v2267 = vadd.f32 0.0, %v2266
        %v2268 = vpop.f32.mrb[0].mxu0
        %v2269 = vadd.f32 0.0, %v2268
        %2270 = vmatprep.mubr.bf16.mxu0 0
        %2271 = vmatmul.mubr.bf16.gmra.mrb[0].mxu0 %v1331
        %v2272 = vpop.f32.mrb[0].mxu0
        %v2273 = vadd.f32 0.0, %v2272
        %v2274 = vpop.f32.mrb[0].mxu0
        %v2275 = vadd.f32 0.0, %v2274
        %v2276 = vpop.f32.mrb[0].mxu0
        %v2277 = vadd.f32 0.0, %v2276
        %v2278 = vpop.f32.mrb[0].mxu0
        %v2279 = vadd.f32 0.0, %v2278
        %2280 = vmatprep.mubr.bf16.mxu0 0
        %2281 = vmatmul.mubr.bf16.gmra.mrb[0].mxu0 %v1332
        %v2282 = vpop.f32.mrb[0].mxu0
        %v2283 = vadd.f32 0.0, %v2282
        %v2284 = vpop.f32.mrb[0].mxu0
        %v2285 = vadd.f32 0.0, %v2284
        %v2286 = vpop.f32.mrb[0].mxu0
        %v2287 = vadd.f32 0.0, %v2286
        %v2288 = vpop.f32.mrb[0].mxu0
        %v2289 = vadd.f32 0.0, %v2288
        %2290 = vmatprep.mubr.bf16.mxu0 0
        %2291 = vmatmul.mubr.bf16.gmra.mrb[0].mxu0 %v1333
        %v2292 = vpop.f32.mrb[0].mxu0
        %v2293 = vadd.f32 0.0, %v2292
        %v2294 = vpop.f32.mrb[0].mxu0
        %v2295 = vadd.f32 0.0, %v2294
        %v2296 = vpop.f32.mrb[0].mxu0
        %v2297 = vadd.f32 0.0, %v2296
        %v2298 = vpop.f32.mrb[0].mxu0
        %v2299 = vadd.f32 0.0, %v2298
        %2300 = vmatprep.mubr.bf16.mxu0 0
        %2301 = vmatmul.mubr.bf16.gmra.mrb[0].mxu0 %v1334
        %v2302 = vpop.f32.mrb[0].mxu0
        %v2303 = vadd.f32 0.0, %v2302
        %v2304 = vpop.f32.mrb[0].mxu0
        %v2305 = vadd.f32 0.0, %v2304
        %v2306 = vpop.f32.mrb[0].mxu0
        %v2307 = vadd.f32 0.0, %v2306
        %v2308 = vpop.f32.mrb[0].mxu0
        %v2309 = vadd.f32 0.0, %v2308
        %2310 = vmatprep.mubr.bf16.mxu0 0
        %2311 = vmatmul.mubr.bf16.gmra.mrb[0].mxu0 %v1335
        %v2312 = vpop.f32.mrb[0].mxu0
        %v2313 = vadd.f32 0.0, %v2312
        %v2314 = vpop.f32.mrb[0].mxu0
        %v2315 = vadd.f32 0.0, %v2314
        %v2316 = vpop.f32.mrb[0].mxu0
        %v2317 = vadd.f32 0.0, %v2316
        %v2318 = vpop.f32.mrb[0].mxu0
        %v2319 = vadd.f32 0.0, %v2318
        %2320 = vmatprep.mubr.bf16.mxu0 0
        %2321 = vmatmul.mubr.bf16.gmra.mrb[0].mxu0 %v1336
        %v2322 = vpop.f32.mrb[0].mxu0
        %v2323 = vadd.f32 0.0, %v2322
        %v2324 = vpop.f32.mrb[0].mxu0
        %v2325 = vadd.f32 0.0, %v2324
        %v2326 = vpop.f32.mrb[0].mxu0
        %v2327 = vadd.f32 0.0, %v2326
        %v2328 = vpop.f32.mrb[0].mxu0
        %v2329 = vadd.f32 0.0, %v2328
        %2330 = vmatprep.mubr.bf16.mxu0 0
        %2331 = vmatmul.mubr.bf16.gmra.mrb[0].mxu0 %v1337
        %v2332 = vpop.f32.mrb[0].mxu0
        %v2333 = vadd.f32 0.0, %v2332
        %v2334 = vpop.f32.mrb[0].mxu0
        %v2335 = vadd.f32 0.0, %v2334
        %v2336 = vpop.f32.mrb[0].mxu0
        %v2337 = vadd.f32 0.0, %v2336
        %v2338 = vpop.f32.mrb[0].mxu0
        %v2339 = vadd.f32 0.0, %v2338
        %2340 = vmatprep.mubr.bf16.mxu0 0
        %2341 = vmatmul.mubr.bf16.gmra.mrb[0].mxu0 %v1338
        %v2342 = vpop.f32.mrb[0].mxu0
        %v2343 = vadd.f32 0.0, %v2342
        %v2344 = vpop.f32.mrb[0].mxu0
        %v2345 = vadd.f32 0.0, %v2344
        %v2346 = vpop.f32.mrb[0].mxu0
        %v2347 = vadd.f32 0.0, %v2346
        %v2348 = vpop.f32.mrb[0].mxu0
        %v2349 = vadd.f32 0.0, %v2348
        %2350 = vmatprep.mubr.bf16.mxu0 0
        %2351 = vmatmul.mubr.bf16.gmra.mrb[0].mxu0 %v1339
        %v2352 = vpop.f32.mrb[0].mxu0
        %v2353 = vadd.f32 0.0, %v2352
        %v2354 = vpop.f32.mrb[0].mxu0
        %v2355 = vadd.f32 0.0, %v2354
        %v2356 = vpop.f32.mrb[0].mxu0
        %v2357 = vadd.f32 0.0, %v2356
        %v2358 = vpop.f32.mrb[0].mxu0
        %v2359 = vadd.f32 0.0, %v2358
        %2360 = vmatprep.mubr.bf16.mxu0 0
        %2361 = vmatmul.mubr.bf16.gmra.mrb[0].mxu0 %v1340
        %v2362 = vpop.f32.mrb[0].mxu0
        %v2363 = vadd.f32 0.0, %v2362
        %v2364 = vpop.f32.mrb[0].mxu0
        %v2365 = vadd.f32 0.0, %v2364
        %v2366 = vpop.f32.mrb[0].mxu0
        %v2367 = vadd.f32 0.0, %v2366
        %v2368 = vpop.f32.mrb[0].mxu0
        %v2369 = vadd.f32 0.0, %v2368
        %2370 = vmatprep.mubr.bf16.mxu0 0
        %2371 = vmatmul.mubr.bf16.gmra.mrb[0].mxu0 %v1341
        %v2372 = vpop.f32.mrb[0].mxu0
        %v2373 = vadd.f32 0.0, %v2372
        %v2374 = vpop.f32.mrb[0].mxu0
        %v2375 = vadd.f32 0.0, %v2374
        %v2376 = vpop.f32.mrb[0].mxu0
        %v2377 = vadd.f32 0.0, %v2376
        %v2378 = vpop.f32.mrb[0].mxu0
        %v2379 = vadd.f32 0.0, %v2378
        %2380 = vmatprep.mubr.bf16.mxu0 0
        %2381 = vmatmul.mubr.bf16.gmra.mrb[0].mxu0 %v1342
        %v2382 = vpop.f32.mrb[0].mxu0
        %v2383 = vadd.f32 0.0, %v2382
        %v2384 = vpop.f32.mrb[0].mxu0
        %v2385 = vadd.f32 0.0, %v2384
        %v2386 = vpop.f32.mrb[0].mxu0
        %v2387 = vadd.f32 0.0, %v2386
        %v2388 = vpop.f32.mrb[0].mxu0
        %v2389 = vadd.f32 0.0, %v2388
        %2390 = vmatprep.mubr.bf16.mxu0 0
        %2391 = vmatmul.mubr.bf16.gmra.mrb[0].mxu0 %v1343
        %v2392 = vpop.f32.mrb[0].mxu0
        %v2393 = vadd.f32 0.0, %v2392
        %v2394 = vpop.f32.mrb[0].mxu0
        %v2395 = vadd.f32 0.0, %v2394
        %v2396 = vpop.f32.mrb[0].mxu0
        %v2397 = vadd.f32 0.0, %v2396
        %v2398 = vpop.f32.mrb[0].mxu0
        %v2399 = vadd.f32 0.0, %v2398
        %2400 = vdwg.mxu0
        %2401 = vmatprep.subr.bf16.mxu0 %v1603
        %2402 = vmatpush1.bf16.msra.mxu0 %v1602
        %2403 = vmatprep.subr.bf16.mxu0 %v1611
        %2404 = vmatpush1.bf16.msra.mxu0 %v1610
        %2405 = vmatprep.subr.bf16.mxu0 %v1619
        %2406 = vmatpush1.bf16.msra.mxu0 %v1618
        %2407 = vmatprep.subr.bf16.mxu0 %v1627
        %2408 = vmatpush1.bf16.msra.mxu0 %v1626
        %2409 = vmatprep.subr.bf16.mxu0 %v1635
        %2410 = vmatpush1.bf16.msra.mxu0 %v1634
        %2411 = vmatprep.subr.bf16.mxu0 %v1643
        %2412 = vmatpush1.bf16.msra.mxu0 %v1642
        %2413 = vmatprep.subr.bf16.mxu0 %v1651
        %2414 = vmatpush1.bf16.msra.mxu0 %v1650
        %2415 = vmatprep.subr.bf16.mxu0 %v1659
        %2416 = vmatpush1.bf16.msra.mxu0 %v1658
        %2417 = vmatprep.subr.bf16.mxu0 0
        %2418 = vmatpush1.bf16.msra.mxu0 0
        %2419 = vmatprep.subr.bf16.mxu0 0
        %2420 = vmatpush1.bf16.msra.mxu0 0
        %2421 = vmatprep.subr.bf16.mxu0 0
        %2422 = vmatpush1.bf16.msra.mxu0 0
        %2423 = vmatprep.subr.bf16.mxu0 0
        %2424 = vmatpush1.bf16.msra.mxu0 0
        %2425 = vmatprep.subr.bf16.mxu0 0
        %2426 = vmatpush1.bf16.msra.mxu0 0
        %2427 = vmatprep.subr.bf16.mxu0 0
        %2428 = vmatpush1.bf16.msra.mxu0 0
        %2429 = vmatprep.subr.bf16.mxu0 0
        %2430 = vmatpush1.bf16.msra.mxu0 0
        %2431 = vmatprep.subr.bf16.mxu0 0
        %2432 = vmatpush1.bf16.msra.mxu0 0
        %2433 = vmatprep.mubr.bf16.mxu0 0
        %2434 = vmatmul.mubr.bf16.gmra.mrb[0].mxu0 %v1280
        %v2435 = vpop.f32.mrb[0].mxu0
        %v2436 = vadd.f32 0.0, %v2435
        %v2437 = vpop.f32.mrb[0].mxu0
        %v2438 = vadd.f32 0.0, %v2437
        %v2439 = vpop.f32.mrb[0].mxu0
        %v2440 = vadd.f32 0.0, %v2439
        %v2441 = vpop.f32.mrb[0].mxu0
        %v2442 = vadd.f32 0.0, %v2441
        %2443 = vmatprep.mubr.bf16.mxu0 0
        %2444 = vmatmul.mubr.bf16.gmra.mrb[0].mxu0 %v1281
        %v2445 = vpop.f32.mrb[0].mxu0
        %v2446 = vadd.f32 0.0, %v2445
        %v2447 = vpop.f32.mrb[0].mxu0
        %v2448 = vadd.f32 0.0, %v2447
        %v2449 = vpop.f32.mrb[0].mxu0
        %v2450 = vadd.f32 0.0, %v2449
        %v2451 = vpop.f32.mrb[0].mxu0
        %v2452 = vadd.f32 0.0, %v2451
        %2453 = vmatprep.mubr.bf16.mxu0 0
        %2454 = vmatmul.mubr.bf16.gmra.mrb[0].mxu0 %v1282
        %v2455 = vpop.f32.mrb[0].mxu0
        %v2456 = vadd.f32 0.0, %v2455
        %v2457 = vpop.f32.mrb[0].mxu0
        %v2458 = vadd.f32 0.0, %v2457
        %v2459 = vpop.f32.mrb[0].mxu0
        %v2460 = vadd.f32 0.0, %v2459
        %v2461 = vpop.f32.mrb[0].mxu0
        %v2462 = vadd.f32 0.0, %v2461
        %2463 = vmatprep.mubr.bf16.mxu0 0
        %2464 = vmatmul.mubr.bf16.gmra.mrb[0].mxu0 %v1283
        %v2465 = vpop.f32.mrb[0].mxu0
        %v2466 = vadd.f32 0.0, %v2465
        %v2467 = vpop.f32.mrb[0].mxu0
        %v2468 = vadd.f32 0.0, %v2467
        %v2469 = vpop.f32.mrb[0].mxu0
        %v2470 = vadd.f32 0.0, %v2469
        %v2471 = vpop.f32.mrb[0].mxu0
        %v2472 = vadd.f32 0.0, %v2471
        %2473 = vmatprep.mubr.bf16.mxu0 0
        %2474 = vmatmul.mubr.bf16.gmra.mrb[0].mxu0 %v1284
        %v2475 = vpop.f32.mrb[0].mxu0
        %v2476 = vadd.f32 0.0, %v2475
        %v2477 = vpop.f32.mrb[0].mxu0
        %v2478 = vadd.f32 0.0, %v2477
        %v2479 = vpop.f32.mrb[0].mxu0
        %v2480 = vadd.f32 0.0, %v2479
        %v2481 = vpop.f32.mrb[0].mxu0
        %v2482 = vadd.f32 0.0, %v2481
        %2483 = vmatprep.mubr.bf16.mxu0 0
        %2484 = vmatmul.mubr.bf16.gmra.mrb[0].mxu0 %v1285
        %v2485 = vpop.f32.mrb[0].mxu0
        %v2486 = vadd.f32 0.0, %v2485
        %v2487 = vpop.f32.mrb[0].mxu0
        %v2488 = vadd.f32 0.0, %v2487
        %v2489 = vpop.f32.mrb[0].mxu0
        %v2490 = vadd.f32 0.0, %v2489
        %v2491 = vpop.f32.mrb[0].mxu0
        %v2492 = vadd.f32 0.0, %v2491
        %2493 = vmatprep.mubr.bf16.mxu0 0
        %2494 = vmatmul.mubr.bf16.gmra.mrb[0].mxu0 %v1286
        %v2495 = vpop.f32.mrb[0].mxu0
        %v2496 = vadd.f32 0.0, %v2495
        %v2497 = vpop.f32.mrb[0].mxu0
        %v2498 = vadd.f32 0.0, %v2497
        %v2499 = vpop.f32.mrb[0].mxu0
        %v2500 = vadd.f32 0.0, %v2499
        %v2501 = vpop.f32.mrb[0].mxu0
        %v2502 = vadd.f32 0.0, %v2501
        %2503 = vmatprep.mubr.bf16.mxu0 0
        %2504 = vmatmul.mubr.bf16.gmra.mrb[0].mxu0 %v1287
        %v2505 = vpop.f32.mrb[0].mxu0
        %v2506 = vadd.f32 0.0, %v2505
        %v2507 = vpop.f32.mrb[0].mxu0
        %v2508 = vadd.f32 0.0, %v2507
        %v2509 = vpop.f32.mrb[0].mxu0
        %v2510 = vadd.f32 0.0, %v2509
        %v2511 = vpop.f32.mrb[0].mxu0
        %v2512 = vadd.f32 0.0, %v2511
        %2513 = vmatprep.mubr.bf16.mxu0 0
        %2514 = vmatmul.mubr.bf16.gmra.mrb[0].mxu0 %v1288
        %v2515 = vpop.f32.mrb[0].mxu0
        %v2516 = vadd.f32 0.0, %v2515
        %v2517 = vpop.f32.mrb[0].mxu0
        %v2518 = vadd.f32 0.0, %v2517
        %v2519 = vpop.f32.mrb[0].mxu0
        %v2520 = vadd.f32 0.0, %v2519
        %v2521 = vpop.f32.mrb[0].mxu0
        %v2522 = vadd.f32 0.0, %v2521
        %2523 = vmatprep.mubr.bf16.mxu0 0
        %2524 = vmatmul.mubr.bf16.gmra.mrb[0].mxu0 %v1289
        %v2525 = vpop.f32.mrb[0].mxu0
        %v2526 = vadd.f32 0.0, %v2525
        %v2527 = vpop.f32.mrb[0].mxu0
        %v2528 = vadd.f32 0.0, %v2527
        %v2529 = vpop.f32.mrb[0].mxu0
        %v2530 = vadd.f32 0.0, %v2529
        %v2531 = vpop.f32.mrb[0].mxu0
        %v2532 = vadd.f32 0.0, %v2531
        %2533 = vmatprep.mubr.bf16.mxu0 0
        %2534 = vmatmul.mubr.bf16.gmra.mrb[0].mxu0 %v1290
        %v2535 = vpop.f32.mrb[0].mxu0
        %v2536 = vadd.f32 0.0, %v2535
        %v2537 = vpop.f32.mrb[0].mxu0
        %v2538 = vadd.f32 0.0, %v2537
        %v2539 = vpop.f32.mrb[0].mxu0
        %v2540 = vadd.f32 0.0, %v2539
        %v2541 = vpop.f32.mrb[0].mxu0
        %v2542 = vadd.f32 0.0, %v2541
        %2543 = vmatprep.mubr.bf16.mxu0 0
        %2544 = vmatmul.mubr.bf16.gmra.mrb[0].mxu0 %v1291
        %v2545 = vpop.f32.mrb[0].mxu0
        %v2546 = vadd.f32 0.0, %v2545
        %v2547 = vpop.f32.mrb[0].mxu0
        %v2548 = vadd.f32 0.0, %v2547
        %v2549 = vpop.f32.mrb[0].mxu0
        %v2550 = vadd.f32 0.0, %v2549
        %v2551 = vpop.f32.mrb[0].mxu0
        %v2552 = vadd.f32 0.0, %v2551
        %2553 = vmatprep.mubr.bf16.mxu0 0
        %2554 = vmatmul.mubr.bf16.gmra.mrb[0].mxu0 %v1292
        %v2555 = vpop.f32.mrb[0].mxu0
        %v2556 = vadd.f32 0.0, %v2555
        %v2557 = vpop.f32.mrb[0].mxu0
        %v2558 = vadd.f32 0.0, %v2557
        %v2559 = vpop.f32.mrb[0].mxu0
        %v2560 = vadd.f32 0.0, %v2559
        %v2561 = vpop.f32.mrb[0].mxu0
        %v2562 = vadd.f32 0.0, %v2561
        %2563 = vmatprep.mubr.bf16.mxu0 0
        %2564 = vmatmul.mubr.bf16.gmra.mrb[0].mxu0 %v1293
        %v2565 = vpop.f32.mrb[0].mxu0
        %v2566 = vadd.f32 0.0, %v2565
        %v2567 = vpop.f32.mrb[0].mxu0
        %v2568 = vadd.f32 0.0, %v2567
        %v2569 = vpop.f32.mrb[0].mxu0
        %v2570 = vadd.f32 0.0, %v2569
        %v2571 = vpop.f32.mrb[0].mxu0
        %v2572 = vadd.f32 0.0, %v2571
        %2573 = vmatprep.mubr.bf16.mxu0 0
        %2574 = vmatmul.mubr.bf16.gmra.mrb[0].mxu0 %v1294
        %v2575 = vpop.f32.mrb[0].mxu0
        %v2576 = vadd.f32 0.0, %v2575
        %v2577 = vpop.f32.mrb[0].mxu0
        %v2578 = vadd.f32 0.0, %v2577
        %v2579 = vpop.f32.mrb[0].mxu0
        %v2580 = vadd.f32 0.0, %v2579
        %v2581 = vpop.f32.mrb[0].mxu0
        %v2582 = vadd.f32 0.0, %v2581
        %2583 = vmatprep.mubr.bf16.mxu0 0
        %2584 = vmatmul.mubr.bf16.gmra.mrb[0].mxu0 %v1295
        %v2585 = vpop.f32.mrb[0].mxu0
        %v2586 = vadd.f32 0.0, %v2585
        %v2587 = vpop.f32.mrb[0].mxu0
        %v2588 = vadd.f32 0.0, %v2587
        %v2589 = vpop.f32.mrb[0].mxu0
        %v2590 = vadd.f32 0.0, %v2589
        %v2591 = vpop.f32.mrb[0].mxu0
        %v2592 = vadd.f32 0.0, %v2591
        %2593 = vmatprep.mubr.bf16.mxu0 0
        %2594 = vmatmul.mubr.bf16.gmra.mrb[0].mxu0 %v1296
        %v2595 = vpop.f32.mrb[0].mxu0
        %v2596 = vadd.f32 0.0, %v2595
        %v2597 = vpop.f32.mrb[0].mxu0
        %v2598 = vadd.f32 0.0, %v2597
        %v2599 = vpop.f32.mrb[0].mxu0
        %v2600 = vadd.f32 0.0, %v2599
        %v2601 = vpop.f32.mrb[0].mxu0
        %v2602 = vadd.f32 0.0, %v2601
        %2603 = vmatprep.mubr.bf16.mxu0 0
        %2604 = vmatmul.mubr.bf16.gmra.mrb[0].mxu0 %v1297
        %v2605 = vpop.f32.mrb[0].mxu0
        %v2606 = vadd.f32 0.0, %v2605
        %v2607 = vpop.f32.mrb[0].mxu0
        %v2608 = vadd.f32 0.0, %v2607
        %v2609 = vpop.f32.mrb[0].mxu0
        %v2610 = vadd.f32 0.0, %v2609
        %v2611 = vpop.f32.mrb[0].mxu0
        %v2612 = vadd.f32 0.0, %v2611
        %2613 = vmatprep.mubr.bf16.mxu0 0
        %2614 = vmatmul.mubr.bf16.gmra.mrb[0].mxu0 %v1298
        %v2615 = vpop.f32.mrb[0].mxu0
        %v2616 = vadd.f32 0.0, %v2615
        %v2617 = vpop.f32.mrb[0].mxu0
        %v2618 = vadd.f32 0.0, %v2617
        %v2619 = vpop.f32.mrb[0].mxu0
        %v2620 = vadd.f32 0.0, %v2619
        %v2621 = vpop.f32.mrb[0].mxu0
        %v2622 = vadd.f32 0.0, %v2621
        %2623 = vmatprep.mubr.bf16.mxu0 0
        %2624 = vmatmul.mubr.bf16.gmra.mrb[0].mxu0 %v1299
        %v2625 = vpop.f32.mrb[0].mxu0
        %v2626 = vadd.f32 0.0, %v2625
        %v2627 = vpop.f32.mrb[0].mxu0
        %v2628 = vadd.f32 0.0, %v2627
        %v2629 = vpop.f32.mrb[0].mxu0
        %v2630 = vadd.f32 0.0, %v2629
        %v2631 = vpop.f32.mrb[0].mxu0
        %v2632 = vadd.f32 0.0, %v2631
        %2633 = vmatprep.mubr.bf16.mxu0 0
        %2634 = vmatmul.mubr.bf16.gmra.mrb[0].mxu0 %v1300
        %v2635 = vpop.f32.mrb[0].mxu0
        %v2636 = vadd.f32 0.0, %v2635
        %v2637 = vpop.f32.mrb[0].mxu0
        %v2638 = vadd.f32 0.0, %v2637
        %v2639 = vpop.f32.mrb[0].mxu0
        %v2640 = vadd.f32 0.0, %v2639
        %v2641 = vpop.f32.mrb[0].mxu0
        %v2642 = vadd.f32 0.0, %v2641
        %2643 = vmatprep.mubr.bf16.mxu0 0
        %2644 = vmatmul.mubr.bf16.gmra.mrb[0].mxu0 %v1301
        %v2645 = vpop.f32.mrb[0].mxu0
        %v2646 = vadd.f32 0.0, %v2645
        %v2647 = vpop.f32.mrb[0].mxu0
        %v2648 = vadd.f32 0.0, %v2647
        %v2649 = vpop.f32.mrb[0].mxu0
        %v2650 = vadd.f32 0.0, %v2649
        %v2651 = vpop.f32.mrb[0].mxu0
        %v2652 = vadd.f32 0.0, %v2651
        %2653 = vmatprep.mubr.bf16.mxu0 0
        %2654 = vmatmul.mubr.bf16.gmra.mrb[0].mxu0 %v1302
        %v2655 = vpop.f32.mrb[0].mxu0
        %v2656 = vadd.f32 0.0, %v2655
        %v2657 = vpop.f32.mrb[0].mxu0
        %v2658 = vadd.f32 0.0, %v2657
        %v2659 = vpop.f32.mrb[0].mxu0
        %v2660 = vadd.f32 0.0, %v2659
        %v2661 = vpop.f32.mrb[0].mxu0
        %v2662 = vadd.f32 0.0, %v2661
        %2663 = vmatprep.mubr.bf16.mxu0 0
        %2664 = vmatmul.mubr.bf16.gmra.mrb[0].mxu0 %v1303
        %v2665 = vpop.f32.mrb[0].mxu0
        %v2666 = vadd.f32 0.0, %v2665
        %v2667 = vpop.f32.mrb[0].mxu0
        %v2668 = vadd.f32 0.0, %v2667
        %v2669 = vpop.f32.mrb[0].mxu0
        %v2670 = vadd.f32 0.0, %v2669
        %v2671 = vpop.f32.mrb[0].mxu0
        %v2672 = vadd.f32 0.0, %v2671
        %2673 = vmatprep.mubr.bf16.mxu0 0
        %2674 = vmatmul.mubr.bf16.gmra.mrb[0].mxu0 %v1304
        %v2675 = vpop.f32.mrb[0].mxu0
        %v2676 = vadd.f32 0.0, %v2675
        %v2677 = vpop.f32.mrb[0].mxu0
        %v2678 = vadd.f32 0.0, %v2677
        %v2679 = vpop.f32.mrb[0].mxu0
        %v2680 = vadd.f32 0.0, %v2679
        %v2681 = vpop.f32.mrb[0].mxu0
        %v2682 = vadd.f32 0.0, %v2681
        %2683 = vmatprep.mubr.bf16.mxu0 0
        %2684 = vmatmul.mubr.bf16.gmra.mrb[0].mxu0 %v1305
        %v2685 = vpop.f32.mrb[0].mxu0
        %v2686 = vadd.f32 0.0, %v2685
        %v2687 = vpop.f32.mrb[0].mxu0
        %v2688 = vadd.f32 0.0, %v2687
        %v2689 = vpop.f32.mrb[0].mxu0
        %v2690 = vadd.f32 0.0, %v2689
        %v2691 = vpop.f32.mrb[0].mxu0
        %v2692 = vadd.f32 0.0, %v2691
        %2693 = vmatprep.mubr.bf16.mxu0 0
        %2694 = vmatmul.mubr.bf16.gmra.mrb[0].mxu0 %v1306
        %v2695 = vpop.f32.mrb[0].mxu0
        %v2696 = vadd.f32 0.0, %v2695
        %v2697 = vpop.f32.mrb[0].mxu0
        %v2698 = vadd.f32 0.0, %v2697
        %v2699 = vpop.f32.mrb[0].mxu0
        %v2700 = vadd.f32 0.0, %v2699
        %v2701 = vpop.f32.mrb[0].mxu0
        %v2702 = vadd.f32 0.0, %v2701
        %2703 = vmatprep.mubr.bf16.mxu0 0
        %2704 = vmatmul.mubr.bf16.gmra.mrb[0].mxu0 %v1307
        %v2705 = vpop.f32.mrb[0].mxu0
        %v2706 = vadd.f32 0.0, %v2705
        %v2707 = vpop.f32.mrb[0].mxu0
        %v2708 = vadd.f32 0.0, %v2707
        %v2709 = vpop.f32.mrb[0].mxu0
        %v2710 = vadd.f32 0.0, %v2709
        %v2711 = vpop.f32.mrb[0].mxu0
        %v2712 = vadd.f32 0.0, %v2711
        %2713 = vmatprep.mubr.bf16.mxu0 0
        %2714 = vmatmul.mubr.bf16.gmra.mrb[0].mxu0 %v1308
        %v2715 = vpop.f32.mrb[0].mxu0
        %v2716 = vadd.f32 0.0, %v2715
        %v2717 = vpop.f32.mrb[0].mxu0
        %v2718 = vadd.f32 0.0, %v2717
        %v2719 = vpop.f32.mrb[0].mxu0
        %v2720 = vadd.f32 0.0, %v2719
        %v2721 = vpop.f32.mrb[0].mxu0
        %v2722 = vadd.f32 0.0, %v2721
        %2723 = vmatprep.mubr.bf16.mxu0 0
        %2724 = vmatmul.mubr.bf16.gmra.mrb[0].mxu0 %v1309
        %v2725 = vpop.f32.mrb[0].mxu0
        %v2726 = vadd.f32 0.0, %v2725
        %v2727 = vpop.f32.mrb[0].mxu0
        %v2728 = vadd.f32 0.0, %v2727
        %v2729 = vpop.f32.mrb[0].mxu0
        %v2730 = vadd.f32 0.0, %v2729
        %v2731 = vpop.f32.mrb[0].mxu0
        %v2732 = vadd.f32 0.0, %v2731
        %2733 = vmatprep.mubr.bf16.mxu0 0
        %2734 = vmatmul.mubr.bf16.gmra.mrb[0].mxu0 %v1310
        %v2735 = vpop.f32.mrb[0].mxu0
        %v2736 = vadd.f32 0.0, %v2735
        %v2737 = vpop.f32.mrb[0].mxu0
        %v2738 = vadd.f32 0.0, %v2737
        %v2739 = vpop.f32.mrb[0].mxu0
        %v2740 = vadd.f32 0.0, %v2739
        %v2741 = vpop.f32.mrb[0].mxu0
        %v2742 = vadd.f32 0.0, %v2741
        %2743 = vmatprep.mubr.bf16.mxu0 0
        %2744 = vmatmul.mubr.bf16.gmra.mrb[0].mxu0 %v1311
        %v2745 = vpop.f32.mrb[0].mxu0
        %v2746 = vadd.f32 0.0, %v2745
        %v2747 = vpop.f32.mrb[0].mxu0
        %v2748 = vadd.f32 0.0, %v2747
        %v2749 = vpop.f32.mrb[0].mxu0
        %v2750 = vadd.f32 0.0, %v2749
        %v2751 = vpop.f32.mrb[0].mxu0
        %v2752 = vadd.f32 0.0, %v2751
        %2753 = vmatprep.mubr.bf16.mxu0 0
        %2754 = vmatmul.mubr.bf16.gmra.mrb[0].mxu0 %v1312
        %v2755 = vpop.f32.mrb[0].mxu0
        %v2756 = vadd.f32 0.0, %v2755
        %v2757 = vpop.f32.mrb[0].mxu0
        %v2758 = vadd.f32 0.0, %v2757
        %v2759 = vpop.f32.mrb[0].mxu0
        %v2760 = vadd.f32 0.0, %v2759
        %v2761 = vpop.f32.mrb[0].mxu0
        %v2762 = vadd.f32 0.0, %v2761
        %2763 = vmatprep.mubr.bf16.mxu0 0
        %2764 = vmatmul.mubr.bf16.gmra.mrb[0].mxu0 %v1313
        %v2765 = vpop.f32.mrb[0].mxu0
        %v2766 = vadd.f32 0.0, %v2765
        %v2767 = vpop.f32.mrb[0].mxu0
        %v2768 = vadd.f32 0.0, %v2767
        %v2769 = vpop.f32.mrb[0].mxu0
        %v2770 = vadd.f32 0.0, %v2769
        %v2771 = vpop.f32.mrb[0].mxu0
        %v2772 = vadd.f32 0.0, %v2771
        %2773 = vmatprep.mubr.bf16.mxu0 0
        %2774 = vmatmul.mubr.bf16.gmra.mrb[0].mxu0 %v1314
        %v2775 = vpop.f32.mrb[0].mxu0
        %v2776 = vadd.f32 0.0, %v2775
        %v2777 = vpop.f32.mrb[0].mxu0
        %v2778 = vadd.f32 0.0, %v2777
        %v2779 = vpop.f32.mrb[0].mxu0
        %v2780 = vadd.f32 0.0, %v2779
        %v2781 = vpop.f32.mrb[0].mxu0
        %v2782 = vadd.f32 0.0, %v2781
        %2783 = vmatprep.mubr.bf16.mxu0 0
        %2784 = vmatmul.mubr.bf16.gmra.mrb[0].mxu0 %v1315
        %v2785 = vpop.f32.mrb[0].mxu0
        %v2786 = vadd.f32 0.0, %v2785
        %v2787 = vpop.f32.mrb[0].mxu0
        %v2788 = vadd.f32 0.0, %v2787
        %v2789 = vpop.f32.mrb[0].mxu0
        %v2790 = vadd.f32 0.0, %v2789
        %v2791 = vpop.f32.mrb[0].mxu0
        %v2792 = vadd.f32 0.0, %v2791
        %2793 = vmatprep.mubr.bf16.mxu0 0
        %2794 = vmatmul.mubr.bf16.gmra.mrb[0].mxu0 %v1316
        %v2795 = vpop.f32.mrb[0].mxu0
        %v2796 = vadd.f32 0.0, %v2795
        %v2797 = vpop.f32.mrb[0].mxu0
        %v2798 = vadd.f32 0.0, %v2797
        %v2799 = vpop.f32.mrb[0].mxu0
        %v2800 = vadd.f32 0.0, %v2799
        %v2801 = vpop.f32.mrb[0].mxu0
        %v2802 = vadd.f32 0.0, %v2801
        %2803 = vmatprep.mubr.bf16.mxu0 0
        %2804 = vmatmul.mubr.bf16.gmra.mrb[0].mxu0 %v1317
        %v2805 = vpop.f32.mrb[0].mxu0
        %v2806 = vadd.f32 0.0, %v2805
        %v2807 = vpop.f32.mrb[0].mxu0
        %v2808 = vadd.f32 0.0, %v2807
        %v2809 = vpop.f32.mrb[0].mxu0
        %v2810 = vadd.f32 0.0, %v2809
        %v2811 = vpop.f32.mrb[0].mxu0
        %v2812 = vadd.f32 0.0, %v2811
        %2813 = vmatprep.mubr.bf16.mxu0 0
        %2814 = vmatmul.mubr.bf16.gmra.mrb[0].mxu0 %v1318
        %v2815 = vpop.f32.mrb[0].mxu0
        %v2816 = vadd.f32 0.0, %v2815
        %v2817 = vpop.f32.mrb[0].mxu0
        %v2818 = vadd.f32 0.0, %v2817
        %v2819 = vpop.f32.mrb[0].mxu0
        %v2820 = vadd.f32 0.0, %v2819
        %v2821 = vpop.f32.mrb[0].mxu0
        %v2822 = vadd.f32 0.0, %v2821
        %2823 = vmatprep.mubr.bf16.mxu0 0
        %2824 = vmatmul.mubr.bf16.gmra.mrb[0].mxu0 %v1319
        %v2825 = vpop.f32.mrb[0].mxu0
        %v2826 = vadd.f32 0.0, %v2825
        %v2827 = vpop.f32.mrb[0].mxu0
        %v2828 = vadd.f32 0.0, %v2827
        %v2829 = vpop.f32.mrb[0].mxu0
        %v2830 = vadd.f32 0.0, %v2829
        %v2831 = vpop.f32.mrb[0].mxu0
        %v2832 = vadd.f32 0.0, %v2831
        %2833 = vmatprep.mubr.bf16.mxu0 0
        %2834 = vmatmul.mubr.bf16.gmra.mrb[0].mxu0 %v1320
        %v2835 = vpop.f32.mrb[0].mxu0
        %v2836 = vadd.f32 0.0, %v2835
        %v2837 = vpop.f32.mrb[0].mxu0
        %v2838 = vadd.f32 0.0, %v2837
        %v2839 = vpop.f32.mrb[0].mxu0
        %v2840 = vadd.f32 0.0, %v2839
        %v2841 = vpop.f32.mrb[0].mxu0
        %v2842 = vadd.f32 0.0, %v2841
        %2843 = vmatprep.mubr.bf16.mxu0 0
        %2844 = vmatmul.mubr.bf16.gmra.mrb[0].mxu0 %v1321
        %v2845 = vpop.f32.mrb[0].mxu0
        %v2846 = vadd.f32 0.0, %v2845
        %v2847 = vpop.f32.mrb[0].mxu0
        %v2848 = vadd.f32 0.0, %v2847
        %v2849 = vpop.f32.mrb[0].mxu0
        %v2850 = vadd.f32 0.0, %v2849
        %v2851 = vpop.f32.mrb[0].mxu0
        %v2852 = vadd.f32 0.0, %v2851
        %2853 = vmatprep.mubr.bf16.mxu0 0
        %2854 = vmatmul.mubr.bf16.gmra.mrb[0].mxu0 %v1322
        %v2855 = vpop.f32.mrb[0].mxu0
        %v2856 = vadd.f32 0.0, %v2855
        %v2857 = vpop.f32.mrb[0].mxu0
        %v2858 = vadd.f32 0.0, %v2857
        %v2859 = vpop.f32.mrb[0].mxu0
        %v2860 = vadd.f32 0.0, %v2859
        %v2861 = vpop.f32.mrb[0].mxu0
        %v2862 = vadd.f32 0.0, %v2861
        %2863 = vmatprep.mubr.bf16.mxu0 0
        %2864 = vmatmul.mubr.bf16.gmra.mrb[0].mxu0 %v1323
        %v2865 = vpop.f32.mrb[0].mxu0
        %v2866 = vadd.f32 0.0, %v2865
        %v2867 = vpop.f32.mrb[0].mxu0
        %v2868 = vadd.f32 0.0, %v2867
        %v2869 = vpop.f32.mrb[0].mxu0
        %v2870 = vadd.f32 0.0, %v2869
        %v2871 = vpop.f32.mrb[0].mxu0
        %v2872 = vadd.f32 0.0, %v2871
        %2873 = vmatprep.mubr.bf16.mxu0 0
        %2874 = vmatmul.mubr.bf16.gmra.mrb[0].mxu0 %v1324
        %v2875 = vpop.f32.mrb[0].mxu0
        %v2876 = vadd.f32 0.0, %v2875
        %v2877 = vpop.f32.mrb[0].mxu0
        %v2878 = vadd.f32 0.0, %v2877
        %v2879 = vpop.f32.mrb[0].mxu0
        %v2880 = vadd.f32 0.0, %v2879
        %v2881 = vpop.f32.mrb[0].mxu0
        %v2882 = vadd.f32 0.0, %v2881
        %2883 = vmatprep.mubr.bf16.mxu0 0
        %2884 = vmatmul.mubr.bf16.gmra.mrb[0].mxu0 %v1325
        %v2885 = vpop.f32.mrb[0].mxu0
        %v2886 = vadd.f32 0.0, %v2885
        %v2887 = vpop.f32.mrb[0].mxu0
        %v2888 = vadd.f32 0.0, %v2887
        %v2889 = vpop.f32.mrb[0].mxu0
        %v2890 = vadd.f32 0.0, %v2889
        %v2891 = vpop.f32.mrb[0].mxu0
        %v2892 = vadd.f32 0.0, %v2891
        %2893 = vmatprep.mubr.bf16.mxu0 0
        %2894 = vmatmul.mubr.bf16.gmra.mrb[0].mxu0 %v1326
        %v2895 = vpop.f32.mrb[0].mxu0
        %v2896 = vadd.f32 0.0, %v2895
        %v2897 = vpop.f32.mrb[0].mxu0
        %v2898 = vadd.f32 0.0, %v2897
        %v2899 = vpop.f32.mrb[0].mxu0
        %v2900 = vadd.f32 0.0, %v2899
        %v2901 = vpop.f32.mrb[0].mxu0
        %v2902 = vadd.f32 0.0, %v2901
        %2903 = vmatprep.mubr.bf16.mxu0 0
        %2904 = vmatmul.mubr.bf16.gmra.mrb[0].mxu0 %v1327
        %v2905 = vpop.f32.mrb[0].mxu0
        %v2906 = vadd.f32 0.0, %v2905
        %v2907 = vpop.f32.mrb[0].mxu0
        %v2908 = vadd.f32 0.0, %v2907
        %v2909 = vpop.f32.mrb[0].mxu0
        %v2910 = vadd.f32 0.0, %v2909
        %v2911 = vpop.f32.mrb[0].mxu0
        %v2912 = vadd.f32 0.0, %v2911
        %2913 = vmatprep.mubr.bf16.mxu0 0
        %2914 = vmatmul.mubr.bf16.gmra.mrb[0].mxu0 %v1328
        %v2915 = vpop.f32.mrb[0].mxu0
        %v2916 = vadd.f32 0.0, %v2915
        %v2917 = vpop.f32.mrb[0].mxu0
        %v2918 = vadd.f32 0.0, %v2917
        %v2919 = vpop.f32.mrb[0].mxu0
        %v2920 = vadd.f32 0.0, %v2919
        %v2921 = vpop.f32.mrb[0].mxu0
        %v2922 = vadd.f32 0.0, %v2921
        %2923 = vmatprep.mubr.bf16.mxu0 0
        %2924 = vmatmul.mubr.bf16.gmra.mrb[0].mxu0 %v1329
        %v2925 = vpop.f32.mrb[0].mxu0
        %v2926 = vadd.f32 0.0, %v2925
        %v2927 = vpop.f32.mrb[0].mxu0
        %v2928 = vadd.f32 0.0, %v2927
        %v2929 = vpop.f32.mrb[0].mxu0
        %v2930 = vadd.f32 0.0, %v2929
        %v2931 = vpop.f32.mrb[0].mxu0
        %v2932 = vadd.f32 0.0, %v2931
        %2933 = vmatprep.mubr.bf16.mxu0 0
        %2934 = vmatmul.mubr.bf16.gmra.mrb[0].mxu0 %v1330
        %v2935 = vpop.f32.mrb[0].mxu0
        %v2936 = vadd.f32 0.0, %v2935
        %v2937 = vpop.f32.mrb[0].mxu0
        %v2938 = vadd.f32 0.0, %v2937
        %v2939 = vpop.f32.mrb[0].mxu0
        %v2940 = vadd.f32 0.0, %v2939
        %v2941 = vpop.f32.mrb[0].mxu0
        %v2942 = vadd.f32 0.0, %v2941
        %2943 = vmatprep.mubr.bf16.mxu0 0
        %2944 = vmatmul.mubr.bf16.gmra.mrb[0].mxu0 %v1331
        %v2945 = vpop.f32.mrb[0].mxu0
        %v2946 = vadd.f32 0.0, %v2945
        %v2947 = vpop.f32.mrb[0].mxu0
        %v2948 = vadd.f32 0.0, %v2947
        %v2949 = vpop.f32.mrb[0].mxu0
        %v2950 = vadd.f32 0.0, %v2949
        %v2951 = vpop.f32.mrb[0].mxu0
        %v2952 = vadd.f32 0.0, %v2951
        %2953 = vmatprep.mubr.bf16.mxu0 0
        %2954 = vmatmul.mubr.bf16.gmra.mrb[0].mxu0 %v1332
        %v2955 = vpop.f32.mrb[0].mxu0
        %v2956 = vadd.f32 0.0, %v2955
        %v2957 = vpop.f32.mrb[0].mxu0
        %v2958 = vadd.f32 0.0, %v2957
        %v2959 = vpop.f32.mrb[0].mxu0
        %v2960 = vadd.f32 0.0, %v2959
        %v2961 = vpop.f32.mrb[0].mxu0
        %v2962 = vadd.f32 0.0, %v2961
        %2963 = vmatprep.mubr.bf16.mxu0 0
        %2964 = vmatmul.mubr.bf16.gmra.mrb[0].mxu0 %v1333
        %v2965 = vpop.f32.mrb[0].mxu0
        %v2966 = vadd.f32 0.0, %v2965
        %v2967 = vpop.f32.mrb[0].mxu0
        %v2968 = vadd.f32 0.0, %v2967
        %v2969 = vpop.f32.mrb[0].mxu0
        %v2970 = vadd.f32 0.0, %v2969
        %v2971 = vpop.f32.mrb[0].mxu0
        %v2972 = vadd.f32 0.0, %v2971
        %2973 = vmatprep.mubr.bf16.mxu0 0
        %2974 = vmatmul.mubr.bf16.gmra.mrb[0].mxu0 %v1334
        %v2975 = vpop.f32.mrb[0].mxu0
        %v2976 = vadd.f32 0.0, %v2975
        %v2977 = vpop.f32.mrb[0].mxu0
        %v2978 = vadd.f32 0.0, %v2977
        %v2979 = vpop.f32.mrb[0].mxu0
        %v2980 = vadd.f32 0.0, %v2979
        %v2981 = vpop.f32.mrb[0].mxu0
        %v2982 = vadd.f32 0.0, %v2981
        %2983 = vmatprep.mubr.bf16.mxu0 0
        %2984 = vmatmul.mubr.bf16.gmra.mrb[0].mxu0 %v1335
        %v2985 = vpop.f32.mrb[0].mxu0
        %v2986 = vadd.f32 0.0, %v2985
        %v2987 = vpop.f32.mrb[0].mxu0
        %v2988 = vadd.f32 0.0, %v2987
        %v2989 = vpop.f32.mrb[0].mxu0
        %v2990 = vadd.f32 0.0, %v2989
        %v2991 = vpop.f32.mrb[0].mxu0
        %v2992 = vadd.f32 0.0, %v2991
        %2993 = vmatprep.mubr.bf16.mxu0 0
        %2994 = vmatmul.mubr.bf16.gmra.mrb[0].mxu0 %v1336
        %v2995 = vpop.f32.mrb[0].mxu0
        %v2996 = vadd.f32 0.0, %v2995
        %v2997 = vpop.f32.mrb[0].mxu0
        %v2998 = vadd.f32 0.0, %v2997
        %v2999 = vpop.f32.mrb[0].mxu0
        %v3000 = vadd.f32 0.0, %v2999
        %v3001 = vpop.f32.mrb[0].mxu0
        %v3002 = vadd.f32 0.0, %v3001
        %3003 = vmatprep.mubr.bf16.mxu0 0
        %3004 = vmatmul.mubr.bf16.gmra.mrb[0].mxu0 %v1337
        %v3005 = vpop.f32.mrb[0].mxu0
        %v3006 = vadd.f32 0.0, %v3005
        %v3007 = vpop.f32.mrb[0].mxu0
        %v3008 = vadd.f32 0.0, %v3007
        %v3009 = vpop.f32.mrb[0].mxu0
        %v3010 = vadd.f32 0.0, %v3009
        %v3011 = vpop.f32.mrb[0].mxu0
        %v3012 = vadd.f32 0.0, %v3011
        %3013 = vmatprep.mubr.bf16.mxu0 0
        %3014 = vmatmul.mubr.bf16.gmra.mrb[0].mxu0 %v1338
        %v3015 = vpop.f32.mrb[0].mxu0
        %v3016 = vadd.f32 0.0, %v3015
        %v3017 = vpop.f32.mrb[0].mxu0
        %v3018 = vadd.f32 0.0, %v3017
        %v3019 = vpop.f32.mrb[0].mxu0
        %v3020 = vadd.f32 0.0, %v3019
        %v3021 = vpop.f32.mrb[0].mxu0
        %v3022 = vadd.f32 0.0, %v3021
        %3023 = vmatprep.mubr.bf16.mxu0 0
        %3024 = vmatmul.mubr.bf16.gmra.mrb[0].mxu0 %v1339
        %v3025 = vpop.f32.mrb[0].mxu0
        %v3026 = vadd.f32 0.0, %v3025
        %v3027 = vpop.f32.mrb[0].mxu0
        %v3028 = vadd.f32 0.0, %v3027
        %v3029 = vpop.f32.mrb[0].mxu0
        %v3030 = vadd.f32 0.0, %v3029
        %v3031 = vpop.f32.mrb[0].mxu0
        %v3032 = vadd.f32 0.0, %v3031
        %3033 = vmatprep.mubr.bf16.mxu0 0
        %3034 = vmatmul.mubr.bf16.gmra.mrb[0].mxu0 %v1340
        %v3035 = vpop.f32.mrb[0].mxu0
        %v3036 = vadd.f32 0.0, %v3035
        %v3037 = vpop.f32.mrb[0].mxu0
        %v3038 = vadd.f32 0.0, %v3037
        %v3039 = vpop.f32.mrb[0].mxu0
        %v3040 = vadd.f32 0.0, %v3039
        %v3041 = vpop.f32.mrb[0].mxu0
        %v3042 = vadd.f32 0.0, %v3041
        %3043 = vmatprep.mubr.bf16.mxu0 0
        %3044 = vmatmul.mubr.bf16.gmra.mrb[0].mxu0 %v1341
        %v3045 = vpop.f32.mrb[0].mxu0
        %v3046 = vadd.f32 0.0, %v3045
        %v3047 = vpop.f32.mrb[0].mxu0
        %v3048 = vadd.f32 0.0, %v3047
        %v3049 = vpop.f32.mrb[0].mxu0
        %v3050 = vadd.f32 0.0, %v3049
        %v3051 = vpop.f32.mrb[0].mxu0
        %v3052 = vadd.f32 0.0, %v3051
        %3053 = vmatprep.mubr.bf16.mxu0 0
        %3054 = vmatmul.mubr.bf16.gmra.mrb[0].mxu0 %v1342
        %v3055 = vpop.f32.mrb[0].mxu0
        %v3056 = vadd.f32 0.0, %v3055
        %v3057 = vpop.f32.mrb[0].mxu0
        %v3058 = vadd.f32 0.0, %v3057
        %v3059 = vpop.f32.mrb[0].mxu0
        %v3060 = vadd.f32 0.0, %v3059
        %v3061 = vpop.f32.mrb[0].mxu0
        %v3062 = vadd.f32 0.0, %v3061
        %3063 = vmatprep.mubr.bf16.mxu0 0
        %3064 = vmatmul.mubr.bf16.gmra.mrb[0].mxu0 %v1343
        %v3065 = vpop.f32.mrb[0].mxu0
        %v3066 = vadd.f32 0.0, %v3065
        %v3067 = vpop.f32.mrb[0].mxu0
        %v3068 = vadd.f32 0.0, %v3067
        %v3069 = vpop.f32.mrb[0].mxu0
        %v3070 = vadd.f32 0.0, %v3069
        %v3071 = vpop.f32.mrb[0].mxu0
        %v3072 = vadd.f32 0.0, %v3071
        %3073 = vdwg.mxu0
        %3074 = vmatprep.subr.bf16.mxu0 %v1605
        %3075 = vmatpush1.bf16.msra.mxu0 %v1604
        %3076 = vmatprep.subr.bf16.mxu0 %v1613
        %3077 = vmatpush1.bf16.msra.mxu0 %v1612
        %3078 = vmatprep.subr.bf16.mxu0 %v1621
        %3079 = vmatpush1.bf16.msra.mxu0 %v1620
        %3080 = vmatprep.subr.bf16.mxu0 %v1629
        %3081 = vmatpush1.bf16.msra.mxu0 %v1628
        %3082 = vmatprep.subr.bf16.mxu0 %v1637
        %3083 = vmatpush1.bf16.msra.mxu0 %v1636
        %3084 = vmatprep.subr.bf16.mxu0 %v1645
        %3085 = vmatpush1.bf16.msra.mxu0 %v1644
        %3086 = vmatprep.subr.bf16.mxu0 %v1653
        %3087 = vmatpush1.bf16.msra.mxu0 %v1652
        %3088 = vmatprep.subr.bf16.mxu0 %v1661
        %3089 = vmatpush1.bf16.msra.mxu0 %v1660
        %3090 = vmatprep.subr.bf16.mxu0 0
        %3091 = vmatpush1.bf16.msra.mxu0 0
        %3092 = vmatprep.subr.bf16.mxu0 0
        %3093 = vmatpush1.bf16.msra.mxu0 0
        %3094 = vmatprep.subr.bf16.mxu0 0
        %3095 = vmatpush1.bf16.msra.mxu0 0
        %3096 = vmatprep.subr.bf16.mxu0 0
        %3097 = vmatpush1.bf16.msra.mxu0 0
        %3098 = vmatprep.subr.bf16.mxu0 0
        %3099 = vmatpush1.bf16.msra.mxu0 0
        %3100 = vmatprep.subr.bf16.mxu0 0
        %3101 = vmatpush1.bf16.msra.mxu0 0
        %3102 = vmatprep.subr.bf16.mxu0 0
        %3103 = vmatpush1.bf16.msra.mxu0 0
        %3104 = vmatprep.subr.bf16.mxu0 0
        %3105 = vmatpush1.bf16.msra.mxu0 0
        %3106 = vmatprep.mubr.bf16.mxu0 0
        %3107 = vmatmul.mubr.bf16.gmra.mrb[0].mxu0 %v1280
        %v3108 = vpop.f32.mrb[0].mxu0
        %v3109 = vadd.f32 0.0, %v3108
        %v3110 = vpop.f32.mrb[0].mxu0
        %v3111 = vadd.f32 0.0, %v3110
        %v3112 = vpop.f32.mrb[0].mxu0
        %v3113 = vadd.f32 0.0, %v3112
        %v3114 = vpop.f32.mrb[0].mxu0
        %v3115 = vadd.f32 0.0, %v3114
        %3116 = vmatprep.mubr.bf16.mxu0 0
        %3117 = vmatmul.mubr.bf16.gmra.mrb[0].mxu0 %v1281
        %v3118 = vpop.f32.mrb[0].mxu0
        %v3119 = vadd.f32 0.0, %v3118
        %v3120 = vpop.f32.mrb[0].mxu0
        %v3121 = vadd.f32 0.0, %v3120
        %v3122 = vpop.f32.mrb[0].mxu0
        %v3123 = vadd.f32 0.0, %v3122
        %v3124 = vpop.f32.mrb[0].mxu0
        %v3125 = vadd.f32 0.0, %v3124
        %3126 = vmatprep.mubr.bf16.mxu0 0
        %3127 = vmatmul.mubr.bf16.gmra.mrb[0].mxu0 %v1282
        %v3128 = vpop.f32.mrb[0].mxu0
        %v3129 = vadd.f32 0.0, %v3128
        %v3130 = vpop.f32.mrb[0].mxu0
        %v3131 = vadd.f32 0.0, %v3130
        %v3132 = vpop.f32.mrb[0].mxu0
        %v3133 = vadd.f32 0.0, %v3132
        %v3134 = vpop.f32.mrb[0].mxu0
        %v3135 = vadd.f32 0.0, %v3134
        %3136 = vmatprep.mubr.bf16.mxu0 0
        %3137 = vmatmul.mubr.bf16.gmra.mrb[0].mxu0 %v1283
        %v3138 = vpop.f32.mrb[0].mxu0
        %v3139 = vadd.f32 0.0, %v3138
        %v3140 = vpop.f32.mrb[0].mxu0
        %v3141 = vadd.f32 0.0, %v3140
        %v3142 = vpop.f32.mrb[0].mxu0
        %v3143 = vadd.f32 0.0, %v3142
        %v3144 = vpop.f32.mrb[0].mxu0
        %v3145 = vadd.f32 0.0, %v3144
        %3146 = vmatprep.mubr.bf16.mxu0 0
        %3147 = vmatmul.mubr.bf16.gmra.mrb[0].mxu0 %v1284
        %v3148 = vpop.f32.mrb[0].mxu0
        %v3149 = vadd.f32 0.0, %v3148
        %v3150 = vpop.f32.mrb[0].mxu0
        %v3151 = vadd.f32 0.0, %v3150
        %v3152 = vpop.f32.mrb[0].mxu0
        %v3153 = vadd.f32 0.0, %v3152
        %v3154 = vpop.f32.mrb[0].mxu0
        %v3155 = vadd.f32 0.0, %v3154
        %3156 = vmatprep.mubr.bf16.mxu0 0
        %3157 = vmatmul.mubr.bf16.gmra.mrb[0].mxu0 %v1285
        %v3158 = vpop.f32.mrb[0].mxu0
        %v3159 = vadd.f32 0.0, %v3158
        %v3160 = vpop.f32.mrb[0].mxu0
        %v3161 = vadd.f32 0.0, %v3160
        %v3162 = vpop.f32.mrb[0].mxu0
        %v3163 = vadd.f32 0.0, %v3162
        %v3164 = vpop.f32.mrb[0].mxu0
        %v3165 = vadd.f32 0.0, %v3164
        %3166 = vmatprep.mubr.bf16.mxu0 0
        %3167 = vmatmul.mubr.bf16.gmra.mrb[0].mxu0 %v1286
        %v3168 = vpop.f32.mrb[0].mxu0
        %v3169 = vadd.f32 0.0, %v3168
        %v3170 = vpop.f32.mrb[0].mxu0
        %v3171 = vadd.f32 0.0, %v3170
        %v3172 = vpop.f32.mrb[0].mxu0
        %v3173 = vadd.f32 0.0, %v3172
        %v3174 = vpop.f32.mrb[0].mxu0
        %v3175 = vadd.f32 0.0, %v3174
        %3176 = vmatprep.mubr.bf16.mxu0 0
        %3177 = vmatmul.mubr.bf16.gmra.mrb[0].mxu0 %v1287
        %v3178 = vpop.f32.mrb[0].mxu0
        %v3179 = vadd.f32 0.0, %v3178
        %v3180 = vpop.f32.mrb[0].mxu0
        %v3181 = vadd.f32 0.0, %v3180
        %v3182 = vpop.f32.mrb[0].mxu0
        %v3183 = vadd.f32 0.0, %v3182
        %v3184 = vpop.f32.mrb[0].mxu0
        %v3185 = vadd.f32 0.0, %v3184
        %3186 = vmatprep.mubr.bf16.mxu0 0
        %3187 = vmatmul.mubr.bf16.gmra.mrb[0].mxu0 %v1288
        %v3188 = vpop.f32.mrb[0].mxu0
        %v3189 = vadd.f32 0.0, %v3188
        %v3190 = vpop.f32.mrb[0].mxu0
        %v3191 = vadd.f32 0.0, %v3190
        %v3192 = vpop.f32.mrb[0].mxu0
        %v3193 = vadd.f32 0.0, %v3192
        %v3194 = vpop.f32.mrb[0].mxu0
        %v3195 = vadd.f32 0.0, %v3194
        %3196 = vmatprep.mubr.bf16.mxu0 0
        %3197 = vmatmul.mubr.bf16.gmra.mrb[0].mxu0 %v1289
        %v3198 = vpop.f32.mrb[0].mxu0
        %v3199 = vadd.f32 0.0, %v3198
        %v3200 = vpop.f32.mrb[0].mxu0
        %v3201 = vadd.f32 0.0, %v3200
        %v3202 = vpop.f32.mrb[0].mxu0
        %v3203 = vadd.f32 0.0, %v3202
        %v3204 = vpop.f32.mrb[0].mxu0
        %v3205 = vadd.f32 0.0, %v3204
        %3206 = vmatprep.mubr.bf16.mxu0 0
        %3207 = vmatmul.mubr.bf16.gmra.mrb[0].mxu0 %v1290
        %v3208 = vpop.f32.mrb[0].mxu0
        %v3209 = vadd.f32 0.0, %v3208
        %v3210 = vpop.f32.mrb[0].mxu0
        %v3211 = vadd.f32 0.0, %v3210
        %v3212 = vpop.f32.mrb[0].mxu0
        %v3213 = vadd.f32 0.0, %v3212
        %v3214 = vpop.f32.mrb[0].mxu0
        %v3215 = vadd.f32 0.0, %v3214
        %3216 = vmatprep.mubr.bf16.mxu0 0
        %3217 = vmatmul.mubr.bf16.gmra.mrb[0].mxu0 %v1291
        %v3218 = vpop.f32.mrb[0].mxu0
        %v3219 = vadd.f32 0.0, %v3218
        %v3220 = vpop.f32.mrb[0].mxu0
        %v3221 = vadd.f32 0.0, %v3220
        %v3222 = vpop.f32.mrb[0].mxu0
        %v3223 = vadd.f32 0.0, %v3222
        %v3224 = vpop.f32.mrb[0].mxu0
        %v3225 = vadd.f32 0.0, %v3224
        %3226 = vmatprep.mubr.bf16.mxu0 0
        %3227 = vmatmul.mubr.bf16.gmra.mrb[0].mxu0 %v1292
        %v3228 = vpop.f32.mrb[0].mxu0
        %v3229 = vadd.f32 0.0, %v3228
        %v3230 = vpop.f32.mrb[0].mxu0
        %v3231 = vadd.f32 0.0, %v3230
        %v3232 = vpop.f32.mrb[0].mxu0
        %v3233 = vadd.f32 0.0, %v3232
        %v3234 = vpop.f32.mrb[0].mxu0
        %v3235 = vadd.f32 0.0, %v3234
        %3236 = vmatprep.mubr.bf16.mxu0 0
        %3237 = vmatmul.mubr.bf16.gmra.mrb[0].mxu0 %v1293
        %v3238 = vpop.f32.mrb[0].mxu0
        %v3239 = vadd.f32 0.0, %v3238
        %v3240 = vpop.f32.mrb[0].mxu0
        %v3241 = vadd.f32 0.0, %v3240
        %v3242 = vpop.f32.mrb[0].mxu0
        %v3243 = vadd.f32 0.0, %v3242
        %v3244 = vpop.f32.mrb[0].mxu0
        %v3245 = vadd.f32 0.0, %v3244
        %3246 = vmatprep.mubr.bf16.mxu0 0
        %3247 = vmatmul.mubr.bf16.gmra.mrb[0].mxu0 %v1294
        %v3248 = vpop.f32.mrb[0].mxu0
        %v3249 = vadd.f32 0.0, %v3248
        %v3250 = vpop.f32.mrb[0].mxu0
        %v3251 = vadd.f32 0.0, %v3250
        %v3252 = vpop.f32.mrb[0].mxu0
        %v3253 = vadd.f32 0.0, %v3252
        %v3254 = vpop.f32.mrb[0].mxu0
        %v3255 = vadd.f32 0.0, %v3254
        %3256 = vmatprep.mubr.bf16.mxu0 0
        %3257 = vmatmul.mubr.bf16.gmra.mrb[0].mxu0 %v1295
        %v3258 = vpop.f32.mrb[0].mxu0
        %v3259 = vadd.f32 0.0, %v3258
        %v3260 = vpop.f32.mrb[0].mxu0
        %v3261 = vadd.f32 0.0, %v3260
        %v3262 = vpop.f32.mrb[0].mxu0
        %v3263 = vadd.f32 0.0, %v3262
        %v3264 = vpop.f32.mrb[0].mxu0
        %v3265 = vadd.f32 0.0, %v3264
        %3266 = vmatprep.mubr.bf16.mxu0 0
        %3267 = vmatmul.mubr.bf16.gmra.mrb[0].mxu0 %v1296
        %v3268 = vpop.f32.mrb[0].mxu0
        %v3269 = vadd.f32 0.0, %v3268
        %v3270 = vpop.f32.mrb[0].mxu0
        %v3271 = vadd.f32 0.0, %v3270
        %v3272 = vpop.f32.mrb[0].mxu0
        %v3273 = vadd.f32 0.0, %v3272
        %v3274 = vpop.f32.mrb[0].mxu0
        %v3275 = vadd.f32 0.0, %v3274
        %3276 = vmatprep.mubr.bf16.mxu0 0
        %3277 = vmatmul.mubr.bf16.gmra.mrb[0].mxu0 %v1297
        %v3278 = vpop.f32.mrb[0].mxu0
        %v3279 = vadd.f32 0.0, %v3278
        %v3280 = vpop.f32.mrb[0].mxu0
        %v3281 = vadd.f32 0.0, %v3280
        %v3282 = vpop.f32.mrb[0].mxu0
        %v3283 = vadd.f32 0.0, %v3282
        %v3284 = vpop.f32.mrb[0].mxu0
        %v3285 = vadd.f32 0.0, %v3284
        %3286 = vmatprep.mubr.bf16.mxu0 0
        %3287 = vmatmul.mubr.bf16.gmra.mrb[0].mxu0 %v1298
        %v3288 = vpop.f32.mrb[0].mxu0
        %v3289 = vadd.f32 0.0, %v3288
        %v3290 = vpop.f32.mrb[0].mxu0
        %v3291 = vadd.f32 0.0, %v3290
        %v3292 = vpop.f32.mrb[0].mxu0
        %v3293 = vadd.f32 0.0, %v3292
        %v3294 = vpop.f32.mrb[0].mxu0
        %v3295 = vadd.f32 0.0, %v3294
        %3296 = vmatprep.mubr.bf16.mxu0 0
        %3297 = vmatmul.mubr.bf16.gmra.mrb[0].mxu0 %v1299
        %v3298 = vpop.f32.mrb[0].mxu0
        %v3299 = vadd.f32 0.0, %v3298
        %v3300 = vpop.f32.mrb[0].mxu0
        %v3301 = vadd.f32 0.0, %v3300
        %v3302 = vpop.f32.mrb[0].mxu0
        %v3303 = vadd.f32 0.0, %v3302
        %v3304 = vpop.f32.mrb[0].mxu0
        %v3305 = vadd.f32 0.0, %v3304
        %3306 = vmatprep.mubr.bf16.mxu0 0
        %3307 = vmatmul.mubr.bf16.gmra.mrb[0].mxu0 %v1300
        %v3308 = vpop.f32.mrb[0].mxu0
        %v3309 = vadd.f32 0.0, %v3308
        %v3310 = vpop.f32.mrb[0].mxu0
        %v3311 = vadd.f32 0.0, %v3310
        %v3312 = vpop.f32.mrb[0].mxu0
        %v3313 = vadd.f32 0.0, %v3312
        %v3314 = vpop.f32.mrb[0].mxu0
        %v3315 = vadd.f32 0.0, %v3314
        %3316 = vmatprep.mubr.bf16.mxu0 0
        %3317 = vmatmul.mubr.bf16.gmra.mrb[0].mxu0 %v1301
        %v3318 = vpop.f32.mrb[0].mxu0
        %v3319 = vadd.f32 0.0, %v3318
        %v3320 = vpop.f32.mrb[0].mxu0
        %v3321 = vadd.f32 0.0, %v3320
        %v3322 = vpop.f32.mrb[0].mxu0
        %v3323 = vadd.f32 0.0, %v3322
        %v3324 = vpop.f32.mrb[0].mxu0
        %v3325 = vadd.f32 0.0, %v3324
        %3326 = vmatprep.mubr.bf16.mxu0 0
        %3327 = vmatmul.mubr.bf16.gmra.mrb[0].mxu0 %v1302
        %v3328 = vpop.f32.mrb[0].mxu0
        %v3329 = vadd.f32 0.0, %v3328
        %v3330 = vpop.f32.mrb[0].mxu0
        %v3331 = vadd.f32 0.0, %v3330
        %v3332 = vpop.f32.mrb[0].mxu0
        %v3333 = vadd.f32 0.0, %v3332
        %v3334 = vpop.f32.mrb[0].mxu0
        %v3335 = vadd.f32 0.0, %v3334
        %3336 = vmatprep.mubr.bf16.mxu0 0
        %3337 = vmatmul.mubr.bf16.gmra.mrb[0].mxu0 %v1303
        %v3338 = vpop.f32.mrb[0].mxu0
        %v3339 = vadd.f32 0.0, %v3338
        %v3340 = vpop.f32.mrb[0].mxu0
        %v3341 = vadd.f32 0.0, %v3340
        %v3342 = vpop.f32.mrb[0].mxu0
        %v3343 = vadd.f32 0.0, %v3342
        %v3344 = vpop.f32.mrb[0].mxu0
        %v3345 = vadd.f32 0.0, %v3344
        %3346 = vmatprep.mubr.bf16.mxu0 0
        %3347 = vmatmul.mubr.bf16.gmra.mrb[0].mxu0 %v1304
        %v3348 = vpop.f32.mrb[0].mxu0
        %v3349 = vadd.f32 0.0, %v3348
        %v3350 = vpop.f32.mrb[0].mxu0
        %v3351 = vadd.f32 0.0, %v3350
        %v3352 = vpop.f32.mrb[0].mxu0
        %v3353 = vadd.f32 0.0, %v3352
        %v3354 = vpop.f32.mrb[0].mxu0
        %v3355 = vadd.f32 0.0, %v3354
        %3356 = vmatprep.mubr.bf16.mxu0 0
        %3357 = vmatmul.mubr.bf16.gmra.mrb[0].mxu0 %v1305
        %v3358 = vpop.f32.mrb[0].mxu0
        %v3359 = vadd.f32 0.0, %v3358
        %v3360 = vpop.f32.mrb[0].mxu0
        %v3361 = vadd.f32 0.0, %v3360
        %v3362 = vpop.f32.mrb[0].mxu0
        %v3363 = vadd.f32 0.0, %v3362
        %v3364 = vpop.f32.mrb[0].mxu0
        %v3365 = vadd.f32 0.0, %v3364
        %3366 = vmatprep.mubr.bf16.mxu0 0
        %3367 = vmatmul.mubr.bf16.gmra.mrb[0].mxu0 %v1306
        %v3368 = vpop.f32.mrb[0].mxu0
        %v3369 = vadd.f32 0.0, %v3368
        %v3370 = vpop.f32.mrb[0].mxu0
        %v3371 = vadd.f32 0.0, %v3370
        %v3372 = vpop.f32.mrb[0].mxu0
        %v3373 = vadd.f32 0.0, %v3372
        %v3374 = vpop.f32.mrb[0].mxu0
        %v3375 = vadd.f32 0.0, %v3374
        %3376 = vmatprep.mubr.bf16.mxu0 0
        %3377 = vmatmul.mubr.bf16.gmra.mrb[0].mxu0 %v1307
        %v3378 = vpop.f32.mrb[0].mxu0
        %v3379 = vadd.f32 0.0, %v3378
        %v3380 = vpop.f32.mrb[0].mxu0
        %v3381 = vadd.f32 0.0, %v3380
        %v3382 = vpop.f32.mrb[0].mxu0
        %v3383 = vadd.f32 0.0, %v3382
        %v3384 = vpop.f32.mrb[0].mxu0
        %v3385 = vadd.f32 0.0, %v3384
        %3386 = vmatprep.mubr.bf16.mxu0 0
        %3387 = vmatmul.mubr.bf16.gmra.mrb[0].mxu0 %v1308
        %v3388 = vpop.f32.mrb[0].mxu0
        %v3389 = vadd.f32 0.0, %v3388
        %v3390 = vpop.f32.mrb[0].mxu0
        %v3391 = vadd.f32 0.0, %v3390
        %v3392 = vpop.f32.mrb[0].mxu0
        %v3393 = vadd.f32 0.0, %v3392
        %v3394 = vpop.f32.mrb[0].mxu0
        %v3395 = vadd.f32 0.0, %v3394
        %3396 = vmatprep.mubr.bf16.mxu0 0
        %3397 = vmatmul.mubr.bf16.gmra.mrb[0].mxu0 %v1309
        %v3398 = vpop.f32.mrb[0].mxu0
        %v3399 = vadd.f32 0.0, %v3398
        %v3400 = vpop.f32.mrb[0].mxu0
        %v3401 = vadd.f32 0.0, %v3400
        %v3402 = vpop.f32.mrb[0].mxu0
        %v3403 = vadd.f32 0.0, %v3402
        %v3404 = vpop.f32.mrb[0].mxu0
        %v3405 = vadd.f32 0.0, %v3404
        %3406 = vmatprep.mubr.bf16.mxu0 0
        %3407 = vmatmul.mubr.bf16.gmra.mrb[0].mxu0 %v1310
        %v3408 = vpop.f32.mrb[0].mxu0
        %v3409 = vadd.f32 0.0, %v3408
        %v3410 = vpop.f32.mrb[0].mxu0
        %v3411 = vadd.f32 0.0, %v3410
        %v3412 = vpop.f32.mrb[0].mxu0
        %v3413 = vadd.f32 0.0, %v3412
        %v3414 = vpop.f32.mrb[0].mxu0
        %v3415 = vadd.f32 0.0, %v3414
        %3416 = vmatprep.mubr.bf16.mxu0 0
        %3417 = vmatmul.mubr.bf16.gmra.mrb[0].mxu0 %v1311
        %v3418 = vpop.f32.mrb[0].mxu0
        %v3419 = vadd.f32 0.0, %v3418
        %v3420 = vpop.f32.mrb[0].mxu0
        %v3421 = vadd.f32 0.0, %v3420
        %v3422 = vpop.f32.mrb[0].mxu0
        %v3423 = vadd.f32 0.0, %v3422
        %v3424 = vpop.f32.mrb[0].mxu0
        %v3425 = vadd.f32 0.0, %v3424
        %3426 = vmatprep.mubr.bf16.mxu0 0
        %3427 = vmatmul.mubr.bf16.gmra.mrb[0].mxu0 %v1312
        %v3428 = vpop.f32.mrb[0].mxu0
        %v3429 = vadd.f32 0.0, %v3428
        %v3430 = vpop.f32.mrb[0].mxu0
        %v3431 = vadd.f32 0.0, %v3430
        %v3432 = vpop.f32.mrb[0].mxu0
        %v3433 = vadd.f32 0.0, %v3432
        %v3434 = vpop.f32.mrb[0].mxu0
        %v3435 = vadd.f32 0.0, %v3434
        %3436 = vmatprep.mubr.bf16.mxu0 0
        %3437 = vmatmul.mubr.bf16.gmra.mrb[0].mxu0 %v1313
        %v3438 = vpop.f32.mrb[0].mxu0
        %v3439 = vadd.f32 0.0, %v3438
        %v3440 = vpop.f32.mrb[0].mxu0
        %v3441 = vadd.f32 0.0, %v3440
        %v3442 = vpop.f32.mrb[0].mxu0
        %v3443 = vadd.f32 0.0, %v3442
        %v3444 = vpop.f32.mrb[0].mxu0
        %v3445 = vadd.f32 0.0, %v3444
        %3446 = vmatprep.mubr.bf16.mxu0 0
        %3447 = vmatmul.mubr.bf16.gmra.mrb[0].mxu0 %v1314
        %v3448 = vpop.f32.mrb[0].mxu0
        %v3449 = vadd.f32 0.0, %v3448
        %v3450 = vpop.f32.mrb[0].mxu0
        %v3451 = vadd.f32 0.0, %v3450
        %v3452 = vpop.f32.mrb[0].mxu0
        %v3453 = vadd.f32 0.0, %v3452
        %v3454 = vpop.f32.mrb[0].mxu0
        %v3455 = vadd.f32 0.0, %v3454
        %3456 = vmatprep.mubr.bf16.mxu0 0
        %3457 = vmatmul.mubr.bf16.gmra.mrb[0].mxu0 %v1315
        %v3458 = vpop.f32.mrb[0].mxu0
        %v3459 = vadd.f32 0.0, %v3458
        %v3460 = vpop.f32.mrb[0].mxu0
        %v3461 = vadd.f32 0.0, %v3460
        %v3462 = vpop.f32.mrb[0].mxu0
        %v3463 = vadd.f32 0.0, %v3462
        %v3464 = vpop.f32.mrb[0].mxu0
        %v3465 = vadd.f32 0.0, %v3464
        %3466 = vmatprep.mubr.bf16.mxu0 0
        %3467 = vmatmul.mubr.bf16.gmra.mrb[0].mxu0 %v1316
        %v3468 = vpop.f32.mrb[0].mxu0
        %v3469 = vadd.f32 0.0, %v3468
        %v3470 = vpop.f32.mrb[0].mxu0
        %v3471 = vadd.f32 0.0, %v3470
        %v3472 = vpop.f32.mrb[0].mxu0
        %v3473 = vadd.f32 0.0, %v3472
        %v3474 = vpop.f32.mrb[0].mxu0
        %v3475 = vadd.f32 0.0, %v3474
        %3476 = vmatprep.mubr.bf16.mxu0 0
        %3477 = vmatmul.mubr.bf16.gmra.mrb[0].mxu0 %v1317
        %v3478 = vpop.f32.mrb[0].mxu0
        %v3479 = vadd.f32 0.0, %v3478
        %v3480 = vpop.f32.mrb[0].mxu0
        %v3481 = vadd.f32 0.0, %v3480
        %v3482 = vpop.f32.mrb[0].mxu0
        %v3483 = vadd.f32 0.0, %v3482
        %v3484 = vpop.f32.mrb[0].mxu0
        %v3485 = vadd.f32 0.0, %v3484
        %3486 = vmatprep.mubr.bf16.mxu0 0
        %3487 = vmatmul.mubr.bf16.gmra.mrb[0].mxu0 %v1318
        %v3488 = vpop.f32.mrb[0].mxu0
        %v3489 = vadd.f32 0.0, %v3488
        %v3490 = vpop.f32.mrb[0].mxu0
        %v3491 = vadd.f32 0.0, %v3490
        %v3492 = vpop.f32.mrb[0].mxu0
        %v3493 = vadd.f32 0.0, %v3492
        %v3494 = vpop.f32.mrb[0].mxu0
        %v3495 = vadd.f32 0.0, %v3494
        %3496 = vmatprep.mubr.bf16.mxu0 0
        %3497 = vmatmul.mubr.bf16.gmra.mrb[0].mxu0 %v1319
        %v3498 = vpop.f32.mrb[0].mxu0
        %v3499 = vadd.f32 0.0, %v3498
        %v3500 = vpop.f32.mrb[0].mxu0
        %v3501 = vadd.f32 0.0, %v3500
        %v3502 = vpop.f32.mrb[0].mxu0
        %v3503 = vadd.f32 0.0, %v3502
        %v3504 = vpop.f32.mrb[0].mxu0
        %v3505 = vadd.f32 0.0, %v3504
        %3506 = vmatprep.mubr.bf16.mxu0 0
        %3507 = vmatmul.mubr.bf16.gmra.mrb[0].mxu0 %v1320
        %v3508 = vpop.f32.mrb[0].mxu0
        %v3509 = vadd.f32 0.0, %v3508
        %v3510 = vpop.f32.mrb[0].mxu0
        %v3511 = vadd.f32 0.0, %v3510
        %v3512 = vpop.f32.mrb[0].mxu0
        %v3513 = vadd.f32 0.0, %v3512
        %v3514 = vpop.f32.mrb[0].mxu0
        %v3515 = vadd.f32 0.0, %v3514
        %3516 = vmatprep.mubr.bf16.mxu0 0
        %3517 = vmatmul.mubr.bf16.gmra.mrb[0].mxu0 %v1321
        %v3518 = vpop.f32.mrb[0].mxu0
        %v3519 = vadd.f32 0.0, %v3518
        %v3520 = vpop.f32.mrb[0].mxu0
        %v3521 = vadd.f32 0.0, %v3520
        %v3522 = vpop.f32.mrb[0].mxu0
        %v3523 = vadd.f32 0.0, %v3522
        %v3524 = vpop.f32.mrb[0].mxu0
        %v3525 = vadd.f32 0.0, %v3524
        %3526 = vmatprep.mubr.bf16.mxu0 0
        %3527 = vmatmul.mubr.bf16.gmra.mrb[0].mxu0 %v1322
        %v3528 = vpop.f32.mrb[0].mxu0
        %v3529 = vadd.f32 0.0, %v3528
        %v3530 = vpop.f32.mrb[0].mxu0
        %v3531 = vadd.f32 0.0, %v3530
        %v3532 = vpop.f32.mrb[0].mxu0
        %v3533 = vadd.f32 0.0, %v3532
        %v3534 = vpop.f32.mrb[0].mxu0
        %v3535 = vadd.f32 0.0, %v3534
        %3536 = vmatprep.mubr.bf16.mxu0 0
        %3537 = vmatmul.mubr.bf16.gmra.mrb[0].mxu0 %v1323
        %v3538 = vpop.f32.mrb[0].mxu0
        %v3539 = vadd.f32 0.0, %v3538
        %v3540 = vpop.f32.mrb[0].mxu0
        %v3541 = vadd.f32 0.0, %v3540
        %v3542 = vpop.f32.mrb[0].mxu0
        %v3543 = vadd.f32 0.0, %v3542
        %v3544 = vpop.f32.mrb[0].mxu0
        %v3545 = vadd.f32 0.0, %v3544
        %3546 = vmatprep.mubr.bf16.mxu0 0
        %3547 = vmatmul.mubr.bf16.gmra.mrb[0].mxu0 %v1324
        %v3548 = vpop.f32.mrb[0].mxu0
        %v3549 = vadd.f32 0.0, %v3548
        %v3550 = vpop.f32.mrb[0].mxu0
        %v3551 = vadd.f32 0.0, %v3550
        %v3552 = vpop.f32.mrb[0].mxu0
        %v3553 = vadd.f32 0.0, %v3552
        %v3554 = vpop.f32.mrb[0].mxu0
        %v3555 = vadd.f32 0.0, %v3554
        %3556 = vmatprep.mubr.bf16.mxu0 0
        %3557 = vmatmul.mubr.bf16.gmra.mrb[0].mxu0 %v1325
        %v3558 = vpop.f32.mrb[0].mxu0
        %v3559 = vadd.f32 0.0, %v3558
        %v3560 = vpop.f32.mrb[0].mxu0
        %v3561 = vadd.f32 0.0, %v3560
        %v3562 = vpop.f32.mrb[0].mxu0
        %v3563 = vadd.f32 0.0, %v3562
        %v3564 = vpop.f32.mrb[0].mxu0
        %v3565 = vadd.f32 0.0, %v3564
        %3566 = vmatprep.mubr.bf16.mxu0 0
        %3567 = vmatmul.mubr.bf16.gmra.mrb[0].mxu0 %v1326
        %v3568 = vpop.f32.mrb[0].mxu0
        %v3569 = vadd.f32 0.0, %v3568
        %v3570 = vpop.f32.mrb[0].mxu0
        %v3571 = vadd.f32 0.0, %v3570
        %v3572 = vpop.f32.mrb[0].mxu0
        %v3573 = vadd.f32 0.0, %v3572
        %v3574 = vpop.f32.mrb[0].mxu0
        %v3575 = vadd.f32 0.0, %v3574
        %3576 = vmatprep.mubr.bf16.mxu0 0
        %3577 = vmatmul.mubr.bf16.gmra.mrb[0].mxu0 %v1327
        %v3578 = vpop.f32.mrb[0].mxu0
        %v3579 = vadd.f32 0.0, %v3578
        %v3580 = vpop.f32.mrb[0].mxu0
        %v3581 = vadd.f32 0.0, %v3580
        %v3582 = vpop.f32.mrb[0].mxu0
        %v3583 = vadd.f32 0.0, %v3582
        %v3584 = vpop.f32.mrb[0].mxu0
        %v3585 = vadd.f32 0.0, %v3584
        %3586 = vmatprep.mubr.bf16.mxu0 0
        %3587 = vmatmul.mubr.bf16.gmra.mrb[0].mxu0 %v1328
        %v3588 = vpop.f32.mrb[0].mxu0
        %v3589 = vadd.f32 0.0, %v3588
        %v3590 = vpop.f32.mrb[0].mxu0
        %v3591 = vadd.f32 0.0, %v3590
        %v3592 = vpop.f32.mrb[0].mxu0
        %v3593 = vadd.f32 0.0, %v3592
        %v3594 = vpop.f32.mrb[0].mxu0
        %v3595 = vadd.f32 0.0, %v3594
        %3596 = vmatprep.mubr.bf16.mxu0 0
        %3597 = vmatmul.mubr.bf16.gmra.mrb[0].mxu0 %v1329
        %v3598 = vpop.f32.mrb[0].mxu0
        %v3599 = vadd.f32 0.0, %v3598
        %v3600 = vpop.f32.mrb[0].mxu0
        %v3601 = vadd.f32 0.0, %v3600
        %v3602 = vpop.f32.mrb[0].mxu0
        %v3603 = vadd.f32 0.0, %v3602
        %v3604 = vpop.f32.mrb[0].mxu0
        %v3605 = vadd.f32 0.0, %v3604
        %3606 = vmatprep.mubr.bf16.mxu0 0
        %3607 = vmatmul.mubr.bf16.gmra.mrb[0].mxu0 %v1330
        %v3608 = vpop.f32.mrb[0].mxu0
        %v3609 = vadd.f32 0.0, %v3608
        %v3610 = vpop.f32.mrb[0].mxu0
        %v3611 = vadd.f32 0.0, %v3610
        %v3612 = vpop.f32.mrb[0].mxu0
        %v3613 = vadd.f32 0.0, %v3612
        %v3614 = vpop.f32.mrb[0].mxu0
        %v3615 = vadd.f32 0.0, %v3614
        %3616 = vmatprep.mubr.bf16.mxu0 0
        %3617 = vmatmul.mubr.bf16.gmra.mrb[0].mxu0 %v1331
        %v3618 = vpop.f32.mrb[0].mxu0
        %v3619 = vadd.f32 0.0, %v3618
        %v3620 = vpop.f32.mrb[0].mxu0
        %v3621 = vadd.f32 0.0, %v3620
        %v3622 = vpop.f32.mrb[0].mxu0
        %v3623 = vadd.f32 0.0, %v3622
        %v3624 = vpop.f32.mrb[0].mxu0
        %v3625 = vadd.f32 0.0, %v3624
        %3626 = vmatprep.mubr.bf16.mxu0 0
        %3627 = vmatmul.mubr.bf16.gmra.mrb[0].mxu0 %v1332
        %v3628 = vpop.f32.mrb[0].mxu0
        %v3629 = vadd.f32 0.0, %v3628
        %v3630 = vpop.f32.mrb[0].mxu0
        %v3631 = vadd.f32 0.0, %v3630
        %v3632 = vpop.f32.mrb[0].mxu0
        %v3633 = vadd.f32 0.0, %v3632
        %v3634 = vpop.f32.mrb[0].mxu0
        %v3635 = vadd.f32 0.0, %v3634
        %3636 = vmatprep.mubr.bf16.mxu0 0
        %3637 = vmatmul.mubr.bf16.gmra.mrb[0].mxu0 %v1333
        %v3638 = vpop.f32.mrb[0].mxu0
        %v3639 = vadd.f32 0.0, %v3638
        %v3640 = vpop.f32.mrb[0].mxu0
        %v3641 = vadd.f32 0.0, %v3640
        %v3642 = vpop.f32.mrb[0].mxu0
        %v3643 = vadd.f32 0.0, %v3642
        %v3644 = vpop.f32.mrb[0].mxu0
        %v3645 = vadd.f32 0.0, %v3644
        %3646 = vmatprep.mubr.bf16.mxu0 0
        %3647 = vmatmul.mubr.bf16.gmra.mrb[0].mxu0 %v1334
        %v3648 = vpop.f32.mrb[0].mxu0
        %v3649 = vadd.f32 0.0, %v3648
        %v3650 = vpop.f32.mrb[0].mxu0
        %v3651 = vadd.f32 0.0, %v3650
        %v3652 = vpop.f32.mrb[0].mxu0
        %v3653 = vadd.f32 0.0, %v3652
        %v3654 = vpop.f32.mrb[0].mxu0
        %v3655 = vadd.f32 0.0, %v3654
        %3656 = vmatprep.mubr.bf16.mxu0 0
        %3657 = vmatmul.mubr.bf16.gmra.mrb[0].mxu0 %v1335
        %v3658 = vpop.f32.mrb[0].mxu0
        %v3659 = vadd.f32 0.0, %v3658
        %v3660 = vpop.f32.mrb[0].mxu0
        %v3661 = vadd.f32 0.0, %v3660
        %v3662 = vpop.f32.mrb[0].mxu0
        %v3663 = vadd.f32 0.0, %v3662
        %v3664 = vpop.f32.mrb[0].mxu0
        %v3665 = vadd.f32 0.0, %v3664
        %3666 = vmatprep.mubr.bf16.mxu0 0
        %3667 = vmatmul.mubr.bf16.gmra.mrb[0].mxu0 %v1336
        %v3668 = vpop.f32.mrb[0].mxu0
        %v3669 = vadd.f32 0.0, %v3668
        %v3670 = vpop.f32.mrb[0].mxu0
        %v3671 = vadd.f32 0.0, %v3670
        %v3672 = vpop.f32.mrb[0].mxu0
        %v3673 = vadd.f32 0.0, %v3672
        %v3674 = vpop.f32.mrb[0].mxu0
        %v3675 = vadd.f32 0.0, %v3674
        %3676 = vmatprep.mubr.bf16.mxu0 0
        %3677 = vmatmul.mubr.bf16.gmra.mrb[0].mxu0 %v1337
        %v3678 = vpop.f32.mrb[0].mxu0
        %v3679 = vadd.f32 0.0, %v3678
        %v3680 = vpop.f32.mrb[0].mxu0
        %v3681 = vadd.f32 0.0, %v3680
        %v3682 = vpop.f32.mrb[0].mxu0
        %v3683 = vadd.f32 0.0, %v3682
        %v3684 = vpop.f32.mrb[0].mxu0
        %v3685 = vadd.f32 0.0, %v3684
        %3686 = vmatprep.mubr.bf16.mxu0 0
        %3687 = vmatmul.mubr.bf16.gmra.mrb[0].mxu0 %v1338
        %v3688 = vpop.f32.mrb[0].mxu0
        %v3689 = vadd.f32 0.0, %v3688
        %v3690 = vpop.f32.mrb[0].mxu0
        %v3691 = vadd.f32 0.0, %v3690
        %v3692 = vpop.f32.mrb[0].mxu0
        %v3693 = vadd.f32 0.0, %v3692
        %v3694 = vpop.f32.mrb[0].mxu0
        %v3695 = vadd.f32 0.0, %v3694
        %3696 = vmatprep.mubr.bf16.mxu0 0
        %3697 = vmatmul.mubr.bf16.gmra.mrb[0].mxu0 %v1339
        %v3698 = vpop.f32.mrb[0].mxu0
        %v3699 = vadd.f32 0.0, %v3698
        %v3700 = vpop.f32.mrb[0].mxu0
        %v3701 = vadd.f32 0.0, %v3700
        %v3702 = vpop.f32.mrb[0].mxu0
        %v3703 = vadd.f32 0.0, %v3702
        %v3704 = vpop.f32.mrb[0].mxu0
        %v3705 = vadd.f32 0.0, %v3704
        %3706 = vmatprep.mubr.bf16.mxu0 0
        %3707 = vmatmul.mubr.bf16.gmra.mrb[0].mxu0 %v1340
        %v3708 = vpop.f32.mrb[0].mxu0
        %v3709 = vadd.f32 0.0, %v3708
        %v3710 = vpop.f32.mrb[0].mxu0
        %v3711 = vadd.f32 0.0, %v3710
        %v3712 = vpop.f32.mrb[0].mxu0
        %v3713 = vadd.f32 0.0, %v3712
        %v3714 = vpop.f32.mrb[0].mxu0
        %v3715 = vadd.f32 0.0, %v3714
        %3716 = vmatprep.mubr.bf16.mxu0 0
        %3717 = vmatmul.mubr.bf16.gmra.mrb[0].mxu0 %v1341
        %v3718 = vpop.f32.mrb[0].mxu0
        %v3719 = vadd.f32 0.0, %v3718
        %v3720 = vpop.f32.mrb[0].mxu0
        %v3721 = vadd.f32 0.0, %v3720
        %v3722 = vpop.f32.mrb[0].mxu0
        %v3723 = vadd.f32 0.0, %v3722
        %v3724 = vpop.f32.mrb[0].mxu0
        %v3725 = vadd.f32 0.0, %v3724
        %3726 = vmatprep.mubr.bf16.mxu0 0
        %3727 = vmatmul.mubr.bf16.gmra.mrb[0].mxu0 %v1342
        %v3728 = vpop.f32.mrb[0].mxu0
        %v3729 = vadd.f32 0.0, %v3728
        %v3730 = vpop.f32.mrb[0].mxu0
        %v3731 = vadd.f32 0.0, %v3730
        %v3732 = vpop.f32.mrb[0].mxu0
        %v3733 = vadd.f32 0.0, %v3732
        %v3734 = vpop.f32.mrb[0].mxu0
        %v3735 = vadd.f32 0.0, %v3734
        %3736 = vmatprep.mubr.bf16.mxu0 0
        %3737 = vmatmul.mubr.bf16.gmra.mrb[0].mxu0 %v1343
        %v3738 = vpop.f32.mrb[0].mxu0
        %v3739 = vadd.f32 0.0, %v3738
        %v3740 = vpop.f32.mrb[0].mxu0
        %v3741 = vadd.f32 0.0, %v3740
        %v3742 = vpop.f32.mrb[0].mxu0
        %v3743 = vadd.f32 0.0, %v3742
        %v3744 = vpop.f32.mrb[0].mxu0
        %v3745 = vadd.f32 0.0, %v3744
        %3746 = vdwg.mxu0
        %3747 = vmatprep.subr.bf16.mxu0 %v1607
        %3748 = vmatpush1.bf16.msra.mxu0 %v1606
        %3749 = vmatprep.subr.bf16.mxu0 %v1615
        %3750 = vmatpush1.bf16.msra.mxu0 %v1614
        %3751 = vmatprep.subr.bf16.mxu0 %v1623
        %3752 = vmatpush1.bf16.msra.mxu0 %v1622
        %3753 = vmatprep.subr.bf16.mxu0 %v1631
        %3754 = vmatpush1.bf16.msra.mxu0 %v1630
        %3755 = vmatprep.subr.bf16.mxu0 %v1639
        %3756 = vmatpush1.bf16.msra.mxu0 %v1638
        %3757 = vmatprep.subr.bf16.mxu0 %v1647
        %3758 = vmatpush1.bf16.msra.mxu0 %v1646
        %3759 = vmatprep.subr.bf16.mxu0 %v1655
        %3760 = vmatpush1.bf16.msra.mxu0 %v1654
        %3761 = vmatprep.subr.bf16.mxu0 %v1663
        %3762 = vmatpush1.bf16.msra.mxu0 %v1662
        %3763 = vmatprep.subr.bf16.mxu0 0
        %3764 = vmatpush1.bf16.msra.mxu0 0
        %3765 = vmatprep.subr.bf16.mxu0 0
        %3766 = vmatpush1.bf16.msra.mxu0 0
        %3767 = vmatprep.subr.bf16.mxu0 0
        %3768 = vmatpush1.bf16.msra.mxu0 0
        %3769 = vmatprep.subr.bf16.mxu0 0
        %3770 = vmatpush1.bf16.msra.mxu0 0
        %3771 = vmatprep.subr.bf16.mxu0 0
        %3772 = vmatpush1.bf16.msra.mxu0 0
        %3773 = vmatprep.subr.bf16.mxu0 0
        %3774 = vmatpush1.bf16.msra.mxu0 0
        %3775 = vmatprep.subr.bf16.mxu0 0
        %3776 = vmatpush1.bf16.msra.mxu0 0
        %3777 = vmatprep.subr.bf16.mxu0 0
        %3778 = vmatpush1.bf16.msra.mxu0 0
        %3779 = vmatprep.mubr.bf16.mxu0 0
        %3780 = vmatmul.mubr.bf16.gmra.mrb[0].mxu0 %v1280
        %v3781 = vpop.f32.mrb[0].mxu0
        %v3782 = vadd.f32 0.0, %v3781
        %v3783 = vpop.f32.mrb[0].mxu0
        %v3784 = vadd.f32 0.0, %v3783
        %v3785 = vpop.f32.mrb[0].mxu0
        %v3786 = vadd.f32 0.0, %v3785
        %v3787 = vpop.f32.mrb[0].mxu0
        %v3788 = vadd.f32 0.0, %v3787
        %3789 = vmatprep.mubr.bf16.mxu0 0
        %3790 = vmatmul.mubr.bf16.gmra.mrb[0].mxu0 %v1281
        %v3791 = vpop.f32.mrb[0].mxu0
        %v3792 = vadd.f32 0.0, %v3791
        %v3793 = vpop.f32.mrb[0].mxu0
        %v3794 = vadd.f32 0.0, %v3793
        %v3795 = vpop.f32.mrb[0].mxu0
        %v3796 = vadd.f32 0.0, %v3795
        %v3797 = vpop.f32.mrb[0].mxu0
        %v3798 = vadd.f32 0.0, %v3797
        %3799 = vmatprep.mubr.bf16.mxu0 0
        %3800 = vmatmul.mubr.bf16.gmra.mrb[0].mxu0 %v1282
        %v3801 = vpop.f32.mrb[0].mxu0
        %v3802 = vadd.f32 0.0, %v3801
        %v3803 = vpop.f32.mrb[0].mxu0
        %v3804 = vadd.f32 0.0, %v3803
        %v3805 = vpop.f32.mrb[0].mxu0
        %v3806 = vadd.f32 0.0, %v3805
        %v3807 = vpop.f32.mrb[0].mxu0
        %v3808 = vadd.f32 0.0, %v3807
        %3809 = vmatprep.mubr.bf16.mxu0 0
        %3810 = vmatmul.mubr.bf16.gmra.mrb[0].mxu0 %v1283
        %v3811 = vpop.f32.mrb[0].mxu0
        %v3812 = vadd.f32 0.0, %v3811
        %v3813 = vpop.f32.mrb[0].mxu0
        %v3814 = vadd.f32 0.0, %v3813
        %v3815 = vpop.f32.mrb[0].mxu0
        %v3816 = vadd.f32 0.0, %v3815
        %v3817 = vpop.f32.mrb[0].mxu0
        %v3818 = vadd.f32 0.0, %v3817
        %3819 = vmatprep.mubr.bf16.mxu0 0
        %3820 = vmatmul.mubr.bf16.gmra.mrb[0].mxu0 %v1284
        %v3821 = vpop.f32.mrb[0].mxu0
        %v3822 = vadd.f32 0.0, %v3821
        %v3823 = vpop.f32.mrb[0].mxu0
        %v3824 = vadd.f32 0.0, %v3823
        %v3825 = vpop.f32.mrb[0].mxu0
        %v3826 = vadd.f32 0.0, %v3825
        %v3827 = vpop.f32.mrb[0].mxu0
        %v3828 = vadd.f32 0.0, %v3827
        %3829 = vmatprep.mubr.bf16.mxu0 0
        %3830 = vmatmul.mubr.bf16.gmra.mrb[0].mxu0 %v1285
        %v3831 = vpop.f32.mrb[0].mxu0
        %v3832 = vadd.f32 0.0, %v3831
        %v3833 = vpop.f32.mrb[0].mxu0
        %v3834 = vadd.f32 0.0, %v3833
        %v3835 = vpop.f32.mrb[0].mxu0
        %v3836 = vadd.f32 0.0, %v3835
        %v3837 = vpop.f32.mrb[0].mxu0
        %v3838 = vadd.f32 0.0, %v3837
        %3839 = vmatprep.mubr.bf16.mxu0 0
        %3840 = vmatmul.mubr.bf16.gmra.mrb[0].mxu0 %v1286
        %v3841 = vpop.f32.mrb[0].mxu0
        %v3842 = vadd.f32 0.0, %v3841
        %v3843 = vpop.f32.mrb[0].mxu0
        %v3844 = vadd.f32 0.0, %v3843
        %v3845 = vpop.f32.mrb[0].mxu0
        %v3846 = vadd.f32 0.0, %v3845
        %v3847 = vpop.f32.mrb[0].mxu0
        %v3848 = vadd.f32 0.0, %v3847
        %3849 = vmatprep.mubr.bf16.mxu0 0
        %3850 = vmatmul.mubr.bf16.gmra.mrb[0].mxu0 %v1287
        %v3851 = vpop.f32.mrb[0].mxu0
        %v3852 = vadd.f32 0.0, %v3851
        %v3853 = vpop.f32.mrb[0].mxu0
        %v3854 = vadd.f32 0.0, %v3853
        %v3855 = vpop.f32.mrb[0].mxu0
        %v3856 = vadd.f32 0.0, %v3855
        %v3857 = vpop.f32.mrb[0].mxu0
        %v3858 = vadd.f32 0.0, %v3857
        %3859 = vmatprep.mubr.bf16.mxu0 0
        %3860 = vmatmul.mubr.bf16.gmra.mrb[0].mxu0 %v1288
        %v3861 = vpop.f32.mrb[0].mxu0
        %v3862 = vadd.f32 0.0, %v3861
        %v3863 = vpop.f32.mrb[0].mxu0
        %v3864 = vadd.f32 0.0, %v3863
        %v3865 = vpop.f32.mrb[0].mxu0
        %v3866 = vadd.f32 0.0, %v3865
        %v3867 = vpop.f32.mrb[0].mxu0
        %v3868 = vadd.f32 0.0, %v3867
        %3869 = vmatprep.mubr.bf16.mxu0 0
        %3870 = vmatmul.mubr.bf16.gmra.mrb[0].mxu0 %v1289
        %v3871 = vpop.f32.mrb[0].mxu0
        %v3872 = vadd.f32 0.0, %v3871
        %v3873 = vpop.f32.mrb[0].mxu0
        %v3874 = vadd.f32 0.0, %v3873
        %v3875 = vpop.f32.mrb[0].mxu0
        %v3876 = vadd.f32 0.0, %v3875
        %v3877 = vpop.f32.mrb[0].mxu0
        %v3878 = vadd.f32 0.0, %v3877
        %3879 = vmatprep.mubr.bf16.mxu0 0
        %3880 = vmatmul.mubr.bf16.gmra.mrb[0].mxu0 %v1290
        %v3881 = vpop.f32.mrb[0].mxu0
        %v3882 = vadd.f32 0.0, %v3881
        %v3883 = vpop.f32.mrb[0].mxu0
        %v3884 = vadd.f32 0.0, %v3883
        %v3885 = vpop.f32.mrb[0].mxu0
        %v3886 = vadd.f32 0.0, %v3885
        %v3887 = vpop.f32.mrb[0].mxu0
        %v3888 = vadd.f32 0.0, %v3887
        %3889 = vmatprep.mubr.bf16.mxu0 0
        %3890 = vmatmul.mubr.bf16.gmra.mrb[0].mxu0 %v1291
        %v3891 = vpop.f32.mrb[0].mxu0
        %v3892 = vadd.f32 0.0, %v3891
        %v3893 = vpop.f32.mrb[0].mxu0
        %v3894 = vadd.f32 0.0, %v3893
        %v3895 = vpop.f32.mrb[0].mxu0
        %v3896 = vadd.f32 0.0, %v3895
        %v3897 = vpop.f32.mrb[0].mxu0
        %v3898 = vadd.f32 0.0, %v3897
        %3899 = vmatprep.mubr.bf16.mxu0 0
        %3900 = vmatmul.mubr.bf16.gmra.mrb[0].mxu0 %v1292
        %v3901 = vpop.f32.mrb[0].mxu0
        %v3902 = vadd.f32 0.0, %v3901
        %v3903 = vpop.f32.mrb[0].mxu0
        %v3904 = vadd.f32 0.0, %v3903
        %v3905 = vpop.f32.mrb[0].mxu0
        %v3906 = vadd.f32 0.0, %v3905
        %v3907 = vpop.f32.mrb[0].mxu0
        %v3908 = vadd.f32 0.0, %v3907
        %3909 = vmatprep.mubr.bf16.mxu0 0
        %3910 = vmatmul.mubr.bf16.gmra.mrb[0].mxu0 %v1293
        %v3911 = vpop.f32.mrb[0].mxu0
        %v3912 = vadd.f32 0.0, %v3911
        %v3913 = vpop.f32.mrb[0].mxu0
        %v3914 = vadd.f32 0.0, %v3913
        %v3915 = vpop.f32.mrb[0].mxu0
        %v3916 = vadd.f32 0.0, %v3915
        %v3917 = vpop.f32.mrb[0].mxu0
        %v3918 = vadd.f32 0.0, %v3917
        %3919 = vmatprep.mubr.bf16.mxu0 0
        %3920 = vmatmul.mubr.bf16.gmra.mrb[0].mxu0 %v1294
        %v3921 = vpop.f32.mrb[0].mxu0
        %v3922 = vadd.f32 0.0, %v3921
        %v3923 = vpop.f32.mrb[0].mxu0
        %v3924 = vadd.f32 0.0, %v3923
        %v3925 = vpop.f32.mrb[0].mxu0
        %v3926 = vadd.f32 0.0, %v3925
        %v3927 = vpop.f32.mrb[0].mxu0
        %v3928 = vadd.f32 0.0, %v3927
        %3929 = vmatprep.mubr.bf16.mxu0 0
        %3930 = vmatmul.mubr.bf16.gmra.mrb[0].mxu0 %v1295
        %v3931 = vpop.f32.mrb[0].mxu0
        %v3932 = vadd.f32 0.0, %v3931
        %v3933 = vpop.f32.mrb[0].mxu0
        %v3934 = vadd.f32 0.0, %v3933
        %v3935 = vpop.f32.mrb[0].mxu0
        %v3936 = vadd.f32 0.0, %v3935
        %v3937 = vpop.f32.mrb[0].mxu0
        %v3938 = vadd.f32 0.0, %v3937
        %3939 = vmatprep.mubr.bf16.mxu0 0
        %3940 = vmatmul.mubr.bf16.gmra.mrb[0].mxu0 %v1296
        %v3941 = vpop.f32.mrb[0].mxu0
        %v3942 = vadd.f32 0.0, %v3941
        %v3943 = vpop.f32.mrb[0].mxu0
        %v3944 = vadd.f32 0.0, %v3943
        %v3945 = vpop.f32.mrb[0].mxu0
        %v3946 = vadd.f32 0.0, %v3945
        %v3947 = vpop.f32.mrb[0].mxu0
        %v3948 = vadd.f32 0.0, %v3947
        %3949 = vmatprep.mubr.bf16.mxu0 0
        %3950 = vmatmul.mubr.bf16.gmra.mrb[0].mxu0 %v1297
        %v3951 = vpop.f32.mrb[0].mxu0
        %v3952 = vadd.f32 0.0, %v3951
        %v3953 = vpop.f32.mrb[0].mxu0
        %v3954 = vadd.f32 0.0, %v3953
        %v3955 = vpop.f32.mrb[0].mxu0
        %v3956 = vadd.f32 0.0, %v3955
        %v3957 = vpop.f32.mrb[0].mxu0
        %v3958 = vadd.f32 0.0, %v3957
        %3959 = vmatprep.mubr.bf16.mxu0 0
        %3960 = vmatmul.mubr.bf16.gmra.mrb[0].mxu0 %v1298
        %v3961 = vpop.f32.mrb[0].mxu0
        %v3962 = vadd.f32 0.0, %v3961
        %v3963 = vpop.f32.mrb[0].mxu0
        %v3964 = vadd.f32 0.0, %v3963
        %v3965 = vpop.f32.mrb[0].mxu0
        %v3966 = vadd.f32 0.0, %v3965
        %v3967 = vpop.f32.mrb[0].mxu0
        %v3968 = vadd.f32 0.0, %v3967
        %3969 = vmatprep.mubr.bf16.mxu0 0
        %3970 = vmatmul.mubr.bf16.gmra.mrb[0].mxu0 %v1299
        %v3971 = vpop.f32.mrb[0].mxu0
        %v3972 = vadd.f32 0.0, %v3971
        %v3973 = vpop.f32.mrb[0].mxu0
        %v3974 = vadd.f32 0.0, %v3973
        %v3975 = vpop.f32.mrb[0].mxu0
        %v3976 = vadd.f32 0.0, %v3975
        %v3977 = vpop.f32.mrb[0].mxu0
        %v3978 = vadd.f32 0.0, %v3977
        %3979 = vmatprep.mubr.bf16.mxu0 0
        %3980 = vmatmul.mubr.bf16.gmra.mrb[0].mxu0 %v1300
        %v3981 = vpop.f32.mrb[0].mxu0
        %v3982 = vadd.f32 0.0, %v3981
        %v3983 = vpop.f32.mrb[0].mxu0
        %v3984 = vadd.f32 0.0, %v3983
        %v3985 = vpop.f32.mrb[0].mxu0
        %v3986 = vadd.f32 0.0, %v3985
        %v3987 = vpop.f32.mrb[0].mxu0
        %v3988 = vadd.f32 0.0, %v3987
        %3989 = vmatprep.mubr.bf16.mxu0 0
        %3990 = vmatmul.mubr.bf16.gmra.mrb[0].mxu0 %v1301
        %v3991 = vpop.f32.mrb[0].mxu0
        %v3992 = vadd.f32 0.0, %v3991
        %v3993 = vpop.f32.mrb[0].mxu0
        %v3994 = vadd.f32 0.0, %v3993
        %v3995 = vpop.f32.mrb[0].mxu0
        %v3996 = vadd.f32 0.0, %v3995
        %v3997 = vpop.f32.mrb[0].mxu0
        %v3998 = vadd.f32 0.0, %v3997
        %3999 = vmatprep.mubr.bf16.mxu0 0
        %4000 = vmatmul.mubr.bf16.gmra.mrb[0].mxu0 %v1302
        %v4001 = vpop.f32.mrb[0].mxu0
        %v4002 = vadd.f32 0.0, %v4001
        %v4003 = vpop.f32.mrb[0].mxu0
        %v4004 = vadd.f32 0.0, %v4003
        %v4005 = vpop.f32.mrb[0].mxu0
        %v4006 = vadd.f32 0.0, %v4005
        %v4007 = vpop.f32.mrb[0].mxu0
        %v4008 = vadd.f32 0.0, %v4007
        %4009 = vmatprep.mubr.bf16.mxu0 0
        %4010 = vmatmul.mubr.bf16.gmra.mrb[0].mxu0 %v1303
        %v4011 = vpop.f32.mrb[0].mxu0
        %v4012 = vadd.f32 0.0, %v4011
        %v4013 = vpop.f32.mrb[0].mxu0
        %v4014 = vadd.f32 0.0, %v4013
        %v4015 = vpop.f32.mrb[0].mxu0
        %v4016 = vadd.f32 0.0, %v4015
        %v4017 = vpop.f32.mrb[0].mxu0
        %v4018 = vadd.f32 0.0, %v4017
        %4019 = vmatprep.mubr.bf16.mxu0 0
        %4020 = vmatmul.mubr.bf16.gmra.mrb[0].mxu0 %v1304
        %v4021 = vpop.f32.mrb[0].mxu0
        %v4022 = vadd.f32 0.0, %v4021
        %v4023 = vpop.f32.mrb[0].mxu0
        %v4024 = vadd.f32 0.0, %v4023
        %v4025 = vpop.f32.mrb[0].mxu0
        %v4026 = vadd.f32 0.0, %v4025
        %v4027 = vpop.f32.mrb[0].mxu0
        %v4028 = vadd.f32 0.0, %v4027
        %4029 = vmatprep.mubr.bf16.mxu0 0
        %4030 = vmatmul.mubr.bf16.gmra.mrb[0].mxu0 %v1305
        %v4031 = vpop.f32.mrb[0].mxu0
        %v4032 = vadd.f32 0.0, %v4031
        %v4033 = vpop.f32.mrb[0].mxu0
        %v4034 = vadd.f32 0.0, %v4033
        %v4035 = vpop.f32.mrb[0].mxu0
        %v4036 = vadd.f32 0.0, %v4035
        %v4037 = vpop.f32.mrb[0].mxu0
        %v4038 = vadd.f32 0.0, %v4037
        %4039 = vmatprep.mubr.bf16.mxu0 0
        %4040 = vmatmul.mubr.bf16.gmra.mrb[0].mxu0 %v1306
        %v4041 = vpop.f32.mrb[0].mxu0
        %v4042 = vadd.f32 0.0, %v4041
        %v4043 = vpop.f32.mrb[0].mxu0
        %v4044 = vadd.f32 0.0, %v4043
        %v4045 = vpop.f32.mrb[0].mxu0
        %v4046 = vadd.f32 0.0, %v4045
        %v4047 = vpop.f32.mrb[0].mxu0
        %v4048 = vadd.f32 0.0, %v4047
        %4049 = vmatprep.mubr.bf16.mxu0 0
        %4050 = vmatmul.mubr.bf16.gmra.mrb[0].mxu0 %v1307
        %v4051 = vpop.f32.mrb[0].mxu0
        %v4052 = vadd.f32 0.0, %v4051
        %v4053 = vpop.f32.mrb[0].mxu0
        %v4054 = vadd.f32 0.0, %v4053
        %v4055 = vpop.f32.mrb[0].mxu0
        %v4056 = vadd.f32 0.0, %v4055
        %v4057 = vpop.f32.mrb[0].mxu0
        %v4058 = vadd.f32 0.0, %v4057
        %4059 = vmatprep.mubr.bf16.mxu0 0
        %4060 = vmatmul.mubr.bf16.gmra.mrb[0].mxu0 %v1308
        %v4061 = vpop.f32.mrb[0].mxu0
        %v4062 = vadd.f32 0.0, %v4061
        %v4063 = vpop.f32.mrb[0].mxu0
        %v4064 = vadd.f32 0.0, %v4063
        %v4065 = vpop.f32.mrb[0].mxu0
        %v4066 = vadd.f32 0.0, %v4065
        %v4067 = vpop.f32.mrb[0].mxu0
        %v4068 = vadd.f32 0.0, %v4067
        %4069 = vmatprep.mubr.bf16.mxu0 0
        %4070 = vmatmul.mubr.bf16.gmra.mrb[0].mxu0 %v1309
        %v4071 = vpop.f32.mrb[0].mxu0
        %v4072 = vadd.f32 0.0, %v4071
        %v4073 = vpop.f32.mrb[0].mxu0
        %v4074 = vadd.f32 0.0, %v4073
        %v4075 = vpop.f32.mrb[0].mxu0
        %v4076 = vadd.f32 0.0, %v4075
        %v4077 = vpop.f32.mrb[0].mxu0
        %v4078 = vadd.f32 0.0, %v4077
        %4079 = vmatprep.mubr.bf16.mxu0 0
        %4080 = vmatmul.mubr.bf16.gmra.mrb[0].mxu0 %v1310
        %v4081 = vpop.f32.mrb[0].mxu0
        %v4082 = vadd.f32 0.0, %v4081
        %v4083 = vpop.f32.mrb[0].mxu0
        %v4084 = vadd.f32 0.0, %v4083
        %v4085 = vpop.f32.mrb[0].mxu0
        %v4086 = vadd.f32 0.0, %v4085
        %v4087 = vpop.f32.mrb[0].mxu0
        %v4088 = vadd.f32 0.0, %v4087
        %4089 = vmatprep.mubr.bf16.mxu0 0
        %4090 = vmatmul.mubr.bf16.gmra.mrb[0].mxu0 %v1311
        %v4091 = vpop.f32.mrb[0].mxu0
        %v4092 = vadd.f32 0.0, %v4091
        %v4093 = vpop.f32.mrb[0].mxu0
        %v4094 = vadd.f32 0.0, %v4093
        %v4095 = vpop.f32.mrb[0].mxu0
        %v4096 = vadd.f32 0.0, %v4095
        %v4097 = vpop.f32.mrb[0].mxu0
        %v4098 = vadd.f32 0.0, %v4097
        %4099 = vmatprep.mubr.bf16.mxu0 0
        %4100 = vmatmul.mubr.bf16.gmra.mrb[0].mxu0 %v1312
        %v4101 = vpop.f32.mrb[0].mxu0
        %v4102 = vadd.f32 0.0, %v4101
        %v4103 = vpop.f32.mrb[0].mxu0
        %v4104 = vadd.f32 0.0, %v4103
        %v4105 = vpop.f32.mrb[0].mxu0
        %v4106 = vadd.f32 0.0, %v4105
        %v4107 = vpop.f32.mrb[0].mxu0
        %v4108 = vadd.f32 0.0, %v4107
        %4109 = vmatprep.mubr.bf16.mxu0 0
        %4110 = vmatmul.mubr.bf16.gmra.mrb[0].mxu0 %v1313
        %v4111 = vpop.f32.mrb[0].mxu0
        %v4112 = vadd.f32 0.0, %v4111
        %v4113 = vpop.f32.mrb[0].mxu0
        %v4114 = vadd.f32 0.0, %v4113
        %v4115 = vpop.f32.mrb[0].mxu0
        %v4116 = vadd.f32 0.0, %v4115
        %v4117 = vpop.f32.mrb[0].mxu0
        %v4118 = vadd.f32 0.0, %v4117
        %4119 = vmatprep.mubr.bf16.mxu0 0
        %4120 = vmatmul.mubr.bf16.gmra.mrb[0].mxu0 %v1314
        %v4121 = vpop.f32.mrb[0].mxu0
        %v4122 = vadd.f32 0.0, %v4121
        %v4123 = vpop.f32.mrb[0].mxu0
        %v4124 = vadd.f32 0.0, %v4123
        %v4125 = vpop.f32.mrb[0].mxu0
        %v4126 = vadd.f32 0.0, %v4125
        %v4127 = vpop.f32.mrb[0].mxu0
        %v4128 = vadd.f32 0.0, %v4127
        %4129 = vmatprep.mubr.bf16.mxu0 0
        %4130 = vmatmul.mubr.bf16.gmra.mrb[0].mxu0 %v1315
        %v4131 = vpop.f32.mrb[0].mxu0
        %v4132 = vadd.f32 0.0, %v4131
        %v4133 = vpop.f32.mrb[0].mxu0
        %v4134 = vadd.f32 0.0, %v4133
        %v4135 = vpop.f32.mrb[0].mxu0
        %v4136 = vadd.f32 0.0, %v4135
        %v4137 = vpop.f32.mrb[0].mxu0
        %v4138 = vadd.f32 0.0, %v4137
        %4139 = vmatprep.mubr.bf16.mxu0 0
        %4140 = vmatmul.mubr.bf16.gmra.mrb[0].mxu0 %v1316
        %v4141 = vpop.f32.mrb[0].mxu0
        %v4142 = vadd.f32 0.0, %v4141
        %v4143 = vpop.f32.mrb[0].mxu0
        %v4144 = vadd.f32 0.0, %v4143
        %v4145 = vpop.f32.mrb[0].mxu0
        %v4146 = vadd.f32 0.0, %v4145
        %v4147 = vpop.f32.mrb[0].mxu0
        %v4148 = vadd.f32 0.0, %v4147
        %4149 = vmatprep.mubr.bf16.mxu0 0
        %4150 = vmatmul.mubr.bf16.gmra.mrb[0].mxu0 %v1317
        %v4151 = vpop.f32.mrb[0].mxu0
        %v4152 = vadd.f32 0.0, %v4151
        %v4153 = vpop.f32.mrb[0].mxu0
        %v4154 = vadd.f32 0.0, %v4153
        %v4155 = vpop.f32.mrb[0].mxu0
        %v4156 = vadd.f32 0.0, %v4155
        %v4157 = vpop.f32.mrb[0].mxu0
        %v4158 = vadd.f32 0.0, %v4157
        %4159 = vmatprep.mubr.bf16.mxu0 0
        %4160 = vmatmul.mubr.bf16.gmra.mrb[0].mxu0 %v1318
        %v4161 = vpop.f32.mrb[0].mxu0
        %v4162 = vadd.f32 0.0, %v4161
        %v4163 = vpop.f32.mrb[0].mxu0
        %v4164 = vadd.f32 0.0, %v4163
        %v4165 = vpop.f32.mrb[0].mxu0
        %v4166 = vadd.f32 0.0, %v4165
        %v4167 = vpop.f32.mrb[0].mxu0
        %v4168 = vadd.f32 0.0, %v4167
        %4169 = vmatprep.mubr.bf16.mxu0 0
        %4170 = vmatmul.mubr.bf16.gmra.mrb[0].mxu0 %v1319
        %v4171 = vpop.f32.mrb[0].mxu0
        %v4172 = vadd.f32 0.0, %v4171
        %v4173 = vpop.f32.mrb[0].mxu0
        %v4174 = vadd.f32 0.0, %v4173
        %v4175 = vpop.f32.mrb[0].mxu0
        %v4176 = vadd.f32 0.0, %v4175
        %v4177 = vpop.f32.mrb[0].mxu0
        %v4178 = vadd.f32 0.0, %v4177
        %4179 = vmatprep.mubr.bf16.mxu0 0
        %4180 = vmatmul.mubr.bf16.gmra.mrb[0].mxu0 %v1320
        %v4181 = vpop.f32.mrb[0].mxu0
        %v4182 = vadd.f32 0.0, %v4181
        %v4183 = vpop.f32.mrb[0].mxu0
        %v4184 = vadd.f32 0.0, %v4183
        %v4185 = vpop.f32.mrb[0].mxu0
        %v4186 = vadd.f32 0.0, %v4185
        %v4187 = vpop.f32.mrb[0].mxu0
        %v4188 = vadd.f32 0.0, %v4187
        %4189 = vmatprep.mubr.bf16.mxu0 0
        %4190 = vmatmul.mubr.bf16.gmra.mrb[0].mxu0 %v1321
        %v4191 = vpop.f32.mrb[0].mxu0
        %v4192 = vadd.f32 0.0, %v4191
        %v4193 = vpop.f32.mrb[0].mxu0
        %v4194 = vadd.f32 0.0, %v4193
        %v4195 = vpop.f32.mrb[0].mxu0
        %v4196 = vadd.f32 0.0, %v4195
        %v4197 = vpop.f32.mrb[0].mxu0
        %v4198 = vadd.f32 0.0, %v4197
        %4199 = vmatprep.mubr.bf16.mxu0 0
        %4200 = vmatmul.mubr.bf16.gmra.mrb[0].mxu0 %v1322
        %v4201 = vpop.f32.mrb[0].mxu0
        %v4202 = vadd.f32 0.0, %v4201
        %v4203 = vpop.f32.mrb[0].mxu0
        %v4204 = vadd.f32 0.0, %v4203
        %v4205 = vpop.f32.mrb[0].mxu0
        %v4206 = vadd.f32 0.0, %v4205
        %v4207 = vpop.f32.mrb[0].mxu0
        %v4208 = vadd.f32 0.0, %v4207
        %4209 = vmatprep.mubr.bf16.mxu0 0
        %4210 = vmatmul.mubr.bf16.gmra.mrb[0].mxu0 %v1323
        %v4211 = vpop.f32.mrb[0].mxu0
        %v4212 = vadd.f32 0.0, %v4211
        %v4213 = vpop.f32.mrb[0].mxu0
        %v4214 = vadd.f32 0.0, %v4213
        %v4215 = vpop.f32.mrb[0].mxu0
        %v4216 = vadd.f32 0.0, %v4215
        %v4217 = vpop.f32.mrb[0].mxu0
        %v4218 = vadd.f32 0.0, %v4217
        %4219 = vmatprep.mubr.bf16.mxu0 0
        %4220 = vmatmul.mubr.bf16.gmra.mrb[0].mxu0 %v1324
        %v4221 = vpop.f32.mrb[0].mxu0
        %v4222 = vadd.f32 0.0, %v4221
        %v4223 = vpop.f32.mrb[0].mxu0
        %v4224 = vadd.f32 0.0, %v4223
        %v4225 = vpop.f32.mrb[0].mxu0
        %v4226 = vadd.f32 0.0, %v4225
        %v4227 = vpop.f32.mrb[0].mxu0
        %v4228 = vadd.f32 0.0, %v4227
        %4229 = vmatprep.mubr.bf16.mxu0 0
        %4230 = vmatmul.mubr.bf16.gmra.mrb[0].mxu0 %v1325
        %v4231 = vpop.f32.mrb[0].mxu0
        %v4232 = vadd.f32 0.0, %v4231
        %v4233 = vpop.f32.mrb[0].mxu0
        %v4234 = vadd.f32 0.0, %v4233
        %v4235 = vpop.f32.mrb[0].mxu0
        %v4236 = vadd.f32 0.0, %v4235
        %v4237 = vpop.f32.mrb[0].mxu0
        %v4238 = vadd.f32 0.0, %v4237
        %4239 = vmatprep.mubr.bf16.mxu0 0
        %4240 = vmatmul.mubr.bf16.gmra.mrb[0].mxu0 %v1326
        %v4241 = vpop.f32.mrb[0].mxu0
        %v4242 = vadd.f32 0.0, %v4241
        %v4243 = vpop.f32.mrb[0].mxu0
        %v4244 = vadd.f32 0.0, %v4243
        %v4245 = vpop.f32.mrb[0].mxu0
        %v4246 = vadd.f32 0.0, %v4245
        %v4247 = vpop.f32.mrb[0].mxu0
        %v4248 = vadd.f32 0.0, %v4247
        %4249 = vmatprep.mubr.bf16.mxu0 0
        %4250 = vmatmul.mubr.bf16.gmra.mrb[0].mxu0 %v1327
        %v4251 = vpop.f32.mrb[0].mxu0
        %v4252 = vadd.f32 0.0, %v4251
        %v4253 = vpop.f32.mrb[0].mxu0
        %v4254 = vadd.f32 0.0, %v4253
        %v4255 = vpop.f32.mrb[0].mxu0
        %v4256 = vadd.f32 0.0, %v4255
        %v4257 = vpop.f32.mrb[0].mxu0
        %v4258 = vadd.f32 0.0, %v4257
        %4259 = vmatprep.mubr.bf16.mxu0 0
        %4260 = vmatmul.mubr.bf16.gmra.mrb[0].mxu0 %v1328
        %v4261 = vpop.f32.mrb[0].mxu0
        %v4262 = vadd.f32 0.0, %v4261
        %v4263 = vpop.f32.mrb[0].mxu0
        %v4264 = vadd.f32 0.0, %v4263
        %v4265 = vpop.f32.mrb[0].mxu0
        %v4266 = vadd.f32 0.0, %v4265
        %v4267 = vpop.f32.mrb[0].mxu0
        %v4268 = vadd.f32 0.0, %v4267
        %4269 = vmatprep.mubr.bf16.mxu0 0
        %4270 = vmatmul.mubr.bf16.gmra.mrb[0].mxu0 %v1329
        %v4271 = vpop.f32.mrb[0].mxu0
        %v4272 = vadd.f32 0.0, %v4271
        %v4273 = vpop.f32.mrb[0].mxu0
        %v4274 = vadd.f32 0.0, %v4273
        %v4275 = vpop.f32.mrb[0].mxu0
        %v4276 = vadd.f32 0.0, %v4275
        %v4277 = vpop.f32.mrb[0].mxu0
        %v4278 = vadd.f32 0.0, %v4277
        %4279 = vmatprep.mubr.bf16.mxu0 0
        %4280 = vmatmul.mubr.bf16.gmra.mrb[0].mxu0 %v1330
        %v4281 = vpop.f32.mrb[0].mxu0
        %v4282 = vadd.f32 0.0, %v4281
        %v4283 = vpop.f32.mrb[0].mxu0
        %v4284 = vadd.f32 0.0, %v4283
        %v4285 = vpop.f32.mrb[0].mxu0
        %v4286 = vadd.f32 0.0, %v4285
        %v4287 = vpop.f32.mrb[0].mxu0
        %v4288 = vadd.f32 0.0, %v4287
        %4289 = vmatprep.mubr.bf16.mxu0 0
        %4290 = vmatmul.mubr.bf16.gmra.mrb[0].mxu0 %v1331
        %v4291 = vpop.f32.mrb[0].mxu0
        %v4292 = vadd.f32 0.0, %v4291
        %v4293 = vpop.f32.mrb[0].mxu0
        %v4294 = vadd.f32 0.0, %v4293
        %v4295 = vpop.f32.mrb[0].mxu0
        %v4296 = vadd.f32 0.0, %v4295
        %v4297 = vpop.f32.mrb[0].mxu0
        %v4298 = vadd.f32 0.0, %v4297
        %4299 = vmatprep.mubr.bf16.mxu0 0
        %4300 = vmatmul.mubr.bf16.gmra.mrb[0].mxu0 %v1332
        %v4301 = vpop.f32.mrb[0].mxu0
        %v4302 = vadd.f32 0.0, %v4301
        %v4303 = vpop.f32.mrb[0].mxu0
        %v4304 = vadd.f32 0.0, %v4303
        %v4305 = vpop.f32.mrb[0].mxu0
        %v4306 = vadd.f32 0.0, %v4305
        %v4307 = vpop.f32.mrb[0].mxu0
        %v4308 = vadd.f32 0.0, %v4307
        %4309 = vmatprep.mubr.bf16.mxu0 0
        %4310 = vmatmul.mubr.bf16.gmra.mrb[0].mxu0 %v1333
        %v4311 = vpop.f32.mrb[0].mxu0
        %v4312 = vadd.f32 0.0, %v4311
        %v4313 = vpop.f32.mrb[0].mxu0
        %v4314 = vadd.f32 0.0, %v4313
        %v4315 = vpop.f32.mrb[0].mxu0
        %v4316 = vadd.f32 0.0, %v4315
        %v4317 = vpop.f32.mrb[0].mxu0
        %v4318 = vadd.f32 0.0, %v4317
        %4319 = vmatprep.mubr.bf16.mxu0 0
        %4320 = vmatmul.mubr.bf16.gmra.mrb[0].mxu0 %v1334
        %v4321 = vpop.f32.mrb[0].mxu0
        %v4322 = vadd.f32 0.0, %v4321
        %v4323 = vpop.f32.mrb[0].mxu0
        %v4324 = vadd.f32 0.0, %v4323
        %v4325 = vpop.f32.mrb[0].mxu0
        %v4326 = vadd.f32 0.0, %v4325
        %v4327 = vpop.f32.mrb[0].mxu0
        %v4328 = vadd.f32 0.0, %v4327
        %4329 = vmatprep.mubr.bf16.mxu0 0
        %4330 = vmatmul.mubr.bf16.gmra.mrb[0].mxu0 %v1335
        %v4331 = vpop.f32.mrb[0].mxu0
        %v4332 = vadd.f32 0.0, %v4331
        %v4333 = vpop.f32.mrb[0].mxu0
        %v4334 = vadd.f32 0.0, %v4333
        %v4335 = vpop.f32.mrb[0].mxu0
        %v4336 = vadd.f32 0.0, %v4335
        %v4337 = vpop.f32.mrb[0].mxu0
        %v4338 = vadd.f32 0.0, %v4337
        %4339 = vmatprep.mubr.bf16.mxu0 0
        %4340 = vmatmul.mubr.bf16.gmra.mrb[0].mxu0 %v1336
        %v4341 = vpop.f32.mrb[0].mxu0
        %v4342 = vadd.f32 0.0, %v4341
        %v4343 = vpop.f32.mrb[0].mxu0
        %v4344 = vadd.f32 0.0, %v4343
        %v4345 = vpop.f32.mrb[0].mxu0
        %v4346 = vadd.f32 0.0, %v4345
        %v4347 = vpop.f32.mrb[0].mxu0
        %v4348 = vadd.f32 0.0, %v4347
        %4349 = vmatprep.mubr.bf16.mxu0 0
        %4350 = vmatmul.mubr.bf16.gmra.mrb[0].mxu0 %v1337
        %v4351 = vpop.f32.mrb[0].mxu0
        %v4352 = vadd.f32 0.0, %v4351
        %v4353 = vpop.f32.mrb[0].mxu0
        %v4354 = vadd.f32 0.0, %v4353
        %v4355 = vpop.f32.mrb[0].mxu0
        %v4356 = vadd.f32 0.0, %v4355
        %v4357 = vpop.f32.mrb[0].mxu0
        %v4358 = vadd.f32 0.0, %v4357
        %4359 = vmatprep.mubr.bf16.mxu0 0
        %4360 = vmatmul.mubr.bf16.gmra.mrb[0].mxu0 %v1338
        %v4361 = vpop.f32.mrb[0].mxu0
        %v4362 = vadd.f32 0.0, %v4361
        %v4363 = vpop.f32.mrb[0].mxu0
        %v4364 = vadd.f32 0.0, %v4363
        %v4365 = vpop.f32.mrb[0].mxu0
        %v4366 = vadd.f32 0.0, %v4365
        %v4367 = vpop.f32.mrb[0].mxu0
        %v4368 = vadd.f32 0.0, %v4367
        %4369 = vmatprep.mubr.bf16.mxu0 0
        %4370 = vmatmul.mubr.bf16.gmra.mrb[0].mxu0 %v1339
        %v4371 = vpop.f32.mrb[0].mxu0
        %v4372 = vadd.f32 0.0, %v4371
        %v4373 = vpop.f32.mrb[0].mxu0
        %v4374 = vadd.f32 0.0, %v4373
        %v4375 = vpop.f32.mrb[0].mxu0
        %v4376 = vadd.f32 0.0, %v4375
        %v4377 = vpop.f32.mrb[0].mxu0
        %v4378 = vadd.f32 0.0, %v4377
        %4379 = vmatprep.mubr.bf16.mxu0 0
        %4380 = vmatmul.mubr.bf16.gmra.mrb[0].mxu0 %v1340
        %v4381 = vpop.f32.mrb[0].mxu0
        %v4382 = vadd.f32 0.0, %v4381
        %v4383 = vpop.f32.mrb[0].mxu0
        %v4384 = vadd.f32 0.0, %v4383
        %v4385 = vpop.f32.mrb[0].mxu0
        %v4386 = vadd.f32 0.0, %v4385
        %v4387 = vpop.f32.mrb[0].mxu0
        %v4388 = vadd.f32 0.0, %v4387
        %4389 = vmatprep.mubr.bf16.mxu0 0
        %4390 = vmatmul.mubr.bf16.gmra.mrb[0].mxu0 %v1341
        %v4391 = vpop.f32.mrb[0].mxu0
        %v4392 = vadd.f32 0.0, %v4391
        %v4393 = vpop.f32.mrb[0].mxu0
        %v4394 = vadd.f32 0.0, %v4393
        %v4395 = vpop.f32.mrb[0].mxu0
        %v4396 = vadd.f32 0.0, %v4395
        %v4397 = vpop.f32.mrb[0].mxu0
        %v4398 = vadd.f32 0.0, %v4397
        %4399 = vmatprep.mubr.bf16.mxu0 0
        %4400 = vmatmul.mubr.bf16.gmra.mrb[0].mxu0 %v1342
        %v4401 = vpop.f32.mrb[0].mxu0
        %v4402 = vadd.f32 0.0, %v4401
        %v4403 = vpop.f32.mrb[0].mxu0
        %v4404 = vadd.f32 0.0, %v4403
        %v4405 = vpop.f32.mrb[0].mxu0
        %v4406 = vadd.f32 0.0, %v4405
        %v4407 = vpop.f32.mrb[0].mxu0
        %v4408 = vadd.f32 0.0, %v4407
        %4409 = vmatprep.mubr.bf16.mxu0 0
        %4410 = vmatmul.mubr.bf16.gmra.mrb[0].mxu0 %v1343
        %v4411 = vpop.f32.mrb[0].mxu0
        %v4412 = vadd.f32 0.0, %v4411
        %v4413 = vpop.f32.mrb[0].mxu0
        %v4414 = vadd.f32 0.0, %v4413
        %v4415 = vpop.f32.mrb[0].mxu0
        %v4416 = vadd.f32 0.0, %v4415
        %v4417 = vpop.f32.mrb[0].mxu0
        %v4418 = vadd.f32 0.0, %v4417
        %4419 = vdwg.mxu0
        %v4420 = vmax.f32 %v1763, 0.0
        %v4421 = vmax.f32 %v1765, 0.0
        %v4422 = vmax.f32 %v2436, 0.0
        %v4423 = vmax.f32 %v2438, 0.0
        %v4424 = vmax.f32 %v3109, 0.0
        %v4425 = vmax.f32 %v3111, 0.0
        %v4426 = vmax.f32 %v3782, 0.0
        %v4427 = vmax.f32 %v3784, 0.0
        %v4428 = vmax.f32 %v1767, 0.0
        %v4429 = vmax.f32 %v1769, 0.0
        %v4430 = vmax.f32 %v2440, 0.0
        %v4431 = vmax.f32 %v2442, 0.0
        %v4432 = vmax.f32 %v3113, 0.0
        %v4433 = vmax.f32 %v3115, 0.0
        %v4434 = vmax.f32 %v3786, 0.0
        %v4435 = vmax.f32 %v3788, 0.0
        %v4436 = vmax.f32 %v1773, 0.0
        %v4437 = vmax.f32 %v1775, 0.0
        %v4438 = vmax.f32 %v2446, 0.0
        %v4439 = vmax.f32 %v2448, 0.0
        %v4440 = vmax.f32 %v3119, 0.0
        %v4441 = vmax.f32 %v3121, 0.0
        %v4442 = vmax.f32 %v3792, 0.0
        %v4443 = vmax.f32 %v3794, 0.0
        %v4444 = vmax.f32 %v1777, 0.0
        %v4445 = vmax.f32 %v1779, 0.0
        %v4446 = vmax.f32 %v2450, 0.0
        %v4447 = vmax.f32 %v2452, 0.0
        %v4448 = vmax.f32 %v3123, 0.0
        %v4449 = vmax.f32 %v3125, 0.0
        %v4450 = vmax.f32 %v3796, 0.0
        %v4451 = vmax.f32 %v3798, 0.0
        %v4452 = vmax.f32 %v1783, 0.0
        %v4453 = vmax.f32 %v1785, 0.0
        %v4454 = vmax.f32 %v2456, 0.0
        %v4455 = vmax.f32 %v2458, 0.0
        %v4456 = vmax.f32 %v3129, 0.0
        %v4457 = vmax.f32 %v3131, 0.0
        %v4458 = vmax.f32 %v3802, 0.0
        %v4459 = vmax.f32 %v3804, 0.0
        %v4460 = vmax.f32 %v1787, 0.0
        %v4461 = vmax.f32 %v1789, 0.0
        %v4462 = vmax.f32 %v2460, 0.0
        %v4463 = vmax.f32 %v2462, 0.0
        %v4464 = vmax.f32 %v3133, 0.0
        %v4465 = vmax.f32 %v3135, 0.0
        %v4466 = vmax.f32 %v3806, 0.0
        %v4467 = vmax.f32 %v3808, 0.0
        %v4468 = vmax.f32 %v1793, 0.0
        %v4469 = vmax.f32 %v1795, 0.0
        %v4470 = vmax.f32 %v2466, 0.0
        %v4471 = vmax.f32 %v2468, 0.0
        %v4472 = vmax.f32 %v3139, 0.0
        %v4473 = vmax.f32 %v3141, 0.0
        %v4474 = vmax.f32 %v3812, 0.0
        %v4475 = vmax.f32 %v3814, 0.0
        %v4476 = vmax.f32 %v1797, 0.0
        %v4477 = vmax.f32 %v1799, 0.0
        %v4478 = vmax.f32 %v2470, 0.0
        %v4479 = vmax.f32 %v2472, 0.0
        %v4480 = vmax.f32 %v3143, 0.0
        %v4481 = vmax.f32 %v3145, 0.0
        %v4482 = vmax.f32 %v3816, 0.0
        %v4483 = vmax.f32 %v3818, 0.0
        %v4484 = vmax.f32 %v1803, 0.0
        %v4485 = vmax.f32 %v1805, 0.0
        %v4486 = vmax.f32 %v2476, 0.0
        %v4487 = vmax.f32 %v2478, 0.0
        %v4488 = vmax.f32 %v3149, 0.0
        %v4489 = vmax.f32 %v3151, 0.0
        %v4490 = vmax.f32 %v3822, 0.0
        %v4491 = vmax.f32 %v3824, 0.0
        %v4492 = vmax.f32 %v1807, 0.0
        %v4493 = vmax.f32 %v1809, 0.0
        %v4494 = vmax.f32 %v2480, 0.0
        %v4495 = vmax.f32 %v2482, 0.0
        %v4496 = vmax.f32 %v3153, 0.0
        %v4497 = vmax.f32 %v3155, 0.0
        %v4498 = vmax.f32 %v3826, 0.0
        %v4499 = vmax.f32 %v3828, 0.0
        %v4500 = vmax.f32 %v1813, 0.0
        %v4501 = vmax.f32 %v1815, 0.0
        %v4502 = vmax.f32 %v2486, 0.0
        %v4503 = vmax.f32 %v2488, 0.0
        %v4504 = vmax.f32 %v3159, 0.0
        %v4505 = vmax.f32 %v3161, 0.0
        %v4506 = vmax.f32 %v3832, 0.0
        %v4507 = vmax.f32 %v3834, 0.0
        %v4508 = vmax.f32 %v1817, 0.0
        %v4509 = vmax.f32 %v1819, 0.0
        %v4510 = vmax.f32 %v2490, 0.0
        %v4511 = vmax.f32 %v2492, 0.0
        %v4512 = vmax.f32 %v3163, 0.0
        %v4513 = vmax.f32 %v3165, 0.0
        %v4514 = vmax.f32 %v3836, 0.0
        %v4515 = vmax.f32 %v3838, 0.0
        %v4516 = vmax.f32 %v1823, 0.0
        %v4517 = vmax.f32 %v1825, 0.0
        %v4518 = vmax.f32 %v2496, 0.0
        %v4519 = vmax.f32 %v2498, 0.0
        %v4520 = vmax.f32 %v3169, 0.0
        %v4521 = vmax.f32 %v3171, 0.0
        %v4522 = vmax.f32 %v3842, 0.0
        %v4523 = vmax.f32 %v3844, 0.0
        %v4524 = vmax.f32 %v1827, 0.0
        %v4525 = vmax.f32 %v1829, 0.0
        %v4526 = vmax.f32 %v2500, 0.0
        %v4527 = vmax.f32 %v2502, 0.0
        %v4528 = vmax.f32 %v3173, 0.0
        %v4529 = vmax.f32 %v3175, 0.0
        %v4530 = vmax.f32 %v3846, 0.0
        %v4531 = vmax.f32 %v3848, 0.0
        %v4532 = vmax.f32 %v1833, 0.0
        %v4533 = vmax.f32 %v1835, 0.0
        %v4534 = vmax.f32 %v2506, 0.0
        %v4535 = vmax.f32 %v2508, 0.0
        %v4536 = vmax.f32 %v3179, 0.0
        %v4537 = vmax.f32 %v3181, 0.0
        %v4538 = vmax.f32 %v3852, 0.0
        %v4539 = vmax.f32 %v3854, 0.0
        %v4540 = vmax.f32 %v1837, 0.0
        %v4541 = vmax.f32 %v1839, 0.0
        %v4542 = vmax.f32 %v2510, 0.0
        %v4543 = vmax.f32 %v2512, 0.0
        %v4544 = vmax.f32 %v3183, 0.0
        %v4545 = vmax.f32 %v3185, 0.0
        %v4546 = vmax.f32 %v3856, 0.0
        %v4547 = vmax.f32 %v3858, 0.0
        %v4548 = vmax.f32 %v1843, 0.0
        %v4549 = vmax.f32 %v1845, 0.0
        %v4550 = vmax.f32 %v2516, 0.0
        %v4551 = vmax.f32 %v2518, 0.0
        %v4552 = vmax.f32 %v3189, 0.0
        %v4553 = vmax.f32 %v3191, 0.0
        %v4554 = vmax.f32 %v3862, 0.0
        %v4555 = vmax.f32 %v3864, 0.0
        %v4556 = vmax.f32 %v1847, 0.0
        %v4557 = vmax.f32 %v1849, 0.0
        %v4558 = vmax.f32 %v2520, 0.0
        %v4559 = vmax.f32 %v2522, 0.0
        %v4560 = vmax.f32 %v3193, 0.0
        %v4561 = vmax.f32 %v3195, 0.0
        %v4562 = vmax.f32 %v3866, 0.0
        %v4563 = vmax.f32 %v3868, 0.0
        %v4564 = vmax.f32 %v1853, 0.0
        %v4565 = vmax.f32 %v1855, 0.0
        %v4566 = vmax.f32 %v2526, 0.0
        %v4567 = vmax.f32 %v2528, 0.0
        %v4568 = vmax.f32 %v3199, 0.0
        %v4569 = vmax.f32 %v3201, 0.0
        %v4570 = vmax.f32 %v3872, 0.0
        %v4571 = vmax.f32 %v3874, 0.0
        %v4572 = vmax.f32 %v1857, 0.0
        %v4573 = vmax.f32 %v1859, 0.0
        %v4574 = vmax.f32 %v2530, 0.0
        %v4575 = vmax.f32 %v2532, 0.0
        %v4576 = vmax.f32 %v3203, 0.0
        %v4577 = vmax.f32 %v3205, 0.0
        %v4578 = vmax.f32 %v3876, 0.0
        %v4579 = vmax.f32 %v3878, 0.0
        %v4580 = vmax.f32 %v1863, 0.0
        %v4581 = vmax.f32 %v1865, 0.0
        %v4582 = vmax.f32 %v2536, 0.0
        %v4583 = vmax.f32 %v2538, 0.0
        %v4584 = vmax.f32 %v3209, 0.0
        %v4585 = vmax.f32 %v3211, 0.0
        %v4586 = vmax.f32 %v3882, 0.0
        %v4587 = vmax.f32 %v3884, 0.0
        %v4588 = vmax.f32 %v1867, 0.0
        %v4589 = vmax.f32 %v1869, 0.0
        %v4590 = vmax.f32 %v2540, 0.0
        %v4591 = vmax.f32 %v2542, 0.0
        %v4592 = vmax.f32 %v3213, 0.0
        %v4593 = vmax.f32 %v3215, 0.0
        %v4594 = vmax.f32 %v3886, 0.0
        %v4595 = vmax.f32 %v3888, 0.0
        %v4596 = vmax.f32 %v1873, 0.0
        %v4597 = vmax.f32 %v1875, 0.0
        %v4598 = vmax.f32 %v2546, 0.0
        %v4599 = vmax.f32 %v2548, 0.0
        %v4600 = vmax.f32 %v3219, 0.0
        %v4601 = vmax.f32 %v3221, 0.0
        %v4602 = vmax.f32 %v3892, 0.0
        %v4603 = vmax.f32 %v3894, 0.0
        %v4604 = vmax.f32 %v1877, 0.0
        %v4605 = vmax.f32 %v1879, 0.0
        %v4606 = vmax.f32 %v2550, 0.0
        %v4607 = vmax.f32 %v2552, 0.0
        %v4608 = vmax.f32 %v3223, 0.0
        %v4609 = vmax.f32 %v3225, 0.0
        %v4610 = vmax.f32 %v3896, 0.0
        %v4611 = vmax.f32 %v3898, 0.0
        %v4612 = vmax.f32 %v1883, 0.0
        %v4613 = vmax.f32 %v1885, 0.0
        %v4614 = vmax.f32 %v2556, 0.0
        %v4615 = vmax.f32 %v2558, 0.0
        %v4616 = vmax.f32 %v3229, 0.0
        %v4617 = vmax.f32 %v3231, 0.0
        %v4618 = vmax.f32 %v3902, 0.0
        %v4619 = vmax.f32 %v3904, 0.0
        %v4620 = vmax.f32 %v1887, 0.0
        %v4621 = vmax.f32 %v1889, 0.0
        %v4622 = vmax.f32 %v2560, 0.0
        %v4623 = vmax.f32 %v2562, 0.0
        %v4624 = vmax.f32 %v3233, 0.0
        %v4625 = vmax.f32 %v3235, 0.0
        %v4626 = vmax.f32 %v3906, 0.0
        %v4627 = vmax.f32 %v3908, 0.0
        %v4628 = vmax.f32 %v1893, 0.0
        %v4629 = vmax.f32 %v1895, 0.0
        %v4630 = vmax.f32 %v2566, 0.0
        %v4631 = vmax.f32 %v2568, 0.0
        %v4632 = vmax.f32 %v3239, 0.0
        %v4633 = vmax.f32 %v3241, 0.0
        %v4634 = vmax.f32 %v3912, 0.0
        %v4635 = vmax.f32 %v3914, 0.0
        %v4636 = vmax.f32 %v1897, 0.0
        %v4637 = vmax.f32 %v1899, 0.0
        %v4638 = vmax.f32 %v2570, 0.0
        %v4639 = vmax.f32 %v2572, 0.0
        %v4640 = vmax.f32 %v3243, 0.0
        %v4641 = vmax.f32 %v3245, 0.0
        %v4642 = vmax.f32 %v3916, 0.0
        %v4643 = vmax.f32 %v3918, 0.0
        %v4644 = vmax.f32 %v1903, 0.0
        %v4645 = vmax.f32 %v1905, 0.0
        %v4646 = vmax.f32 %v2576, 0.0
        %v4647 = vmax.f32 %v2578, 0.0
        %v4648 = vmax.f32 %v3249, 0.0
        %v4649 = vmax.f32 %v3251, 0.0
        %v4650 = vmax.f32 %v3922, 0.0
        %v4651 = vmax.f32 %v3924, 0.0
        %v4652 = vmax.f32 %v1907, 0.0
        %v4653 = vmax.f32 %v1909, 0.0
        %v4654 = vmax.f32 %v2580, 0.0
        %v4655 = vmax.f32 %v2582, 0.0
        %v4656 = vmax.f32 %v3253, 0.0
        %v4657 = vmax.f32 %v3255, 0.0
        %v4658 = vmax.f32 %v3926, 0.0
        %v4659 = vmax.f32 %v3928, 0.0
        %v4660 = vmax.f32 %v1913, 0.0
        %v4661 = vmax.f32 %v1915, 0.0
        %v4662 = vmax.f32 %v2586, 0.0
        %v4663 = vmax.f32 %v2588, 0.0
        %v4664 = vmax.f32 %v3259, 0.0
        %v4665 = vmax.f32 %v3261, 0.0
        %v4666 = vmax.f32 %v3932, 0.0
        %v4667 = vmax.f32 %v3934, 0.0
        %v4668 = vmax.f32 %v1917, 0.0
        %v4669 = vmax.f32 %v1919, 0.0
        %v4670 = vmax.f32 %v2590, 0.0
        %v4671 = vmax.f32 %v2592, 0.0
        %v4672 = vmax.f32 %v3263, 0.0
        %v4673 = vmax.f32 %v3265, 0.0
        %v4674 = vmax.f32 %v3936, 0.0
        %v4675 = vmax.f32 %v3938, 0.0
        %v4676 = vmax.f32 %v1923, 0.0
        %v4677 = vmax.f32 %v1925, 0.0
        %v4678 = vmax.f32 %v2596, 0.0
        %v4679 = vmax.f32 %v2598, 0.0
        %v4680 = vmax.f32 %v3269, 0.0
        %v4681 = vmax.f32 %v3271, 0.0
        %v4682 = vmax.f32 %v3942, 0.0
        %v4683 = vmax.f32 %v3944, 0.0
        %v4684 = vmax.f32 %v1927, 0.0
        %v4685 = vmax.f32 %v1929, 0.0
        %v4686 = vmax.f32 %v2600, 0.0
        %v4687 = vmax.f32 %v2602, 0.0
        %v4688 = vmax.f32 %v3273, 0.0
        %v4689 = vmax.f32 %v3275, 0.0
        %v4690 = vmax.f32 %v3946, 0.0
        %v4691 = vmax.f32 %v3948, 0.0
        %v4692 = vmax.f32 %v1933, 0.0
        %v4693 = vmax.f32 %v1935, 0.0
        %v4694 = vmax.f32 %v2606, 0.0
        %v4695 = vmax.f32 %v2608, 0.0
        %v4696 = vmax.f32 %v3279, 0.0
        %v4697 = vmax.f32 %v3281, 0.0
        %v4698 = vmax.f32 %v3952, 0.0
        %v4699 = vmax.f32 %v3954, 0.0
        %v4700 = vmax.f32 %v1937, 0.0
        %v4701 = vmax.f32 %v1939, 0.0
        %v4702 = vmax.f32 %v2610, 0.0
        %v4703 = vmax.f32 %v2612, 0.0
        %v4704 = vmax.f32 %v3283, 0.0
        %v4705 = vmax.f32 %v3285, 0.0
        %v4706 = vmax.f32 %v3956, 0.0
        %v4707 = vmax.f32 %v3958, 0.0
        %v4708 = vmax.f32 %v1943, 0.0
        %v4709 = vmax.f32 %v1945, 0.0
        %v4710 = vmax.f32 %v2616, 0.0
        %v4711 = vmax.f32 %v2618, 0.0
        %v4712 = vmax.f32 %v3289, 0.0
        %v4713 = vmax.f32 %v3291, 0.0
        %v4714 = vmax.f32 %v3962, 0.0
        %v4715 = vmax.f32 %v3964, 0.0
        %v4716 = vmax.f32 %v1947, 0.0
        %v4717 = vmax.f32 %v1949, 0.0
        %v4718 = vmax.f32 %v2620, 0.0
        %v4719 = vmax.f32 %v2622, 0.0
        %v4720 = vmax.f32 %v3293, 0.0
        %v4721 = vmax.f32 %v3295, 0.0
        %v4722 = vmax.f32 %v3966, 0.0
        %v4723 = vmax.f32 %v3968, 0.0
        %v4724 = vmax.f32 %v1953, 0.0
        %v4725 = vmax.f32 %v1955, 0.0
        %v4726 = vmax.f32 %v2626, 0.0
        %v4727 = vmax.f32 %v2628, 0.0
        %v4728 = vmax.f32 %v3299, 0.0
        %v4729 = vmax.f32 %v3301, 0.0
        %v4730 = vmax.f32 %v3972, 0.0
        %v4731 = vmax.f32 %v3974, 0.0
        %v4732 = vmax.f32 %v1957, 0.0
        %v4733 = vmax.f32 %v1959, 0.0
        %v4734 = vmax.f32 %v2630, 0.0
        %v4735 = vmax.f32 %v2632, 0.0
        %v4736 = vmax.f32 %v3303, 0.0
        %v4737 = vmax.f32 %v3305, 0.0
        %v4738 = vmax.f32 %v3976, 0.0
        %v4739 = vmax.f32 %v3978, 0.0
        %v4740 = vmax.f32 %v1963, 0.0
        %v4741 = vmax.f32 %v1965, 0.0
        %v4742 = vmax.f32 %v2636, 0.0
        %v4743 = vmax.f32 %v2638, 0.0
        %v4744 = vmax.f32 %v3309, 0.0
        %v4745 = vmax.f32 %v3311, 0.0
        %v4746 = vmax.f32 %v3982, 0.0
        %v4747 = vmax.f32 %v3984, 0.0
        %v4748 = vmax.f32 %v1967, 0.0
        %v4749 = vmax.f32 %v1969, 0.0
        %v4750 = vmax.f32 %v2640, 0.0
        %v4751 = vmax.f32 %v2642, 0.0
        %v4752 = vmax.f32 %v3313, 0.0
        %v4753 = vmax.f32 %v3315, 0.0
        %v4754 = vmax.f32 %v3986, 0.0
        %v4755 = vmax.f32 %v3988, 0.0
        %v4756 = vmax.f32 %v1973, 0.0
        %v4757 = vmax.f32 %v1975, 0.0
        %v4758 = vmax.f32 %v2646, 0.0
        %v4759 = vmax.f32 %v2648, 0.0
        %v4760 = vmax.f32 %v3319, 0.0
        %v4761 = vmax.f32 %v3321, 0.0
        %v4762 = vmax.f32 %v3992, 0.0
        %v4763 = vmax.f32 %v3994, 0.0
        %v4764 = vmax.f32 %v1977, 0.0
        %v4765 = vmax.f32 %v1979, 0.0
        %v4766 = vmax.f32 %v2650, 0.0
        %v4767 = vmax.f32 %v2652, 0.0
        %v4768 = vmax.f32 %v3323, 0.0
        %v4769 = vmax.f32 %v3325, 0.0
        %v4770 = vmax.f32 %v3996, 0.0
        %v4771 = vmax.f32 %v3998, 0.0
        %v4772 = vmax.f32 %v1983, 0.0
        %v4773 = vmax.f32 %v1985, 0.0
        %v4774 = vmax.f32 %v2656, 0.0
        %v4775 = vmax.f32 %v2658, 0.0
        %v4776 = vmax.f32 %v3329, 0.0
        %v4777 = vmax.f32 %v3331, 0.0
        %v4778 = vmax.f32 %v4002, 0.0
        %v4779 = vmax.f32 %v4004, 0.0
        %v4780 = vmax.f32 %v1987, 0.0
        %v4781 = vmax.f32 %v1989, 0.0
        %v4782 = vmax.f32 %v2660, 0.0
        %v4783 = vmax.f32 %v2662, 0.0
        %v4784 = vmax.f32 %v3333, 0.0
        %v4785 = vmax.f32 %v3335, 0.0
        %v4786 = vmax.f32 %v4006, 0.0
        %v4787 = vmax.f32 %v4008, 0.0
        %v4788 = vmax.f32 %v1993, 0.0
        %v4789 = vmax.f32 %v1995, 0.0
        %v4790 = vmax.f32 %v2666, 0.0
        %v4791 = vmax.f32 %v2668, 0.0
        %v4792 = vmax.f32 %v3339, 0.0
        %v4793 = vmax.f32 %v3341, 0.0
        %v4794 = vmax.f32 %v4012, 0.0
        %v4795 = vmax.f32 %v4014, 0.0
        %v4796 = vmax.f32 %v1997, 0.0
        %v4797 = vmax.f32 %v1999, 0.0
        %v4798 = vmax.f32 %v2670, 0.0
        %v4799 = vmax.f32 %v2672, 0.0
        %v4800 = vmax.f32 %v3343, 0.0
        %v4801 = vmax.f32 %v3345, 0.0
        %v4802 = vmax.f32 %v4016, 0.0
        %v4803 = vmax.f32 %v4018, 0.0
        %v4804 = vmax.f32 %v2003, 0.0
        %v4805 = vmax.f32 %v2005, 0.0
        %v4806 = vmax.f32 %v2676, 0.0
        %v4807 = vmax.f32 %v2678, 0.0
        %v4808 = vmax.f32 %v3349, 0.0
        %v4809 = vmax.f32 %v3351, 0.0
        %v4810 = vmax.f32 %v4022, 0.0
        %v4811 = vmax.f32 %v4024, 0.0
        %v4812 = vmax.f32 %v2007, 0.0
        %v4813 = vmax.f32 %v2009, 0.0
        %v4814 = vmax.f32 %v2680, 0.0
        %v4815 = vmax.f32 %v2682, 0.0
        %v4816 = vmax.f32 %v3353, 0.0
        %v4817 = vmax.f32 %v3355, 0.0
        %v4818 = vmax.f32 %v4026, 0.0
        %v4819 = vmax.f32 %v4028, 0.0
        %v4820 = vmax.f32 %v2013, 0.0
        %v4821 = vmax.f32 %v2015, 0.0
        %v4822 = vmax.f32 %v2686, 0.0
        %v4823 = vmax.f32 %v2688, 0.0
        %v4824 = vmax.f32 %v3359, 0.0
        %v4825 = vmax.f32 %v3361, 0.0
        %v4826 = vmax.f32 %v4032, 0.0
        %v4827 = vmax.f32 %v4034, 0.0
        %v4828 = vmax.f32 %v2017, 0.0
        %v4829 = vmax.f32 %v2019, 0.0
        %v4830 = vmax.f32 %v2690, 0.0
        %v4831 = vmax.f32 %v2692, 0.0
        %v4832 = vmax.f32 %v3363, 0.0
        %v4833 = vmax.f32 %v3365, 0.0
        %v4834 = vmax.f32 %v4036, 0.0
        %v4835 = vmax.f32 %v4038, 0.0
        %v4836 = vmax.f32 %v2023, 0.0
        %v4837 = vmax.f32 %v2025, 0.0
        %v4838 = vmax.f32 %v2696, 0.0
        %v4839 = vmax.f32 %v2698, 0.0
        %v4840 = vmax.f32 %v3369, 0.0
        %v4841 = vmax.f32 %v3371, 0.0
        %v4842 = vmax.f32 %v4042, 0.0
        %v4843 = vmax.f32 %v4044, 0.0
        %v4844 = vmax.f32 %v2027, 0.0
        %v4845 = vmax.f32 %v2029, 0.0
        %v4846 = vmax.f32 %v2700, 0.0
        %v4847 = vmax.f32 %v2702, 0.0
        %v4848 = vmax.f32 %v3373, 0.0
        %v4849 = vmax.f32 %v3375, 0.0
        %v4850 = vmax.f32 %v4046, 0.0
        %v4851 = vmax.f32 %v4048, 0.0
        %v4852 = vmax.f32 %v2033, 0.0
        %v4853 = vmax.f32 %v2035, 0.0
        %v4854 = vmax.f32 %v2706, 0.0
        %v4855 = vmax.f32 %v2708, 0.0
        %v4856 = vmax.f32 %v3379, 0.0
        %v4857 = vmax.f32 %v3381, 0.0
        %v4858 = vmax.f32 %v4052, 0.0
        %v4859 = vmax.f32 %v4054, 0.0
        %v4860 = vmax.f32 %v2037, 0.0
        %v4861 = vmax.f32 %v2039, 0.0
        %v4862 = vmax.f32 %v2710, 0.0
        %v4863 = vmax.f32 %v2712, 0.0
        %v4864 = vmax.f32 %v3383, 0.0
        %v4865 = vmax.f32 %v3385, 0.0
        %v4866 = vmax.f32 %v4056, 0.0
        %v4867 = vmax.f32 %v4058, 0.0
        %v4868 = vmax.f32 %v2043, 0.0
        %v4869 = vmax.f32 %v2045, 0.0
        %v4870 = vmax.f32 %v2716, 0.0
        %v4871 = vmax.f32 %v2718, 0.0
        %v4872 = vmax.f32 %v3389, 0.0
        %v4873 = vmax.f32 %v3391, 0.0
        %v4874 = vmax.f32 %v4062, 0.0
        %v4875 = vmax.f32 %v4064, 0.0
        %v4876 = vmax.f32 %v2047, 0.0
        %v4877 = vmax.f32 %v2049, 0.0
        %v4878 = vmax.f32 %v2720, 0.0
        %v4879 = vmax.f32 %v2722, 0.0
        %v4880 = vmax.f32 %v3393, 0.0
        %v4881 = vmax.f32 %v3395, 0.0
        %v4882 = vmax.f32 %v4066, 0.0
        %v4883 = vmax.f32 %v4068, 0.0
        %v4884 = vmax.f32 %v2053, 0.0
        %v4885 = vmax.f32 %v2055, 0.0
        %v4886 = vmax.f32 %v2726, 0.0
        %v4887 = vmax.f32 %v2728, 0.0
        %v4888 = vmax.f32 %v3399, 0.0
        %v4889 = vmax.f32 %v3401, 0.0
        %v4890 = vmax.f32 %v4072, 0.0
        %v4891 = vmax.f32 %v4074, 0.0
        %v4892 = vmax.f32 %v2057, 0.0
        %v4893 = vmax.f32 %v2059, 0.0
        %v4894 = vmax.f32 %v2730, 0.0
        %v4895 = vmax.f32 %v2732, 0.0
        %v4896 = vmax.f32 %v3403, 0.0
        %v4897 = vmax.f32 %v3405, 0.0
        %v4898 = vmax.f32 %v4076, 0.0
        %v4899 = vmax.f32 %v4078, 0.0
        %v4900 = vmax.f32 %v2063, 0.0
        %v4901 = vmax.f32 %v2065, 0.0
        %v4902 = vmax.f32 %v2736, 0.0
        %v4903 = vmax.f32 %v2738, 0.0
        %v4904 = vmax.f32 %v3409, 0.0
        %v4905 = vmax.f32 %v3411, 0.0
        %v4906 = vmax.f32 %v4082, 0.0
        %v4907 = vmax.f32 %v4084, 0.0
        %v4908 = vmax.f32 %v2067, 0.0
        %v4909 = vmax.f32 %v2069, 0.0
        %v4910 = vmax.f32 %v2740, 0.0
        %v4911 = vmax.f32 %v2742, 0.0
        %v4912 = vmax.f32 %v3413, 0.0
        %v4913 = vmax.f32 %v3415, 0.0
        %v4914 = vmax.f32 %v4086, 0.0
        %v4915 = vmax.f32 %v4088, 0.0
        %v4916 = vmax.f32 %v2073, 0.0
        %v4917 = vmax.f32 %v2075, 0.0
        %v4918 = vmax.f32 %v2746, 0.0
        %v4919 = vmax.f32 %v2748, 0.0
        %v4920 = vmax.f32 %v3419, 0.0
        %v4921 = vmax.f32 %v3421, 0.0
        %v4922 = vmax.f32 %v4092, 0.0
        %v4923 = vmax.f32 %v4094, 0.0
        %v4924 = vmax.f32 %v2077, 0.0
        %v4925 = vmax.f32 %v2079, 0.0
        %v4926 = vmax.f32 %v2750, 0.0
        %v4927 = vmax.f32 %v2752, 0.0
        %v4928 = vmax.f32 %v3423, 0.0
        %v4929 = vmax.f32 %v3425, 0.0
        %v4930 = vmax.f32 %v4096, 0.0
        %v4931 = vmax.f32 %v4098, 0.0
        %v4932 = vmax.f32 %v2083, 0.0
        %v4933 = vmax.f32 %v2085, 0.0
        %v4934 = vmax.f32 %v2756, 0.0
        %v4935 = vmax.f32 %v2758, 0.0
        %v4936 = vmax.f32 %v3429, 0.0
        %v4937 = vmax.f32 %v3431, 0.0
        %v4938 = vmax.f32 %v4102, 0.0
        %v4939 = vmax.f32 %v4104, 0.0
        %v4940 = vmax.f32 %v2087, 0.0
        %v4941 = vmax.f32 %v2089, 0.0
        %v4942 = vmax.f32 %v2760, 0.0
        %v4943 = vmax.f32 %v2762, 0.0
        %v4944 = vmax.f32 %v3433, 0.0
        %v4945 = vmax.f32 %v3435, 0.0
        %v4946 = vmax.f32 %v4106, 0.0
        %v4947 = vmax.f32 %v4108, 0.0
        %v4948 = vmax.f32 %v2093, 0.0
        %v4949 = vmax.f32 %v2095, 0.0
        %v4950 = vmax.f32 %v2766, 0.0
        %v4951 = vmax.f32 %v2768, 0.0
        %v4952 = vmax.f32 %v3439, 0.0
        %v4953 = vmax.f32 %v3441, 0.0
        %v4954 = vmax.f32 %v4112, 0.0
        %v4955 = vmax.f32 %v4114, 0.0
        %v4956 = vmax.f32 %v2097, 0.0
        %v4957 = vmax.f32 %v2099, 0.0
        %v4958 = vmax.f32 %v2770, 0.0
        %v4959 = vmax.f32 %v2772, 0.0
        %v4960 = vmax.f32 %v3443, 0.0
        %v4961 = vmax.f32 %v3445, 0.0
        %v4962 = vmax.f32 %v4116, 0.0
        %v4963 = vmax.f32 %v4118, 0.0
        %v4964 = vmax.f32 %v2103, 0.0
        %v4965 = vmax.f32 %v2105, 0.0
        %v4966 = vmax.f32 %v2776, 0.0
        %v4967 = vmax.f32 %v2778, 0.0
        %v4968 = vmax.f32 %v3449, 0.0
        %v4969 = vmax.f32 %v3451, 0.0
        %v4970 = vmax.f32 %v4122, 0.0
        %v4971 = vmax.f32 %v4124, 0.0
        %v4972 = vmax.f32 %v2107, 0.0
        %v4973 = vmax.f32 %v2109, 0.0
        %v4974 = vmax.f32 %v2780, 0.0
        %v4975 = vmax.f32 %v2782, 0.0
        %v4976 = vmax.f32 %v3453, 0.0
        %v4977 = vmax.f32 %v3455, 0.0
        %v4978 = vmax.f32 %v4126, 0.0
        %v4979 = vmax.f32 %v4128, 0.0
        %v4980 = vmax.f32 %v2113, 0.0
        %v4981 = vmax.f32 %v2115, 0.0
        %v4982 = vmax.f32 %v2786, 0.0
        %v4983 = vmax.f32 %v2788, 0.0
        %v4984 = vmax.f32 %v3459, 0.0
        %v4985 = vmax.f32 %v3461, 0.0
        %v4986 = vmax.f32 %v4132, 0.0
        %v4987 = vmax.f32 %v4134, 0.0
        %v4988 = vmax.f32 %v2117, 0.0
        %v4989 = vmax.f32 %v2119, 0.0
        %v4990 = vmax.f32 %v2790, 0.0
        %v4991 = vmax.f32 %v2792, 0.0
        %v4992 = vmax.f32 %v3463, 0.0
        %v4993 = vmax.f32 %v3465, 0.0
        %v4994 = vmax.f32 %v4136, 0.0
        %v4995 = vmax.f32 %v4138, 0.0
        %v4996 = vmax.f32 %v2123, 0.0
        %v4997 = vmax.f32 %v2125, 0.0
        %v4998 = vmax.f32 %v2796, 0.0
        %v4999 = vmax.f32 %v2798, 0.0
        %v5000 = vmax.f32 %v3469, 0.0
        %v5001 = vmax.f32 %v3471, 0.0
        %v5002 = vmax.f32 %v4142, 0.0
        %v5003 = vmax.f32 %v4144, 0.0
        %v5004 = vmax.f32 %v2127, 0.0
        %v5005 = vmax.f32 %v2129, 0.0
        %v5006 = vmax.f32 %v2800, 0.0
        %v5007 = vmax.f32 %v2802, 0.0
        %v5008 = vmax.f32 %v3473, 0.0
        %v5009 = vmax.f32 %v3475, 0.0
        %v5010 = vmax.f32 %v4146, 0.0
        %v5011 = vmax.f32 %v4148, 0.0
        %v5012 = vmax.f32 %v2133, 0.0
        %v5013 = vmax.f32 %v2135, 0.0
        %v5014 = vmax.f32 %v2806, 0.0
        %v5015 = vmax.f32 %v2808, 0.0
        %v5016 = vmax.f32 %v3479, 0.0
        %v5017 = vmax.f32 %v3481, 0.0
        %v5018 = vmax.f32 %v4152, 0.0
        %v5019 = vmax.f32 %v4154, 0.0
        %v5020 = vmax.f32 %v2137, 0.0
        %v5021 = vmax.f32 %v2139, 0.0
        %v5022 = vmax.f32 %v2810, 0.0
        %v5023 = vmax.f32 %v2812, 0.0
        %v5024 = vmax.f32 %v3483, 0.0
        %v5025 = vmax.f32 %v3485, 0.0
        %v5026 = vmax.f32 %v4156, 0.0
        %v5027 = vmax.f32 %v4158, 0.0
        %v5028 = vmax.f32 %v2143, 0.0
        %v5029 = vmax.f32 %v2145, 0.0
        %v5030 = vmax.f32 %v2816, 0.0
        %v5031 = vmax.f32 %v2818, 0.0
        %v5032 = vmax.f32 %v3489, 0.0
        %v5033 = vmax.f32 %v3491, 0.0
        %v5034 = vmax.f32 %v4162, 0.0
        %v5035 = vmax.f32 %v4164, 0.0
        %v5036 = vmax.f32 %v2147, 0.0
        %v5037 = vmax.f32 %v2149, 0.0
        %v5038 = vmax.f32 %v2820, 0.0
        %v5039 = vmax.f32 %v2822, 0.0
        %v5040 = vmax.f32 %v3493, 0.0
        %v5041 = vmax.f32 %v3495, 0.0
        %v5042 = vmax.f32 %v4166, 0.0
        %v5043 = vmax.f32 %v4168, 0.0
        %v5044 = vmax.f32 %v2153, 0.0
        %v5045 = vmax.f32 %v2155, 0.0
        %v5046 = vmax.f32 %v2826, 0.0
        %v5047 = vmax.f32 %v2828, 0.0
        %v5048 = vmax.f32 %v3499, 0.0
        %v5049 = vmax.f32 %v3501, 0.0
        %v5050 = vmax.f32 %v4172, 0.0
        %v5051 = vmax.f32 %v4174, 0.0
        %v5052 = vmax.f32 %v2157, 0.0
        %v5053 = vmax.f32 %v2159, 0.0
        %v5054 = vmax.f32 %v2830, 0.0
        %v5055 = vmax.f32 %v2832, 0.0
        %v5056 = vmax.f32 %v3503, 0.0
        %v5057 = vmax.f32 %v3505, 0.0
        %v5058 = vmax.f32 %v4176, 0.0
        %v5059 = vmax.f32 %v4178, 0.0
        %v5060 = vmax.f32 %v2163, 0.0
        %v5061 = vmax.f32 %v2165, 0.0
        %v5062 = vmax.f32 %v2836, 0.0
        %v5063 = vmax.f32 %v2838, 0.0
        %v5064 = vmax.f32 %v3509, 0.0
        %v5065 = vmax.f32 %v3511, 0.0
        %v5066 = vmax.f32 %v4182, 0.0
        %v5067 = vmax.f32 %v4184, 0.0
        %v5068 = vmax.f32 %v2167, 0.0
        %v5069 = vmax.f32 %v2169, 0.0
        %v5070 = vmax.f32 %v2840, 0.0
        %v5071 = vmax.f32 %v2842, 0.0
        %v5072 = vmax.f32 %v3513, 0.0
        %v5073 = vmax.f32 %v3515, 0.0
        %v5074 = vmax.f32 %v4186, 0.0
        %v5075 = vmax.f32 %v4188, 0.0
        %v5076 = vmax.f32 %v2173, 0.0
        %v5077 = vmax.f32 %v2175, 0.0
        %v5078 = vmax.f32 %v2846, 0.0
        %v5079 = vmax.f32 %v2848, 0.0
        %v5080 = vmax.f32 %v3519, 0.0
        %v5081 = vmax.f32 %v3521, 0.0
        %v5082 = vmax.f32 %v4192, 0.0
        %v5083 = vmax.f32 %v4194, 0.0
        %v5084 = vmax.f32 %v2177, 0.0
        %v5085 = vmax.f32 %v2179, 0.0
        %v5086 = vmax.f32 %v2850, 0.0
        %v5087 = vmax.f32 %v2852, 0.0
        %v5088 = vmax.f32 %v3523, 0.0
        %v5089 = vmax.f32 %v3525, 0.0
        %v5090 = vmax.f32 %v4196, 0.0
        %v5091 = vmax.f32 %v4198, 0.0
        %v5092 = vmax.f32 %v2183, 0.0
        %v5093 = vmax.f32 %v2185, 0.0
        %v5094 = vmax.f32 %v2856, 0.0
        %v5095 = vmax.f32 %v2858, 0.0
        %v5096 = vmax.f32 %v3529, 0.0
        %v5097 = vmax.f32 %v3531, 0.0
        %v5098 = vmax.f32 %v4202, 0.0
        %v5099 = vmax.f32 %v4204, 0.0
        %v5100 = vmax.f32 %v2187, 0.0
        %v5101 = vmax.f32 %v2189, 0.0
        %v5102 = vmax.f32 %v2860, 0.0
        %v5103 = vmax.f32 %v2862, 0.0
        %v5104 = vmax.f32 %v3533, 0.0
        %v5105 = vmax.f32 %v3535, 0.0
        %v5106 = vmax.f32 %v4206, 0.0
        %v5107 = vmax.f32 %v4208, 0.0
        %v5108 = vmax.f32 %v2193, 0.0
        %v5109 = vmax.f32 %v2195, 0.0
        %v5110 = vmax.f32 %v2866, 0.0
        %v5111 = vmax.f32 %v2868, 0.0
        %v5112 = vmax.f32 %v3539, 0.0
        %v5113 = vmax.f32 %v3541, 0.0
        %v5114 = vmax.f32 %v4212, 0.0
        %v5115 = vmax.f32 %v4214, 0.0
        %v5116 = vmax.f32 %v2197, 0.0
        %v5117 = vmax.f32 %v2199, 0.0
        %v5118 = vmax.f32 %v2870, 0.0
        %v5119 = vmax.f32 %v2872, 0.0
        %v5120 = vmax.f32 %v3543, 0.0
        %v5121 = vmax.f32 %v3545, 0.0
        %v5122 = vmax.f32 %v4216, 0.0
        %v5123 = vmax.f32 %v4218, 0.0
        %v5124 = vmax.f32 %v2203, 0.0
        %v5125 = vmax.f32 %v2205, 0.0
        %v5126 = vmax.f32 %v2876, 0.0
        %v5127 = vmax.f32 %v2878, 0.0
        %v5128 = vmax.f32 %v3549, 0.0
        %v5129 = vmax.f32 %v3551, 0.0
        %v5130 = vmax.f32 %v4222, 0.0
        %v5131 = vmax.f32 %v4224, 0.0
        %v5132 = vmax.f32 %v2207, 0.0
        %v5133 = vmax.f32 %v2209, 0.0
        %v5134 = vmax.f32 %v2880, 0.0
        %v5135 = vmax.f32 %v2882, 0.0
        %v5136 = vmax.f32 %v3553, 0.0
        %v5137 = vmax.f32 %v3555, 0.0
        %v5138 = vmax.f32 %v4226, 0.0
        %v5139 = vmax.f32 %v4228, 0.0
        %v5140 = vmax.f32 %v2213, 0.0
        %v5141 = vmax.f32 %v2215, 0.0
        %v5142 = vmax.f32 %v2886, 0.0
        %v5143 = vmax.f32 %v2888, 0.0
        %v5144 = vmax.f32 %v3559, 0.0
        %v5145 = vmax.f32 %v3561, 0.0
        %v5146 = vmax.f32 %v4232, 0.0
        %v5147 = vmax.f32 %v4234, 0.0
        %v5148 = vmax.f32 %v2217, 0.0
        %v5149 = vmax.f32 %v2219, 0.0
        %v5150 = vmax.f32 %v2890, 0.0
        %v5151 = vmax.f32 %v2892, 0.0
        %v5152 = vmax.f32 %v3563, 0.0
        %v5153 = vmax.f32 %v3565, 0.0
        %v5154 = vmax.f32 %v4236, 0.0
        %v5155 = vmax.f32 %v4238, 0.0
        %v5156 = vmax.f32 %v2223, 0.0
        %v5157 = vmax.f32 %v2225, 0.0
        %v5158 = vmax.f32 %v2896, 0.0
        %v5159 = vmax.f32 %v2898, 0.0
        %v5160 = vmax.f32 %v3569, 0.0
        %v5161 = vmax.f32 %v3571, 0.0
        %v5162 = vmax.f32 %v4242, 0.0
        %v5163 = vmax.f32 %v4244, 0.0
        %v5164 = vmax.f32 %v2227, 0.0
        %v5165 = vmax.f32 %v2229, 0.0
        %v5166 = vmax.f32 %v2900, 0.0
        %v5167 = vmax.f32 %v2902, 0.0
        %v5168 = vmax.f32 %v3573, 0.0
        %v5169 = vmax.f32 %v3575, 0.0
        %v5170 = vmax.f32 %v4246, 0.0
        %v5171 = vmax.f32 %v4248, 0.0
        %v5172 = vmax.f32 %v2233, 0.0
        %v5173 = vmax.f32 %v2235, 0.0
        %v5174 = vmax.f32 %v2906, 0.0
        %v5175 = vmax.f32 %v2908, 0.0
        %v5176 = vmax.f32 %v3579, 0.0
        %v5177 = vmax.f32 %v3581, 0.0
        %v5178 = vmax.f32 %v4252, 0.0
        %v5179 = vmax.f32 %v4254, 0.0
        %v5180 = vmax.f32 %v2237, 0.0
        %v5181 = vmax.f32 %v2239, 0.0
        %v5182 = vmax.f32 %v2910, 0.0
        %v5183 = vmax.f32 %v2912, 0.0
        %v5184 = vmax.f32 %v3583, 0.0
        %v5185 = vmax.f32 %v3585, 0.0
        %v5186 = vmax.f32 %v4256, 0.0
        %v5187 = vmax.f32 %v4258, 0.0
        %v5188 = vmax.f32 %v2243, 0.0
        %v5189 = vmax.f32 %v2245, 0.0
        %v5190 = vmax.f32 %v2916, 0.0
        %v5191 = vmax.f32 %v2918, 0.0
        %v5192 = vmax.f32 %v3589, 0.0
        %v5193 = vmax.f32 %v3591, 0.0
        %v5194 = vmax.f32 %v4262, 0.0
        %v5195 = vmax.f32 %v4264, 0.0
        %v5196 = vmax.f32 %v2247, 0.0
        %v5197 = vmax.f32 %v2249, 0.0
        %v5198 = vmax.f32 %v2920, 0.0
        %v5199 = vmax.f32 %v2922, 0.0
        %v5200 = vmax.f32 %v3593, 0.0
        %v5201 = vmax.f32 %v3595, 0.0
        %v5202 = vmax.f32 %v4266, 0.0
        %v5203 = vmax.f32 %v4268, 0.0
        %v5204 = vmax.f32 %v2253, 0.0
        %v5205 = vmax.f32 %v2255, 0.0
        %v5206 = vmax.f32 %v2926, 0.0
        %v5207 = vmax.f32 %v2928, 0.0
        %v5208 = vmax.f32 %v3599, 0.0
        %v5209 = vmax.f32 %v3601, 0.0
        %v5210 = vmax.f32 %v4272, 0.0
        %v5211 = vmax.f32 %v4274, 0.0
        %v5212 = vmax.f32 %v2257, 0.0
        %v5213 = vmax.f32 %v2259, 0.0
        %v5214 = vmax.f32 %v2930, 0.0
        %v5215 = vmax.f32 %v2932, 0.0
        %v5216 = vmax.f32 %v3603, 0.0
        %v5217 = vmax.f32 %v3605, 0.0
        %v5218 = vmax.f32 %v4276, 0.0
        %v5219 = vmax.f32 %v4278, 0.0
        %v5220 = vmax.f32 %v2263, 0.0
        %v5221 = vmax.f32 %v2265, 0.0
        %v5222 = vmax.f32 %v2936, 0.0
        %v5223 = vmax.f32 %v2938, 0.0
        %v5224 = vmax.f32 %v3609, 0.0
        %v5225 = vmax.f32 %v3611, 0.0
        %v5226 = vmax.f32 %v4282, 0.0
        %v5227 = vmax.f32 %v4284, 0.0
        %v5228 = vmax.f32 %v2267, 0.0
        %v5229 = vmax.f32 %v2269, 0.0
        %v5230 = vmax.f32 %v2940, 0.0
        %v5231 = vmax.f32 %v2942, 0.0
        %v5232 = vmax.f32 %v3613, 0.0
        %v5233 = vmax.f32 %v3615, 0.0
        %v5234 = vmax.f32 %v4286, 0.0
        %v5235 = vmax.f32 %v4288, 0.0
        %v5236 = vmax.f32 %v2273, 0.0
        %v5237 = vmax.f32 %v2275, 0.0
        %v5238 = vmax.f32 %v2946, 0.0
        %v5239 = vmax.f32 %v2948, 0.0
        %v5240 = vmax.f32 %v3619, 0.0
        %v5241 = vmax.f32 %v3621, 0.0
        %v5242 = vmax.f32 %v4292, 0.0
        %v5243 = vmax.f32 %v4294, 0.0
        %v5244 = vmax.f32 %v2277, 0.0
        %v5245 = vmax.f32 %v2279, 0.0
        %v5246 = vmax.f32 %v2950, 0.0
        %v5247 = vmax.f32 %v2952, 0.0
        %v5248 = vmax.f32 %v3623, 0.0
        %v5249 = vmax.f32 %v3625, 0.0
        %v5250 = vmax.f32 %v4296, 0.0
        %v5251 = vmax.f32 %v4298, 0.0
        %v5252 = vmax.f32 %v2283, 0.0
        %v5253 = vmax.f32 %v2285, 0.0
        %v5254 = vmax.f32 %v2956, 0.0
        %v5255 = vmax.f32 %v2958, 0.0
        %v5256 = vmax.f32 %v3629, 0.0
        %v5257 = vmax.f32 %v3631, 0.0
        %v5258 = vmax.f32 %v4302, 0.0
        %v5259 = vmax.f32 %v4304, 0.0
        %v5260 = vmax.f32 %v2287, 0.0
        %v5261 = vmax.f32 %v2289, 0.0
        %v5262 = vmax.f32 %v2960, 0.0
        %v5263 = vmax.f32 %v2962, 0.0
        %v5264 = vmax.f32 %v3633, 0.0
        %v5265 = vmax.f32 %v3635, 0.0
        %v5266 = vmax.f32 %v4306, 0.0
        %v5267 = vmax.f32 %v4308, 0.0
        %v5268 = vmax.f32 %v2293, 0.0
        %v5269 = vmax.f32 %v2295, 0.0
        %v5270 = vmax.f32 %v2966, 0.0
        %v5271 = vmax.f32 %v2968, 0.0
        %v5272 = vmax.f32 %v3639, 0.0
        %v5273 = vmax.f32 %v3641, 0.0
        %v5274 = vmax.f32 %v4312, 0.0
        %v5275 = vmax.f32 %v4314, 0.0
        %v5276 = vmax.f32 %v2297, 0.0
        %v5277 = vmax.f32 %v2299, 0.0
        %v5278 = vmax.f32 %v2970, 0.0
        %v5279 = vmax.f32 %v2972, 0.0
        %v5280 = vmax.f32 %v3643, 0.0
        %v5281 = vmax.f32 %v3645, 0.0
        %v5282 = vmax.f32 %v4316, 0.0
        %v5283 = vmax.f32 %v4318, 0.0
        %v5284 = vmax.f32 %v2303, 0.0
        %v5285 = vmax.f32 %v2305, 0.0
        %v5286 = vmax.f32 %v2976, 0.0
        %v5287 = vmax.f32 %v2978, 0.0
        %v5288 = vmax.f32 %v3649, 0.0
        %v5289 = vmax.f32 %v3651, 0.0
        %v5290 = vmax.f32 %v4322, 0.0
        %v5291 = vmax.f32 %v4324, 0.0
        %v5292 = vmax.f32 %v2307, 0.0
        %v5293 = vmax.f32 %v2309, 0.0
        %v5294 = vmax.f32 %v2980, 0.0
        %v5295 = vmax.f32 %v2982, 0.0
        %v5296 = vmax.f32 %v3653, 0.0
        %v5297 = vmax.f32 %v3655, 0.0
        %v5298 = vmax.f32 %v4326, 0.0
        %v5299 = vmax.f32 %v4328, 0.0
        %v5300 = vmax.f32 %v2313, 0.0
        %v5301 = vmax.f32 %v2315, 0.0
        %v5302 = vmax.f32 %v2986, 0.0
        %v5303 = vmax.f32 %v2988, 0.0
        %v5304 = vmax.f32 %v3659, 0.0
        %v5305 = vmax.f32 %v3661, 0.0
        %v5306 = vmax.f32 %v4332, 0.0
        %v5307 = vmax.f32 %v4334, 0.0
        %v5308 = vmax.f32 %v2317, 0.0
        %v5309 = vmax.f32 %v2319, 0.0
        %v5310 = vmax.f32 %v2990, 0.0
        %v5311 = vmax.f32 %v2992, 0.0
        %v5312 = vmax.f32 %v3663, 0.0
        %v5313 = vmax.f32 %v3665, 0.0
        %v5314 = vmax.f32 %v4336, 0.0
        %v5315 = vmax.f32 %v4338, 0.0
        %v5316 = vmax.f32 %v2323, 0.0
        %v5317 = vmax.f32 %v2325, 0.0
        %v5318 = vmax.f32 %v2996, 0.0
        %v5319 = vmax.f32 %v2998, 0.0
        %v5320 = vmax.f32 %v3669, 0.0
        %v5321 = vmax.f32 %v3671, 0.0
        %v5322 = vmax.f32 %v4342, 0.0
        %v5323 = vmax.f32 %v4344, 0.0
        %v5324 = vmax.f32 %v2327, 0.0
        %v5325 = vmax.f32 %v2329, 0.0
        %v5326 = vmax.f32 %v3000, 0.0
        %v5327 = vmax.f32 %v3002, 0.0
        %v5328 = vmax.f32 %v3673, 0.0
        %v5329 = vmax.f32 %v3675, 0.0
        %v5330 = vmax.f32 %v4346, 0.0
        %v5331 = vmax.f32 %v4348, 0.0
        %v5332 = vmax.f32 %v2333, 0.0
        %v5333 = vmax.f32 %v2335, 0.0
        %v5334 = vmax.f32 %v3006, 0.0
        %v5335 = vmax.f32 %v3008, 0.0
        %v5336 = vmax.f32 %v3679, 0.0
        %v5337 = vmax.f32 %v3681, 0.0
        %v5338 = vmax.f32 %v4352, 0.0
        %v5339 = vmax.f32 %v4354, 0.0
        %v5340 = vmax.f32 %v2337, 0.0
        %v5341 = vmax.f32 %v2339, 0.0
        %v5342 = vmax.f32 %v3010, 0.0
        %v5343 = vmax.f32 %v3012, 0.0
        %v5344 = vmax.f32 %v3683, 0.0
        %v5345 = vmax.f32 %v3685, 0.0
        %v5346 = vmax.f32 %v4356, 0.0
        %v5347 = vmax.f32 %v4358, 0.0
        %v5348 = vmax.f32 %v2343, 0.0
        %v5349 = vmax.f32 %v2345, 0.0
        %v5350 = vmax.f32 %v3016, 0.0
        %v5351 = vmax.f32 %v3018, 0.0
        %v5352 = vmax.f32 %v3689, 0.0
        %v5353 = vmax.f32 %v3691, 0.0
        %v5354 = vmax.f32 %v4362, 0.0
        %v5355 = vmax.f32 %v4364, 0.0
        %v5356 = vmax.f32 %v2347, 0.0
        %v5357 = vmax.f32 %v2349, 0.0
        %v5358 = vmax.f32 %v3020, 0.0
        %v5359 = vmax.f32 %v3022, 0.0
        %v5360 = vmax.f32 %v3693, 0.0
        %v5361 = vmax.f32 %v3695, 0.0
        %v5362 = vmax.f32 %v4366, 0.0
        %v5363 = vmax.f32 %v4368, 0.0
        %v5364 = vmax.f32 %v2353, 0.0
        %v5365 = vmax.f32 %v2355, 0.0
        %v5366 = vmax.f32 %v3026, 0.0
        %v5367 = vmax.f32 %v3028, 0.0
        %v5368 = vmax.f32 %v3699, 0.0
        %v5369 = vmax.f32 %v3701, 0.0
        %v5370 = vmax.f32 %v4372, 0.0
        %v5371 = vmax.f32 %v4374, 0.0
        %v5372 = vmax.f32 %v2357, 0.0
        %v5373 = vmax.f32 %v2359, 0.0
        %v5374 = vmax.f32 %v3030, 0.0
        %v5375 = vmax.f32 %v3032, 0.0
        %v5376 = vmax.f32 %v3703, 0.0
        %v5377 = vmax.f32 %v3705, 0.0
        %v5378 = vmax.f32 %v4376, 0.0
        %v5379 = vmax.f32 %v4378, 0.0
        %v5380 = vmax.f32 %v2363, 0.0
        %v5381 = vmax.f32 %v2365, 0.0
        %v5382 = vmax.f32 %v3036, 0.0
        %v5383 = vmax.f32 %v3038, 0.0
        %v5384 = vmax.f32 %v3709, 0.0
        %v5385 = vmax.f32 %v3711, 0.0
        %v5386 = vmax.f32 %v4382, 0.0
        %v5387 = vmax.f32 %v4384, 0.0
        %v5388 = vmax.f32 %v2367, 0.0
        %v5389 = vmax.f32 %v2369, 0.0
        %v5390 = vmax.f32 %v3040, 0.0
        %v5391 = vmax.f32 %v3042, 0.0
        %v5392 = vmax.f32 %v3713, 0.0
        %v5393 = vmax.f32 %v3715, 0.0
        %v5394 = vmax.f32 %v4386, 0.0
        %v5395 = vmax.f32 %v4388, 0.0
        %v5396 = vmax.f32 %v2373, 0.0
        %v5397 = vmax.f32 %v2375, 0.0
        %v5398 = vmax.f32 %v3046, 0.0
        %v5399 = vmax.f32 %v3048, 0.0
        %v5400 = vmax.f32 %v3719, 0.0
        %v5401 = vmax.f32 %v3721, 0.0
        %v5402 = vmax.f32 %v4392, 0.0
        %v5403 = vmax.f32 %v4394, 0.0
        %v5404 = vmax.f32 %v2377, 0.0
        %v5405 = vmax.f32 %v2379, 0.0
        %v5406 = vmax.f32 %v3050, 0.0
        %v5407 = vmax.f32 %v3052, 0.0
        %v5408 = vmax.f32 %v3723, 0.0
        %v5409 = vmax.f32 %v3725, 0.0
        %v5410 = vmax.f32 %v4396, 0.0
        %v5411 = vmax.f32 %v4398, 0.0
        %v5412 = vmax.f32 %v2383, 0.0
        %v5413 = vmax.f32 %v2385, 0.0
        %v5414 = vmax.f32 %v3056, 0.0
        %v5415 = vmax.f32 %v3058, 0.0
        %v5416 = vmax.f32 %v3729, 0.0
        %v5417 = vmax.f32 %v3731, 0.0
        %v5418 = vmax.f32 %v4402, 0.0
        %v5419 = vmax.f32 %v4404, 0.0
        %v5420 = vmax.f32 %v2387, 0.0
        %v5421 = vmax.f32 %v2389, 0.0
        %v5422 = vmax.f32 %v3060, 0.0
        %v5423 = vmax.f32 %v3062, 0.0
        %v5424 = vmax.f32 %v3733, 0.0
        %v5425 = vmax.f32 %v3735, 0.0
        %v5426 = vmax.f32 %v4406, 0.0
        %v5427 = vmax.f32 %v4408, 0.0
        %v5428 = vmax.f32 %v2393, 0.0
        %v5429 = vmax.f32 %v2395, 0.0
        %v5430 = vmax.f32 %v3066, 0.0
        %v5431 = vmax.f32 %v3068, 0.0
        %v5432 = vmax.f32 %v3739, 0.0
        %v5433 = vmax.f32 %v3741, 0.0
        %v5434 = vmax.f32 %v4412, 0.0
        %v5435 = vmax.f32 %v4414, 0.0
        %v5436 = vmax.f32 %v2397, 0.0
        %v5437 = vmax.f32 %v2399, 0.0
        %v5438 = vmax.f32 %v3070, 0.0
        %v5439 = vmax.f32 %v3072, 0.0
        %v5440 = vmax.f32 %v3743, 0.0
        %v5441 = vmax.f32 %v3745, 0.0
        %v5442 = vmax.f32 %v4416, 0.0
        %v5443 = vmax.f32 %v4418, 0.0
        %v5444 = vld [vmem:[#allocation2] sm:$0xff]
        %v5445 = vld [vmem:[#allocation2 + $0x8] sm:$0xff]
        %v5446 = vld [vmem:[#allocation2 + $0x10] sm:$0xff]
        %v5447 = vld [vmem:[#allocation2 + $0x18] sm:$0xff]
        %v5448 = vld [vmem:[#allocation2 + $0x20] sm:$0xff]
        %v5449 = vld [vmem:[#allocation2 + $0x28] sm:$0xff]
        %v5450 = vld [vmem:[#allocation2 + $0x30] sm:$0xff]
        %v5451 = vld [vmem:[#allocation2 + $0x38] sm:$0xff]
        %v5452 = vadd.f32 %v4420, %v4428
        %v5453 = vadd.f32 %v5452, %v4436
        %v5454 = vadd.f32 %v5453, %v4444
        %v5455 = vadd.f32 %v5454, %v4452
        %v5456 = vadd.f32 %v5455, %v4460
        %v5457 = vadd.f32 %v5456, %v4468
        %v5458 = vadd.f32 %v5457, %v4476
        %v5459 = vadd.f32 %v5458, %v4484
        %v5460 = vadd.f32 %v5459, %v4492
        %v5461 = vadd.f32 %v5460, %v4500
        %v5462 = vadd.f32 %v5461, %v4508
        %v5463 = vadd.f32 %v5462, %v4516
        %v5464 = vadd.f32 %v5463, %v4524
        %v5465 = vadd.f32 %v5464, %v4532
        %v5466 = vadd.f32 %v5465, %v4540
        %v5467 = vrot.slane %v5466, 4
        %v5468 = vadd.f32 %v5466, %v5467
        %v5469 = vrot.slane %v5468, 2
        %v5470 = vadd.f32 %v5468, %v5469
        %v5471 = vrot.slane %v5470, 1
        %v5472 = vadd.f32 %v5470, %v5471
        %v5473 = vadd.f32 %v4421, %v4429
        %v5474 = vadd.f32 %v5473, %v4437
        %v5475 = vadd.f32 %v5474, %v4445
        %v5476 = vadd.f32 %v5475, %v4453
        %v5477 = vadd.f32 %v5476, %v4461
        %v5478 = vadd.f32 %v5477, %v4469
        %v5479 = vadd.f32 %v5478, %v4477
        %v5480 = vadd.f32 %v5479, %v4485
        %v5481 = vadd.f32 %v5480, %v4493
        %v5482 = vadd.f32 %v5481, %v4501
        %v5483 = vadd.f32 %v5482, %v4509
        %v5484 = vadd.f32 %v5483, %v4517
        %v5485 = vadd.f32 %v5484, %v4525
        %v5486 = vadd.f32 %v5485, %v4533
        %v5487 = vadd.f32 %v5486, %v4541
        %v5488 = vrot.slane %v5487, 4
        %v5489 = vadd.f32 %v5487, %v5488
        %v5490 = vrot.slane %v5489, 2
        %v5491 = vadd.f32 %v5489, %v5490
        %v5492 = vrot.slane %v5491, 1
        %v5493 = vadd.f32 %v5491, %v5492
        %v5494 = vadd.f32 %v4422, %v4430
        %v5495 = vadd.f32 %v5494, %v4438
        %v5496 = vadd.f32 %v5495, %v4446
        %v5497 = vadd.f32 %v5496, %v4454
        %v5498 = vadd.f32 %v5497, %v4462
        %v5499 = vadd.f32 %v5498, %v4470
        %v5500 = vadd.f32 %v5499, %v4478
        %v5501 = vadd.f32 %v5500, %v4486
        %v5502 = vadd.f32 %v5501, %v4494
        %v5503 = vadd.f32 %v5502, %v4502
        %v5504 = vadd.f32 %v5503, %v4510
        %v5505 = vadd.f32 %v5504, %v4518
        %v5506 = vadd.f32 %v5505, %v4526
        %v5507 = vadd.f32 %v5506, %v4534
        %v5508 = vadd.f32 %v5507, %v4542
        %v5509 = vrot.slane %v5508, 4
        %v5510 = vadd.f32 %v5508, %v5509
        %v5511 = vrot.slane %v5510, 2
        %v5512 = vadd.f32 %v5510, %v5511
        %v5513 = vrot.slane %v5512, 1
        %v5514 = vadd.f32 %v5512, %v5513
        %v5515 = vadd.f32 %v4423, %v4431
        %v5516 = vadd.f32 %v5515, %v4439
        %v5517 = vadd.f32 %v5516, %v4447
        %v5518 = vadd.f32 %v5517, %v4455
        %v5519 = vadd.f32 %v5518, %v4463
        %v5520 = vadd.f32 %v5519, %v4471
        %v5521 = vadd.f32 %v5520, %v4479
        %v5522 = vadd.f32 %v5521, %v4487
        %v5523 = vadd.f32 %v5522, %v4495
        %v5524 = vadd.f32 %v5523, %v4503
        %v5525 = vadd.f32 %v5524, %v4511
        %v5526 = vadd.f32 %v5525, %v4519
        %v5527 = vadd.f32 %v5526, %v4527
        %v5528 = vadd.f32 %v5527, %v4535
        %v5529 = vadd.f32 %v5528, %v4543
        %v5530 = vrot.slane %v5529, 4
        %v5531 = vadd.f32 %v5529, %v5530
        %v5532 = vrot.slane %v5531, 2
        %v5533 = vadd.f32 %v5531, %v5532
        %v5534 = vrot.slane %v5533, 1
        %v5535 = vadd.f32 %v5533, %v5534
        %v5536 = vadd.f32 %v4424, %v4432
        %v5537 = vadd.f32 %v5536, %v4440
        %v5538 = vadd.f32 %v5537, %v4448
        %v5539 = vadd.f32 %v5538, %v4456
        %v5540 = vadd.f32 %v5539, %v4464
        %v5541 = vadd.f32 %v5540, %v4472
        %v5542 = vadd.f32 %v5541, %v4480
        %v5543 = vadd.f32 %v5542, %v4488
        %v5544 = vadd.f32 %v5543, %v4496
        %v5545 = vadd.f32 %v5544, %v4504
        %v5546 = vadd.f32 %v5545, %v4512
        %v5547 = vadd.f32 %v5546, %v4520
        %v5548 = vadd.f32 %v5547, %v4528
        %v5549 = vadd.f32 %v5548, %v4536
        %v5550 = vadd.f32 %v5549, %v4544
        %v5551 = vrot.slane %v5550, 4
        %v5552 = vadd.f32 %v5550, %v5551
        %v5553 = vrot.slane %v5552, 2
        %v5554 = vadd.f32 %v5552, %v5553
        %v5555 = vrot.slane %v5554, 1
        %v5556 = vadd.f32 %v5554, %v5555
        %v5557 = vadd.f32 %v4425, %v4433
        %v5558 = vadd.f32 %v5557, %v4441
        %v5559 = vadd.f32 %v5558, %v4449
        %v5560 = vadd.f32 %v5559, %v4457
        %v5561 = vadd.f32 %v5560, %v4465
        %v5562 = vadd.f32 %v5561, %v4473
        %v5563 = vadd.f32 %v5562, %v4481
        %v5564 = vadd.f32 %v5563, %v4489
        %v5565 = vadd.f32 %v5564, %v4497
        %v5566 = vadd.f32 %v5565, %v4505
        %v5567 = vadd.f32 %v5566, %v4513
        %v5568 = vadd.f32 %v5567, %v4521
        %v5569 = vadd.f32 %v5568, %v4529
        %v5570 = vadd.f32 %v5569, %v4537
        %v5571 = vadd.f32 %v5570, %v4545
        %v5572 = vrot.slane %v5571, 4
        %v5573 = vadd.f32 %v5571, %v5572
        %v5574 = vrot.slane %v5573, 2
        %v5575 = vadd.f32 %v5573, %v5574
        %v5576 = vrot.slane %v5575, 1
        %v5577 = vadd.f32 %v5575, %v5576
        %v5578 = vadd.f32 %v4426, %v4434
        %v5579 = vadd.f32 %v5578, %v4442
        %v5580 = vadd.f32 %v5579, %v4450
        %v5581 = vadd.f32 %v5580, %v4458
        %v5582 = vadd.f32 %v5581, %v4466
        %v5583 = vadd.f32 %v5582, %v4474
        %v5584 = vadd.f32 %v5583, %v4482
        %v5585 = vadd.f32 %v5584, %v4490
        %v5586 = vadd.f32 %v5585, %v4498
        %v5587 = vadd.f32 %v5586, %v4506
        %v5588 = vadd.f32 %v5587, %v4514
        %v5589 = vadd.f32 %v5588, %v4522
        %v5590 = vadd.f32 %v5589, %v4530
        %v5591 = vadd.f32 %v5590, %v4538
        %v5592 = vadd.f32 %v5591, %v4546
        %v5593 = vrot.slane %v5592, 4
        %v5594 = vadd.f32 %v5592, %v5593
        %v5595 = vrot.slane %v5594, 2
        %v5596 = vadd.f32 %v5594, %v5595
        %v5597 = vrot.slane %v5596, 1
        %v5598 = vadd.f32 %v5596, %v5597
        %v5599 = vadd.f32 %v4427, %v4435
        %v5600 = vadd.f32 %v5599, %v4443
        %v5601 = vadd.f32 %v5600, %v4451
        %v5602 = vadd.f32 %v5601, %v4459
        %v5603 = vadd.f32 %v5602, %v4467
        %v5604 = vadd.f32 %v5603, %v4475
        %v5605 = vadd.f32 %v5604, %v4483
        %v5606 = vadd.f32 %v5605, %v4491
        %v5607 = vadd.f32 %v5606, %v4499
        %v5608 = vadd.f32 %v5607, %v4507
        %v5609 = vadd.f32 %v5608, %v4515
        %v5610 = vadd.f32 %v5609, %v4523
        %v5611 = vadd.f32 %v5610, %v4531
        %v5612 = vadd.f32 %v5611, %v4539
        %v5613 = vadd.f32 %v5612, %v4547
        %v5614 = vrot.slane %v5613, 4
        %v5615 = vadd.f32 %v5613, %v5614
        %v5616 = vrot.slane %v5615, 2
        %v5617 = vadd.f32 %v5615, %v5616
        %v5618 = vrot.slane %v5617, 1
        %v5619 = vadd.f32 %v5617, %v5618
        %v5620 = vadd.f32 %v4548, %v4556
        %v5621 = vadd.f32 %v5620, %v4564
        %v5622 = vadd.f32 %v5621, %v4572
        %v5623 = vadd.f32 %v5622, %v4580
        %v5624 = vadd.f32 %v5623, %v4588
        %v5625 = vadd.f32 %v5624, %v4596
        %v5626 = vadd.f32 %v5625, %v4604
        %v5627 = vadd.f32 %v5626, %v4612
        %v5628 = vadd.f32 %v5627, %v4620
        %v5629 = vadd.f32 %v5628, %v4628
        %v5630 = vadd.f32 %v5629, %v4636
        %v5631 = vadd.f32 %v5630, %v4644
        %v5632 = vadd.f32 %v5631, %v4652
        %v5633 = vadd.f32 %v5632, %v4660
        %v5634 = vadd.f32 %v5633, %v4668
        %v5635 = vrot.slane %v5634, 4
        %v5636 = vadd.f32 %v5634, %v5635
        %v5637 = vrot.slane %v5636, 2
        %v5638 = vadd.f32 %v5636, %v5637
        %v5639 = vrot.slane %v5638, 1
        %v5640 = vadd.f32 %v5638, %v5639
        %v5641 = vadd.f32 %v4549, %v4557
        %v5642 = vadd.f32 %v5641, %v4565
        %v5643 = vadd.f32 %v5642, %v4573
        %v5644 = vadd.f32 %v5643, %v4581
        %v5645 = vadd.f32 %v5644, %v4589
        %v5646 = vadd.f32 %v5645, %v4597
        %v5647 = vadd.f32 %v5646, %v4605
        %v5648 = vadd.f32 %v5647, %v4613
        %v5649 = vadd.f32 %v5648, %v4621
        %v5650 = vadd.f32 %v5649, %v4629
        %v5651 = vadd.f32 %v5650, %v4637
        %v5652 = vadd.f32 %v5651, %v4645
        %v5653 = vadd.f32 %v5652, %v4653
        %v5654 = vadd.f32 %v5653, %v4661
        %v5655 = vadd.f32 %v5654, %v4669
        %v5656 = vrot.slane %v5655, 4
        %v5657 = vadd.f32 %v5655, %v5656
        %v5658 = vrot.slane %v5657, 2
        %v5659 = vadd.f32 %v5657, %v5658
        %v5660 = vrot.slane %v5659, 1
        %v5661 = vadd.f32 %v5659, %v5660
        %v5662 = vadd.f32 %v4550, %v4558
        %v5663 = vadd.f32 %v5662, %v4566
        %v5664 = vadd.f32 %v5663, %v4574
        %v5665 = vadd.f32 %v5664, %v4582
        %v5666 = vadd.f32 %v5665, %v4590
        %v5667 = vadd.f32 %v5666, %v4598
        %v5668 = vadd.f32 %v5667, %v4606
        %v5669 = vadd.f32 %v5668, %v4614
        %v5670 = vadd.f32 %v5669, %v4622
        %v5671 = vadd.f32 %v5670, %v4630
        %v5672 = vadd.f32 %v5671, %v4638
        %v5673 = vadd.f32 %v5672, %v4646
        %v5674 = vadd.f32 %v5673, %v4654
        %v5675 = vadd.f32 %v5674, %v4662
        %v5676 = vadd.f32 %v5675, %v4670
        %v5677 = vrot.slane %v5676, 4
        %v5678 = vadd.f32 %v5676, %v5677
        %v5679 = vrot.slane %v5678, 2
        %v5680 = vadd.f32 %v5678, %v5679
        %v5681 = vrot.slane %v5680, 1
        %v5682 = vadd.f32 %v5680, %v5681
        %v5683 = vadd.f32 %v4551, %v4559
        %v5684 = vadd.f32 %v5683, %v4567
        %v5685 = vadd.f32 %v5684, %v4575
        %v5686 = vadd.f32 %v5685, %v4583
        %v5687 = vadd.f32 %v5686, %v4591
        %v5688 = vadd.f32 %v5687, %v4599
        %v5689 = vadd.f32 %v5688, %v4607
        %v5690 = vadd.f32 %v5689, %v4615
        %v5691 = vadd.f32 %v5690, %v4623
        %v5692 = vadd.f32 %v5691, %v4631
        %v5693 = vadd.f32 %v5692, %v4639
        %v5694 = vadd.f32 %v5693, %v4647
        %v5695 = vadd.f32 %v5694, %v4655
        %v5696 = vadd.f32 %v5695, %v4663
        %v5697 = vadd.f32 %v5696, %v4671
        %v5698 = vrot.slane %v5697, 4
        %v5699 = vadd.f32 %v5697, %v5698
        %v5700 = vrot.slane %v5699, 2
        %v5701 = vadd.f32 %v5699, %v5700
        %v5702 = vrot.slane %v5701, 1
        %v5703 = vadd.f32 %v5701, %v5702
        %v5704 = vadd.f32 %v4552, %v4560
        %v5705 = vadd.f32 %v5704, %v4568
        %v5706 = vadd.f32 %v5705, %v4576
        %v5707 = vadd.f32 %v5706, %v4584
        %v5708 = vadd.f32 %v5707, %v4592
        %v5709 = vadd.f32 %v5708, %v4600
        %v5710 = vadd.f32 %v5709, %v4608
        %v5711 = vadd.f32 %v5710, %v4616
        %v5712 = vadd.f32 %v5711, %v4624
        %v5713 = vadd.f32 %v5712, %v4632
        %v5714 = vadd.f32 %v5713, %v4640
        %v5715 = vadd.f32 %v5714, %v4648
        %v5716 = vadd.f32 %v5715, %v4656
        %v5717 = vadd.f32 %v5716, %v4664
        %v5718 = vadd.f32 %v5717, %v4672
        %v5719 = vrot.slane %v5718, 4
        %v5720 = vadd.f32 %v5718, %v5719
        %v5721 = vrot.slane %v5720, 2
        %v5722 = vadd.f32 %v5720, %v5721
        %v5723 = vrot.slane %v5722, 1
        %v5724 = vadd.f32 %v5722, %v5723
        %v5725 = vadd.f32 %v4553, %v4561
        %v5726 = vadd.f32 %v5725, %v4569
        %v5727 = vadd.f32 %v5726, %v4577
        %v5728 = vadd.f32 %v5727, %v4585
        %v5729 = vadd.f32 %v5728, %v4593
        %v5730 = vadd.f32 %v5729, %v4601
        %v5731 = vadd.f32 %v5730, %v4609
        %v5732 = vadd.f32 %v5731, %v4617
        %v5733 = vadd.f32 %v5732, %v4625
        %v5734 = vadd.f32 %v5733, %v4633
        %v5735 = vadd.f32 %v5734, %v4641
        %v5736 = vadd.f32 %v5735, %v4649
        %v5737 = vadd.f32 %v5736, %v4657
        %v5738 = vadd.f32 %v5737, %v4665
        %v5739 = vadd.f32 %v5738, %v4673
        %v5740 = vrot.slane %v5739, 4
        %v5741 = vadd.f32 %v5739, %v5740
        %v5742 = vrot.slane %v5741, 2
        %v5743 = vadd.f32 %v5741, %v5742
        %v5744 = vrot.slane %v5743, 1
        %v5745 = vadd.f32 %v5743, %v5744
        %v5746 = vadd.f32 %v4554, %v4562
        %v5747 = vadd.f32 %v5746, %v4570
        %v5748 = vadd.f32 %v5747, %v4578
        %v5749 = vadd.f32 %v5748, %v4586
        %v5750 = vadd.f32 %v5749, %v4594
        %v5751 = vadd.f32 %v5750, %v4602
        %v5752 = vadd.f32 %v5751, %v4610
        %v5753 = vadd.f32 %v5752, %v4618
        %v5754 = vadd.f32 %v5753, %v4626
        %v5755 = vadd.f32 %v5754, %v4634
        %v5756 = vadd.f32 %v5755, %v4642
        %v5757 = vadd.f32 %v5756, %v4650
        %v5758 = vadd.f32 %v5757, %v4658
        %v5759 = vadd.f32 %v5758, %v4666
        %v5760 = vadd.f32 %v5759, %v4674
        %v5761 = vrot.slane %v5760, 4
        %v5762 = vadd.f32 %v5760, %v5761
        %v5763 = vrot.slane %v5762, 2
        %v5764 = vadd.f32 %v5762, %v5763
        %v5765 = vrot.slane %v5764, 1
        %v5766 = vadd.f32 %v5764, %v5765
        %v5767 = vadd.f32 %v4555, %v4563
        %v5768 = vadd.f32 %v5767, %v4571
        %v5769 = vadd.f32 %v5768, %v4579
        %v5770 = vadd.f32 %v5769, %v4587
        %v5771 = vadd.f32 %v5770, %v4595
        %v5772 = vadd.f32 %v5771, %v4603
        %v5773 = vadd.f32 %v5772, %v4611
        %v5774 = vadd.f32 %v5773, %v4619
        %v5775 = vadd.f32 %v5774, %v4627
        %v5776 = vadd.f32 %v5775, %v4635
        %v5777 = vadd.f32 %v5776, %v4643
        %v5778 = vadd.f32 %v5777, %v4651
        %v5779 = vadd.f32 %v5778, %v4659
        %v5780 = vadd.f32 %v5779, %v4667
        %v5781 = vadd.f32 %v5780, %v4675
        %v5782 = vrot.slane %v5781, 4
        %v5783 = vadd.f32 %v5781, %v5782
        %v5784 = vrot.slane %v5783, 2
        %v5785 = vadd.f32 %v5783, %v5784
        %v5786 = vrot.slane %v5785, 1
        %v5787 = vadd.f32 %v5785, %v5786
        %v5788 = vadd.f32 %v4676, %v4684
        %v5789 = vadd.f32 %v5788, %v4692
        %v5790 = vadd.f32 %v5789, %v4700
        %v5791 = vadd.f32 %v5790, %v4708
        %v5792 = vadd.f32 %v5791, %v4716
        %v5793 = vadd.f32 %v5792, %v4724
        %v5794 = vadd.f32 %v5793, %v4732
        %v5795 = vadd.f32 %v5794, %v4740
        %v5796 = vadd.f32 %v5795, %v4748
        %v5797 = vadd.f32 %v5796, %v4756
        %v5798 = vadd.f32 %v5797, %v4764
        %v5799 = vadd.f32 %v5798, %v4772
        %v5800 = vadd.f32 %v5799, %v4780
        %v5801 = vadd.f32 %v5800, %v4788
        %v5802 = vadd.f32 %v5801, %v4796
        %v5803 = vrot.slane %v5802, 4
        %v5804 = vadd.f32 %v5802, %v5803
        %v5805 = vrot.slane %v5804, 2
        %v5806 = vadd.f32 %v5804, %v5805
        %v5807 = vrot.slane %v5806, 1
        %v5808 = vadd.f32 %v5806, %v5807
        %v5809 = vadd.f32 %v4677, %v4685
        %v5810 = vadd.f32 %v5809, %v4693
        %v5811 = vadd.f32 %v5810, %v4701
        %v5812 = vadd.f32 %v5811, %v4709
        %v5813 = vadd.f32 %v5812, %v4717
        %v5814 = vadd.f32 %v5813, %v4725
        %v5815 = vadd.f32 %v5814, %v4733
        %v5816 = vadd.f32 %v5815, %v4741
        %v5817 = vadd.f32 %v5816, %v4749
        %v5818 = vadd.f32 %v5817, %v4757
        %v5819 = vadd.f32 %v5818, %v4765
        %v5820 = vadd.f32 %v5819, %v4773
        %v5821 = vadd.f32 %v5820, %v4781
        %v5822 = vadd.f32 %v5821, %v4789
        %v5823 = vadd.f32 %v5822, %v4797
        %v5824 = vrot.slane %v5823, 4
        %v5825 = vadd.f32 %v5823, %v5824
        %v5826 = vrot.slane %v5825, 2
        %v5827 = vadd.f32 %v5825, %v5826
        %v5828 = vrot.slane %v5827, 1
        %v5829 = vadd.f32 %v5827, %v5828
        %v5830 = vadd.f32 %v4678, %v4686
        %v5831 = vadd.f32 %v5830, %v4694
        %v5832 = vadd.f32 %v5831, %v4702
        %v5833 = vadd.f32 %v5832, %v4710
        %v5834 = vadd.f32 %v5833, %v4718
        %v5835 = vadd.f32 %v5834, %v4726
        %v5836 = vadd.f32 %v5835, %v4734
        %v5837 = vadd.f32 %v5836, %v4742
        %v5838 = vadd.f32 %v5837, %v4750
        %v5839 = vadd.f32 %v5838, %v4758
        %v5840 = vadd.f32 %v5839, %v4766
        %v5841 = vadd.f32 %v5840, %v4774
        %v5842 = vadd.f32 %v5841, %v4782
        %v5843 = vadd.f32 %v5842, %v4790
        %v5844 = vadd.f32 %v5843, %v4798
        %v5845 = vrot.slane %v5844, 4
        %v5846 = vadd.f32 %v5844, %v5845
        %v5847 = vrot.slane %v5846, 2
        %v5848 = vadd.f32 %v5846, %v5847
        %v5849 = vrot.slane %v5848, 1
        %v5850 = vadd.f32 %v5848, %v5849
        %v5851 = vadd.f32 %v4679, %v4687
        %v5852 = vadd.f32 %v5851, %v4695
        %v5853 = vadd.f32 %v5852, %v4703
        %v5854 = vadd.f32 %v5853, %v4711
        %v5855 = vadd.f32 %v5854, %v4719
        %v5856 = vadd.f32 %v5855, %v4727
        %v5857 = vadd.f32 %v5856, %v4735
        %v5858 = vadd.f32 %v5857, %v4743
        %v5859 = vadd.f32 %v5858, %v4751
        %v5860 = vadd.f32 %v5859, %v4759
        %v5861 = vadd.f32 %v5860, %v4767
        %v5862 = vadd.f32 %v5861, %v4775
        %v5863 = vadd.f32 %v5862, %v4783
        %v5864 = vadd.f32 %v5863, %v4791
        %v5865 = vadd.f32 %v5864, %v4799
        %v5866 = vrot.slane %v5865, 4
        %v5867 = vadd.f32 %v5865, %v5866
        %v5868 = vrot.slane %v5867, 2
        %v5869 = vadd.f32 %v5867, %v5868
        %v5870 = vrot.slane %v5869, 1
        %v5871 = vadd.f32 %v5869, %v5870
        %v5872 = vadd.f32 %v4680, %v4688
        %v5873 = vadd.f32 %v5872, %v4696
        %v5874 = vadd.f32 %v5873, %v4704
        %v5875 = vadd.f32 %v5874, %v4712
        %v5876 = vadd.f32 %v5875, %v4720
        %v5877 = vadd.f32 %v5876, %v4728
        %v5878 = vadd.f32 %v5877, %v4736
        %v5879 = vadd.f32 %v5878, %v4744
        %v5880 = vadd.f32 %v5879, %v4752
        %v5881 = vadd.f32 %v5880, %v4760
        %v5882 = vadd.f32 %v5881, %v4768
        %v5883 = vadd.f32 %v5882, %v4776
        %v5884 = vadd.f32 %v5883, %v4784
        %v5885 = vadd.f32 %v5884, %v4792
        %v5886 = vadd.f32 %v5885, %v4800
        %v5887 = vrot.slane %v5886, 4
        %v5888 = vadd.f32 %v5886, %v5887
        %v5889 = vrot.slane %v5888, 2
        %v5890 = vadd.f32 %v5888, %v5889
        %v5891 = vrot.slane %v5890, 1
        %v5892 = vadd.f32 %v5890, %v5891
        %v5893 = vadd.f32 %v4681, %v4689
        %v5894 = vadd.f32 %v5893, %v4697
        %v5895 = vadd.f32 %v5894, %v4705
        %v5896 = vadd.f32 %v5895, %v4713
        %v5897 = vadd.f32 %v5896, %v4721
        %v5898 = vadd.f32 %v5897, %v4729
        %v5899 = vadd.f32 %v5898, %v4737
        %v5900 = vadd.f32 %v5899, %v4745
        %v5901 = vadd.f32 %v5900, %v4753
        %v5902 = vadd.f32 %v5901, %v4761
        %v5903 = vadd.f32 %v5902, %v4769
        %v5904 = vadd.f32 %v5903, %v4777
        %v5905 = vadd.f32 %v5904, %v4785
        %v5906 = vadd.f32 %v5905, %v4793
        %v5907 = vadd.f32 %v5906, %v4801
        %v5908 = vrot.slane %v5907, 4
        %v5909 = vadd.f32 %v5907, %v5908
        %v5910 = vrot.slane %v5909, 2
        %v5911 = vadd.f32 %v5909, %v5910
        %v5912 = vrot.slane %v5911, 1
        %v5913 = vadd.f32 %v5911, %v5912
        %v5914 = vadd.f32 %v4682, %v4690
        %v5915 = vadd.f32 %v5914, %v4698
        %v5916 = vadd.f32 %v5915, %v4706
        %v5917 = vadd.f32 %v5916, %v4714
        %v5918 = vadd.f32 %v5917, %v4722
        %v5919 = vadd.f32 %v5918, %v4730
        %v5920 = vadd.f32 %v5919, %v4738
        %v5921 = vadd.f32 %v5920, %v4746
        %v5922 = vadd.f32 %v5921, %v4754
        %v5923 = vadd.f32 %v5922, %v4762
        %v5924 = vadd.f32 %v5923, %v4770
        %v5925 = vadd.f32 %v5924, %v4778
        %v5926 = vadd.f32 %v5925, %v4786
        %v5927 = vadd.f32 %v5926, %v4794
        %v5928 = vadd.f32 %v5927, %v4802
        %v5929 = vrot.slane %v5928, 4
        %v5930 = vadd.f32 %v5928, %v5929
        %v5931 = vrot.slane %v5930, 2
        %v5932 = vadd.f32 %v5930, %v5931
        %v5933 = vrot.slane %v5932, 1
        %v5934 = vadd.f32 %v5932, %v5933
        %v5935 = vadd.f32 %v4683, %v4691
        %v5936 = vadd.f32 %v5935, %v4699
        %v5937 = vadd.f32 %v5936, %v4707
        %v5938 = vadd.f32 %v5937, %v4715
        %v5939 = vadd.f32 %v5938, %v4723
        %v5940 = vadd.f32 %v5939, %v4731
        %v5941 = vadd.f32 %v5940, %v4739
        %v5942 = vadd.f32 %v5941, %v4747
        %v5943 = vadd.f32 %v5942, %v4755
        %v5944 = vadd.f32 %v5943, %v4763
        %v5945 = vadd.f32 %v5944, %v4771
        %v5946 = vadd.f32 %v5945, %v4779
        %v5947 = vadd.f32 %v5946, %v4787
        %v5948 = vadd.f32 %v5947, %v4795
        %v5949 = vadd.f32 %v5948, %v4803
        %v5950 = vrot.slane %v5949, 4
        %v5951 = vadd.f32 %v5949, %v5950
        %v5952 = vrot.slane %v5951, 2
        %v5953 = vadd.f32 %v5951, %v5952
        %v5954 = vrot.slane %v5953, 1
        %v5955 = vadd.f32 %v5953, %v5954
        %v5956 = vadd.f32 %v4804, %v4812
        %v5957 = vadd.f32 %v5956, %v4820
        %v5958 = vadd.f32 %v5957, %v4828
        %v5959 = vadd.f32 %v5958, %v4836
        %v5960 = vadd.f32 %v5959, %v4844
        %v5961 = vadd.f32 %v5960, %v4852
        %v5962 = vadd.f32 %v5961, %v4860
        %v5963 = vadd.f32 %v5962, %v4868
        %v5964 = vadd.f32 %v5963, %v4876
        %v5965 = vadd.f32 %v5964, %v4884
        %v5966 = vadd.f32 %v5965, %v4892
        %v5967 = vadd.f32 %v5966, %v4900
        %v5968 = vadd.f32 %v5967, %v4908
        %v5969 = vadd.f32 %v5968, %v4916
        %v5970 = vadd.f32 %v5969, %v4924
        %v5971 = vrot.slane %v5970, 4
        %v5972 = vadd.f32 %v5970, %v5971
        %v5973 = vrot.slane %v5972, 2
        %v5974 = vadd.f32 %v5972, %v5973
        %v5975 = vrot.slane %v5974, 1
        %v5976 = vadd.f32 %v5974, %v5975
        %v5977 = vadd.f32 %v4805, %v4813
        %v5978 = vadd.f32 %v5977, %v4821
        %v5979 = vadd.f32 %v5978, %v4829
        %v5980 = vadd.f32 %v5979, %v4837
        %v5981 = vadd.f32 %v5980, %v4845
        %v5982 = vadd.f32 %v5981, %v4853
        %v5983 = vadd.f32 %v5982, %v4861
        %v5984 = vadd.f32 %v5983, %v4869
        %v5985 = vadd.f32 %v5984, %v4877
        %v5986 = vadd.f32 %v5985, %v4885
        %v5987 = vadd.f32 %v5986, %v4893
        %v5988 = vadd.f32 %v5987, %v4901
        %v5989 = vadd.f32 %v5988, %v4909
        %v5990 = vadd.f32 %v5989, %v4917
        %v5991 = vadd.f32 %v5990, %v4925
        %v5992 = vrot.slane %v5991, 4
        %v5993 = vadd.f32 %v5991, %v5992
        %v5994 = vrot.slane %v5993, 2
        %v5995 = vadd.f32 %v5993, %v5994
        %v5996 = vrot.slane %v5995, 1
        %v5997 = vadd.f32 %v5995, %v5996
        %v5998 = vadd.f32 %v4806, %v4814
        %v5999 = vadd.f32 %v5998, %v4822
        %v6000 = vadd.f32 %v5999, %v4830
        %v6001 = vadd.f32 %v6000, %v4838
        %v6002 = vadd.f32 %v6001, %v4846
        %v6003 = vadd.f32 %v6002, %v4854
        %v6004 = vadd.f32 %v6003, %v4862
        %v6005 = vadd.f32 %v6004, %v4870
        %v6006 = vadd.f32 %v6005, %v4878
        %v6007 = vadd.f32 %v6006, %v4886
        %v6008 = vadd.f32 %v6007, %v4894
        %v6009 = vadd.f32 %v6008, %v4902
        %v6010 = vadd.f32 %v6009, %v4910
        %v6011 = vadd.f32 %v6010, %v4918
        %v6012 = vadd.f32 %v6011, %v4926
        %v6013 = vrot.slane %v6012, 4
        %v6014 = vadd.f32 %v6012, %v6013
        %v6015 = vrot.slane %v6014, 2
        %v6016 = vadd.f32 %v6014, %v6015
        %v6017 = vrot.slane %v6016, 1
        %v6018 = vadd.f32 %v6016, %v6017
        %v6019 = vadd.f32 %v4807, %v4815
        %v6020 = vadd.f32 %v6019, %v4823
        %v6021 = vadd.f32 %v6020, %v4831
        %v6022 = vadd.f32 %v6021, %v4839
        %v6023 = vadd.f32 %v6022, %v4847
        %v6024 = vadd.f32 %v6023, %v4855
        %v6025 = vadd.f32 %v6024, %v4863
        %v6026 = vadd.f32 %v6025, %v4871
        %v6027 = vadd.f32 %v6026, %v4879
        %v6028 = vadd.f32 %v6027, %v4887
        %v6029 = vadd.f32 %v6028, %v4895
        %v6030 = vadd.f32 %v6029, %v4903
        %v6031 = vadd.f32 %v6030, %v4911
        %v6032 = vadd.f32 %v6031, %v4919
        %v6033 = vadd.f32 %v6032, %v4927
        %v6034 = vrot.slane %v6033, 4
        %v6035 = vadd.f32 %v6033, %v6034
        %v6036 = vrot.slane %v6035, 2
        %v6037 = vadd.f32 %v6035, %v6036
        %v6038 = vrot.slane %v6037, 1
        %v6039 = vadd.f32 %v6037, %v6038
        %v6040 = vadd.f32 %v4808, %v4816
        %v6041 = vadd.f32 %v6040, %v4824
        %v6042 = vadd.f32 %v6041, %v4832
        %v6043 = vadd.f32 %v6042, %v4840
        %v6044 = vadd.f32 %v6043, %v4848
        %v6045 = vadd.f32 %v6044, %v4856
        %v6046 = vadd.f32 %v6045, %v4864
        %v6047 = vadd.f32 %v6046, %v4872
        %v6048 = vadd.f32 %v6047, %v4880
        %v6049 = vadd.f32 %v6048, %v4888
        %v6050 = vadd.f32 %v6049, %v4896
        %v6051 = vadd.f32 %v6050, %v4904
        %v6052 = vadd.f32 %v6051, %v4912
        %v6053 = vadd.f32 %v6052, %v4920
        %v6054 = vadd.f32 %v6053, %v4928
        %v6055 = vrot.slane %v6054, 4
        %v6056 = vadd.f32 %v6054, %v6055
        %v6057 = vrot.slane %v6056, 2
        %v6058 = vadd.f32 %v6056, %v6057
        %v6059 = vrot.slane %v6058, 1
        %v6060 = vadd.f32 %v6058, %v6059
        %v6061 = vadd.f32 %v4809, %v4817
        %v6062 = vadd.f32 %v6061, %v4825
        %v6063 = vadd.f32 %v6062, %v4833
        %v6064 = vadd.f32 %v6063, %v4841
        %v6065 = vadd.f32 %v6064, %v4849
        %v6066 = vadd.f32 %v6065, %v4857
        %v6067 = vadd.f32 %v6066, %v4865
        %v6068 = vadd.f32 %v6067, %v4873
        %v6069 = vadd.f32 %v6068, %v4881
        %v6070 = vadd.f32 %v6069, %v4889
        %v6071 = vadd.f32 %v6070, %v4897
        %v6072 = vadd.f32 %v6071, %v4905
        %v6073 = vadd.f32 %v6072, %v4913
        %v6074 = vadd.f32 %v6073, %v4921
        %v6075 = vadd.f32 %v6074, %v4929
        %v6076 = vrot.slane %v6075, 4
        %v6077 = vadd.f32 %v6075, %v6076
        %v6078 = vrot.slane %v6077, 2
        %v6079 = vadd.f32 %v6077, %v6078
        %v6080 = vrot.slane %v6079, 1
        %v6081 = vadd.f32 %v6079, %v6080
        %v6082 = vadd.f32 %v4810, %v4818
        %v6083 = vadd.f32 %v6082, %v4826
        %v6084 = vadd.f32 %v6083, %v4834
        %v6085 = vadd.f32 %v6084, %v4842
        %v6086 = vadd.f32 %v6085, %v4850
        %v6087 = vadd.f32 %v6086, %v4858
        %v6088 = vadd.f32 %v6087, %v4866
        %v6089 = vadd.f32 %v6088, %v4874
        %v6090 = vadd.f32 %v6089, %v4882
        %v6091 = vadd.f32 %v6090, %v4890
        %v6092 = vadd.f32 %v6091, %v4898
        %v6093 = vadd.f32 %v6092, %v4906
        %v6094 = vadd.f32 %v6093, %v4914
        %v6095 = vadd.f32 %v6094, %v4922
        %v6096 = vadd.f32 %v6095, %v4930
        %v6097 = vrot.slane %v6096, 4
        %v6098 = vadd.f32 %v6096, %v6097
        %v6099 = vrot.slane %v6098, 2
        %v6100 = vadd.f32 %v6098, %v6099
        %v6101 = vrot.slane %v6100, 1
        %v6102 = vadd.f32 %v6100, %v6101
        %v6103 = vadd.f32 %v4811, %v4819
        %v6104 = vadd.f32 %v6103, %v4827
        %v6105 = vadd.f32 %v6104, %v4835
        %v6106 = vadd.f32 %v6105, %v4843
        %v6107 = vadd.f32 %v6106, %v4851
        %v6108 = vadd.f32 %v6107, %v4859
        %v6109 = vadd.f32 %v6108, %v4867
        %v6110 = vadd.f32 %v6109, %v4875
        %v6111 = vadd.f32 %v6110, %v4883
        %v6112 = vadd.f32 %v6111, %v4891
        %v6113 = vadd.f32 %v6112, %v4899
        %v6114 = vadd.f32 %v6113, %v4907
        %v6115 = vadd.f32 %v6114, %v4915
        %v6116 = vadd.f32 %v6115, %v4923
        %v6117 = vadd.f32 %v6116, %v4931
        %v6118 = vrot.slane %v6117, 4
        %v6119 = vadd.f32 %v6117, %v6118
        %v6120 = vrot.slane %v6119, 2
        %v6121 = vadd.f32 %v6119, %v6120
        %v6122 = vrot.slane %v6121, 1
        %v6123 = vadd.f32 %v6121, %v6122
        %v6124 = vadd.f32 %v4932, %v4940
        %v6125 = vadd.f32 %v6124, %v4948
        %v6126 = vadd.f32 %v6125, %v4956
        %v6127 = vadd.f32 %v6126, %v4964
        %v6128 = vadd.f32 %v6127, %v4972
        %v6129 = vadd.f32 %v6128, %v4980
        %v6130 = vadd.f32 %v6129, %v4988
        %v6131 = vadd.f32 %v6130, %v4996
        %v6132 = vadd.f32 %v6131, %v5004
        %v6133 = vadd.f32 %v6132, %v5012
        %v6134 = vadd.f32 %v6133, %v5020
        %v6135 = vadd.f32 %v6134, %v5028
        %v6136 = vadd.f32 %v6135, %v5036
        %v6137 = vadd.f32 %v6136, %v5044
        %v6138 = vadd.f32 %v6137, %v5052
        %v6139 = vrot.slane %v6138, 4
        %v6140 = vadd.f32 %v6138, %v6139
        %v6141 = vrot.slane %v6140, 2
        %v6142 = vadd.f32 %v6140, %v6141
        %v6143 = vrot.slane %v6142, 1
        %v6144 = vadd.f32 %v6142, %v6143
        %v6145 = vadd.f32 %v4933, %v4941
        %v6146 = vadd.f32 %v6145, %v4949
        %v6147 = vadd.f32 %v6146, %v4957
        %v6148 = vadd.f32 %v6147, %v4965
        %v6149 = vadd.f32 %v6148, %v4973
        %v6150 = vadd.f32 %v6149, %v4981
        %v6151 = vadd.f32 %v6150, %v4989
        %v6152 = vadd.f32 %v6151, %v4997
        %v6153 = vadd.f32 %v6152, %v5005
        %v6154 = vadd.f32 %v6153, %v5013
        %v6155 = vadd.f32 %v6154, %v5021
        %v6156 = vadd.f32 %v6155, %v5029
        %v6157 = vadd.f32 %v6156, %v5037
        %v6158 = vadd.f32 %v6157, %v5045
        %v6159 = vadd.f32 %v6158, %v5053
        %v6160 = vrot.slane %v6159, 4
        %v6161 = vadd.f32 %v6159, %v6160
        %v6162 = vrot.slane %v6161, 2
        %v6163 = vadd.f32 %v6161, %v6162
        %v6164 = vrot.slane %v6163, 1
        %v6165 = vadd.f32 %v6163, %v6164
        %v6166 = vadd.f32 %v4934, %v4942
        %v6167 = vadd.f32 %v6166, %v4950
        %v6168 = vadd.f32 %v6167, %v4958
        %v6169 = vadd.f32 %v6168, %v4966
        %v6170 = vadd.f32 %v6169, %v4974
        %v6171 = vadd.f32 %v6170, %v4982
        %v6172 = vadd.f32 %v6171, %v4990
        %v6173 = vadd.f32 %v6172, %v4998
        %v6174 = vadd.f32 %v6173, %v5006
        %v6175 = vadd.f32 %v6174, %v5014
        %v6176 = vadd.f32 %v6175, %v5022
        %v6177 = vadd.f32 %v6176, %v5030
        %v6178 = vadd.f32 %v6177, %v5038
        %v6179 = vadd.f32 %v6178, %v5046
        %v6180 = vadd.f32 %v6179, %v5054
        %v6181 = vrot.slane %v6180, 4
        %v6182 = vadd.f32 %v6180, %v6181
        %v6183 = vrot.slane %v6182, 2
        %v6184 = vadd.f32 %v6182, %v6183
        %v6185 = vrot.slane %v6184, 1
        %v6186 = vadd.f32 %v6184, %v6185
        %v6187 = vadd.f32 %v4935, %v4943
        %v6188 = vadd.f32 %v6187, %v4951
        %v6189 = vadd.f32 %v6188, %v4959
        %v6190 = vadd.f32 %v6189, %v4967
        %v6191 = vadd.f32 %v6190, %v4975
        %v6192 = vadd.f32 %v6191, %v4983
        %v6193 = vadd.f32 %v6192, %v4991
        %v6194 = vadd.f32 %v6193, %v4999
        %v6195 = vadd.f32 %v6194, %v5007
        %v6196 = vadd.f32 %v6195, %v5015
        %v6197 = vadd.f32 %v6196, %v5023
        %v6198 = vadd.f32 %v6197, %v5031
        %v6199 = vadd.f32 %v6198, %v5039
        %v6200 = vadd.f32 %v6199, %v5047
        %v6201 = vadd.f32 %v6200, %v5055
        %v6202 = vrot.slane %v6201, 4
        %v6203 = vadd.f32 %v6201, %v6202
        %v6204 = vrot.slane %v6203, 2
        %v6205 = vadd.f32 %v6203, %v6204
        %v6206 = vrot.slane %v6205, 1
        %v6207 = vadd.f32 %v6205, %v6206
        %v6208 = vadd.f32 %v4936, %v4944
        %v6209 = vadd.f32 %v6208, %v4952
        %v6210 = vadd.f32 %v6209, %v4960
        %v6211 = vadd.f32 %v6210, %v4968
        %v6212 = vadd.f32 %v6211, %v4976
        %v6213 = vadd.f32 %v6212, %v4984
        %v6214 = vadd.f32 %v6213, %v4992
        %v6215 = vadd.f32 %v6214, %v5000
        %v6216 = vadd.f32 %v6215, %v5008
        %v6217 = vadd.f32 %v6216, %v5016
        %v6218 = vadd.f32 %v6217, %v5024
        %v6219 = vadd.f32 %v6218, %v5032
        %v6220 = vadd.f32 %v6219, %v5040
        %v6221 = vadd.f32 %v6220, %v5048
        %v6222 = vadd.f32 %v6221, %v5056
        %v6223 = vrot.slane %v6222, 4
        %v6224 = vadd.f32 %v6222, %v6223
        %v6225 = vrot.slane %v6224, 2
        %v6226 = vadd.f32 %v6224, %v6225
        %v6227 = vrot.slane %v6226, 1
        %v6228 = vadd.f32 %v6226, %v6227
        %v6229 = vadd.f32 %v4937, %v4945
        %v6230 = vadd.f32 %v6229, %v4953
        %v6231 = vadd.f32 %v6230, %v4961
        %v6232 = vadd.f32 %v6231, %v4969
        %v6233 = vadd.f32 %v6232, %v4977
        %v6234 = vadd.f32 %v6233, %v4985
        %v6235 = vadd.f32 %v6234, %v4993
        %v6236 = vadd.f32 %v6235, %v5001
        %v6237 = vadd.f32 %v6236, %v5009
        %v6238 = vadd.f32 %v6237, %v5017
        %v6239 = vadd.f32 %v6238, %v5025
        %v6240 = vadd.f32 %v6239, %v5033
        %v6241 = vadd.f32 %v6240, %v5041
        %v6242 = vadd.f32 %v6241, %v5049
        %v6243 = vadd.f32 %v6242, %v5057
        %v6244 = vrot.slane %v6243, 4
        %v6245 = vadd.f32 %v6243, %v6244
        %v6246 = vrot.slane %v6245, 2
        %v6247 = vadd.f32 %v6245, %v6246
        %v6248 = vrot.slane %v6247, 1
        %v6249 = vadd.f32 %v6247, %v6248
        %v6250 = vadd.f32 %v4938, %v4946
        %v6251 = vadd.f32 %v6250, %v4954
        %v6252 = vadd.f32 %v6251, %v4962
        %v6253 = vadd.f32 %v6252, %v4970
        %v6254 = vadd.f32 %v6253, %v4978
        %v6255 = vadd.f32 %v6254, %v4986
        %v6256 = vadd.f32 %v6255, %v4994
        %v6257 = vadd.f32 %v6256, %v5002
        %v6258 = vadd.f32 %v6257, %v5010
        %v6259 = vadd.f32 %v6258, %v5018
        %v6260 = vadd.f32 %v6259, %v5026
        %v6261 = vadd.f32 %v6260, %v5034
        %v6262 = vadd.f32 %v6261, %v5042
        %v6263 = vadd.f32 %v6262, %v5050
        %v6264 = vadd.f32 %v6263, %v5058
        %v6265 = vrot.slane %v6264, 4
        %v6266 = vadd.f32 %v6264, %v6265
        %v6267 = vrot.slane %v6266, 2
        %v6268 = vadd.f32 %v6266, %v6267
        %v6269 = vrot.slane %v6268, 1
        %v6270 = vadd.f32 %v6268, %v6269
        %v6271 = vadd.f32 %v4939, %v4947
        %v6272 = vadd.f32 %v6271, %v4955
        %v6273 = vadd.f32 %v6272, %v4963
        %v6274 = vadd.f32 %v6273, %v4971
        %v6275 = vadd.f32 %v6274, %v4979
        %v6276 = vadd.f32 %v6275, %v4987
        %v6277 = vadd.f32 %v6276, %v4995
        %v6278 = vadd.f32 %v6277, %v5003
        %v6279 = vadd.f32 %v6278, %v5011
        %v6280 = vadd.f32 %v6279, %v5019
        %v6281 = vadd.f32 %v6280, %v5027
        %v6282 = vadd.f32 %v6281, %v5035
        %v6283 = vadd.f32 %v6282, %v5043
        %v6284 = vadd.f32 %v6283, %v5051
        %v6285 = vadd.f32 %v6284, %v5059
        %v6286 = vrot.slane %v6285, 4
        %v6287 = vadd.f32 %v6285, %v6286
        %v6288 = vrot.slane %v6287, 2
        %v6289 = vadd.f32 %v6287, %v6288
        %v6290 = vrot.slane %v6289, 1
        %v6291 = vadd.f32 %v6289, %v6290
        %v6292 = vadd.f32 %v5060, %v5068
        %v6293 = vadd.f32 %v6292, %v5076
        %v6294 = vadd.f32 %v6293, %v5084
        %v6295 = vadd.f32 %v6294, %v5092
        %v6296 = vadd.f32 %v6295, %v5100
        %v6297 = vadd.f32 %v6296, %v5108
        %v6298 = vadd.f32 %v6297, %v5116
        %v6299 = vadd.f32 %v6298, %v5124
        %v6300 = vadd.f32 %v6299, %v5132
        %v6301 = vadd.f32 %v6300, %v5140
        %v6302 = vadd.f32 %v6301, %v5148
        %v6303 = vadd.f32 %v6302, %v5156
        %v6304 = vadd.f32 %v6303, %v5164
        %v6305 = vadd.f32 %v6304, %v5172
        %v6306 = vadd.f32 %v6305, %v5180
        %v6307 = vrot.slane %v6306, 4
        %v6308 = vadd.f32 %v6306, %v6307
        %v6309 = vrot.slane %v6308, 2
        %v6310 = vadd.f32 %v6308, %v6309
        %v6311 = vrot.slane %v6310, 1
        %v6312 = vadd.f32 %v6310, %v6311
        %v6313 = vadd.f32 %v5061, %v5069
        %v6314 = vadd.f32 %v6313, %v5077
        %v6315 = vadd.f32 %v6314, %v5085
        %v6316 = vadd.f32 %v6315, %v5093
        %v6317 = vadd.f32 %v6316, %v5101
        %v6318 = vadd.f32 %v6317, %v5109
        %v6319 = vadd.f32 %v6318, %v5117
        %v6320 = vadd.f32 %v6319, %v5125
        %v6321 = vadd.f32 %v6320, %v5133
        %v6322 = vadd.f32 %v6321, %v5141
        %v6323 = vadd.f32 %v6322, %v5149
        %v6324 = vadd.f32 %v6323, %v5157
        %v6325 = vadd.f32 %v6324, %v5165
        %v6326 = vadd.f32 %v6325, %v5173
        %v6327 = vadd.f32 %v6326, %v5181
        %v6328 = vrot.slane %v6327, 4
        %v6329 = vadd.f32 %v6327, %v6328
        %v6330 = vrot.slane %v6329, 2
        %v6331 = vadd.f32 %v6329, %v6330
        %v6332 = vrot.slane %v6331, 1
        %v6333 = vadd.f32 %v6331, %v6332
        %v6334 = vadd.f32 %v5062, %v5070
        %v6335 = vadd.f32 %v6334, %v5078
        %v6336 = vadd.f32 %v6335, %v5086
        %v6337 = vadd.f32 %v6336, %v5094
        %v6338 = vadd.f32 %v6337, %v5102
        %v6339 = vadd.f32 %v6338, %v5110
        %v6340 = vadd.f32 %v6339, %v5118
        %v6341 = vadd.f32 %v6340, %v5126
        %v6342 = vadd.f32 %v6341, %v5134
        %v6343 = vadd.f32 %v6342, %v5142
        %v6344 = vadd.f32 %v6343, %v5150
        %v6345 = vadd.f32 %v6344, %v5158
        %v6346 = vadd.f32 %v6345, %v5166
        %v6347 = vadd.f32 %v6346, %v5174
        %v6348 = vadd.f32 %v6347, %v5182
        %v6349 = vrot.slane %v6348, 4
        %v6350 = vadd.f32 %v6348, %v6349
        %v6351 = vrot.slane %v6350, 2
        %v6352 = vadd.f32 %v6350, %v6351
        %v6353 = vrot.slane %v6352, 1
        %v6354 = vadd.f32 %v6352, %v6353
        %v6355 = vadd.f32 %v5063, %v5071
        %v6356 = vadd.f32 %v6355, %v5079
        %v6357 = vadd.f32 %v6356, %v5087
        %v6358 = vadd.f32 %v6357, %v5095
        %v6359 = vadd.f32 %v6358, %v5103
        %v6360 = vadd.f32 %v6359, %v5111
        %v6361 = vadd.f32 %v6360, %v5119
        %v6362 = vadd.f32 %v6361, %v5127
        %v6363 = vadd.f32 %v6362, %v5135
        %v6364 = vadd.f32 %v6363, %v5143
        %v6365 = vadd.f32 %v6364, %v5151
        %v6366 = vadd.f32 %v6365, %v5159
        %v6367 = vadd.f32 %v6366, %v5167
        %v6368 = vadd.f32 %v6367, %v5175
        %v6369 = vadd.f32 %v6368, %v5183
        %v6370 = vrot.slane %v6369, 4
        %v6371 = vadd.f32 %v6369, %v6370
        %v6372 = vrot.slane %v6371, 2
        %v6373 = vadd.f32 %v6371, %v6372
        %v6374 = vrot.slane %v6373, 1
        %v6375 = vadd.f32 %v6373, %v6374
        %v6376 = vadd.f32 %v5064, %v5072
        %v6377 = vadd.f32 %v6376, %v5080
        %v6378 = vadd.f32 %v6377, %v5088
        %v6379 = vadd.f32 %v6378, %v5096
        %v6380 = vadd.f32 %v6379, %v5104
        %v6381 = vadd.f32 %v6380, %v5112
        %v6382 = vadd.f32 %v6381, %v5120
        %v6383 = vadd.f32 %v6382, %v5128
        %v6384 = vadd.f32 %v6383, %v5136
        %v6385 = vadd.f32 %v6384, %v5144
        %v6386 = vadd.f32 %v6385, %v5152
        %v6387 = vadd.f32 %v6386, %v5160
        %v6388 = vadd.f32 %v6387, %v5168
        %v6389 = vadd.f32 %v6388, %v5176
        %v6390 = vadd.f32 %v6389, %v5184
        %v6391 = vrot.slane %v6390, 4
        %v6392 = vadd.f32 %v6390, %v6391
        %v6393 = vrot.slane %v6392, 2
        %v6394 = vadd.f32 %v6392, %v6393
        %v6395 = vrot.slane %v6394, 1
        %v6396 = vadd.f32 %v6394, %v6395
        %v6397 = vadd.f32 %v5065, %v5073
        %v6398 = vadd.f32 %v6397, %v5081
        %v6399 = vadd.f32 %v6398, %v5089
        %v6400 = vadd.f32 %v6399, %v5097
        %v6401 = vadd.f32 %v6400, %v5105
        %v6402 = vadd.f32 %v6401, %v5113
        %v6403 = vadd.f32 %v6402, %v5121
        %v6404 = vadd.f32 %v6403, %v5129
        %v6405 = vadd.f32 %v6404, %v5137
        %v6406 = vadd.f32 %v6405, %v5145
        %v6407 = vadd.f32 %v6406, %v5153
        %v6408 = vadd.f32 %v6407, %v5161
        %v6409 = vadd.f32 %v6408, %v5169
        %v6410 = vadd.f32 %v6409, %v5177
        %v6411 = vadd.f32 %v6410, %v5185
        %v6412 = vrot.slane %v6411, 4
        %v6413 = vadd.f32 %v6411, %v6412
        %v6414 = vrot.slane %v6413, 2
        %v6415 = vadd.f32 %v6413, %v6414
        %v6416 = vrot.slane %v6415, 1
        %v6417 = vadd.f32 %v6415, %v6416
        %v6418 = vadd.f32 %v5066, %v5074
        %v6419 = vadd.f32 %v6418, %v5082
        %v6420 = vadd.f32 %v6419, %v5090
        %v6421 = vadd.f32 %v6420, %v5098
        %v6422 = vadd.f32 %v6421, %v5106
        %v6423 = vadd.f32 %v6422, %v5114
        %v6424 = vadd.f32 %v6423, %v5122
        %v6425 = vadd.f32 %v6424, %v5130
        %v6426 = vadd.f32 %v6425, %v5138
        %v6427 = vadd.f32 %v6426, %v5146
        %v6428 = vadd.f32 %v6427, %v5154
        %v6429 = vadd.f32 %v6428, %v5162
        %v6430 = vadd.f32 %v6429, %v5170
        %v6431 = vadd.f32 %v6430, %v5178
        %v6432 = vadd.f32 %v6431, %v5186
        %v6433 = vrot.slane %v6432, 4
        %v6434 = vadd.f32 %v6432, %v6433
        %v6435 = vrot.slane %v6434, 2
        %v6436 = vadd.f32 %v6434, %v6435
        %v6437 = vrot.slane %v6436, 1
        %v6438 = vadd.f32 %v6436, %v6437
        %v6439 = vadd.f32 %v5067, %v5075
        %v6440 = vadd.f32 %v6439, %v5083
        %v6441 = vadd.f32 %v6440, %v5091
        %v6442 = vadd.f32 %v6441, %v5099
        %v6443 = vadd.f32 %v6442, %v5107
        %v6444 = vadd.f32 %v6443, %v5115
        %v6445 = vadd.f32 %v6444, %v5123
        %v6446 = vadd.f32 %v6445, %v5131
        %v6447 = vadd.f32 %v6446, %v5139
        %v6448 = vadd.f32 %v6447, %v5147
        %v6449 = vadd.f32 %v6448, %v5155
        %v6450 = vadd.f32 %v6449, %v5163
        %v6451 = vadd.f32 %v6450, %v5171
        %v6452 = vadd.f32 %v6451, %v5179
        %v6453 = vadd.f32 %v6452, %v5187
        %v6454 = vrot.slane %v6453, 4
        %v6455 = vadd.f32 %v6453, %v6454
        %v6456 = vrot.slane %v6455, 2
        %v6457 = vadd.f32 %v6455, %v6456
        %v6458 = vrot.slane %v6457, 1
        %v6459 = vadd.f32 %v6457, %v6458
        %v6460 = vadd.f32 %v5188, %v5196
        %v6461 = vadd.f32 %v6460, %v5204
        %v6462 = vadd.f32 %v6461, %v5212
        %v6463 = vadd.f32 %v6462, %v5220
        %v6464 = vadd.f32 %v6463, %v5228
        %v6465 = vadd.f32 %v6464, %v5236
        %v6466 = vadd.f32 %v6465, %v5244
        %v6467 = vadd.f32 %v6466, %v5252
        %v6468 = vadd.f32 %v6467, %v5260
        %v6469 = vadd.f32 %v6468, %v5268
        %v6470 = vadd.f32 %v6469, %v5276
        %v6471 = vadd.f32 %v6470, %v5284
        %v6472 = vadd.f32 %v6471, %v5292
        %v6473 = vadd.f32 %v6472, %v5300
        %v6474 = vadd.f32 %v6473, %v5308
        %v6475 = vrot.slane %v6474, 4
        %v6476 = vadd.f32 %v6474, %v6475
        %v6477 = vrot.slane %v6476, 2
        %v6478 = vadd.f32 %v6476, %v6477
        %v6479 = vrot.slane %v6478, 1
        %v6480 = vadd.f32 %v6478, %v6479
        %v6481 = vadd.f32 %v5189, %v5197
        %v6482 = vadd.f32 %v6481, %v5205
        %v6483 = vadd.f32 %v6482, %v5213
        %v6484 = vadd.f32 %v6483, %v5221
        %v6485 = vadd.f32 %v6484, %v5229
        %v6486 = vadd.f32 %v6485, %v5237
        %v6487 = vadd.f32 %v6486, %v5245
        %v6488 = vadd.f32 %v6487, %v5253
        %v6489 = vadd.f32 %v6488, %v5261
        %v6490 = vadd.f32 %v6489, %v5269
        %v6491 = vadd.f32 %v6490, %v5277
        %v6492 = vadd.f32 %v6491, %v5285
        %v6493 = vadd.f32 %v6492, %v5293
        %v6494 = vadd.f32 %v6493, %v5301
        %v6495 = vadd.f32 %v6494, %v5309
        %v6496 = vrot.slane %v6495, 4
        %v6497 = vadd.f32 %v6495, %v6496
        %v6498 = vrot.slane %v6497, 2
        %v6499 = vadd.f32 %v6497, %v6498
        %v6500 = vrot.slane %v6499, 1
        %v6501 = vadd.f32 %v6499, %v6500
        %v6502 = vadd.f32 %v5190, %v5198
        %v6503 = vadd.f32 %v6502, %v5206
        %v6504 = vadd.f32 %v6503, %v5214
        %v6505 = vadd.f32 %v6504, %v5222
        %v6506 = vadd.f32 %v6505, %v5230
        %v6507 = vadd.f32 %v6506, %v5238
        %v6508 = vadd.f32 %v6507, %v5246
        %v6509 = vadd.f32 %v6508, %v5254
        %v6510 = vadd.f32 %v6509, %v5262
        %v6511 = vadd.f32 %v6510, %v5270
        %v6512 = vadd.f32 %v6511, %v5278
        %v6513 = vadd.f32 %v6512, %v5286
        %v6514 = vadd.f32 %v6513, %v5294
        %v6515 = vadd.f32 %v6514, %v5302
        %v6516 = vadd.f32 %v6515, %v5310
        %v6517 = vrot.slane %v6516, 4
        %v6518 = vadd.f32 %v6516, %v6517
        %v6519 = vrot.slane %v6518, 2
        %v6520 = vadd.f32 %v6518, %v6519
        %v6521 = vrot.slane %v6520, 1
        %v6522 = vadd.f32 %v6520, %v6521
        %v6523 = vadd.f32 %v5191, %v5199
        %v6524 = vadd.f32 %v6523, %v5207
        %v6525 = vadd.f32 %v6524, %v5215
        %v6526 = vadd.f32 %v6525, %v5223
        %v6527 = vadd.f32 %v6526, %v5231
        %v6528 = vadd.f32 %v6527, %v5239
        %v6529 = vadd.f32 %v6528, %v5247
        %v6530 = vadd.f32 %v6529, %v5255
        %v6531 = vadd.f32 %v6530, %v5263
        %v6532 = vadd.f32 %v6531, %v5271
        %v6533 = vadd.f32 %v6532, %v5279
        %v6534 = vadd.f32 %v6533, %v5287
        %v6535 = vadd.f32 %v6534, %v5295
        %v6536 = vadd.f32 %v6535, %v5303
        %v6537 = vadd.f32 %v6536, %v5311
        %v6538 = vrot.slane %v6537, 4
        %v6539 = vadd.f32 %v6537, %v6538
        %v6540 = vrot.slane %v6539, 2
        %v6541 = vadd.f32 %v6539, %v6540
        %v6542 = vrot.slane %v6541, 1
        %v6543 = vadd.f32 %v6541, %v6542
        %v6544 = vadd.f32 %v5192, %v5200
        %v6545 = vadd.f32 %v6544, %v5208
        %v6546 = vadd.f32 %v6545, %v5216
        %v6547 = vadd.f32 %v6546, %v5224
        %v6548 = vadd.f32 %v6547, %v5232
        %v6549 = vadd.f32 %v6548, %v5240
        %v6550 = vadd.f32 %v6549, %v5248
        %v6551 = vadd.f32 %v6550, %v5256
        %v6552 = vadd.f32 %v6551, %v5264
        %v6553 = vadd.f32 %v6552, %v5272
        %v6554 = vadd.f32 %v6553, %v5280
        %v6555 = vadd.f32 %v6554, %v5288
        %v6556 = vadd.f32 %v6555, %v5296
        %v6557 = vadd.f32 %v6556, %v5304
        %v6558 = vadd.f32 %v6557, %v5312
        %v6559 = vrot.slane %v6558, 4
        %v6560 = vadd.f32 %v6558, %v6559
        %v6561 = vrot.slane %v6560, 2
        %v6562 = vadd.f32 %v6560, %v6561
        %v6563 = vrot.slane %v6562, 1
        %v6564 = vadd.f32 %v6562, %v6563
        %v6565 = vadd.f32 %v5193, %v5201
        %v6566 = vadd.f32 %v6565, %v5209
        %v6567 = vadd.f32 %v6566, %v5217
        %v6568 = vadd.f32 %v6567, %v5225
        %v6569 = vadd.f32 %v6568, %v5233
        %v6570 = vadd.f32 %v6569, %v5241
        %v6571 = vadd.f32 %v6570, %v5249
        %v6572 = vadd.f32 %v6571, %v5257
        %v6573 = vadd.f32 %v6572, %v5265
        %v6574 = vadd.f32 %v6573, %v5273
        %v6575 = vadd.f32 %v6574, %v5281
        %v6576 = vadd.f32 %v6575, %v5289
        %v6577 = vadd.f32 %v6576, %v5297
        %v6578 = vadd.f32 %v6577, %v5305
        %v6579 = vadd.f32 %v6578, %v5313
        %v6580 = vrot.slane %v6579, 4
        %v6581 = vadd.f32 %v6579, %v6580
        %v6582 = vrot.slane %v6581, 2
        %v6583 = vadd.f32 %v6581, %v6582
        %v6584 = vrot.slane %v6583, 1
        %v6585 = vadd.f32 %v6583, %v6584
        %v6586 = vadd.f32 %v5194, %v5202
        %v6587 = vadd.f32 %v6586, %v5210
        %v6588 = vadd.f32 %v6587, %v5218
        %v6589 = vadd.f32 %v6588, %v5226
        %v6590 = vadd.f32 %v6589, %v5234
        %v6591 = vadd.f32 %v6590, %v5242
        %v6592 = vadd.f32 %v6591, %v5250
        %v6593 = vadd.f32 %v6592, %v5258
        %v6594 = vadd.f32 %v6593, %v5266
        %v6595 = vadd.f32 %v6594, %v5274
        %v6596 = vadd.f32 %v6595, %v5282
        %v6597 = vadd.f32 %v6596, %v5290
        %v6598 = vadd.f32 %v6597, %v5298
        %v6599 = vadd.f32 %v6598, %v5306
        %v6600 = vadd.f32 %v6599, %v5314
        %v6601 = vrot.slane %v6600, 4
        %v6602 = vadd.f32 %v6600, %v6601
        %v6603 = vrot.slane %v6602, 2
        %v6604 = vadd.f32 %v6602, %v6603
        %v6605 = vrot.slane %v6604, 1
        %v6606 = vadd.f32 %v6604, %v6605
        %v6607 = vadd.f32 %v5195, %v5203
        %v6608 = vadd.f32 %v6607, %v5211
        %v6609 = vadd.f32 %v6608, %v5219
        %v6610 = vadd.f32 %v6609, %v5227
        %v6611 = vadd.f32 %v6610, %v5235
        %v6612 = vadd.f32 %v6611, %v5243
        %v6613 = vadd.f32 %v6612, %v5251
        %v6614 = vadd.f32 %v6613, %v5259
        %v6615 = vadd.f32 %v6614, %v5267
        %v6616 = vadd.f32 %v6615, %v5275
        %v6617 = vadd.f32 %v6616, %v5283
        %v6618 = vadd.f32 %v6617, %v5291
        %v6619 = vadd.f32 %v6618, %v5299
        %v6620 = vadd.f32 %v6619, %v5307
        %v6621 = vadd.f32 %v6620, %v5315
        %v6622 = vrot.slane %v6621, 4
        %v6623 = vadd.f32 %v6621, %v6622
        %v6624 = vrot.slane %v6623, 2
        %v6625 = vadd.f32 %v6623, %v6624
        %v6626 = vrot.slane %v6625, 1
        %v6627 = vadd.f32 %v6625, %v6626
        %v6628 = vadd.f32 %v5316, %v5324
        %v6629 = vadd.f32 %v6628, %v5332
        %v6630 = vadd.f32 %v6629, %v5340
        %v6631 = vadd.f32 %v6630, %v5348
        %v6632 = vadd.f32 %v6631, %v5356
        %v6633 = vadd.f32 %v6632, %v5364
        %v6634 = vadd.f32 %v6633, %v5372
        %v6635 = vadd.f32 %v6634, %v5380
        %v6636 = vadd.f32 %v6635, %v5388
        %v6637 = vadd.f32 %v6636, %v5396
        %v6638 = vadd.f32 %v6637, %v5404
        %v6639 = vadd.f32 %v6638, %v5412
        %v6640 = vadd.f32 %v6639, %v5420
        %v6641 = vadd.f32 %v6640, %v5428
        %v6642 = vadd.f32 %v6641, %v5436
        %v6643 = vrot.slane %v6642, 4
        %v6644 = vadd.f32 %v6642, %v6643
        %v6645 = vrot.slane %v6644, 2
        %v6646 = vadd.f32 %v6644, %v6645
        %v6647 = vrot.slane %v6646, 1
        %v6648 = vadd.f32 %v6646, %v6647
        %v6649 = vadd.f32 %v5317, %v5325
        %v6650 = vadd.f32 %v6649, %v5333
        %v6651 = vadd.f32 %v6650, %v5341
        %v6652 = vadd.f32 %v6651, %v5349
        %v6653 = vadd.f32 %v6652, %v5357
        %v6654 = vadd.f32 %v6653, %v5365
        %v6655 = vadd.f32 %v6654, %v5373
        %v6656 = vadd.f32 %v6655, %v5381
        %v6657 = vadd.f32 %v6656, %v5389
        %v6658 = vadd.f32 %v6657, %v5397
        %v6659 = vadd.f32 %v6658, %v5405
        %v6660 = vadd.f32 %v6659, %v5413
        %v6661 = vadd.f32 %v6660, %v5421
        %v6662 = vadd.f32 %v6661, %v5429
        %v6663 = vadd.f32 %v6662, %v5437
        %v6664 = vrot.slane %v6663, 4
        %v6665 = vadd.f32 %v6663, %v6664
        %v6666 = vrot.slane %v6665, 2
        %v6667 = vadd.f32 %v6665, %v6666
        %v6668 = vrot.slane %v6667, 1
        %v6669 = vadd.f32 %v6667, %v6668
        %v6670 = vadd.f32 %v5318, %v5326
        %v6671 = vadd.f32 %v6670, %v5334
        %v6672 = vadd.f32 %v6671, %v5342
        %v6673 = vadd.f32 %v6672, %v5350
        %v6674 = vadd.f32 %v6673, %v5358
        %v6675 = vadd.f32 %v6674, %v5366
        %v6676 = vadd.f32 %v6675, %v5374
        %v6677 = vadd.f32 %v6676, %v5382
        %v6678 = vadd.f32 %v6677, %v5390
        %v6679 = vadd.f32 %v6678, %v5398
        %v6680 = vadd.f32 %v6679, %v5406
        %v6681 = vadd.f32 %v6680, %v5414
        %v6682 = vadd.f32 %v6681, %v5422
        %v6683 = vadd.f32 %v6682, %v5430
        %v6684 = vadd.f32 %v6683, %v5438
        %v6685 = vrot.slane %v6684, 4
        %v6686 = vadd.f32 %v6684, %v6685
        %v6687 = vrot.slane %v6686, 2
        %v6688 = vadd.f32 %v6686, %v6687
        %v6689 = vrot.slane %v6688, 1
        %v6690 = vadd.f32 %v6688, %v6689
        %v6691 = vadd.f32 %v5319, %v5327
        %v6692 = vadd.f32 %v6691, %v5335
        %v6693 = vadd.f32 %v6692, %v5343
        %v6694 = vadd.f32 %v6693, %v5351
        %v6695 = vadd.f32 %v6694, %v5359
        %v6696 = vadd.f32 %v6695, %v5367
        %v6697 = vadd.f32 %v6696, %v5375
        %v6698 = vadd.f32 %v6697, %v5383
        %v6699 = vadd.f32 %v6698, %v5391
        %v6700 = vadd.f32 %v6699, %v5399
        %v6701 = vadd.f32 %v6700, %v5407
        %v6702 = vadd.f32 %v6701, %v5415
        %v6703 = vadd.f32 %v6702, %v5423
        %v6704 = vadd.f32 %v6703, %v5431
        %v6705 = vadd.f32 %v6704, %v5439
        %v6706 = vrot.slane %v6705, 4
        %v6707 = vadd.f32 %v6705, %v6706
        %v6708 = vrot.slane %v6707, 2
        %v6709 = vadd.f32 %v6707, %v6708
        %v6710 = vrot.slane %v6709, 1
        %v6711 = vadd.f32 %v6709, %v6710
        %v6712 = vadd.f32 %v5320, %v5328
        %v6713 = vadd.f32 %v6712, %v5336
        %v6714 = vadd.f32 %v6713, %v5344
        %v6715 = vadd.f32 %v6714, %v5352
        %v6716 = vadd.f32 %v6715, %v5360
        %v6717 = vadd.f32 %v6716, %v5368
        %v6718 = vadd.f32 %v6717, %v5376
        %v6719 = vadd.f32 %v6718, %v5384
        %v6720 = vadd.f32 %v6719, %v5392
        %v6721 = vadd.f32 %v6720, %v5400
        %v6722 = vadd.f32 %v6721, %v5408
        %v6723 = vadd.f32 %v6722, %v5416
        %v6724 = vadd.f32 %v6723, %v5424
        %v6725 = vadd.f32 %v6724, %v5432
        %v6726 = vadd.f32 %v6725, %v5440
        %v6727 = vrot.slane %v6726, 4
        %v6728 = vadd.f32 %v6726, %v6727
        %v6729 = vrot.slane %v6728, 2
        %v6730 = vadd.f32 %v6728, %v6729
        %v6731 = vrot.slane %v6730, 1
        %v6732 = vadd.f32 %v6730, %v6731
        %v6733 = vadd.f32 %v5321, %v5329
        %v6734 = vadd.f32 %v6733, %v5337
        %v6735 = vadd.f32 %v6734, %v5345
        %v6736 = vadd.f32 %v6735, %v5353
        %v6737 = vadd.f32 %v6736, %v5361
        %v6738 = vadd.f32 %v6737, %v5369
        %v6739 = vadd.f32 %v6738, %v5377
        %v6740 = vadd.f32 %v6739, %v5385
        %v6741 = vadd.f32 %v6740, %v5393
        %v6742 = vadd.f32 %v6741, %v5401
        %v6743 = vadd.f32 %v6742, %v5409
        %v6744 = vadd.f32 %v6743, %v5417
        %v6745 = vadd.f32 %v6744, %v5425
        %v6746 = vadd.f32 %v6745, %v5433
        %v6747 = vadd.f32 %v6746, %v5441
        %v6748 = vrot.slane %v6747, 4
        %v6749 = vadd.f32 %v6747, %v6748
        %v6750 = vrot.slane %v6749, 2
        %v6751 = vadd.f32 %v6749, %v6750
        %v6752 = vrot.slane %v6751, 1
        %v6753 = vadd.f32 %v6751, %v6752
        %v6754 = vadd.f32 %v5322, %v5330
        %v6755 = vadd.f32 %v6754, %v5338
        %v6756 = vadd.f32 %v6755, %v5346
        %v6757 = vadd.f32 %v6756, %v5354
        %v6758 = vadd.f32 %v6757, %v5362
        %v6759 = vadd.f32 %v6758, %v5370
        %v6760 = vadd.f32 %v6759, %v5378
        %v6761 = vadd.f32 %v6760, %v5386
        %v6762 = vadd.f32 %v6761, %v5394
        %v6763 = vadd.f32 %v6762, %v5402
        %v6764 = vadd.f32 %v6763, %v5410
        %v6765 = vadd.f32 %v6764, %v5418
        %v6766 = vadd.f32 %v6765, %v5426
        %v6767 = vadd.f32 %v6766, %v5434
        %v6768 = vadd.f32 %v6767, %v5442
        %v6769 = vrot.slane %v6768, 4
        %v6770 = vadd.f32 %v6768, %v6769
        %v6771 = vrot.slane %v6770, 2
        %v6772 = vadd.f32 %v6770, %v6771
        %v6773 = vrot.slane %v6772, 1
        %v6774 = vadd.f32 %v6772, %v6773
        %v6775 = vadd.f32 %v5323, %v5331
        %v6776 = vadd.f32 %v6775, %v5339
        %v6777 = vadd.f32 %v6776, %v5347
        %v6778 = vadd.f32 %v6777, %v5355
        %v6779 = vadd.f32 %v6778, %v5363
        %v6780 = vadd.f32 %v6779, %v5371
        %v6781 = vadd.f32 %v6780, %v5379
        %v6782 = vadd.f32 %v6781, %v5387
        %v6783 = vadd.f32 %v6782, %v5395
        %v6784 = vadd.f32 %v6783, %v5403
        %v6785 = vadd.f32 %v6784, %v5411
        %v6786 = vadd.f32 %v6785, %v5419
        %v6787 = vadd.f32 %v6786, %v5427
        %v6788 = vadd.f32 %v6787, %v5435
        %v6789 = vadd.f32 %v6788, %v5443
        %v6790 = vrot.slane %v6789, 4
        %v6791 = vadd.f32 %v6789, %v6790
        %v6792 = vrot.slane %v6791, 2
        %v6793 = vadd.f32 %v6791, %v6792
        %v6794 = vrot.slane %v6793, 1
        %v6795 = vadd.f32 %v6793, %v6794
        %vm6860 = vcmask 1041409
        %v6861 = vsel %vm6860, %v5640, %v5472
        %vm6862 = vcmask 1042434
        %v6863 = vsel %vm6862, %v5808, %v6861
        %vm6864 = vcmask 1043459
        %v6865 = vsel %vm6864, %v5976, %v6863
        %vm6866 = vcmask 1044484
        %v6867 = vsel %vm6866, %v6144, %v6865
        %vm6868 = vcmask 1045509
        %v6869 = vsel %vm6868, %v6312, %v6867
        %vm6870 = vcmask 1046534
        %v6871 = vsel %vm6870, %v6480, %v6869
        %vm6872 = vcmask 1047559
        %v6873 = vsel %vm6872, %v6648, %v6871
        %v6874 = vsel %vm6860, %v5661, %v5493
        %v6875 = vsel %vm6862, %v5829, %v6874
        %v6876 = vsel %vm6864, %v5997, %v6875
        %v6877 = vsel %vm6866, %v6165, %v6876
        %v6878 = vsel %vm6868, %v6333, %v6877
        %v6879 = vsel %vm6870, %v6501, %v6878
        %v6880 = vsel %vm6872, %v6669, %v6879
        %v6881 = vsel %vm6860, %v5682, %v5514
        %v6882 = vsel %vm6862, %v5850, %v6881
        %v6883 = vsel %vm6864, %v6018, %v6882
        %v6884 = vsel %vm6866, %v6186, %v6883
        %v6885 = vsel %vm6868, %v6354, %v6884
        %v6886 = vsel %vm6870, %v6522, %v6885
        %v6887 = vsel %vm6872, %v6690, %v6886
        %v6888 = vsel %vm6860, %v5703, %v5535
        %v6889 = vsel %vm6862, %v5871, %v6888
        %v6890 = vsel %vm6864, %v6039, %v6889
        %v6891 = vsel %vm6866, %v6207, %v6890
        %v6892 = vsel %vm6868, %v6375, %v6891
        %v6893 = vsel %vm6870, %v6543, %v6892
        %v6894 = vsel %vm6872, %v6711, %v6893
        %v6895 = vsel %vm6860, %v5724, %v5556
        %v6896 = vsel %vm6862, %v5892, %v6895
        %v6897 = vsel %vm6864, %v6060, %v6896
        %v6898 = vsel %vm6866, %v6228, %v6897
        %v6899 = vsel %vm6868, %v6396, %v6898
        %v6900 = vsel %vm6870, %v6564, %v6899
        %v6901 = vsel %vm6872, %v6732, %v6900
        %v6902 = vsel %vm6860, %v5745, %v5577
        %v6903 = vsel %vm6862, %v5913, %v6902
        %v6904 = vsel %vm6864, %v6081, %v6903
        %v6905 = vsel %vm6866, %v6249, %v6904
        %v6906 = vsel %vm6868, %v6417, %v6905
        %v6907 = vsel %vm6870, %v6585, %v6906
        %v6908 = vsel %vm6872, %v6753, %v6907
        %v6909 = vsel %vm6860, %v5766, %v5598
        %v6910 = vsel %vm6862, %v5934, %v6909
        %v6911 = vsel %vm6864, %v6102, %v6910
        %v6912 = vsel %vm6866, %v6270, %v6911
        %v6913 = vsel %vm6868, %v6438, %v6912
        %v6914 = vsel %vm6870, %v6606, %v6913
        %v6915 = vsel %vm6872, %v6774, %v6914
        %v6916 = vsel %vm6860, %v5787, %v5619
        %v6917 = vsel %vm6862, %v5955, %v6916
        %v6918 = vsel %vm6864, %v6123, %v6917
        %v6919 = vsel %vm6866, %v6291, %v6918
        %v6920 = vsel %vm6868, %v6459, %v6919
        %v6921 = vsel %vm6870, %v6627, %v6920
        %v6922 = vsel %vm6872, %v6795, %v6921
        %v6931 = vadd.f32 %v5444, %v6873
        %v6932 = vadd.f32 %v5445, %v6880
        %v6933 = vadd.f32 %v5446, %v6887
        %v6934 = vadd.f32 %v5447, %v6894
        %v6935 = vadd.f32 %v5448, %v6901
        %v6936 = vadd.f32 %v5449, %v6908
        %v6937 = vadd.f32 %v5450, %v6915
        %v6938 = vadd.f32 %v5451, %v6922
        %6939 = vst [vmem:[#allocation2] sm:$0xff] %v6931
        %6940 = vst [vmem:[#allocation2 + $0x8] sm:$0xff] %v6932
        %6941 = vst [vmem:[#allocation2 + $0x10] sm:$0xff] %v6933
        %6942 = vst [vmem:[#allocation2 + $0x18] sm:$0xff] %v6934
        %6943 = vst [vmem:[#allocation2 + $0x20] sm:$0xff] %v6935
        %6944 = vst [vmem:[#allocation2 + $0x28] sm:$0xff] %v6936
        %6945 = vst [vmem:[#allocation2 + $0x30] sm:$0xff] %v6937
        %6946 = vst [vmem:[#allocation2 + $0x38] sm:$0xff] %v6938
        %p6947 = scmp.eq.s32.totalorder %s22, 1
        // Predicated region
        $region90: #{network_forward.1} parent=80 // pred_check
          %p6948 = pneg %p6947
        $region91: #{network_forward.1} parent=80 // pred_check_branch
          %6950 = sbr.rel (%p6948) target = $region93
        $region92: #{network_forward.1} parent=80 // pred_region
          %v6951 = vld [vmem:[#allocation2] sm:$0xff]
          %v6952 = vld [vmem:[#allocation2 + $0x8] sm:$0xff]
          %v6953 = vld [vmem:[#allocation2 + $0x10] sm:$0xff]
          %v6954 = vld [vmem:[#allocation2 + $0x18] sm:$0xff]
          %v6955 = vld [vmem:[#allocation2 + $0x20] sm:$0xff]
          %v6956 = vld [vmem:[#allocation2 + $0x28] sm:$0xff]
          %v6957 = vld [vmem:[#allocation2 + $0x30] sm:$0xff]
          %v6958 = vld [vmem:[#allocation2 + $0x38] sm:$0xff]
          %v6959 = vmul.f32 %v6951, 0.00390625
          %v6960 = vmul.f32 %v6952, 0.00390625
          %v6961 = vmul.f32 %v6953, 0.00390625
          %v6962 = vmul.f32 %v6954, 0.00390625
          %v6963 = vmul.f32 %v6955, 0.00390625
          %v6964 = vmul.f32 %v6956, 0.00390625
          %v6965 = vmul.f32 %v6957, 0.00390625
          %v6966 = vmul.f32 %v6958, 0.00390625
          %v6967 = vpack.c.bf16 %v6959, %v6959
          %v6968 = vpack.c.bf16 %v6960, %v6960
          %v6969 = vpack.c.bf16 %v6961, %v6961
          %v6970 = vpack.c.bf16 %v6962, %v6962
          %v6971 = vpack.c.bf16 %v6963, %v6963
          %v6972 = vpack.c.bf16 %v6964, %v6964
          %v6973 = vpack.c.bf16 %v6965, %v6965
          %v6974 = vpack.c.bf16 %v6966, %v6966
          %v6975 = vld [vmem:[%s2] sm:$0xf]
          %v6976 = vld [vmem:[%s2 + $0x4] sm:$0xf]
          %v6977 = vld [vmem:[%s2 + $0x8] sm:$0xf]
          %v6978 = vld [vmem:[%s2 + $0xc] sm:$0xf]
          %v6979 = vld [vmem:[%s2 + $0x10] sm:$0xf]
          %v6980 = vld [vmem:[%s2 + $0x14] sm:$0xf]
          %v6981 = vld [vmem:[%s2 + $0x18] sm:$0xf]
          %v6982 = vld [vmem:[%s2 + $0x1c] sm:$0xf]
          %v6983 = vld [vmem:[%s2 + $0x20] sm:$0xf]
          %v6984 = vld [vmem:[%s2 + $0x24] sm:$0xf]
          %v6985 = vld [vmem:[%s2 + $0x28] sm:$0xf]
          %v6986 = vld [vmem:[%s2 + $0x2c] sm:$0xf]
          %v6987 = vld [vmem:[%s2 + $0x30] sm:$0xf]
          %v6988 = vld [vmem:[%s2 + $0x34] sm:$0xf]
          %v6989 = vld [vmem:[%s2 + $0x38] sm:$0xf]
          %v6990 = vld [vmem:[%s2 + $0x3c] sm:$0xf]
          %v6991 = vld [vmem:[%s2 + $0x40] sm:$0xf]
          %v6992 = vld [vmem:[%s2 + $0x44] sm:$0xf]
          %v6993 = vld [vmem:[%s2 + $0x48] sm:$0xf]
          %v6994 = vld [vmem:[%s2 + $0x4c] sm:$0xf]
          %v6995 = vld [vmem:[%s2 + $0x50] sm:$0xf]
          %v6996 = vld [vmem:[%s2 + $0x54] sm:$0xf]
          %v6997 = vld [vmem:[%s2 + $0x58] sm:$0xf]
          %v6998 = vld [vmem:[%s2 + $0x5c] sm:$0xf]
          %v6999 = vld [vmem:[%s2 + $0x60] sm:$0xf]
          %v7000 = vld [vmem:[%s2 + $0x64] sm:$0xf]
          %v7001 = vld [vmem:[%s2 + $0x68] sm:$0xf]
          %v7002 = vld [vmem:[%s2 + $0x6c] sm:$0xf]
          %v7003 = vld [vmem:[%s2 + $0x70] sm:$0xf]
          %v7004 = vld [vmem:[%s2 + $0x74] sm:$0xf]
          %v7005 = vld [vmem:[%s2 + $0x78] sm:$0xf]
          %v7006 = vld [vmem:[%s2 + $0x7c] sm:$0xf]
          %v7007 = vld [vmem:[%s2 + $0x80] sm:$0xf]
          %v7008 = vld [vmem:[%s2 + $0x84] sm:$0xf]
          %v7009 = vld [vmem:[%s2 + $0x88] sm:$0xf]
          %v7010 = vld [vmem:[%s2 + $0x8c] sm:$0xf]
          %v7011 = vld [vmem:[%s2 + $0x90] sm:$0xf]
          %v7012 = vld [vmem:[%s2 + $0x94] sm:$0xf]
          %v7013 = vld [vmem:[%s2 + $0x98] sm:$0xf]
          %v7014 = vld [vmem:[%s2 + $0x9c] sm:$0xf]
          %v7015 = vld [vmem:[%s2 + $0xa0] sm:$0xf]
          %v7016 = vld [vmem:[%s2 + $0xa4] sm:$0xf]
          %v7017 = vld [vmem:[%s2 + $0xa8] sm:$0xf]
          %v7018 = vld [vmem:[%s2 + $0xac] sm:$0xf]
          %v7019 = vld [vmem:[%s2 + $0xb0] sm:$0xf]
          %v7020 = vld [vmem:[%s2 + $0xb4] sm:$0xf]
          %v7021 = vld [vmem:[%s2 + $0xb8] sm:$0xf]
          %v7022 = vld [vmem:[%s2 + $0xbc] sm:$0xf]
          %v7023 = vld [vmem:[%s2 + $0xc0] sm:$0xf]
          %v7024 = vld [vmem:[%s2 + $0xc4] sm:$0xf]
          %v7025 = vld [vmem:[%s2 + $0xc8] sm:$0xf]
          %v7026 = vld [vmem:[%s2 + $0xcc] sm:$0xf]
          %v7027 = vld [vmem:[%s2 + $0xd0] sm:$0xf]
          %v7028 = vld [vmem:[%s2 + $0xd4] sm:$0xf]
          %v7029 = vld [vmem:[%s2 + $0xd8] sm:$0xf]
          %v7030 = vld [vmem:[%s2 + $0xdc] sm:$0xf]
          %v7031 = vld [vmem:[%s2 + $0xe0] sm:$0xf]
          %v7032 = vld [vmem:[%s2 + $0xe4] sm:$0xf]
          %v7033 = vld [vmem:[%s2 + $0xe8] sm:$0xf]
          %v7034 = vld [vmem:[%s2 + $0xec] sm:$0xf]
          %v7035 = vld [vmem:[%s2 + $0xf0] sm:$0xf]
          %v7036 = vld [vmem:[%s2 + $0xf4] sm:$0xf]
          %v7037 = vld [vmem:[%s2 + $0xf8] sm:$0xf]
          %v7038 = vld [vmem:[%s2 + $0xfc] sm:$0xf]
          %v7039 = vld [vmem:[%s2 + $0x100] sm:$0xf]
          %v7040 = vld [vmem:[%s2 + $0x104] sm:$0xf]
          %v7041 = vld [vmem:[%s2 + $0x108] sm:$0xf]
          %v7042 = vld [vmem:[%s2 + $0x10c] sm:$0xf]
          %v7043 = vld [vmem:[%s2 + $0x110] sm:$0xf]
          %v7044 = vld [vmem:[%s2 + $0x114] sm:$0xf]
          %v7045 = vld [vmem:[%s2 + $0x118] sm:$0xf]
          %v7046 = vld [vmem:[%s2 + $0x11c] sm:$0xf]
          %v7047 = vld [vmem:[%s2 + $0x120] sm:$0xf]
          %v7048 = vld [vmem:[%s2 + $0x124] sm:$0xf]
          %v7049 = vld [vmem:[%s2 + $0x128] sm:$0xf]
          %v7050 = vld [vmem:[%s2 + $0x12c] sm:$0xf]
          %v7051 = vld [vmem:[%s2 + $0x130] sm:$0xf]
          %v7052 = vld [vmem:[%s2 + $0x134] sm:$0xf]
          %v7053 = vld [vmem:[%s2 + $0x138] sm:$0xf]
          %v7054 = vld [vmem:[%s2 + $0x13c] sm:$0xf]
          %v7055 = vld [vmem:[%s2 + $0x140] sm:$0xf]
          %v7056 = vld [vmem:[%s2 + $0x144] sm:$0xf]
          %v7057 = vld [vmem:[%s2 + $0x148] sm:$0xf]
          %v7058 = vld [vmem:[%s2 + $0x14c] sm:$0xf]
          %v7059 = vld [vmem:[%s2 + $0x150] sm:$0xf]
          %v7060 = vld [vmem:[%s2 + $0x154] sm:$0xf]
          %v7061 = vld [vmem:[%s2 + $0x158] sm:$0xf]
          %v7062 = vld [vmem:[%s2 + $0x15c] sm:$0xf]
          %v7063 = vld [vmem:[%s2 + $0x160] sm:$0xf]
          %v7064 = vld [vmem:[%s2 + $0x164] sm:$0xf]
          %v7065 = vld [vmem:[%s2 + $0x168] sm:$0xf]
          %v7066 = vld [vmem:[%s2 + $0x16c] sm:$0xf]
          %v7067 = vld [vmem:[%s2 + $0x170] sm:$0xf]
          %v7068 = vld [vmem:[%s2 + $0x174] sm:$0xf]
          %v7069 = vld [vmem:[%s2 + $0x178] sm:$0xf]
          %v7070 = vld [vmem:[%s2 + $0x17c] sm:$0xf]
          %v7071 = vld [vmem:[%s2 + $0x180] sm:$0xf]
          %v7072 = vld [vmem:[%s2 + $0x184] sm:$0xf]
          %v7073 = vld [vmem:[%s2 + $0x188] sm:$0xf]
          %v7074 = vld [vmem:[%s2 + $0x18c] sm:$0xf]
          %v7075 = vld [vmem:[%s2 + $0x190] sm:$0xf]
          %v7076 = vld [vmem:[%s2 + $0x194] sm:$0xf]
          %v7077 = vld [vmem:[%s2 + $0x198] sm:$0xf]
          %v7078 = vld [vmem:[%s2 + $0x19c] sm:$0xf]
          %v7079 = vld [vmem:[%s2 + $0x1a0] sm:$0xf]
          %v7080 = vld [vmem:[%s2 + $0x1a4] sm:$0xf]
          %v7081 = vld [vmem:[%s2 + $0x1a8] sm:$0xf]
          %v7082 = vld [vmem:[%s2 + $0x1ac] sm:$0xf]
          %v7083 = vld [vmem:[%s2 + $0x1b0] sm:$0xf]
          %v7084 = vld [vmem:[%s2 + $0x1b4] sm:$0xf]
          %v7085 = vld [vmem:[%s2 + $0x1b8] sm:$0xf]
          %v7086 = vld [vmem:[%s2 + $0x1bc] sm:$0xf]
          %v7087 = vld [vmem:[%s2 + $0x1c0] sm:$0xf]
          %v7088 = vld [vmem:[%s2 + $0x1c4] sm:$0xf]
          %v7089 = vld [vmem:[%s2 + $0x1c8] sm:$0xf]
          %v7090 = vld [vmem:[%s2 + $0x1cc] sm:$0xf]
          %v7091 = vld [vmem:[%s2 + $0x1d0] sm:$0xf]
          %v7092 = vld [vmem:[%s2 + $0x1d4] sm:$0xf]
          %v7093 = vld [vmem:[%s2 + $0x1d8] sm:$0xf]
          %v7094 = vld [vmem:[%s2 + $0x1dc] sm:$0xf]
          %v7095 = vld [vmem:[%s2 + $0x1e0] sm:$0xf]
          %v7096 = vld [vmem:[%s2 + $0x1e4] sm:$0xf]
          %v7097 = vld [vmem:[%s2 + $0x1e8] sm:$0xf]
          %v7098 = vld [vmem:[%s2 + $0x1ec] sm:$0xf]
          %v7099 = vld [vmem:[%s2 + $0x1f0] sm:$0xf]
          %v7100 = vld [vmem:[%s2 + $0x1f4] sm:$0xf]
          %v7101 = vld [vmem:[%s2 + $0x1f8] sm:$0xf]
          %v7102 = vld [vmem:[%s2 + $0x1fc] sm:$0xf]
          %v7103 = vld [vmem:[%s3] sm:$0x1]
          %v7105 = vlaneseq
          %v7106 = vshrl.u32 %v7105, 7
          %v7107 = vsub.s32 0, %v7106
          %v7108 = vrot.slane %v7103, %v7107
          %v7238 = vunpack.c.l.b16 %v6975
          %v7239 = vunpack.c.l.b16 %v6976
          %v7240 = vunpack.c.l.b16 %v6977
          %v7241 = vunpack.c.l.b16 %v6978
          %v7242 = vunpack.c.l.b16 %v6979
          %v7243 = vunpack.c.l.b16 %v6980
          %v7244 = vunpack.c.l.b16 %v6981
          %v7245 = vunpack.c.l.b16 %v6982
          %v7246 = vunpack.c.l.b16 %v6983
          %v7247 = vunpack.c.l.b16 %v6984
          %v7248 = vunpack.c.l.b16 %v6985
          %v7249 = vunpack.c.l.b16 %v6986
          %v7250 = vunpack.c.l.b16 %v6987
          %v7251 = vunpack.c.l.b16 %v6988
          %v7252 = vunpack.c.l.b16 %v6989
          %v7253 = vunpack.c.l.b16 %v6990
          %v7254 = vunpack.c.l.b16 %v6991
          %v7255 = vunpack.c.l.b16 %v6992
          %v7256 = vunpack.c.l.b16 %v6993
          %v7257 = vunpack.c.l.b16 %v6994
          %v7258 = vunpack.c.l.b16 %v6995
          %v7259 = vunpack.c.l.b16 %v6996
          %v7260 = vunpack.c.l.b16 %v6997
          %v7261 = vunpack.c.l.b16 %v6998
          %v7262 = vunpack.c.l.b16 %v6999
          %v7263 = vunpack.c.l.b16 %v7000
          %v7264 = vunpack.c.l.b16 %v7001
          %v7265 = vunpack.c.l.b16 %v7002
          %v7266 = vunpack.c.l.b16 %v7003
          %v7267 = vunpack.c.l.b16 %v7004
          %v7268 = vunpack.c.l.b16 %v7005
          %v7269 = vunpack.c.l.b16 %v7006
          %v7270 = vunpack.c.l.b16 %v7007
          %v7271 = vunpack.c.l.b16 %v7008
          %v7272 = vunpack.c.l.b16 %v7009
          %v7273 = vunpack.c.l.b16 %v7010
          %v7274 = vunpack.c.l.b16 %v7011
          %v7275 = vunpack.c.l.b16 %v7012
          %v7276 = vunpack.c.l.b16 %v7013
          %v7277 = vunpack.c.l.b16 %v7014
          %v7278 = vunpack.c.l.b16 %v7015
          %v7279 = vunpack.c.l.b16 %v7016
          %v7280 = vunpack.c.l.b16 %v7017
          %v7281 = vunpack.c.l.b16 %v7018
          %v7282 = vunpack.c.l.b16 %v7019
          %v7283 = vunpack.c.l.b16 %v7020
          %v7284 = vunpack.c.l.b16 %v7021
          %v7285 = vunpack.c.l.b16 %v7022
          %v7286 = vunpack.c.l.b16 %v7023
          %v7287 = vunpack.c.l.b16 %v7024
          %v7288 = vunpack.c.l.b16 %v7025
          %v7289 = vunpack.c.l.b16 %v7026
          %v7290 = vunpack.c.l.b16 %v7027
          %v7291 = vunpack.c.l.b16 %v7028
          %v7292 = vunpack.c.l.b16 %v7029
          %v7293 = vunpack.c.l.b16 %v7030
          %v7294 = vunpack.c.l.b16 %v7031
          %v7295 = vunpack.c.l.b16 %v7032
          %v7296 = vunpack.c.l.b16 %v7033
          %v7297 = vunpack.c.l.b16 %v7034
          %v7298 = vunpack.c.l.b16 %v7035
          %v7299 = vunpack.c.l.b16 %v7036
          %v7300 = vunpack.c.l.b16 %v7037
          %v7301 = vunpack.c.l.b16 %v7038
          %v7302 = vunpack.c.l.b16 %v7039
          %v7303 = vunpack.c.l.b16 %v7040
          %v7304 = vunpack.c.l.b16 %v7041
          %v7305 = vunpack.c.l.b16 %v7042
          %v7306 = vunpack.c.l.b16 %v7043
          %v7307 = vunpack.c.l.b16 %v7044
          %v7308 = vunpack.c.l.b16 %v7045
          %v7309 = vunpack.c.l.b16 %v7046
          %v7310 = vunpack.c.l.b16 %v7047
          %v7311 = vunpack.c.l.b16 %v7048
          %v7312 = vunpack.c.l.b16 %v7049
          %v7313 = vunpack.c.l.b16 %v7050
          %v7314 = vunpack.c.l.b16 %v7051
          %v7315 = vunpack.c.l.b16 %v7052
          %v7316 = vunpack.c.l.b16 %v7053
          %v7317 = vunpack.c.l.b16 %v7054
          %v7318 = vunpack.c.l.b16 %v7055
          %v7319 = vunpack.c.l.b16 %v7056
          %v7320 = vunpack.c.l.b16 %v7057
          %v7321 = vunpack.c.l.b16 %v7058
          %v7322 = vunpack.c.l.b16 %v7059
          %v7323 = vunpack.c.l.b16 %v7060
          %v7324 = vunpack.c.l.b16 %v7061
          %v7325 = vunpack.c.l.b16 %v7062
          %v7326 = vunpack.c.l.b16 %v7063
          %v7327 = vunpack.c.l.b16 %v7064
          %v7328 = vunpack.c.l.b16 %v7065
          %v7329 = vunpack.c.l.b16 %v7066
          %v7330 = vunpack.c.l.b16 %v7067
          %v7331 = vunpack.c.l.b16 %v7068
          %v7332 = vunpack.c.l.b16 %v7069
          %v7333 = vunpack.c.l.b16 %v7070
          %v7334 = vunpack.c.l.b16 %v7071
          %v7335 = vunpack.c.l.b16 %v7072
          %v7336 = vunpack.c.l.b16 %v7073
          %v7337 = vunpack.c.l.b16 %v7074
          %v7338 = vunpack.c.l.b16 %v7075
          %v7339 = vunpack.c.l.b16 %v7076
          %v7340 = vunpack.c.l.b16 %v7077
          %v7341 = vunpack.c.l.b16 %v7078
          %v7342 = vunpack.c.l.b16 %v7079
          %v7343 = vunpack.c.l.b16 %v7080
          %v7344 = vunpack.c.l.b16 %v7081
          %v7345 = vunpack.c.l.b16 %v7082
          %v7346 = vunpack.c.l.b16 %v7083
          %v7347 = vunpack.c.l.b16 %v7084
          %v7348 = vunpack.c.l.b16 %v7085
          %v7349 = vunpack.c.l.b16 %v7086
          %v7350 = vunpack.c.l.b16 %v7087
          %v7351 = vunpack.c.l.b16 %v7088
          %v7352 = vunpack.c.l.b16 %v7089
          %v7353 = vunpack.c.l.b16 %v7090
          %v7354 = vunpack.c.l.b16 %v7091
          %v7355 = vunpack.c.l.b16 %v7092
          %v7356 = vunpack.c.l.b16 %v7093
          %v7357 = vunpack.c.l.b16 %v7094
          %v7358 = vunpack.c.l.b16 %v7095
          %v7359 = vunpack.c.l.b16 %v7096
          %v7360 = vunpack.c.l.b16 %v7097
          %v7361 = vunpack.c.l.b16 %v7098
          %v7362 = vunpack.c.l.b16 %v7099
          %v7363 = vunpack.c.l.b16 %v7100
          %v7364 = vunpack.c.l.b16 %v7101
          %v7365 = vunpack.c.l.b16 %v7102
          %v7366 = vpack.c.b16 %v7239, %v7238
          %v7367 = vpack.c.b16 %v7241, %v7240
          %v7368 = vpack.c.b16 %v7243, %v7242
          %v7369 = vpack.c.b16 %v7245, %v7244
          %v7370 = vpack.c.b16 %v7247, %v7246
          %v7371 = vpack.c.b16 %v7249, %v7248
          %v7372 = vpack.c.b16 %v7251, %v7250
          %v7373 = vpack.c.b16 %v7253, %v7252
          %v7374 = vpack.c.b16 %v7255, %v7254
          %v7375 = vpack.c.b16 %v7257, %v7256
          %v7376 = vpack.c.b16 %v7259, %v7258
          %v7377 = vpack.c.b16 %v7261, %v7260
          %v7378 = vpack.c.b16 %v7263, %v7262
          %v7379 = vpack.c.b16 %v7265, %v7264
          %v7380 = vpack.c.b16 %v7267, %v7266
          %v7381 = vpack.c.b16 %v7269, %v7268
          %v7382 = vpack.c.b16 %v7271, %v7270
          %v7383 = vpack.c.b16 %v7273, %v7272
          %v7384 = vpack.c.b16 %v7275, %v7274
          %v7385 = vpack.c.b16 %v7277, %v7276
          %v7386 = vpack.c.b16 %v7279, %v7278
          %v7387 = vpack.c.b16 %v7281, %v7280
          %v7388 = vpack.c.b16 %v7283, %v7282
          %v7389 = vpack.c.b16 %v7285, %v7284
          %v7390 = vpack.c.b16 %v7287, %v7286
          %v7391 = vpack.c.b16 %v7289, %v7288
          %v7392 = vpack.c.b16 %v7291, %v7290
          %v7393 = vpack.c.b16 %v7293, %v7292
          %v7394 = vpack.c.b16 %v7295, %v7294
          %v7395 = vpack.c.b16 %v7297, %v7296
          %v7396 = vpack.c.b16 %v7299, %v7298
          %v7397 = vpack.c.b16 %v7301, %v7300
          %v7398 = vpack.c.b16 %v7303, %v7302
          %v7399 = vpack.c.b16 %v7305, %v7304
          %v7400 = vpack.c.b16 %v7307, %v7306
          %v7401 = vpack.c.b16 %v7309, %v7308
          %v7402 = vpack.c.b16 %v7311, %v7310
          %v7403 = vpack.c.b16 %v7313, %v7312
          %v7404 = vpack.c.b16 %v7315, %v7314
          %v7405 = vpack.c.b16 %v7317, %v7316
          %v7406 = vpack.c.b16 %v7319, %v7318
          %v7407 = vpack.c.b16 %v7321, %v7320
          %v7408 = vpack.c.b16 %v7323, %v7322
          %v7409 = vpack.c.b16 %v7325, %v7324
          %v7410 = vpack.c.b16 %v7327, %v7326
          %v7411 = vpack.c.b16 %v7329, %v7328
          %v7412 = vpack.c.b16 %v7331, %v7330
          %v7413 = vpack.c.b16 %v7333, %v7332
          %v7414 = vpack.c.b16 %v7335, %v7334
          %v7415 = vpack.c.b16 %v7337, %v7336
          %v7416 = vpack.c.b16 %v7339, %v7338
          %v7417 = vpack.c.b16 %v7341, %v7340
          %v7418 = vpack.c.b16 %v7343, %v7342
          %v7419 = vpack.c.b16 %v7345, %v7344
          %v7420 = vpack.c.b16 %v7347, %v7346
          %v7421 = vpack.c.b16 %v7349, %v7348
          %v7422 = vpack.c.b16 %v7351, %v7350
          %v7423 = vpack.c.b16 %v7353, %v7352
          %v7424 = vpack.c.b16 %v7355, %v7354
          %v7425 = vpack.c.b16 %v7357, %v7356
          %v7426 = vpack.c.b16 %v7359, %v7358
          %v7427 = vpack.c.b16 %v7361, %v7360
          %v7428 = vpack.c.b16 %v7363, %v7362
          %v7429 = vpack.c.b16 %v7365, %v7364
          %7494 = vmatprep.subr.bf16.mxu0 0
          %7495 = vmatpush1.bf16.msra.mxu0 %v7366
          %7496 = vmatprep.subr.bf16.mxu0 0
          %7497 = vmatpush1.bf16.msra.mxu0 %v7367
          %7498 = vmatprep.subr.bf16.mxu0 0
          %7499 = vmatpush1.bf16.msra.mxu0 %v7368
          %7500 = vmatprep.subr.bf16.mxu0 0
          %7501 = vmatpush1.bf16.msra.mxu0 %v7369
          %7502 = vmatprep.subr.bf16.mxu0 0
          %7503 = vmatpush1.bf16.msra.mxu0 %v7370
          %7504 = vmatprep.subr.bf16.mxu0 0
          %7505 = vmatpush1.bf16.msra.mxu0 %v7371
          %7506 = vmatprep.subr.bf16.mxu0 0
          %7507 = vmatpush1.bf16.msra.mxu0 %v7372
          %7508 = vmatprep.subr.bf16.mxu0 0
          %7509 = vmatpush1.bf16.msra.mxu0 %v7373
          %7510 = vmatprep.subr.bf16.mxu0 0
          %7511 = vmatpush1.bf16.msra.mxu0 %v7374
          %7512 = vmatprep.subr.bf16.mxu0 0
          %7513 = vmatpush1.bf16.msra.mxu0 %v7375
          %7514 = vmatprep.subr.bf16.mxu0 0
          %7515 = vmatpush1.bf16.msra.mxu0 %v7376
          %7516 = vmatprep.subr.bf16.mxu0 0
          %7517 = vmatpush1.bf16.msra.mxu0 %v7377
          %7518 = vmatprep.subr.bf16.mxu0 0
          %7519 = vmatpush1.bf16.msra.mxu0 %v7378
          %7520 = vmatprep.subr.bf16.mxu0 0
          %7521 = vmatpush1.bf16.msra.mxu0 %v7379
          %7522 = vmatprep.subr.bf16.mxu0 0
          %7523 = vmatpush1.bf16.msra.mxu0 %v7380
          %7524 = vmatprep.subr.bf16.mxu0 0
          %7525 = vmatpush1.bf16.msra.mxu0 %v7381
          %7526 = vmatprep.mubr.bf16.mxu0 %v6968
          %7527 = vmatmul.mubr.bf16.gmra.mrb[0].mxu0 %v6967
          %v7528 = vpop.f32.mrb[0].mxu0
          %v7529 = vadd.f32 %v7108, %v7528
          %v7530 = vpop.f32.mrb[0].mxu0
          %v7531 = vpop.f32.mrb[0].mxu0
          %v7532 = vpop.f32.mrb[0].mxu0
          %7533 = vdwg.mxu0
          %7534 = vmatprep.subr.bf16.mxu0 0
          %7535 = vmatpush1.bf16.msra.mxu0 %v7382
          %7536 = vmatprep.subr.bf16.mxu0 0
          %7537 = vmatpush1.bf16.msra.mxu0 %v7383
          %7538 = vmatprep.subr.bf16.mxu0 0
          %7539 = vmatpush1.bf16.msra.mxu0 %v7384
          %7540 = vmatprep.subr.bf16.mxu0 0
          %7541 = vmatpush1.bf16.msra.mxu0 %v7385
          %7542 = vmatprep.subr.bf16.mxu0 0
          %7543 = vmatpush1.bf16.msra.mxu0 %v7386
          %7544 = vmatprep.subr.bf16.mxu0 0
          %7545 = vmatpush1.bf16.msra.mxu0 %v7387
          %7546 = vmatprep.subr.bf16.mxu0 0
          %7547 = vmatpush1.bf16.msra.mxu0 %v7388
          %7548 = vmatprep.subr.bf16.mxu0 0
          %7549 = vmatpush1.bf16.msra.mxu0 %v7389
          %7550 = vmatprep.subr.bf16.mxu0 0
          %7551 = vmatpush1.bf16.msra.mxu0 %v7390
          %7552 = vmatprep.subr.bf16.mxu0 0
          %7553 = vmatpush1.bf16.msra.mxu0 %v7391
          %7554 = vmatprep.subr.bf16.mxu0 0
          %7555 = vmatpush1.bf16.msra.mxu0 %v7392
          %7556 = vmatprep.subr.bf16.mxu0 0
          %7557 = vmatpush1.bf16.msra.mxu0 %v7393
          %7558 = vmatprep.subr.bf16.mxu0 0
          %7559 = vmatpush1.bf16.msra.mxu0 %v7394
          %7560 = vmatprep.subr.bf16.mxu0 0
          %7561 = vmatpush1.bf16.msra.mxu0 %v7395
          %7562 = vmatprep.subr.bf16.mxu0 0
          %7563 = vmatpush1.bf16.msra.mxu0 %v7396
          %7564 = vmatprep.subr.bf16.mxu0 0
          %7565 = vmatpush1.bf16.msra.mxu0 %v7397
          %7566 = vmatprep.mubr.bf16.mxu0 %v6970
          %7567 = vmatmul.mubr.bf16.gmra.mrb[0].mxu0 %v6969
          %v7568 = vpop.f32.mrb[0].mxu0
          %v7569 = vadd.f32 %v7529, %v7568
          %v7570 = vpop.f32.mrb[0].mxu0
          %v7571 = vpop.f32.mrb[0].mxu0
          %v7572 = vpop.f32.mrb[0].mxu0
          %7573 = vdwg.mxu0
          %7574 = vmatprep.subr.bf16.mxu0 0
          %7575 = vmatpush1.bf16.msra.mxu0 %v7398
          %7576 = vmatprep.subr.bf16.mxu0 0
          %7577 = vmatpush1.bf16.msra.mxu0 %v7399
          %7578 = vmatprep.subr.bf16.mxu0 0
          %7579 = vmatpush1.bf16.msra.mxu0 %v7400
          %7580 = vmatprep.subr.bf16.mxu0 0
          %7581 = vmatpush1.bf16.msra.mxu0 %v7401
          %7582 = vmatprep.subr.bf16.mxu0 0
          %7583 = vmatpush1.bf16.msra.mxu0 %v7402
          %7584 = vmatprep.subr.bf16.mxu0 0
          %7585 = vmatpush1.bf16.msra.mxu0 %v7403
          %7586 = vmatprep.subr.bf16.mxu0 0
          %7587 = vmatpush1.bf16.msra.mxu0 %v7404
          %7588 = vmatprep.subr.bf16.mxu0 0
          %7589 = vmatpush1.bf16.msra.mxu0 %v7405
          %7590 = vmatprep.subr.bf16.mxu0 0
          %7591 = vmatpush1.bf16.msra.mxu0 %v7406
          %7592 = vmatprep.subr.bf16.mxu0 0
          %7593 = vmatpush1.bf16.msra.mxu0 %v7407
          %7594 = vmatprep.subr.bf16.mxu0 0
          %7595 = vmatpush1.bf16.msra.mxu0 %v7408
          %7596 = vmatprep.subr.bf16.mxu0 0
          %7597 = vmatpush1.bf16.msra.mxu0 %v7409
          %7598 = vmatprep.subr.bf16.mxu0 0
          %7599 = vmatpush1.bf16.msra.mxu0 %v7410
          %7600 = vmatprep.subr.bf16.mxu0 0
          %7601 = vmatpush1.bf16.msra.mxu0 %v7411
          %7602 = vmatprep.subr.bf16.mxu0 0
          %7603 = vmatpush1.bf16.msra.mxu0 %v7412
          %7604 = vmatprep.subr.bf16.mxu0 0
          %7605 = vmatpush1.bf16.msra.mxu0 %v7413
          %7606 = vmatprep.mubr.bf16.mxu0 %v6972
          %7607 = vmatmul.mubr.bf16.gmra.mrb[0].mxu0 %v6971
          %v7608 = vpop.f32.mrb[0].mxu0
          %v7609 = vadd.f32 %v7569, %v7608
          %v7610 = vpop.f32.mrb[0].mxu0
          %v7611 = vpop.f32.mrb[0].mxu0
          %v7612 = vpop.f32.mrb[0].mxu0
          %7613 = vdwg.mxu0
          %7614 = vmatprep.subr.bf16.mxu0 0
          %7615 = vmatpush1.bf16.msra.mxu0 %v7414
          %7616 = vmatprep.subr.bf16.mxu0 0
          %7617 = vmatpush1.bf16.msra.mxu0 %v7415
          %7618 = vmatprep.subr.bf16.mxu0 0
          %7619 = vmatpush1.bf16.msra.mxu0 %v7416
          %7620 = vmatprep.subr.bf16.mxu0 0
          %7621 = vmatpush1.bf16.msra.mxu0 %v7417
          %7622 = vmatprep.subr.bf16.mxu0 0
          %7623 = vmatpush1.bf16.msra.mxu0 %v7418
          %7624 = vmatprep.subr.bf16.mxu0 0
          %7625 = vmatpush1.bf16.msra.mxu0 %v7419
          %7626 = vmatprep.subr.bf16.mxu0 0
          %7627 = vmatpush1.bf16.msra.mxu0 %v7420
          %7628 = vmatprep.subr.bf16.mxu0 0
          %7629 = vmatpush1.bf16.msra.mxu0 %v7421
          %7630 = vmatprep.subr.bf16.mxu0 0
          %7631 = vmatpush1.bf16.msra.mxu0 %v7422
          %7632 = vmatprep.subr.bf16.mxu0 0
          %7633 = vmatpush1.bf16.msra.mxu0 %v7423
          %7634 = vmatprep.subr.bf16.mxu0 0
          %7635 = vmatpush1.bf16.msra.mxu0 %v7424
          %7636 = vmatprep.subr.bf16.mxu0 0
          %7637 = vmatpush1.bf16.msra.mxu0 %v7425
          %7638 = vmatprep.subr.bf16.mxu0 0
          %7639 = vmatpush1.bf16.msra.mxu0 %v7426
          %7640 = vmatprep.subr.bf16.mxu0 0
          %7641 = vmatpush1.bf16.msra.mxu0 %v7427
          %7642 = vmatprep.subr.bf16.mxu0 0
          %7643 = vmatpush1.bf16.msra.mxu0 %v7428
          %7644 = vmatprep.subr.bf16.mxu0 0
          %7645 = vmatpush1.bf16.msra.mxu0 %v7429
          %7646 = vmatprep.mubr.bf16.mxu0 %v6974
          %7647 = vmatmul.mubr.bf16.gmra.mrb[0].mxu0 %v6973
          %v7648 = vpop.f32.mrb[0].mxu0
          %v7649 = vadd.f32 %v7609, %v7648
          %v7650 = vpop.f32.mrb[0].mxu0
          %v7651 = vpop.f32.mrb[0].mxu0
          %v7652 = vpop.f32.mrb[0].mxu0
          %7653 = vdwg.mxu0
          %v7654 = vmul.f32 %v7649, %v7649
          %7655 = vadd.xlane.f32.xlu0 %v7654
          %v7656 = vpop.xlane.xlu0 %7655
          %v7657 = vmax.f32 %v7656, 1e-24
          %v7658 = vrsqrt.pop %v7657
          %v7659 = vmul.f32 %v7649, %v7658
          %v7660 = vpack.c.bf16 %v7659, %v7659
          %v7661 = vld [vmem:[%s4] sm:$0xf]
          %v7662 = vld [vmem:[%s4 + $0x4] sm:$0xf]
          %v7663 = vld [vmem:[%s4 + $0x8] sm:$0xf]
          %v7664 = vld [vmem:[%s4 + $0xc] sm:$0xf]
          %v7665 = vld [vmem:[%s4 + $0x10] sm:$0xf]
          %v7666 = vld [vmem:[%s4 + $0x14] sm:$0xf]
          %v7667 = vld [vmem:[%s4 + $0x18] sm:$0xf]
          %v7668 = vld [vmem:[%s4 + $0x1c] sm:$0xf]
          %v7669 = vld [vmem:[%s4 + $0x20] sm:$0xf]
          %v7670 = vld [vmem:[%s4 + $0x24] sm:$0xf]
          %v7671 = vld [vmem:[%s4 + $0x28] sm:$0xf]
          %v7672 = vld [vmem:[%s4 + $0x2c] sm:$0xf]
          %v7673 = vld [vmem:[%s4 + $0x30] sm:$0xf]
          %v7674 = vld [vmem:[%s4 + $0x34] sm:$0xf]
          %v7675 = vld [vmem:[%s4 + $0x38] sm:$0xf]
          %v7676 = vld [vmem:[%s4 + $0x3c] sm:$0xf]
          %v7677 = vld [vmem:[%s5] sm:$0x1]
          %v7679 = vlaneseq
          %v7680 = vshrl.u32 %v7679, 7
          %v7681 = vsub.s32 0, %v7680
          %v7682 = vrot.slane %v7677, %v7681
          %v7700 = vunpack.c.l.b16 %v7661
          %v7701 = vunpack.c.l.b16 %v7662
          %v7702 = vunpack.c.l.b16 %v7663
          %v7703 = vunpack.c.l.b16 %v7664
          %v7704 = vunpack.c.l.b16 %v7665
          %v7705 = vunpack.c.l.b16 %v7666
          %v7706 = vunpack.c.l.b16 %v7667
          %v7707 = vunpack.c.l.b16 %v7668
          %v7708 = vunpack.c.l.b16 %v7669
          %v7709 = vunpack.c.l.b16 %v7670
          %v7710 = vunpack.c.l.b16 %v7671
          %v7711 = vunpack.c.l.b16 %v7672
          %v7712 = vunpack.c.l.b16 %v7673
          %v7713 = vunpack.c.l.b16 %v7674
          %v7714 = vunpack.c.l.b16 %v7675
          %v7715 = vunpack.c.l.b16 %v7676
          %v7716 = vpack.c.b16 %v7701, %v7700
          %v7717 = vpack.c.b16 %v7703, %v7702
          %v7718 = vpack.c.b16 %v7705, %v7704
          %v7719 = vpack.c.b16 %v7707, %v7706
          %v7720 = vpack.c.b16 %v7709, %v7708
          %v7721 = vpack.c.b16 %v7711, %v7710
          %v7722 = vpack.c.b16 %v7713, %v7712
          %v7723 = vpack.c.b16 %v7715, %v7714
          %7732 = vmatprep.subr.bf16.mxu0 0
          %7733 = vmatpush1.bf16.msra.mxu0 %v7716
          %7734 = vmatprep.subr.bf16.mxu0 0
          %7735 = vmatpush1.bf16.msra.mxu0 %v7717
          %7736 = vmatprep.subr.bf16.mxu0 0
          %7737 = vmatpush1.bf16.msra.mxu0 %v7718
          %7738 = vmatprep.subr.bf16.mxu0 0
          %7739 = vmatpush1.bf16.msra.mxu0 %v7719
          %7740 = vmatprep.subr.bf16.mxu0 0
          %7741 = vmatpush1.bf16.msra.mxu0 %v7720
          %7742 = vmatprep.subr.bf16.mxu0 0
          %7743 = vmatpush1.bf16.msra.mxu0 %v7721
          %7744 = vmatprep.subr.bf16.mxu0 0
          %7745 = vmatpush1.bf16.msra.mxu0 %v7722
          %7746 = vmatprep.subr.bf16.mxu0 0
          %7747 = vmatpush1.bf16.msra.mxu0 %v7723
          %7748 = vmatprep.subr.bf16.mxu0 0
          %7749 = vmatpush1.bf16.msra.mxu0 0
          %7750 = vmatprep.subr.bf16.mxu0 0
          %7751 = vmatpush1.bf16.msra.mxu0 0
          %7752 = vmatprep.subr.bf16.mxu0 0
          %7753 = vmatpush1.bf16.msra.mxu0 0
          %7754 = vmatprep.subr.bf16.mxu0 0
          %7755 = vmatpush1.bf16.msra.mxu0 0
          %7756 = vmatprep.subr.bf16.mxu0 0
          %7757 = vmatpush1.bf16.msra.mxu0 0
          %7758 = vmatprep.subr.bf16.mxu0 0
          %7759 = vmatpush1.bf16.msra.mxu0 0
          %7760 = vmatprep.subr.bf16.mxu0 0
          %7761 = vmatpush1.bf16.msra.mxu0 0
          %7762 = vmatprep.subr.bf16.mxu0 0
          %7763 = vmatpush1.bf16.msra.mxu0 0
          %7764 = vmatprep.mubr.bf16.mxu0 0
          %7765 = vmatmul.mubr.bf16.gmra.mrb[0].mxu0 %v7660
          %v7766 = vpop.f32.mrb[0].mxu0
          %v7767 = vadd.f32 %v7682, %v7766
          %v7768 = vpop.f32.mrb[0].mxu0
          %v7769 = vpop.f32.mrb[0].mxu0
          %v7770 = vpop.f32.mrb[0].mxu0
          %7771 = vdwg.mxu0
          %7772 = vst [vmem:[%s818] sm:$0xff] %v7767
        $region93: #{network_forward.1} parent=80 // pred_fallthru
          _
        %p7773 = scmp.lt.s32.totalorder %s21, 0
        %s7774 = scalar_select %p7773, %s21, 0
        %s7775 = smul.addr %s7774, 8
        %s7776 = scalar_lea.vmem %s6, %s7775
        // Predicated region
        $region94: #{network_forward.1} parent=80 // pred_check
          %p7777 = pneg %p180
        $region95: #{network_forward.1} parent=80 // pred_check_branch
          %7779 = sbr.rel (%p7777) target = $region97
        $region96: #{network_forward.1} parent=80 // pred_region
          _
        $region97: #{network_forward.1} parent=80 // pred_fallthru
          _
        // Predicated region
        $region98: #{network_forward.1} parent=80 // pred_check
          %p7780 = pneg %p180
        $region99: #{network_forward.1} parent=80 // pred_check_branch
          %7782 = sbr.rel (%p7780) target = $region101
        $region100: #{network_forward.1} parent=80 // pred_region
          %p7783 = scmp.lt.s32.totalorder %s21, 0
          %s7784 = scalar_select %p7783, %s21, 0
          %s7785 = smul.addr %s7784, 8
          %s7786 = scalar_lea.vmem %s6, %s7785
        $region101: #{network_forward.1} parent=80 // pred_fallthru
          _
      $region81: #{network_forward.1} parent=5 // pred_fallthru
        _
      %p7787 = scmp.le.s32.totalorder 2, %s12
      // Predicated region
      $region102: #{network_forward.1} parent=5 // pred_check
        %p7788 = pneg %p7787
      $region103: #{network_forward.1} parent=5 // pred_check_branch
        %7790 = sbr.rel (%p7788) target = $region105
      $region104: #{network_forward.1} parent=5 // pred_region
        %s7791 = ssub.s32 %s12, 2
      $region105: #{network_forward.1} parent=5 // pred_fallthru
        _
    $region6: #{network_forward.1} parent=1 // loop_footer
      %s16 = sadd.s32 1, %s12
    $region7: #{network_forward.1} parent=1 // loop_footer_branch
      %11 = sbr.rel target = $region3
    $region8: #{network_forward.1} parent=1 // loop_exit
      _

</llo_original>
